<compile_context>
chip_gen: v7x
topology: tpu7x:2x2x1
jax: 0.10.0
libtpu: 0.0.40
codegen_flags: <defaults>
</compile_context>

<pallas_src>
import functools

import jax
import jax.numpy as jnp
from jax.experimental import pallas as pl
from jax.experimental.pallas import tpu as pltpu

D_IN = 224 * 224          # 50176 = 2^10 * 7^2  (2048 does NOT divide it)
H1 = 4096
H2 = 1024
D_OUT = 1


def _linear_kernel(x_ref, w_ref, b_ref, o_ref, *, apply_relu):
    """One (B, tile_k) x (tile_k, tile_n) partial product; grid = (N, K).

    The output block index is constant over k, so o_ref stays VMEM-resident
    and acts as the f32 accumulator (no separate scratch needed).
    """
    k = pl.program_id(1)

    @pl.when(k == 0)
    def _init():
        o_ref[...] = jnp.zeros_like(o_ref)

    # Weights live in HBM as bf16; cast the (small) x block to match so the
    # MXU runs its native single-pass bf16 path with an f32 accumulator.
    o_ref[...] += jnp.dot(x_ref[...].astype(w_ref.dtype), w_ref[...],
                          preferred_element_type=jnp.float32)

    @pl.when(k == pl.num_programs(1) - 1)
    def _finalize():
        y = o_ref[...] + b_ref[...]
        if apply_relu:
            y = jnp.maximum(y, 0.0)
        o_ref[...] = y


def linear_layer(x, w, b, *, apply_relu, tile_n, tile_k,
                 vmem_limit_bytes=32 << 20):
    """y = x @ w + b (optionally ReLU), tiled over (N, K). w may be bf16."""
    B, K = x.shape
    Kw, N = w.shape
    assert K == Kw and b.shape == (1, N)
    assert K % tile_k == 0 and N % tile_n == 0
    grid = (N // tile_n, K // tile_k)

    kernel = functools.partial(_linear_kernel, apply_relu=apply_relu)
    cost = pl.CostEstimate(
        flops=2 * B * K * N,
        transcendentals=0,
        bytes_accessed=(x.dtype.itemsize * B * K * (N // tile_n)  # x re-read per N tile
                        + w.dtype.itemsize * K * N                # full weight stream
                        + b.dtype.itemsize * N
                        + 4 * B * N),
    )

    return pl.pallas_call(
        kernel,
        out_shape=jax.ShapeDtypeStruct((B, N), jnp.float32),
        grid_spec=pltpu.PrefetchScalarGridSpec(
            num_scalar_prefetch=0,
            grid=grid,
            in_specs=[
                pl.BlockSpec((B, tile_k), lambda n, k: (0, k)),        # x (f32)
                pl.BlockSpec((tile_k, tile_n), lambda n, k: (k, n)),   # W (bf16)
                pl.BlockSpec((1, tile_n), lambda n, k: (0, n)),        # b (f32)
            ],
            out_specs=pl.BlockSpec((B, tile_n), lambda n, k: (0, n)),
        ),
        compiler_params=pltpu.CompilerParams(
            dimension_semantics=("parallel", "arbitrary"),
            vmem_limit_bytes=vmem_limit_bytes),
        cost_estimate=cost,
    )(x, w, b)


def _fused_l23_kernel(h1_ref, w2_ref, b2_ref, w3t_ref, b3_ref, o_ref, acc_ref):
    """Fused Linear(4096,1024)+ReLU+Linear(1024,1); grid = (K2_tiles,)."""
    k = pl.program_id(0)

    @pl.when(k == 0)
    def _init():
        acc_ref[...] = jnp.zeros_like(acc_ref)

    acc_ref[...] += jnp.dot(h1_ref[...].astype(w2_ref.dtype), w2_ref[...],
                            preferred_element_type=jnp.float32)

    @pl.when(k == pl.num_programs(0) - 1)
    def _finalize():
        h2 = jnp.maximum(acc_ref[...] + b2_ref[...], 0.0)          # ReLU(h1@W2+b2)
        # Layer 3 (1024 -> 1) in f32: broadcast-multiply by the weight row and
        # lane-reduce (XLU) — trivial cost, no degenerate 1-lane MXU matmul.
        o_ref[...] = (jnp.sum(h2 * w3t_ref[...], axis=-1, keepdims=True)
                      + b3_ref[...])


def fused_layer23(h1, w2, b2, w3, b3, *, tile_k, vmem_limit_bytes=32 << 20):
    """out = ReLU(h1 @ w2 + b2) @ w3 + b3, in a single pallas_call."""
    B, K = h1.shape
    Kw, N = w2.shape
    assert K == Kw and b2.shape == (1, N)
    assert w3.shape == (N, D_OUT) and D_OUT == 1 and b3.shape == (1, D_OUT)
    assert K % tile_k == 0
    grid = (K // tile_k,)
    w3t = w3.T  # (1, N) weight row for the lane reduction

    cost = pl.CostEstimate(
        flops=2 * B * K * N + 2 * B * N * D_OUT,
        transcendentals=0,
        bytes_accessed=(4 * B * K + w2.dtype.itemsize * K * N + 4 * N
                        + 4 * N + 4 + 4 * B * D_OUT),
    )

    return pl.pallas_call(
        _fused_l23_kernel,
        out_shape=jax.ShapeDtypeStruct((B, D_OUT), jnp.float32),
        grid_spec=pltpu.PrefetchScalarGridSpec(
            num_scalar_prefetch=0,
            grid=grid,
            in_specs=[
                pl.BlockSpec((B, tile_k), lambda k: (0, k)),      # h1 (f32)
                pl.BlockSpec((tile_k, N), lambda k: (k, 0)),      # W2 (bf16)
                pl.BlockSpec((1, N), lambda k: (0, 0)),           # b2 (f32)
                pl.BlockSpec((1, N), lambda k: (0, 0)),           # W3^T (f32)
                pl.BlockSpec((1, D_OUT), lambda k: (0, 0)),       # b3 (f32)
            ],
            out_specs=pl.BlockSpec((B, D_OUT), lambda k: (0, 0)),
            scratch_shapes=[pltpu.VMEM((B, N), jnp.float32)],     # h2 accumulator
        ),
        compiler_params=pltpu.CompilerParams(
            dimension_semantics=("arbitrary",),
            vmem_limit_bytes=vmem_limit_bytes),
        cost_estimate=cost,
    )(h1, w2, b2, w3t, b3)


def linear_net_forward(x, params):
    """Forward pass of LinearNet.  x: (B, 224, 224) or (B, 1, 224, 224)."""
    (w1, b1), (w2, b2), (w3, b3) = params
    x2d = x.reshape(-1, D_IN)                            # x.view(-1, 224*224)
    # Layer 1: 50176 -> 4096, ReLU.  Dominant cost: streaming W1 (bf16, 411 MB).
    # tile_k=3584 (K = 2^10*7^2) -> 4x14 grid, ~7 MiB W blocks (14 MiB double-buffered).
    h1 = linear_layer(x2d, w1, b1, apply_relu=True, tile_n=1024, tile_k=3584)
    # Layers 2+3 fused: ReLU(h1 @ W2 + b2) @ W3 + b3 in one pallas_call.
    out = fused_layer23(h1, w2, b2, w3, b3, tile_k=2048)
    return out


if __name__ == "__main__":
    B = 2  # small batch; feature dims are fixed by the module (224*224 -> 4096 -> 1024 -> 1)

    key = jax.random.PRNGKey(0)
    kx, k1, k2, k3, k4, k5, k6 = jax.random.split(key, 7)

    x = jax.random.normal(kx, (B, 224, 224), dtype=jnp.float32)

    def init_linear(kw, kb, fan_in, fan_out, w_dtype):
        # torch.nn.Linear default init: U(-1/sqrt(fan_in), 1/sqrt(fan_in)).
        bound = 1.0 / (fan_in ** 0.5)
        w = jax.random.uniform(kw, (fan_in, fan_out), jnp.float32, -bound, bound)
        b = jax.random.uniform(kb, (1, fan_out), jnp.float32, -bound, bound)
        return w.astype(w_dtype), b

    # Bandwidth-dominant W1/W2 stored as bf16 in HBM; biases and the tiny
    # final 1024->1 layer kept in f32.  Weights are (in, out), i.e. already
    # transposed vs torch.nn.Linear, so y = x @ W + b.
    w1, b1 = init_linear(k1, k2, D_IN, H1, jnp.bfloat16)
    w2, b2 = init_linear(k3, k4, H1, H2, jnp.bfloat16)
    w3, b3 = init_linear(k5, k6, H2, D_OUT, jnp.float32)
    params = ((w1, b1), (w2, b2), (w3, b3))

    out = jax.block_until_ready(linear_net_forward(x, params))

    # Pure-JAX reference on the SAME dtypes (bf16 weights, f32 accumulation):
    # validates the kernel independent of the bf16 quantization choice.
    x2d = x.reshape(B, D_IN)
    h1_ref = jnp.maximum(
        jnp.dot(x2d.astype(jnp.bfloat16), w1,
                preferred_element_type=jnp.float32) + b1, 0.0)
    h2_ref = jnp.maximum(
        jnp.dot(h1_ref.astype(jnp.bfloat16), w2,
                preferred_element_type=jnp.float32) + b2, 0.0)
    ref = jnp.dot(h2_ref, w3, precision="highest") + b3

    assert out.shape == (B, D_OUT)
    assert jnp.allclose(out, ref, atol=5e-3, rtol=5e-3), float(
        jnp.max(jnp.abs(out - ref)))

    print("KERNEL_OK")
</pallas_src>

<mosaic_0001>
module attributes {stable_mosaic.version = 11 : i64} {
  func.func @_linear_kernel(%arg0: i32, %arg1: i32, %arg2: memref<2x3584xf32, #tpu.memory_space<vmem>>, %arg3: memref<3584x1024xbf16, #tpu.memory_space<vmem>>, %arg4: memref<1x1024xf32, #tpu.memory_space<vmem>>, %arg5: memref<2x1024xf32, #tpu.memory_space<vmem>>) attributes {dimension_semantics = [#tpu.dimension_semantics<parallel>, #tpu.dimension_semantics<arbitrary>], iteration_bounds = array<i64: 4, 14>, scalar_prefetch = 0 : i64, scratch_operands = 0 : i64, tpu.core_type = #tpu.core_type<tc>, window_params = [{transform_indices = @transform_0, window_bounds = array<i64: 2, 3584>}, {transform_indices = @transform_1, window_bounds = array<i64: 3584, 1024>}, {transform_indices = @transform_2, window_bounds = array<i64: 1, 1024>}, {transform_indices = @transform_3, window_bounds = array<i64: 2, 1024>}]} {
    %c0_i32 = arith.constant 0 : i32
    %0 = arith.cmpi eq, %arg1, %c0_i32 : i32
    %1 = arith.extui %0 : i1 to i32
    %c0_i32_0 = arith.constant 0 : i32
    %2 = arith.cmpi ne, %1, %c0_i32_0 : i32
    scf.if %2 {
      %cst_9 = arith.constant 0.000000e+00 : f32
      %13 = vector.broadcast %cst_9 : f32 to vector<2x1024xf32>
      %c0_10 = arith.constant 0 : index
      %c0_11 = arith.constant 0 : index
      %14 = vector.load %arg5[%c0_10, %c0_11] : memref<2x1024xf32, #tpu.memory_space<vmem>>, vector<2x1024xf32>
      tpu.vector_store %arg5[%c0_10, %c0_11], %13 {strides = array<i32>} : memref<2x1024xf32, #tpu.memory_space<vmem>>, vector<2x1024xf32>,
    } else {
    }
    %c0 = arith.constant 0 : index
    %c0_1 = arith.constant 0 : index
    %3 = vector.load %arg5[%c0, %c0_1] : memref<2x1024xf32, #tpu.memory_space<vmem>>, vector<2x1024xf32>
    %c0_2 = arith.constant 0 : index
    %c0_3 = arith.constant 0 : index
    %4 = vector.load %arg2[%c0_2, %c0_3] : memref<2x3584xf32, #tpu.memory_space<vmem>>, vector<2x3584xf32>
    %5 = arith.truncf %4 : vector<2x3584xf32> to vector<2x3584xbf16>
    %c0_4 = arith.constant 0 : index
    %c0_5 = arith.constant 0 : index
    %6 = vector.load %arg3[%c0_4, %c0_5] : memref<3584x1024xbf16, #tpu.memory_space<vmem>>, vector<3584x1024xbf16>
    %cst = arith.constant dense<0.000000e+00> : vector<2x1024xf32>
    %7 = tpu.matmul %5, %6, %cst {dimension_numbers = #tpu.dot_dimension_numbers<[1], [0], [0], [1], [0, 0, 1, 1], [], []>} : vector<2x3584xbf16>, vector<3584x1024xbf16>, vector<2x1024xf32> -> vector<2x1024xf32>
    %8 = arith.addf %3, %7 : vector<2x1024xf32>
    %c0_6 = arith.constant 0 : index
    %c0_7 = arith.constant 0 : index
    %9 = vector.load %arg5[%c0_6, %c0_7] : memref<2x1024xf32, #tpu.memory_space<vmem>>, vector<2x1024xf32>
    tpu.vector_store %arg5[%c0_6, %c0_7], %8 {strides = array<i32>} : memref<2x1024xf32, #tpu.memory_space<vmem>>, vector<2x1024xf32>,
    %c13_i32 = arith.constant 13 : i32
    %10 = arith.cmpi eq, %arg1, %c13_i32 : i32
    %11 = arith.extui %10 : i1 to i32
    %c0_i32_8 = arith.constant 0 : i32
    %12 = arith.cmpi ne, %11, %c0_i32_8 : i32
    scf.if %12 {
      %c0_9 = arith.constant 0 : index
      %c0_10 = arith.constant 0 : index
      %13 = vector.load %arg5[%c0_9, %c0_10] : memref<2x1024xf32, #tpu.memory_space<vmem>>, vector<2x1024xf32>
      %c0_11 = arith.constant 0 : index
      %c0_12 = arith.constant 0 : index
      %14 = vector.load %arg4[%c0_11, %c0_12] : memref<1x1024xf32, #tpu.memory_space<vmem>>, vector<1x1024xf32>
      %15 = vector.broadcast %14 : vector<1x1024xf32> to vector<2x1024xf32>
      %16 = arith.addf %13, %15 : vector<2x1024xf32>
      %cst_13 = arith.constant 0.000000e+00 : f32
      %17 = vector.broadcast %cst_13 : f32 to vector<2x1024xf32>
      %18 = arith.maximumf %16, %17 : vector<2x1024xf32>
      %c0_14 = arith.constant 0 : index
      %c0_15 = arith.constant 0 : index
      %19 = vector.load %arg5[%c0_14, %c0_15] : memref<2x1024xf32, #tpu.memory_space<vmem>>, vector<2x1024xf32>
      tpu.vector_store %arg5[%c0_14, %c0_15], %18 {strides = array<i32>} : memref<2x1024xf32, #tpu.memory_space<vmem>>, vector<2x1024xf32>,
    } else {
    }
    return
  }
  func.func @transform_0(%arg0: i32, %arg1: i32) -> (i32, i32) {
    %c0_i32 = arith.constant 0 : i32
    %c0_i32_0 = arith.constant 0 : i32
    return %c0_i32, %arg1 : i32, i32
  }
  func.func @transform_1(%arg0: i32, %arg1: i32) -> (i32, i32) {
    %c0_i32 = arith.constant 0 : i32
    return %arg1, %arg0 : i32, i32
  }
  func.func @transform_2(%arg0: i32, %arg1: i32) -> (i32, i32) {
    %c0_i32 = arith.constant 0 : i32
    %c0_i32_0 = arith.constant 0 : i32
    return %c0_i32, %arg0 : i32, i32
  }
  func.func @transform_3(%arg0: i32, %arg1: i32) -> (i32, i32) {
    %c0_i32 = arith.constant 0 : i32
    %c0_i32_0 = arith.constant 0 : i32
    return %c0_i32, %arg0 : i32, i32
  }
}

</mosaic_0001>

<llo_original>
// kernel: tpu_custom_call.1
$region0: #{tpu_custom_call.1}
  #allocation0 [shape = 'u32[]', space=smem, size = 0x4, offset = 0x4, fixed_abs, tag = 'smem constant byte address 0x4 - core index']
  #allocation1 [shape = 'u32[144,128]{1,0:T(1,128)}', space=vmem, size = 0x12000, scoped, tag = 'internal scratch']
  %s0 = inlined_call_operand.hbm [shape: f32[2,50176], index: 0, kind: input, shape index: {}]
  %s1 = inlined_call_operand.hbm [shape: bf16[50176,4096], index: 1, kind: input, shape index: {}]
  %s2 = inlined_call_operand.hbm [shape: f32[1,4096], index: 2, kind: input, shape index: {}]
  %s3 = inlined_call_operand.hbm [shape: f32[2,4096], index: 3, kind: output, shape index: {}]
  %s4 = sld [smem:[#allocation0]]
  $region65: #{tpu_custom_call.1} parent=0
    _
  %s6 = ssub.s32 1, %s4
  %s7 = scalar_select 0, %s6, %s4
  $region1: #{tpu_custom_call.1} parent=0
    #allocation2 [shape = 'u8[57344]{0}', space=vmem, size = 0xe000, scoped, tag = 'input window, operand 0']
    #allocation3 [shape = 's32[2]{0}', space=sflag, size = 0x8, scoped, tag = 'scoped memory for tpu_custom_call.1']
    #allocation4 [shape = 's32[2]{0}', space=sflag, size = 0x8, scoped, tag = 'scoped memory for tpu_custom_call.1']
    #allocation5 [shape = 'u8[14680064]{0}', space=vmem, size = 0xe00000, scoped, tag = 'input window, operand 1']
    #allocation6 [shape = 's32[2]{0}', space=sflag, size = 0x8, scoped, tag = 'scoped memory for tpu_custom_call.1']
    #allocation7 [shape = 'u8[8192]{0}', space=vmem, size = 0x2000, scoped, tag = 'input window, operand 2']
    #allocation8 [shape = 'u8[16384]{0}', space=vmem, size = 0x4000, scoped, tag = 'output window, operand 0']
    %8 = vsyncpa [#allocation3], 0
    %s9 = scalar_lea.sflag [#allocation3], 1
    %10 = vsyncpa %s9, 0
    %11 = vsyncpa [#allocation6], 0
    %s12 = scalar_lea.sflag [#allocation6], 1
    %13 = vsyncpa %s12, 0
    %14 = vsyncpa [#allocation4], 0
    %s15 = scalar_lea.sflag [#allocation4], 1
    %16 = vsyncpa %s15, 0
    loop: start=0, step=1, limit=58
    $region2: #{tpu_custom_call.1} parent=1 // loop_pre_header
      _
    $region3: #{tpu_custom_call.1} parent=1 // loop_header
      %s18 = sphi 0, %s22
      %p19 = scmp.ge.s32.totalorder %s18, 58
      %s25 = sphi 0, %s37
      %s26 = sphi 0, %s33
      %s27 = sphi 0, %s25
      %s28 = sphi 0, %s26
      %s29 = sphi 0, %s27
      %s30 = sphi 0, %s28
      %s40 = sphi 0, %s42
      %s43 = sphi 0, %s40
      %s44 = sphi 0, %s43
      %s60 = sphi 0, %s44
      %s68 = sphi 0, %s70
      %s71 = sphi 0, %s68
      %s72 = sphi 0, %s71
      %s88 = sphi 0, %s72
      %s94 = sphi 0, %s96
      %s97 = sphi 0, %s94
      %s98 = sphi 0, %s97
      %s114 = sphi 0, %s98
      %s120 = sphi 0, %s122
      %s123 = sphi 0, %s120
      %s124 = sphi 0, %s123
      %s140 = sphi 0, %s124
    $region4: #{tpu_custom_call.1} parent=1 // loop_header_branch
      %21 = sbr.rel (%p19) target = $region8
    $region5: #{tpu_custom_call.1} parent=1 // loop_body
      %s23 = ssub.s32 %s18, 1
      %s24 = ssub.s32 %s18, 2
      %s31 = sadd.s32 1, %s26
      %p32 = scmp.ge.s32.totalorder %s31, 14
      %s33 = scalar_select %p32, 0, %s31
      %s34 = sadd.s32 1, %s25
      %s35 = scalar_select %p32, %s34, %s25
      %p36 = scmp.ge.s32.totalorder %s35, 4
      %s37 = scalar_select %p36, 0, %s35
      %s38 = ssub.s32 %s26, %s33
      %p39 = scmp.eq.s32.totalorder %s38, 0
      %s41 = sadd.s32 %s40, 1
      %s42 = scalar_select %p39, %s40, %s41
      %p45 = pneg %p39
      %p46 = scmp.eq.s32.totalorder %s18, 55
      %p47 = por %p45, %p46
      %p48 = scmp.ne.s32.totalorder %s40, %s43
      %p49 = scmp.eq.s32.totalorder %s18, 0
      %p50 = por %p48, %p49
      %p51 = scmp.ne.s32.totalorder %s40, %s43
      %p52 = scmp.eq.s32.totalorder %s23, 55
      %p53 = por %p51, %p52
      %p54 = scmp.ne.s32.totalorder %s43, %s44
      %p55 = scmp.eq.s32.totalorder %s23, 0
      %p56 = por %p54, %p55
      %p57 = scmp.ne.s32.totalorder %s43, %s44
      %p58 = scmp.eq.s32.totalorder %s24, 55
      %p59 = por %p57, %p58
      %p61 = scmp.ne.s32.totalorder %s44, %s60
      %p62 = scmp.eq.s32.totalorder %s24, 0
      %p63 = por %p61, %p62
      %s64 = ssub.s32 %s26, %s33
      %s65 = ssub.s32 %s25, %s37
      %s66 = sor.u32 %s64, %s65
      %p67 = scmp.eq.s32.totalorder %s66, 0
      %s69 = sadd.s32 %s68, 1
      %s70 = scalar_select %p67, %s68, %s69
      %p73 = pneg %p67
      %p74 = scmp.eq.s32.totalorder %s18, 55
      %p75 = por %p73, %p74
      %p76 = scmp.ne.s32.totalorder %s68, %s71
      %p77 = scmp.eq.s32.totalorder %s18, 0
      %p78 = por %p76, %p77
      %p79 = scmp.ne.s32.totalorder %s68, %s71
      %p80 = scmp.eq.s32.totalorder %s23, 55
      %p81 = por %p79, %p80
      %p82 = scmp.ne.s32.totalorder %s71, %s72
      %p83 = scmp.eq.s32.totalorder %s23, 0
      %p84 = por %p82, %p83
      %p85 = scmp.ne.s32.totalorder %s71, %s72
      %p86 = scmp.eq.s32.totalorder %s24, 55
      %p87 = por %p85, %p86
      %p89 = scmp.ne.s32.totalorder %s72, %s88
      %p90 = scmp.eq.s32.totalorder %s24, 0
      %p91 = por %p89, %p90
      %s92 = ssub.s32 %s25, %s37
      %p93 = scmp.eq.s32.totalorder %s92, 0
      %s95 = sadd.s32 %s94, 1
      %s96 = scalar_select %p93, %s94, %s95
      %p99 = pneg %p93
      %p100 = scmp.eq.s32.totalorder %s18, 55
      %p101 = por %p99, %p100
      %p102 = scmp.ne.s32.totalorder %s94, %s97
      %p103 = scmp.eq.s32.totalorder %s18, 0
      %p104 = por %p102, %p103
      %p105 = scmp.ne.s32.totalorder %s94, %s97
      %p106 = scmp.eq.s32.totalorder %s23, 55
      %p107 = por %p105, %p106
      %p108 = scmp.ne.s32.totalorder %s97, %s98
      %p109 = scmp.eq.s32.totalorder %s23, 0
      %p110 = por %p108, %p109
      %p111 = scmp.ne.s32.totalorder %s97, %s98
      %p112 = scmp.eq.s32.totalorder %s24, 55
      %p113 = por %p111, %p112
      %p115 = scmp.ne.s32.totalorder %s98, %s114
      %p116 = scmp.eq.s32.totalorder %s24, 0
      %p117 = por %p115, %p116
      %s118 = ssub.s32 %s25, %s37
      %p119 = scmp.eq.s32.totalorder %s118, 0
      %s121 = sadd.s32 %s120, 1
      %s122 = scalar_select %p119, %s120, %s121
      %p125 = pneg %p119
      %p126 = scmp.eq.s32.totalorder %s18, 55
      %p127 = por %p125, %p126
      %p128 = scmp.ne.s32.totalorder %s120, %s123
      %p129 = scmp.eq.s32.totalorder %s18, 0
      %p130 = por %p128, %p129
      %p131 = scmp.ne.s32.totalorder %s120, %s123
      %p132 = scmp.eq.s32.totalorder %s23, 55
      %p133 = por %p131, %p132
      %p134 = scmp.ne.s32.totalorder %s123, %s124
      %p135 = scmp.eq.s32.totalorder %s23, 0
      %p136 = por %p134, %p135
      %p137 = scmp.ne.s32.totalorder %s123, %s124
      %p138 = scmp.eq.s32.totalorder %s24, 55
      %p139 = por %p137, %p138
      %p141 = scmp.ne.s32.totalorder %s124, %s140
      %p142 = scmp.eq.s32.totalorder %s24, 0
      %p143 = por %p141, %p142
      %p144 = scmp.le.s32.totalorder 1, %s18
      %p145 = scmp.lt.s32.totalorder %s18, 57
      %p146 = pnand %p144, %p145
      %p147 = pneg %p146
      // Predicated region
      $region9: #{tpu_custom_call.1} parent=5 // pred_check
        _
      $region10: #{tpu_custom_call.1} parent=5 // pred_check_branch
        %149 = sbr.rel (%p146) target = $region12
      $region11: #{tpu_custom_call.1} parent=5 // pred_region
        %s150 = ssub.s32 %s18, 1
      $region12: #{tpu_custom_call.1} parent=5 // pred_fallthru
        _
      %p151 = scmp.lt.s32.totalorder %s18, 56
      // Predicated region
      $region13: #{tpu_custom_call.1} parent=5 // pred_check
        %p152 = pneg %p151
      $region14: #{tpu_custom_call.1} parent=5 // pred_check_branch
        %154 = sbr.rel (%p152) target = $region16
      $region15: #{tpu_custom_call.1} parent=5 // pred_region
        // Predicated region
        $region17: #{tpu_custom_call.1} parent=15 // pred_check
          %p155 = pneg %p50
        $region18: #{tpu_custom_call.1} parent=15 // pred_check_branch
          %157 = sbr.rel (%p155) target = $region20
        $region19: #{tpu_custom_call.1} parent=15 // pred_region
          %s158 = sand.u32 %s40, 1
          %s159 = scalar_lea.sflag [#allocation3], %s158
          %s160 = sand.u32 %s40, 1
          %s161 = smul.addr %s160, 56
          %s162 = scalar_lea.vmem [#allocation2], %s161
          %s163 = smul.u32 28, %s26
          %s165 = ssub.s32 896, 896
          %166 = vsyncadd %s159, %s165
          %s167 = smul.addr %s163, 32
          %s168 = scalar_lea.hbm %s0, %s167
          %s170 = sshll.u32 %s162, 4
          %s171 = int_to_ptr.vmem [resolvable:$true] %s170
          %173 = dma.hbm_to_vmem [thread:$0]  %s168, 896, %s171, %s159
        $region20: #{tpu_custom_call.1} parent=15 // pred_fallthru
          _
        // Predicated region
        $region21: #{tpu_custom_call.1} parent=15 // pred_check
          %p174 = pneg %p78
        $region22: #{tpu_custom_call.1} parent=15 // pred_check_branch
          %176 = sbr.rel (%p174) target = $region24
        $region23: #{tpu_custom_call.1} parent=15 // pred_region
          %s177 = sand.u32 %s18, 1
          %s178 = scalar_lea.sflag [#allocation6], %s177
          %s179 = sand.u32 %s68, 1
          %s180 = smul.addr %s179, 14336
          %s181 = scalar_lea.vmem [#allocation5], %s180
          %s182 = smul.u32 448, %s26
          %s183 = smul.u32 8, %s25
          %s185 = ssub.s32 229376, 229376
          %186 = vsyncadd %s178, %s185
          %s187 = smul.addr %s182, 32
          %s188 = sadd.s32 %s183, %s187
          %s189 = smul.addr %s188, 64
          %s190 = scalar_lea.hbm %s1, %s189
          %s191 = sshll.u32 %s181, 4
          %s192 = int_to_ptr.vmem [resolvable:$true] %s191
          %197 = dma.hbm_to_vmem [thread:$0]  %s190, 229376, %s192, %s178, 2048, 512, 32
        $region24: #{tpu_custom_call.1} parent=15 // pred_fallthru
          _
        // Predicated region
        $region25: #{tpu_custom_call.1} parent=15 // pred_check
          %p198 = pneg %p104
        $region26: #{tpu_custom_call.1} parent=15 // pred_check_branch
          %200 = sbr.rel (%p198) target = $region28
        $region27: #{tpu_custom_call.1} parent=15 // pred_region
          %s201 = sand.u32 %s18, 1
          %s202 = scalar_lea.sflag [#allocation6], %s201
          %s203 = sand.u32 %s94, 1
          %s204 = smul.addr %s203, 8
          %s205 = scalar_lea.vmem [#allocation7], %s204
          %s206 = smul.u32 8, %s25
          %s208 = ssub.s32 128, 128
          %209 = vsyncadd %s202, %s208
          %s210 = smul.addr %s206, 16
          %s211 = scalar_lea.hbm %s2, %s210
          %s213 = sshll.u32 %s205, 4
          %s214 = int_to_ptr.vmem [resolvable:$true] %s213
          %216 = dma.hbm_to_vmem [thread:$0]  %s211, 128, %s214, %s202
        $region28: #{tpu_custom_call.1} parent=15 // pred_fallthru
          _
      $region16: #{tpu_custom_call.1} parent=5 // pred_fallthru
        _
      %p217 = scmp.le.s32.totalorder 1, %s18
      %p218 = scmp.lt.s32.totalorder %s18, 57
      %p219 = pnand %p217, %p218
      %p220 = pneg %p219
      // Predicated region
      $region29: #{tpu_custom_call.1} parent=5 // pred_check
        _
      $region30: #{tpu_custom_call.1} parent=5 // pred_check_branch
        %222 = sbr.rel (%p219) target = $region32
      $region31: #{tpu_custom_call.1} parent=5 // pred_region
        %s223 = ssub.s32 %s18, 1
        %s224 = sand.u32 %s43, 1
        %s225 = scalar_lea.sflag [#allocation3], %s224
        %s226 = sand.u32 %s43, 1
        %s227 = smul.addr %s226, 56
        %s228 = scalar_lea.vmem [#allocation2], %s227
        // Predicated region
        $region33: #{tpu_custom_call.1} parent=31 // pred_check
          %p229 = pneg %p56
        $region34: #{tpu_custom_call.1} parent=31 // pred_check_branch
          %231 = sbr.rel (%p229) target = $region36
        $region35: #{tpu_custom_call.1} parent=31 // pred_region
          %232 = dma.done %s225, 896
        $region36: #{tpu_custom_call.1} parent=31 // pred_fallthru
          _
        %s233 = sand.u32 %s23, 1
        %s234 = scalar_lea.sflag [#allocation6], %s233
        %s235 = sand.u32 %s71, 1
        %s236 = smul.addr %s235, 14336
        %s237 = scalar_lea.vmem [#allocation5], %s236
        // Predicated region
        $region37: #{tpu_custom_call.1} parent=31 // pred_check
          %p238 = pneg %p84
        $region38: #{tpu_custom_call.1} parent=31 // pred_check_branch
          %240 = sbr.rel (%p238) target = $region40
        $region39: #{tpu_custom_call.1} parent=31 // pred_region
          %241 = dma.done %s234, 229376
        $region40: #{tpu_custom_call.1} parent=31 // pred_fallthru
          _
        %s242 = sand.u32 %s23, 1
        %s243 = scalar_lea.sflag [#allocation6], %s242
        %s244 = sand.u32 %s97, 1
        %s245 = smul.addr %s244, 8
        %s246 = scalar_lea.vmem [#allocation7], %s245
        // Predicated region
        $region41: #{tpu_custom_call.1} parent=31 // pred_check
          %p247 = pneg %p110
        $region42: #{tpu_custom_call.1} parent=31 // pred_check_branch
          %249 = sbr.rel (%p247) target = $region44
        $region43: #{tpu_custom_call.1} parent=31 // pred_region
          %250 = dma.done %s243, 128
        $region44: #{tpu_custom_call.1} parent=31 // pred_fallthru
          _
        %s251 = sand.u32 %s43, 1
        %s252 = scalar_lea.sflag [#allocation3], %s251
        %s253 = sand.u32 %s43, 1
        %s254 = smul.addr %s253, 56
        %s255 = scalar_lea.vmem [#allocation2], %s254
        %p256 = pneg %p56
        %p257 = pneg %p53
        %s258 = sand.u32 %s23, 1
        %s259 = scalar_lea.sflag [#allocation6], %s258
        %s260 = sand.u32 %s71, 1
        %s261 = smul.addr %s260, 14336
        %s262 = scalar_lea.vmem [#allocation5], %s261
        %p263 = pneg %p84
        %p264 = pneg %p81
        %s265 = sand.u32 %s23, 1
        %s266 = scalar_lea.sflag [#allocation6], %s265
        %s267 = sand.u32 %s97, 1
        %s268 = smul.addr %s267, 8
        %s269 = scalar_lea.vmem [#allocation7], %s268
        %p270 = pneg %p110
        %p271 = pneg %p107
        %p272 = pneg %p136
        %p273 = pneg %p133
        %s274 = sand.u32 %s123, 1
        %s275 = scalar_lea.sflag [#allocation4], %s274
        %s276 = sand.u32 %s123, 1
        %s277 = smul.addr %s276, 16
        %s278 = scalar_lea.vmem [#allocation8], %s277
        %s279 = smul.u32 28, %s28
        %s280 = smul.u32 448, %s28
        %s281 = smul.u32 8, %s27
        %s282 = smul.u32 8, %s27
        %s283 = smul.u32 8, %s27
        %p284 = scmp.eq.s32.totalorder %s28, 0
        // Predicated region
        $region45: #{tpu_custom_call.1} parent=31 // pred_check
          %p285 = pneg %p284
        $region46: #{tpu_custom_call.1} parent=31 // pred_check_branch
          %287 = sbr.rel (%p285) target = $region48
        $region47: #{tpu_custom_call.1} parent=31 // pred_region
          %288 = vst [vmem:[%s278] sm:$0xff] 0.0
          %289 = vst [vmem:[%s278 + $0x8] sm:$0xff] 0.0
        $region48: #{tpu_custom_call.1} parent=31 // pred_fallthru
          _
        %v290 = vld [vmem:[%s278] sm:$0xff]
        %v291 = vld [vmem:[%s278 + $0x8] sm:$0xff]
        %v292 = vld [vmem:[%s228] sm:$0xff]
        %v293 = vld [vmem:[%s228 + $0x8] sm:$0xff]
        %v294 = vld [vmem:[%s228 + $0x10] sm:$0xff]
        %v295 = vld [vmem:[%s228 + $0x18] sm:$0xff]
        %v296 = vld [vmem:[%s228 + $0x20] sm:$0xff]
        %v297 = vld [vmem:[%s228 + $0x28] sm:$0xff]
        %v298 = vld [vmem:[%s228 + $0x30] sm:$0xff]
        %v306 = vcombine.high %v292, %v292
        %v308 = vunpack.c.l.s4 1983009808
        %v309 = vunpack.c.0.s8 %v308
        %v310 = vlaneseq
        %v311 = vshrl.u32 %v310, 7
        %v312 = vsub.s32 %v309, %v311
        %v313 = vrot.slane %v292, %v312
        %v315 = vunpack.c.l.s4 1983009808
        %v316 = vunpack.c.0.s8 %v315
        %v317 = vlaneseq
        %v318 = vshrl.u32 %v317, 7
        %v319 = vsub.s32 %v316, %v318
        %v320 = vrot.slane %v306, %v319
        %v321 = vcombine.high %v313, %v313
        %v322 = vcombine.high %v320, %v320
        %v323 = vcombine.high %v293, %v293
        %v325 = vunpack.c.l.s4 1983009808
        %v326 = vunpack.c.0.s8 %v325
        %v327 = vlaneseq
        %v328 = vshrl.u32 %v327, 7
        %v329 = vsub.s32 %v326, %v328
        %v330 = vrot.slane %v293, %v329
        %v332 = vunpack.c.l.s4 1983009808
        %v333 = vunpack.c.0.s8 %v332
        %v334 = vlaneseq
        %v335 = vshrl.u32 %v334, 7
        %v336 = vsub.s32 %v333, %v335
        %v337 = vrot.slane %v323, %v336
        %v338 = vcombine.high %v330, %v330
        %v339 = vcombine.high %v337, %v337
        %v340 = vcombine.high %v294, %v294
        %v342 = vunpack.c.l.s4 1983009808
        %v343 = vunpack.c.0.s8 %v342
        %v344 = vlaneseq
        %v345 = vshrl.u32 %v344, 7
        %v346 = vsub.s32 %v343, %v345
        %v347 = vrot.slane %v294, %v346
        %v349 = vunpack.c.l.s4 1983009808
        %v350 = vunpack.c.0.s8 %v349
        %v351 = vlaneseq
        %v352 = vshrl.u32 %v351, 7
        %v353 = vsub.s32 %v350, %v352
        %v354 = vrot.slane %v340, %v353
        %v355 = vcombine.high %v347, %v347
        %v356 = vcombine.high %v354, %v354
        %v357 = vcombine.high %v295, %v295
        %v359 = vunpack.c.l.s4 1983009808
        %v360 = vunpack.c.0.s8 %v359
        %v361 = vlaneseq
        %v362 = vshrl.u32 %v361, 7
        %v363 = vsub.s32 %v360, %v362
        %v364 = vrot.slane %v295, %v363
        %v366 = vunpack.c.l.s4 1983009808
        %v367 = vunpack.c.0.s8 %v366
        %v368 = vlaneseq
        %v369 = vshrl.u32 %v368, 7
        %v370 = vsub.s32 %v367, %v369
        %v371 = vrot.slane %v357, %v370
        %v372 = vcombine.high %v364, %v364
        %v373 = vcombine.high %v371, %v371
        %v374 = vcombine.high %v296, %v296
        %v376 = vunpack.c.l.s4 1983009808
        %v377 = vunpack.c.0.s8 %v376
        %v378 = vlaneseq
        %v379 = vshrl.u32 %v378, 7
        %v380 = vsub.s32 %v377, %v379
        %v381 = vrot.slane %v296, %v380
        %v383 = vunpack.c.l.s4 1983009808
        %v384 = vunpack.c.0.s8 %v383
        %v385 = vlaneseq
        %v386 = vshrl.u32 %v385, 7
        %v387 = vsub.s32 %v384, %v386
        %v388 = vrot.slane %v374, %v387
        %v389 = vcombine.high %v381, %v381
        %v390 = vcombine.high %v388, %v388
        %v391 = vcombine.high %v297, %v297
        %v393 = vunpack.c.l.s4 1983009808
        %v394 = vunpack.c.0.s8 %v393
        %v395 = vlaneseq
        %v396 = vshrl.u32 %v395, 7
        %v397 = vsub.s32 %v394, %v396
        %v398 = vrot.slane %v297, %v397
        %v400 = vunpack.c.l.s4 1983009808
        %v401 = vunpack.c.0.s8 %v400
        %v402 = vlaneseq
        %v403 = vshrl.u32 %v402, 7
        %v404 = vsub.s32 %v401, %v403
        %v405 = vrot.slane %v391, %v404
        %v406 = vcombine.high %v398, %v398
        %v407 = vcombine.high %v405, %v405
        %v408 = vcombine.high %v298, %v298
        %v410 = vunpack.c.l.s4 1983009808
        %v411 = vunpack.c.0.s8 %v410
        %v412 = vlaneseq
        %v413 = vshrl.u32 %v412, 7
        %v414 = vsub.s32 %v411, %v413
        %v415 = vrot.slane %v298, %v414
        %v417 = vunpack.c.l.s4 1983009808
        %v418 = vunpack.c.0.s8 %v417
        %v419 = vlaneseq
        %v420 = vshrl.u32 %v419, 7
        %v421 = vsub.s32 %v418, %v420
        %v422 = vrot.slane %v408, %v421
        %v423 = vcombine.high %v415, %v415
        %v424 = vcombine.high %v422, %v422
        %v453 = vpack.c.bf16 %v313, %v313
        %v454 = vpack.c.bf16 %v321, %v321
        %v455 = vpack.c.bf16 %v320, %v320
        %v456 = vpack.c.bf16 %v322, %v322
        %v457 = vpack.c.bf16 %v330, %v330
        %v458 = vpack.c.bf16 %v338, %v338
        %v459 = vpack.c.bf16 %v337, %v337
        %v460 = vpack.c.bf16 %v339, %v339
        %v461 = vpack.c.bf16 %v347, %v347
        %v462 = vpack.c.bf16 %v355, %v355
        %v463 = vpack.c.bf16 %v354, %v354
        %v464 = vpack.c.bf16 %v356, %v356
        %v465 = vpack.c.bf16 %v364, %v364
        %v466 = vpack.c.bf16 %v372, %v372
        %v467 = vpack.c.bf16 %v371, %v371
        %v468 = vpack.c.bf16 %v373, %v373
        %v469 = vpack.c.bf16 %v381, %v381
        %v470 = vpack.c.bf16 %v389, %v389
        %v471 = vpack.c.bf16 %v388, %v388
        %v472 = vpack.c.bf16 %v390, %v390
        %v473 = vpack.c.bf16 %v398, %v398
        %v474 = vpack.c.bf16 %v406, %v406
        %v475 = vpack.c.bf16 %v405, %v405
        %v476 = vpack.c.bf16 %v407, %v407
        %v477 = vpack.c.bf16 %v415, %v415
        %v478 = vpack.c.bf16 %v423, %v423
        %v479 = vpack.c.bf16 %v422, %v422
        %v480 = vpack.c.bf16 %v424, %v424
        %v481 = vld [vmem:[%s237] sm:$0xff]
        %v482 = vld [vmem:[%s237 + $0x8] sm:$0xff]
        %v483 = vld [vmem:[%s237 + $0x10] sm:$0xff]
        %v484 = vld [vmem:[%s237 + $0x18] sm:$0xff]
        %v485 = vld [vmem:[%s237 + $0x20] sm:$0xff]
        %v486 = vld [vmem:[%s237 + $0x28] sm:$0xff]
        %v487 = vld [vmem:[%s237 + $0x30] sm:$0xff]
        %v488 = vld [vmem:[%s237 + $0x38] sm:$0xff]
        %v489 = vld [vmem:[%s237 + $0x40] sm:$0xff]
        %v490 = vld [vmem:[%s237 + $0x48] sm:$0xff]
        %v491 = vld [vmem:[%s237 + $0x50] sm:$0xff]
        %v492 = vld [vmem:[%s237 + $0x58] sm:$0xff]
        %v493 = vld [vmem:[%s237 + $0x60] sm:$0xff]
        %v494 = vld [vmem:[%s237 + $0x68] sm:$0xff]
        %v495 = vld [vmem:[%s237 + $0x70] sm:$0xff]
        %v496 = vld [vmem:[%s237 + $0x78] sm:$0xff]
        %v497 = vld [vmem:[%s237 + $0x80] sm:$0xff]
        %v498 = vld [vmem:[%s237 + $0x88] sm:$0xff]
        %v499 = vld [vmem:[%s237 + $0x90] sm:$0xff]
        %v500 = vld [vmem:[%s237 + $0x98] sm:$0xff]
        %v501 = vld [vmem:[%s237 + $0xa0] sm:$0xff]
        %v502 = vld [vmem:[%s237 + $0xa8] sm:$0xff]
        %v503 = vld [vmem:[%s237 + $0xb0] sm:$0xff]
        %v504 = vld [vmem:[%s237 + $0xb8] sm:$0xff]
        %v505 = vld [vmem:[%s237 + $0xc0] sm:$0xff]
        %v506 = vld [vmem:[%s237 + $0xc8] sm:$0xff]
        %v507 = vld [vmem:[%s237 + $0xd0] sm:$0xff]
        %v508 = vld [vmem:[%s237 + $0xd8] sm:$0xff]
        %v509 = vld [vmem:[%s237 + $0xe0] sm:$0xff]
        %v510 = vld [vmem:[%s237 + $0xe8] sm:$0xff]
        %v511 = vld [vmem:[%s237 + $0xf0] sm:$0xff]
        %v512 = vld [vmem:[%s237 + $0xf8] sm:$0xff]
        %v513 = vld [vmem:[%s237 + $0x100] sm:$0xff]
        %v514 = vld [vmem:[%s237 + $0x108] sm:$0xff]
        %v515 = vld [vmem:[%s237 + $0x110] sm:$0xff]
        %v516 = vld [vmem:[%s237 + $0x118] sm:$0xff]
        %v517 = vld [vmem:[%s237 + $0x120] sm:$0xff]
        %v518 = vld [vmem:[%s237 + $0x128] sm:$0xff]
        %v519 = vld [vmem:[%s237 + $0x130] sm:$0xff]
        %v520 = vld [vmem:[%s237 + $0x138] sm:$0xff]
        %v521 = vld [vmem:[%s237 + $0x140] sm:$0xff]
        %v522 = vld [vmem:[%s237 + $0x148] sm:$0xff]
        %v523 = vld [vmem:[%s237 + $0x150] sm:$0xff]
        %v524 = vld [vmem:[%s237 + $0x158] sm:$0xff]
        %v525 = vld [vmem:[%s237 + $0x160] sm:$0xff]
        %v526 = vld [vmem:[%s237 + $0x168] sm:$0xff]
        %v527 = vld [vmem:[%s237 + $0x170] sm:$0xff]
        %v528 = vld [vmem:[%s237 + $0x178] sm:$0xff]
        %v529 = vld [vmem:[%s237 + $0x180] sm:$0xff]
        %v530 = vld [vmem:[%s237 + $0x188] sm:$0xff]
        %v531 = vld [vmem:[%s237 + $0x190] sm:$0xff]
        %v532 = vld [vmem:[%s237 + $0x198] sm:$0xff]
        %v533 = vld [vmem:[%s237 + $0x1a0] sm:$0xff]
        %v534 = vld [vmem:[%s237 + $0x1a8] sm:$0xff]
        %v535 = vld [vmem:[%s237 + $0x1b0] sm:$0xff]
        %v536 = vld [vmem:[%s237 + $0x1b8] sm:$0xff]
        %v537 = vld [vmem:[%s237 + $0x1c0] sm:$0xff]
        %v538 = vld [vmem:[%s237 + $0x1c8] sm:$0xff]
        %v539 = vld [vmem:[%s237 + $0x1d0] sm:$0xff]
        %v540 = vld [vmem:[%s237 + $0x1d8] sm:$0xff]
        %v541 = vld [vmem:[%s237 + $0x1e0] sm:$0xff]
        %v542 = vld [vmem:[%s237 + $0x1e8] sm:$0xff]
        %v543 = vld [vmem:[%s237 + $0x1f0] sm:$0xff]
        %v544 = vld [vmem:[%s237 + $0x1f8] sm:$0xff]
        %v545 = vld [vmem:[%s237 + $0x200] sm:$0xff]
        %v546 = vld [vmem:[%s237 + $0x208] sm:$0xff]
        %v547 = vld [vmem:[%s237 + $0x210] sm:$0xff]
        %v548 = vld [vmem:[%s237 + $0x218] sm:$0xff]
        %v549 = vld [vmem:[%s237 + $0x220] sm:$0xff]
        %v550 = vld [vmem:[%s237 + $0x228] sm:$0xff]
        %v551 = vld [vmem:[%s237 + $0x230] sm:$0xff]
        %v552 = vld [vmem:[%s237 + $0x238] sm:$0xff]
        %v553 = vld [vmem:[%s237 + $0x240] sm:$0xff]
        %v554 = vld [vmem:[%s237 + $0x248] sm:$0xff]
        %v555 = vld [vmem:[%s237 + $0x250] sm:$0xff]
        %v556 = vld [vmem:[%s237 + $0x258] sm:$0xff]
        %v557 = vld [vmem:[%s237 + $0x260] sm:$0xff]
        %v558 = vld [vmem:[%s237 + $0x268] sm:$0xff]
        %v559 = vld [vmem:[%s237 + $0x270] sm:$0xff]
        %v560 = vld [vmem:[%s237 + $0x278] sm:$0xff]
        %v561 = vld [vmem:[%s237 + $0x280] sm:$0xff]
        %v562 = vld [vmem:[%s237 + $0x288] sm:$0xff]
        %v563 = vld [vmem:[%s237 + $0x290] sm:$0xff]
        %v564 = vld [vmem:[%s237 + $0x298] sm:$0xff]
        %v565 = vld [vmem:[%s237 + $0x2a0] sm:$0xff]
        %v566 = vld [vmem:[%s237 + $0x2a8] sm:$0xff]
        %v567 = vld [vmem:[%s237 + $0x2b0] sm:$0xff]
        %v568 = vld [vmem:[%s237 + $0x2b8] sm:$0xff]
        %v569 = vld [vmem:[%s237 + $0x2c0] sm:$0xff]
        %v570 = vld [vmem:[%s237 + $0x2c8] sm:$0xff]
        %v571 = vld [vmem:[%s237 + $0x2d0] sm:$0xff]
        %v572 = vld [vmem:[%s237 + $0x2d8] sm:$0xff]
        %v573 = vld [vmem:[%s237 + $0x2e0] sm:$0xff]
        %v574 = vld [vmem:[%s237 + $0x2e8] sm:$0xff]
        %v575 = vld [vmem:[%s237 + $0x2f0] sm:$0xff]
        %v576 = vld [vmem:[%s237 + $0x2f8] sm:$0xff]
        %v577 = vld [vmem:[%s237 + $0x300] sm:$0xff]
        %v578 = vld [vmem:[%s237 + $0x308] sm:$0xff]
        %v579 = vld [vmem:[%s237 + $0x310] sm:$0xff]
        %v580 = vld [vmem:[%s237 + $0x318] sm:$0xff]
        %v581 = vld [vmem:[%s237 + $0x320] sm:$0xff]
        %v582 = vld [vmem:[%s237 + $0x328] sm:$0xff]
        %v583 = vld [vmem:[%s237 + $0x330] sm:$0xff]
        %v584 = vld [vmem:[%s237 + $0x338] sm:$0xff]
        %v585 = vld [vmem:[%s237 + $0x340] sm:$0xff]
        %v586 = vld [vmem:[%s237 + $0x348] sm:$0xff]
        %v587 = vld [vmem:[%s237 + $0x350] sm:$0xff]
        %v588 = vld [vmem:[%s237 + $0x358] sm:$0xff]
        %v589 = vld [vmem:[%s237 + $0x360] sm:$0xff]
        %v590 = vld [vmem:[%s237 + $0x368] sm:$0xff]
        %v591 = vld [vmem:[%s237 + $0x370] sm:$0xff]
        %v592 = vld [vmem:[%s237 + $0x378] sm:$0xff]
        %v593 = vld [vmem:[%s237 + $0x380] sm:$0xff]
        %v594 = vld [vmem:[%s237 + $0x388] sm:$0xff]
        %v595 = vld [vmem:[%s237 + $0x390] sm:$0xff]
        %v596 = vld [vmem:[%s237 + $0x398] sm:$0xff]
        %v597 = vld [vmem:[%s237 + $0x3a0] sm:$0xff]
        %v598 = vld [vmem:[%s237 + $0x3a8] sm:$0xff]
        %v599 = vld [vmem:[%s237 + $0x3b0] sm:$0xff]
        %v600 = vld [vmem:[%s237 + $0x3b8] sm:$0xff]
        %v601 = vld [vmem:[%s237 + $0x3c0] sm:$0xff]
        %v602 = vld [vmem:[%s237 + $0x3c8] sm:$0xff]
        %v603 = vld [vmem:[%s237 + $0x3d0] sm:$0xff]
        %v604 = vld [vmem:[%s237 + $0x3d8] sm:$0xff]
        %v605 = vld [vmem:[%s237 + $0x3e0] sm:$0xff]
        %v606 = vld [vmem:[%s237 + $0x3e8] sm:$0xff]
        %v607 = vld [vmem:[%s237 + $0x3f0] sm:$0xff]
        %v608 = vld [vmem:[%s237 + $0x3f8] sm:$0xff]
        %v609 = vld [vmem:[%s237 + $0x400] sm:$0xff]
        %v610 = vld [vmem:[%s237 + $0x408] sm:$0xff]
        %v611 = vld [vmem:[%s237 + $0x410] sm:$0xff]
        %v612 = vld [vmem:[%s237 + $0x418] sm:$0xff]
        %v613 = vld [vmem:[%s237 + $0x420] sm:$0xff]
        %v614 = vld [vmem:[%s237 + $0x428] sm:$0xff]
        %v615 = vld [vmem:[%s237 + $0x430] sm:$0xff]
        %v616 = vld [vmem:[%s237 + $0x438] sm:$0xff]
        %v617 = vld [vmem:[%s237 + $0x440] sm:$0xff]
        %v618 = vld [vmem:[%s237 + $0x448] sm:$0xff]
        %v619 = vld [vmem:[%s237 + $0x450] sm:$0xff]
        %v620 = vld [vmem:[%s237 + $0x458] sm:$0xff]
        %v621 = vld [vmem:[%s237 + $0x460] sm:$0xff]
        %v622 = vld [vmem:[%s237 + $0x468] sm:$0xff]
        %v623 = vld [vmem:[%s237 + $0x470] sm:$0xff]
        %v624 = vld [vmem:[%s237 + $0x478] sm:$0xff]
        %v625 = vld [vmem:[%s237 + $0x480] sm:$0xff]
        %v626 = vld [vmem:[%s237 + $0x488] sm:$0xff]
        %v627 = vld [vmem:[%s237 + $0x490] sm:$0xff]
        %v628 = vld [vmem:[%s237 + $0x498] sm:$0xff]
        %v629 = vld [vmem:[%s237 + $0x4a0] sm:$0xff]
        %v630 = vld [vmem:[%s237 + $0x4a8] sm:$0xff]
        %v631 = vld [vmem:[%s237 + $0x4b0] sm:$0xff]
        %v632 = vld [vmem:[%s237 + $0x4b8] sm:$0xff]
        %v633 = vld [vmem:[%s237 + $0x4c0] sm:$0xff]
        %v634 = vld [vmem:[%s237 + $0x4c8] sm:$0xff]
        %v635 = vld [vmem:[%s237 + $0x4d0] sm:$0xff]
        %v636 = vld [vmem:[%s237 + $0x4d8] sm:$0xff]
        %v637 = vld [vmem:[%s237 + $0x4e0] sm:$0xff]
        %v638 = vld [vmem:[%s237 + $0x4e8] sm:$0xff]
        %v639 = vld [vmem:[%s237 + $0x4f0] sm:$0xff]
        %v640 = vld [vmem:[%s237 + $0x4f8] sm:$0xff]
        %v641 = vld [vmem:[%s237 + $0x500] sm:$0xff]
        %v642 = vld [vmem:[%s237 + $0x508] sm:$0xff]
        %v643 = vld [vmem:[%s237 + $0x510] sm:$0xff]
        %v644 = vld [vmem:[%s237 + $0x518] sm:$0xff]
        %v645 = vld [vmem:[%s237 + $0x520] sm:$0xff]
        %v646 = vld [vmem:[%s237 + $0x528] sm:$0xff]
        %v647 = vld [vmem:[%s237 + $0x530] sm:$0xff]
        %v648 = vld [vmem:[%s237 + $0x538] sm:$0xff]
        %v649 = vld [vmem:[%s237 + $0x540] sm:$0xff]
        %v650 = vld [vmem:[%s237 + $0x548] sm:$0xff]
        %v651 = vld [vmem:[%s237 + $0x550] sm:$0xff]
        %v652 = vld [vmem:[%s237 + $0x558] sm:$0xff]
        %v653 = vld [vmem:[%s237 + $0x560] sm:$0xff]
        %v654 = vld [vmem:[%s237 + $0x568] sm:$0xff]
        %v655 = vld [vmem:[%s237 + $0x570] sm:$0xff]
        %v656 = vld [vmem:[%s237 + $0x578] sm:$0xff]
        %v657 = vld [vmem:[%s237 + $0x580] sm:$0xff]
        %v658 = vld [vmem:[%s237 + $0x588] sm:$0xff]
        %v659 = vld [vmem:[%s237 + $0x590] sm:$0xff]
        %v660 = vld [vmem:[%s237 + $0x598] sm:$0xff]
        %v661 = vld [vmem:[%s237 + $0x5a0] sm:$0xff]
        %v662 = vld [vmem:[%s237 + $0x5a8] sm:$0xff]
        %v663 = vld [vmem:[%s237 + $0x5b0] sm:$0xff]
        %v664 = vld [vmem:[%s237 + $0x5b8] sm:$0xff]
        %v665 = vld [vmem:[%s237 + $0x5c0] sm:$0xff]
        %v666 = vld [vmem:[%s237 + $0x5c8] sm:$0xff]
        %v667 = vld [vmem:[%s237 + $0x5d0] sm:$0xff]
        %v668 = vld [vmem:[%s237 + $0x5d8] sm:$0xff]
        %v669 = vld [vmem:[%s237 + $0x5e0] sm:$0xff]
        %v670 = vld [vmem:[%s237 + $0x5e8] sm:$0xff]
        %v671 = vld [vmem:[%s237 + $0x5f0] sm:$0xff]
        %v672 = vld [vmem:[%s237 + $0x5f8] sm:$0xff]
        %v673 = vld [vmem:[%s237 + $0x600] sm:$0xff]
        %v674 = vld [vmem:[%s237 + $0x608] sm:$0xff]
        %v675 = vld [vmem:[%s237 + $0x610] sm:$0xff]
        %v676 = vld [vmem:[%s237 + $0x618] sm:$0xff]
        %v677 = vld [vmem:[%s237 + $0x620] sm:$0xff]
        %v678 = vld [vmem:[%s237 + $0x628] sm:$0xff]
        %v679 = vld [vmem:[%s237 + $0x630] sm:$0xff]
        %v680 = vld [vmem:[%s237 + $0x638] sm:$0xff]
        %v681 = vld [vmem:[%s237 + $0x640] sm:$0xff]
        %v682 = vld [vmem:[%s237 + $0x648] sm:$0xff]
        %v683 = vld [vmem:[%s237 + $0x650] sm:$0xff]
        %v684 = vld [vmem:[%s237 + $0x658] sm:$0xff]
        %v685 = vld [vmem:[%s237 + $0x660] sm:$0xff]
        %v686 = vld [vmem:[%s237 + $0x668] sm:$0xff]
        %v687 = vld [vmem:[%s237 + $0x670] sm:$0xff]
        %v688 = vld [vmem:[%s237 + $0x678] sm:$0xff]
        %v689 = vld [vmem:[%s237 + $0x680] sm:$0xff]
        %v690 = vld [vmem:[%s237 + $0x688] sm:$0xff]
        %v691 = vld [vmem:[%s237 + $0x690] sm:$0xff]
        %v692 = vld [vmem:[%s237 + $0x698] sm:$0xff]
        %v693 = vld [vmem:[%s237 + $0x6a0] sm:$0xff]
        %v694 = vld [vmem:[%s237 + $0x6a8] sm:$0xff]
        %v695 = vld [vmem:[%s237 + $0x6b0] sm:$0xff]
        %v696 = vld [vmem:[%s237 + $0x6b8] sm:$0xff]
        %v697 = vld [vmem:[%s237 + $0x6c0] sm:$0xff]
        %v698 = vld [vmem:[%s237 + $0x6c8] sm:$0xff]
        %v699 = vld [vmem:[%s237 + $0x6d0] sm:$0xff]
        %v700 = vld [vmem:[%s237 + $0x6d8] sm:$0xff]
        %v701 = vld [vmem:[%s237 + $0x6e0] sm:$0xff]
        %v702 = vld [vmem:[%s237 + $0x6e8] sm:$0xff]
        %v703 = vld [vmem:[%s237 + $0x6f0] sm:$0xff]
        %v704 = vld [vmem:[%s237 + $0x6f8] sm:$0xff]
        %v705 = vld [vmem:[%s237 + $0x700] sm:$0xff]
        %v706 = vld [vmem:[%s237 + $0x708] sm:$0xff]
        %v707 = vld [vmem:[%s237 + $0x710] sm:$0xff]
        %v708 = vld [vmem:[%s237 + $0x718] sm:$0xff]
        %v709 = vld [vmem:[%s237 + $0x720] sm:$0xff]
        %v710 = vld [vmem:[%s237 + $0x728] sm:$0xff]
        %v711 = vld [vmem:[%s237 + $0x730] sm:$0xff]
        %v712 = vld [vmem:[%s237 + $0x738] sm:$0xff]
        %v713 = vld [vmem:[%s237 + $0x740] sm:$0xff]
        %v714 = vld [vmem:[%s237 + $0x748] sm:$0xff]
        %v715 = vld [vmem:[%s237 + $0x750] sm:$0xff]
        %v716 = vld [vmem:[%s237 + $0x758] sm:$0xff]
        %v717 = vld [vmem:[%s237 + $0x760] sm:$0xff]
        %v718 = vld [vmem:[%s237 + $0x768] sm:$0xff]
        %v719 = vld [vmem:[%s237 + $0x770] sm:$0xff]
        %v720 = vld [vmem:[%s237 + $0x778] sm:$0xff]
        %v721 = vld [vmem:[%s237 + $0x780] sm:$0xff]
        %v722 = vld [vmem:[%s237 + $0x788] sm:$0xff]
        %v723 = vld [vmem:[%s237 + $0x790] sm:$0xff]
        %v724 = vld [vmem:[%s237 + $0x798] sm:$0xff]
        %v725 = vld [vmem:[%s237 + $0x7a0] sm:$0xff]
        %v726 = vld [vmem:[%s237 + $0x7a8] sm:$0xff]
        %v727 = vld [vmem:[%s237 + $0x7b0] sm:$0xff]
        %v728 = vld [vmem:[%s237 + $0x7b8] sm:$0xff]
        %v729 = vld [vmem:[%s237 + $0x7c0] sm:$0xff]
        %v730 = vld [vmem:[%s237 + $0x7c8] sm:$0xff]
        %v731 = vld [vmem:[%s237 + $0x7d0] sm:$0xff]
        %v732 = vld [vmem:[%s237 + $0x7d8] sm:$0xff]
        %v733 = vld [vmem:[%s237 + $0x7e0] sm:$0xff]
        %v734 = vld [vmem:[%s237 + $0x7e8] sm:$0xff]
        %v735 = vld [vmem:[%s237 + $0x7f0] sm:$0xff]
        %v736 = vld [vmem:[%s237 + $0x7f8] sm:$0xff]
        %v737 = vld [vmem:[%s237 + $0x800] sm:$0xff]
        %v738 = vld [vmem:[%s237 + $0x808] sm:$0xff]
        %v739 = vld [vmem:[%s237 + $0x810] sm:$0xff]
        %v740 = vld [vmem:[%s237 + $0x818] sm:$0xff]
        %v741 = vld [vmem:[%s237 + $0x820] sm:$0xff]
        %v742 = vld [vmem:[%s237 + $0x828] sm:$0xff]
        %v743 = vld [vmem:[%s237 + $0x830] sm:$0xff]
        %v744 = vld [vmem:[%s237 + $0x838] sm:$0xff]
        %v745 = vld [vmem:[%s237 + $0x840] sm:$0xff]
        %v746 = vld [vmem:[%s237 + $0x848] sm:$0xff]
        %v747 = vld [vmem:[%s237 + $0x850] sm:$0xff]
        %v748 = vld [vmem:[%s237 + $0x858] sm:$0xff]
        %v749 = vld [vmem:[%s237 + $0x860] sm:$0xff]
        %v750 = vld [vmem:[%s237 + $0x868] sm:$0xff]
        %v751 = vld [vmem:[%s237 + $0x870] sm:$0xff]
        %v752 = vld [vmem:[%s237 + $0x878] sm:$0xff]
        %v753 = vld [vmem:[%s237 + $0x880] sm:$0xff]
        %v754 = vld [vmem:[%s237 + $0x888] sm:$0xff]
        %v755 = vld [vmem:[%s237 + $0x890] sm:$0xff]
        %v756 = vld [vmem:[%s237 + $0x898] sm:$0xff]
        %v757 = vld [vmem:[%s237 + $0x8a0] sm:$0xff]
        %v758 = vld [vmem:[%s237 + $0x8a8] sm:$0xff]
        %v759 = vld [vmem:[%s237 + $0x8b0] sm:$0xff]
        %v760 = vld [vmem:[%s237 + $0x8b8] sm:$0xff]
        %v761 = vld [vmem:[%s237 + $0x8c0] sm:$0xff]
        %v762 = vld [vmem:[%s237 + $0x8c8] sm:$0xff]
        %v763 = vld [vmem:[%s237 + $0x8d0] sm:$0xff]
        %v764 = vld [vmem:[%s237 + $0x8d8] sm:$0xff]
        %v765 = vld [vmem:[%s237 + $0x8e0] sm:$0xff]
        %v766 = vld [vmem:[%s237 + $0x8e8] sm:$0xff]
        %v767 = vld [vmem:[%s237 + $0x8f0] sm:$0xff]
        %v768 = vld [vmem:[%s237 + $0x8f8] sm:$0xff]
        %v769 = vld [vmem:[%s237 + $0x900] sm:$0xff]
        %v770 = vld [vmem:[%s237 + $0x908] sm:$0xff]
        %v771 = vld [vmem:[%s237 + $0x910] sm:$0xff]
        %v772 = vld [vmem:[%s237 + $0x918] sm:$0xff]
        %v773 = vld [vmem:[%s237 + $0x920] sm:$0xff]
        %v774 = vld [vmem:[%s237 + $0x928] sm:$0xff]
        %v775 = vld [vmem:[%s237 + $0x930] sm:$0xff]
        %v776 = vld [vmem:[%s237 + $0x938] sm:$0xff]
        %v777 = vld [vmem:[%s237 + $0x940] sm:$0xff]
        %v778 = vld [vmem:[%s237 + $0x948] sm:$0xff]
        %v779 = vld [vmem:[%s237 + $0x950] sm:$0xff]
        %v780 = vld [vmem:[%s237 + $0x958] sm:$0xff]
        %v781 = vld [vmem:[%s237 + $0x960] sm:$0xff]
        %v782 = vld [vmem:[%s237 + $0x968] sm:$0xff]
        %v783 = vld [vmem:[%s237 + $0x970] sm:$0xff]
        %v784 = vld [vmem:[%s237 + $0x978] sm:$0xff]
        %v785 = vld [vmem:[%s237 + $0x980] sm:$0xff]
        %v786 = vld [vmem:[%s237 + $0x988] sm:$0xff]
        %v787 = vld [vmem:[%s237 + $0x990] sm:$0xff]
        %v788 = vld [vmem:[%s237 + $0x998] sm:$0xff]
        %v789 = vld [vmem:[%s237 + $0x9a0] sm:$0xff]
        %v790 = vld [vmem:[%s237 + $0x9a8] sm:$0xff]
        %v791 = vld [vmem:[%s237 + $0x9b0] sm:$0xff]
        %v792 = vld [vmem:[%s237 + $0x9b8] sm:$0xff]
        %v793 = vld [vmem:[%s237 + $0x9c0] sm:$0xff]
        %v794 = vld [vmem:[%s237 + $0x9c8] sm:$0xff]
        %v795 = vld [vmem:[%s237 + $0x9d0] sm:$0xff]
        %v796 = vld [vmem:[%s237 + $0x9d8] sm:$0xff]
        %v797 = vld [vmem:[%s237 + $0x9e0] sm:$0xff]
        %v798 = vld [vmem:[%s237 + $0x9e8] sm:$0xff]
        %v799 = vld [vmem:[%s237 + $0x9f0] sm:$0xff]
        %v800 = vld [vmem:[%s237 + $0x9f8] sm:$0xff]
        %v801 = vld [vmem:[%s237 + $0xa00] sm:$0xff]
        %v802 = vld [vmem:[%s237 + $0xa08] sm:$0xff]
        %v803 = vld [vmem:[%s237 + $0xa10] sm:$0xff]
        %v804 = vld [vmem:[%s237 + $0xa18] sm:$0xff]
        %v805 = vld [vmem:[%s237 + $0xa20] sm:$0xff]
        %v806 = vld [vmem:[%s237 + $0xa28] sm:$0xff]
        %v807 = vld [vmem:[%s237 + $0xa30] sm:$0xff]
        %v808 = vld [vmem:[%s237 + $0xa38] sm:$0xff]
        %v809 = vld [vmem:[%s237 + $0xa40] sm:$0xff]
        %v810 = vld [vmem:[%s237 + $0xa48] sm:$0xff]
        %v811 = vld [vmem:[%s237 + $0xa50] sm:$0xff]
        %v812 = vld [vmem:[%s237 + $0xa58] sm:$0xff]
        %v813 = vld [vmem:[%s237 + $0xa60] sm:$0xff]
        %v814 = vld [vmem:[%s237 + $0xa68] sm:$0xff]
        %v815 = vld [vmem:[%s237 + $0xa70] sm:$0xff]
        %v816 = vld [vmem:[%s237 + $0xa78] sm:$0xff]
        %v817 = vld [vmem:[%s237 + $0xa80] sm:$0xff]
        %v818 = vld [vmem:[%s237 + $0xa88] sm:$0xff]
        %v819 = vld [vmem:[%s237 + $0xa90] sm:$0xff]
        %v820 = vld [vmem:[%s237 + $0xa98] sm:$0xff]
        %v821 = vld [vmem:[%s237 + $0xaa0] sm:$0xff]
        %v822 = vld [vmem:[%s237 + $0xaa8] sm:$0xff]
        %v823 = vld [vmem:[%s237 + $0xab0] sm:$0xff]
        %v824 = vld [vmem:[%s237 + $0xab8] sm:$0xff]
        %v825 = vld [vmem:[%s237 + $0xac0] sm:$0xff]
        %v826 = vld [vmem:[%s237 + $0xac8] sm:$0xff]
        %v827 = vld [vmem:[%s237 + $0xad0] sm:$0xff]
        %v828 = vld [vmem:[%s237 + $0xad8] sm:$0xff]
        %v829 = vld [vmem:[%s237 + $0xae0] sm:$0xff]
        %v830 = vld [vmem:[%s237 + $0xae8] sm:$0xff]
        %v831 = vld [vmem:[%s237 + $0xaf0] sm:$0xff]
        %v832 = vld [vmem:[%s237 + $0xaf8] sm:$0xff]
        %v833 = vld [vmem:[%s237 + $0xb00] sm:$0xff]
        %v834 = vld [vmem:[%s237 + $0xb08] sm:$0xff]
        %v835 = vld [vmem:[%s237 + $0xb10] sm:$0xff]
        %v836 = vld [vmem:[%s237 + $0xb18] sm:$0xff]
        %v837 = vld [vmem:[%s237 + $0xb20] sm:$0xff]
        %v838 = vld [vmem:[%s237 + $0xb28] sm:$0xff]
        %v839 = vld [vmem:[%s237 + $0xb30] sm:$0xff]
        %v840 = vld [vmem:[%s237 + $0xb38] sm:$0xff]
        %v841 = vld [vmem:[%s237 + $0xb40] sm:$0xff]
        %v842 = vld [vmem:[%s237 + $0xb48] sm:$0xff]
        %v843 = vld [vmem:[%s237 + $0xb50] sm:$0xff]
        %v844 = vld [vmem:[%s237 + $0xb58] sm:$0xff]
        %v845 = vld [vmem:[%s237 + $0xb60] sm:$0xff]
        %v846 = vld [vmem:[%s237 + $0xb68] sm:$0xff]
        %v847 = vld [vmem:[%s237 + $0xb70] sm:$0xff]
        %v848 = vld [vmem:[%s237 + $0xb78] sm:$0xff]
        %v849 = vld [vmem:[%s237 + $0xb80] sm:$0xff]
        %v850 = vld [vmem:[%s237 + $0xb88] sm:$0xff]
        %v851 = vld [vmem:[%s237 + $0xb90] sm:$0xff]
        %v852 = vld [vmem:[%s237 + $0xb98] sm:$0xff]
        %v853 = vld [vmem:[%s237 + $0xba0] sm:$0xff]
        %v854 = vld [vmem:[%s237 + $0xba8] sm:$0xff]
        %v855 = vld [vmem:[%s237 + $0xbb0] sm:$0xff]
        %v856 = vld [vmem:[%s237 + $0xbb8] sm:$0xff]
        %v857 = vld [vmem:[%s237 + $0xbc0] sm:$0xff]
        %v858 = vld [vmem:[%s237 + $0xbc8] sm:$0xff]
        %v859 = vld [vmem:[%s237 + $0xbd0] sm:$0xff]
        %v860 = vld [vmem:[%s237 + $0xbd8] sm:$0xff]
        %v861 = vld [vmem:[%s237 + $0xbe0] sm:$0xff]
        %v862 = vld [vmem:[%s237 + $0xbe8] sm:$0xff]
        %v863 = vld [vmem:[%s237 + $0xbf0] sm:$0xff]
        %v864 = vld [vmem:[%s237 + $0xbf8] sm:$0xff]
        %v865 = vld [vmem:[%s237 + $0xc00] sm:$0xff]
        %v866 = vld [vmem:[%s237 + $0xc08] sm:$0xff]
        %v867 = vld [vmem:[%s237 + $0xc10] sm:$0xff]
        %v868 = vld [vmem:[%s237 + $0xc18] sm:$0xff]
        %v869 = vld [vmem:[%s237 + $0xc20] sm:$0xff]
        %v870 = vld [vmem:[%s237 + $0xc28] sm:$0xff]
        %v871 = vld [vmem:[%s237 + $0xc30] sm:$0xff]
        %v872 = vld [vmem:[%s237 + $0xc38] sm:$0xff]
        %v873 = vld [vmem:[%s237 + $0xc40] sm:$0xff]
        %v874 = vld [vmem:[%s237 + $0xc48] sm:$0xff]
        %v875 = vld [vmem:[%s237 + $0xc50] sm:$0xff]
        %v876 = vld [vmem:[%s237 + $0xc58] sm:$0xff]
        %v877 = vld [vmem:[%s237 + $0xc60] sm:$0xff]
        %v878 = vld [vmem:[%s237 + $0xc68] sm:$0xff]
        %v879 = vld [vmem:[%s237 + $0xc70] sm:$0xff]
        %v880 = vld [vmem:[%s237 + $0xc78] sm:$0xff]
        %v881 = vld [vmem:[%s237 + $0xc80] sm:$0xff]
        %v882 = vld [vmem:[%s237 + $0xc88] sm:$0xff]
        %v883 = vld [vmem:[%s237 + $0xc90] sm:$0xff]
        %v884 = vld [vmem:[%s237 + $0xc98] sm:$0xff]
        %v885 = vld [vmem:[%s237 + $0xca0] sm:$0xff]
        %v886 = vld [vmem:[%s237 + $0xca8] sm:$0xff]
        %v887 = vld [vmem:[%s237 + $0xcb0] sm:$0xff]
        %v888 = vld [vmem:[%s237 + $0xcb8] sm:$0xff]
        %v889 = vld [vmem:[%s237 + $0xcc0] sm:$0xff]
        %v890 = vld [vmem:[%s237 + $0xcc8] sm:$0xff]
        %v891 = vld [vmem:[%s237 + $0xcd0] sm:$0xff]
        %v892 = vld [vmem:[%s237 + $0xcd8] sm:$0xff]
        %v893 = vld [vmem:[%s237 + $0xce0] sm:$0xff]
        %v894 = vld [vmem:[%s237 + $0xce8] sm:$0xff]
        %v895 = vld [vmem:[%s237 + $0xcf0] sm:$0xff]
        %v896 = vld [vmem:[%s237 + $0xcf8] sm:$0xff]
        %v897 = vld [vmem:[%s237 + $0xd00] sm:$0xff]
        %v898 = vld [vmem:[%s237 + $0xd08] sm:$0xff]
        %v899 = vld [vmem:[%s237 + $0xd10] sm:$0xff]
        %v900 = vld [vmem:[%s237 + $0xd18] sm:$0xff]
        %v901 = vld [vmem:[%s237 + $0xd20] sm:$0xff]
        %v902 = vld [vmem:[%s237 + $0xd28] sm:$0xff]
        %v903 = vld [vmem:[%s237 + $0xd30] sm:$0xff]
        %v904 = vld [vmem:[%s237 + $0xd38] sm:$0xff]
        %v905 = vld [vmem:[%s237 + $0xd40] sm:$0xff]
        %v906 = vld [vmem:[%s237 + $0xd48] sm:$0xff]
        %v907 = vld [vmem:[%s237 + $0xd50] sm:$0xff]
        %v908 = vld [vmem:[%s237 + $0xd58] sm:$0xff]
        %v909 = vld [vmem:[%s237 + $0xd60] sm:$0xff]
        %v910 = vld [vmem:[%s237 + $0xd68] sm:$0xff]
        %v911 = vld [vmem:[%s237 + $0xd70] sm:$0xff]
        %v912 = vld [vmem:[%s237 + $0xd78] sm:$0xff]
        %v913 = vld [vmem:[%s237 + $0xd80] sm:$0xff]
        %v914 = vld [vmem:[%s237 + $0xd88] sm:$0xff]
        %v915 = vld [vmem:[%s237 + $0xd90] sm:$0xff]
        %v916 = vld [vmem:[%s237 + $0xd98] sm:$0xff]
        %v917 = vld [vmem:[%s237 + $0xda0] sm:$0xff]
        %v918 = vld [vmem:[%s237 + $0xda8] sm:$0xff]
        %v919 = vld [vmem:[%s237 + $0xdb0] sm:$0xff]
        %v920 = vld [vmem:[%s237 + $0xdb8] sm:$0xff]
        %v921 = vld [vmem:[%s237 + $0xdc0] sm:$0xff]
        %v922 = vld [vmem:[%s237 + $0xdc8] sm:$0xff]
        %v923 = vld [vmem:[%s237 + $0xdd0] sm:$0xff]
        %v924 = vld [vmem:[%s237 + $0xdd8] sm:$0xff]
        %v925 = vld [vmem:[%s237 + $0xde0] sm:$0xff]
        %v926 = vld [vmem:[%s237 + $0xde8] sm:$0xff]
        %v927 = vld [vmem:[%s237 + $0xdf0] sm:$0xff]
        %v928 = vld [vmem:[%s237 + $0xdf8] sm:$0xff]
        %v929 = vld [vmem:[%s237 + $0xe00] sm:$0xff]
        %v930 = vld [vmem:[%s237 + $0xe08] sm:$0xff]
        %v931 = vld [vmem:[%s237 + $0xe10] sm:$0xff]
        %v932 = vld [vmem:[%s237 + $0xe18] sm:$0xff]
        %v933 = vld [vmem:[%s237 + $0xe20] sm:$0xff]
        %v934 = vld [vmem:[%s237 + $0xe28] sm:$0xff]
        %v935 = vld [vmem:[%s237 + $0xe30] sm:$0xff]
        %v936 = vld [vmem:[%s237 + $0xe38] sm:$0xff]
        %v937 = vld [vmem:[%s237 + $0xe40] sm:$0xff]
        %v938 = vld [vmem:[%s237 + $0xe48] sm:$0xff]
        %v939 = vld [vmem:[%s237 + $0xe50] sm:$0xff]
        %v940 = vld [vmem:[%s237 + $0xe58] sm:$0xff]
        %v941 = vld [vmem:[%s237 + $0xe60] sm:$0xff]
        %v942 = vld [vmem:[%s237 + $0xe68] sm:$0xff]
        %v943 = vld [vmem:[%s237 + $0xe70] sm:$0xff]
        %v944 = vld [vmem:[%s237 + $0xe78] sm:$0xff]
        %v945 = vld [vmem:[%s237 + $0xe80] sm:$0xff]
        %v946 = vld [vmem:[%s237 + $0xe88] sm:$0xff]
        %v947 = vld [vmem:[%s237 + $0xe90] sm:$0xff]
        %v948 = vld [vmem:[%s237 + $0xe98] sm:$0xff]
        %v949 = vld [vmem:[%s237 + $0xea0] sm:$0xff]
        %v950 = vld [vmem:[%s237 + $0xea8] sm:$0xff]
        %v951 = vld [vmem:[%s237 + $0xeb0] sm:$0xff]
        %v952 = vld [vmem:[%s237 + $0xeb8] sm:$0xff]
        %v953 = vld [vmem:[%s237 + $0xec0] sm:$0xff]
        %v954 = vld [vmem:[%s237 + $0xec8] sm:$0xff]
        %v955 = vld [vmem:[%s237 + $0xed0] sm:$0xff]
        %v956 = vld [vmem:[%s237 + $0xed8] sm:$0xff]
        %v957 = vld [vmem:[%s237 + $0xee0] sm:$0xff]
        %v958 = vld [vmem:[%s237 + $0xee8] sm:$0xff]
        %v959 = vld [vmem:[%s237 + $0xef0] sm:$0xff]
        %v960 = vld [vmem:[%s237 + $0xef8] sm:$0xff]
        %v961 = vld [vmem:[%s237 + $0xf00] sm:$0xff]
        %v962 = vld [vmem:[%s237 + $0xf08] sm:$0xff]
        %v963 = vld [vmem:[%s237 + $0xf10] sm:$0xff]
        %v964 = vld [vmem:[%s237 + $0xf18] sm:$0xff]
        %v965 = vld [vmem:[%s237 + $0xf20] sm:$0xff]
        %v966 = vld [vmem:[%s237 + $0xf28] sm:$0xff]
        %v967 = vld [vmem:[%s237 + $0xf30] sm:$0xff]
        %v968 = vld [vmem:[%s237 + $0xf38] sm:$0xff]
        %v969 = vld [vmem:[%s237 + $0xf40] sm:$0xff]
        %v970 = vld [vmem:[%s237 + $0xf48] sm:$0xff]
        %v971 = vld [vmem:[%s237 + $0xf50] sm:$0xff]
        %v972 = vld [vmem:[%s237 + $0xf58] sm:$0xff]
        %v973 = vld [vmem:[%s237 + $0xf60] sm:$0xff]
        %v974 = vld [vmem:[%s237 + $0xf68] sm:$0xff]
        %v975 = vld [vmem:[%s237 + $0xf70] sm:$0xff]
        %v976 = vld [vmem:[%s237 + $0xf78] sm:$0xff]
        %v977 = vld [vmem:[%s237 + $0xf80] sm:$0xff]
        %v978 = vld [vmem:[%s237 + $0xf88] sm:$0xff]
        %v979 = vld [vmem:[%s237 + $0xf90] sm:$0xff]
        %v980 = vld [vmem:[%s237 + $0xf98] sm:$0xff]
        %v981 = vld [vmem:[%s237 + $0xfa0] sm:$0xff]
        %v982 = vld [vmem:[%s237 + $0xfa8] sm:$0xff]
        %v983 = vld [vmem:[%s237 + $0xfb0] sm:$0xff]
        %v984 = vld [vmem:[%s237 + $0xfb8] sm:$0xff]
        %v985 = vld [vmem:[%s237 + $0xfc0] sm:$0xff]
        %v986 = vld [vmem:[%s237 + $0xfc8] sm:$0xff]
        %v987 = vld [vmem:[%s237 + $0xfd0] sm:$0xff]
        %v988 = vld [vmem:[%s237 + $0xfd8] sm:$0xff]
        %v989 = vld [vmem:[%s237 + $0xfe0] sm:$0xff]
        %v990 = vld [vmem:[%s237 + $0xfe8] sm:$0xff]
        %v991 = vld [vmem:[%s237 + $0xff0] sm:$0xff]
        %v992 = vld [vmem:[%s237 + $0xff8] sm:$0xff]
        %v993 = vld [vmem:[%s237 + $0x1000] sm:$0xff]
        %v994 = vld [vmem:[%s237 + $0x1008] sm:$0xff]
        %v995 = vld [vmem:[%s237 + $0x1010] sm:$0xff]
        %v996 = vld [vmem:[%s237 + $0x1018] sm:$0xff]
        %v997 = vld [vmem:[%s237 + $0x1020] sm:$0xff]
        %v998 = vld [vmem:[%s237 + $0x1028] sm:$0xff]
        %v999 = vld [vmem:[%s237 + $0x1030] sm:$0xff]
        %v1000 = vld [vmem:[%s237 + $0x1038] sm:$0xff]
        %v1001 = vld [vmem:[%s237 + $0x1040] sm:$0xff]
        %v1002 = vld [vmem:[%s237 + $0x1048] sm:$0xff]
        %v1003 = vld [vmem:[%s237 + $0x1050] sm:$0xff]
        %v1004 = vld [vmem:[%s237 + $0x1058] sm:$0xff]
        %v1005 = vld [vmem:[%s237 + $0x1060] sm:$0xff]
        %v1006 = vld [vmem:[%s237 + $0x1068] sm:$0xff]
        %v1007 = vld [vmem:[%s237 + $0x1070] sm:$0xff]
        %v1008 = vld [vmem:[%s237 + $0x1078] sm:$0xff]
        %v1009 = vld [vmem:[%s237 + $0x1080] sm:$0xff]
        %v1010 = vld [vmem:[%s237 + $0x1088] sm:$0xff]
        %v1011 = vld [vmem:[%s237 + $0x1090] sm:$0xff]
        %v1012 = vld [vmem:[%s237 + $0x1098] sm:$0xff]
        %v1013 = vld [vmem:[%s237 + $0x10a0] sm:$0xff]
        %v1014 = vld [vmem:[%s237 + $0x10a8] sm:$0xff]
        %v1015 = vld [vmem:[%s237 + $0x10b0] sm:$0xff]
        %v1016 = vld [vmem:[%s237 + $0x10b8] sm:$0xff]
        %v1017 = vld [vmem:[%s237 + $0x10c0] sm:$0xff]
        %v1018 = vld [vmem:[%s237 + $0x10c8] sm:$0xff]
        %v1019 = vld [vmem:[%s237 + $0x10d0] sm:$0xff]
        %v1020 = vld [vmem:[%s237 + $0x10d8] sm:$0xff]
        %v1021 = vld [vmem:[%s237 + $0x10e0] sm:$0xff]
        %v1022 = vld [vmem:[%s237 + $0x10e8] sm:$0xff]
        %v1023 = vld [vmem:[%s237 + $0x10f0] sm:$0xff]
        %v1024 = vld [vmem:[%s237 + $0x10f8] sm:$0xff]
        %v1025 = vld [vmem:[%s237 + $0x1100] sm:$0xff]
        %v1026 = vld [vmem:[%s237 + $0x1108] sm:$0xff]
        %v1027 = vld [vmem:[%s237 + $0x1110] sm:$0xff]
        %v1028 = vld [vmem:[%s237 + $0x1118] sm:$0xff]
        %v1029 = vld [vmem:[%s237 + $0x1120] sm:$0xff]
        %v1030 = vld [vmem:[%s237 + $0x1128] sm:$0xff]
        %v1031 = vld [vmem:[%s237 + $0x1130] sm:$0xff]
        %v1032 = vld [vmem:[%s237 + $0x1138] sm:$0xff]
        %v1033 = vld [vmem:[%s237 + $0x1140] sm:$0xff]
        %v1034 = vld [vmem:[%s237 + $0x1148] sm:$0xff]
        %v1035 = vld [vmem:[%s237 + $0x1150] sm:$0xff]
        %v1036 = vld [vmem:[%s237 + $0x1158] sm:$0xff]
        %v1037 = vld [vmem:[%s237 + $0x1160] sm:$0xff]
        %v1038 = vld [vmem:[%s237 + $0x1168] sm:$0xff]
        %v1039 = vld [vmem:[%s237 + $0x1170] sm:$0xff]
        %v1040 = vld [vmem:[%s237 + $0x1178] sm:$0xff]
        %v1041 = vld [vmem:[%s237 + $0x1180] sm:$0xff]
        %v1042 = vld [vmem:[%s237 + $0x1188] sm:$0xff]
        %v1043 = vld [vmem:[%s237 + $0x1190] sm:$0xff]
        %v1044 = vld [vmem:[%s237 + $0x1198] sm:$0xff]
        %v1045 = vld [vmem:[%s237 + $0x11a0] sm:$0xff]
        %v1046 = vld [vmem:[%s237 + $0x11a8] sm:$0xff]
        %v1047 = vld [vmem:[%s237 + $0x11b0] sm:$0xff]
        %v1048 = vld [vmem:[%s237 + $0x11b8] sm:$0xff]
        %v1049 = vld [vmem:[%s237 + $0x11c0] sm:$0xff]
        %v1050 = vld [vmem:[%s237 + $0x11c8] sm:$0xff]
        %v1051 = vld [vmem:[%s237 + $0x11d0] sm:$0xff]
        %v1052 = vld [vmem:[%s237 + $0x11d8] sm:$0xff]
        %v1053 = vld [vmem:[%s237 + $0x11e0] sm:$0xff]
        %v1054 = vld [vmem:[%s237 + $0x11e8] sm:$0xff]
        %v1055 = vld [vmem:[%s237 + $0x11f0] sm:$0xff]
        %v1056 = vld [vmem:[%s237 + $0x11f8] sm:$0xff]
        %v1057 = vld [vmem:[%s237 + $0x1200] sm:$0xff]
        %v1058 = vld [vmem:[%s237 + $0x1208] sm:$0xff]
        %v1059 = vld [vmem:[%s237 + $0x1210] sm:$0xff]
        %v1060 = vld [vmem:[%s237 + $0x1218] sm:$0xff]
        %v1061 = vld [vmem:[%s237 + $0x1220] sm:$0xff]
        %v1062 = vld [vmem:[%s237 + $0x1228] sm:$0xff]
        %v1063 = vld [vmem:[%s237 + $0x1230] sm:$0xff]
        %v1064 = vld [vmem:[%s237 + $0x1238] sm:$0xff]
        %v1065 = vld [vmem:[%s237 + $0x1240] sm:$0xff]
        %v1066 = vld [vmem:[%s237 + $0x1248] sm:$0xff]
        %v1067 = vld [vmem:[%s237 + $0x1250] sm:$0xff]
        %v1068 = vld [vmem:[%s237 + $0x1258] sm:$0xff]
        %v1069 = vld [vmem:[%s237 + $0x1260] sm:$0xff]
        %v1070 = vld [vmem:[%s237 + $0x1268] sm:$0xff]
        %v1071 = vld [vmem:[%s237 + $0x1270] sm:$0xff]
        %v1072 = vld [vmem:[%s237 + $0x1278] sm:$0xff]
        %v1073 = vld [vmem:[%s237 + $0x1280] sm:$0xff]
        %v1074 = vld [vmem:[%s237 + $0x1288] sm:$0xff]
        %v1075 = vld [vmem:[%s237 + $0x1290] sm:$0xff]
        %v1076 = vld [vmem:[%s237 + $0x1298] sm:$0xff]
        %v1077 = vld [vmem:[%s237 + $0x12a0] sm:$0xff]
        %v1078 = vld [vmem:[%s237 + $0x12a8] sm:$0xff]
        %v1079 = vld [vmem:[%s237 + $0x12b0] sm:$0xff]
        %v1080 = vld [vmem:[%s237 + $0x12b8] sm:$0xff]
        %v1081 = vld [vmem:[%s237 + $0x12c0] sm:$0xff]
        %v1082 = vld [vmem:[%s237 + $0x12c8] sm:$0xff]
        %v1083 = vld [vmem:[%s237 + $0x12d0] sm:$0xff]
        %v1084 = vld [vmem:[%s237 + $0x12d8] sm:$0xff]
        %v1085 = vld [vmem:[%s237 + $0x12e0] sm:$0xff]
        %v1086 = vld [vmem:[%s237 + $0x12e8] sm:$0xff]
        %v1087 = vld [vmem:[%s237 + $0x12f0] sm:$0xff]
        %v1088 = vld [vmem:[%s237 + $0x12f8] sm:$0xff]
        %v1089 = vld [vmem:[%s237 + $0x1300] sm:$0xff]
        %v1090 = vld [vmem:[%s237 + $0x1308] sm:$0xff]
        %v1091 = vld [vmem:[%s237 + $0x1310] sm:$0xff]
        %v1092 = vld [vmem:[%s237 + $0x1318] sm:$0xff]
        %v1093 = vld [vmem:[%s237 + $0x1320] sm:$0xff]
        %v1094 = vld [vmem:[%s237 + $0x1328] sm:$0xff]
        %v1095 = vld [vmem:[%s237 + $0x1330] sm:$0xff]
        %v1096 = vld [vmem:[%s237 + $0x1338] sm:$0xff]
        %v1097 = vld [vmem:[%s237 + $0x1340] sm:$0xff]
        %v1098 = vld [vmem:[%s237 + $0x1348] sm:$0xff]
        %v1099 = vld [vmem:[%s237 + $0x1350] sm:$0xff]
        %v1100 = vld [vmem:[%s237 + $0x1358] sm:$0xff]
        %v1101 = vld [vmem:[%s237 + $0x1360] sm:$0xff]
        %v1102 = vld [vmem:[%s237 + $0x1368] sm:$0xff]
        %v1103 = vld [vmem:[%s237 + $0x1370] sm:$0xff]
        %v1104 = vld [vmem:[%s237 + $0x1378] sm:$0xff]
        %v1105 = vld [vmem:[%s237 + $0x1380] sm:$0xff]
        %v1106 = vld [vmem:[%s237 + $0x1388] sm:$0xff]
        %v1107 = vld [vmem:[%s237 + $0x1390] sm:$0xff]
        %v1108 = vld [vmem:[%s237 + $0x1398] sm:$0xff]
        %v1109 = vld [vmem:[%s237 + $0x13a0] sm:$0xff]
        %v1110 = vld [vmem:[%s237 + $0x13a8] sm:$0xff]
        %v1111 = vld [vmem:[%s237 + $0x13b0] sm:$0xff]
        %v1112 = vld [vmem:[%s237 + $0x13b8] sm:$0xff]
        %v1113 = vld [vmem:[%s237 + $0x13c0] sm:$0xff]
        %v1114 = vld [vmem:[%s237 + $0x13c8] sm:$0xff]
        %v1115 = vld [vmem:[%s237 + $0x13d0] sm:$0xff]
        %v1116 = vld [vmem:[%s237 + $0x13d8] sm:$0xff]
        %v1117 = vld [vmem:[%s237 + $0x13e0] sm:$0xff]
        %v1118 = vld [vmem:[%s237 + $0x13e8] sm:$0xff]
        %v1119 = vld [vmem:[%s237 + $0x13f0] sm:$0xff]
        %v1120 = vld [vmem:[%s237 + $0x13f8] sm:$0xff]
        %v1121 = vld [vmem:[%s237 + $0x1400] sm:$0xff]
        %v1122 = vld [vmem:[%s237 + $0x1408] sm:$0xff]
        %v1123 = vld [vmem:[%s237 + $0x1410] sm:$0xff]
        %v1124 = vld [vmem:[%s237 + $0x1418] sm:$0xff]
        %v1125 = vld [vmem:[%s237 + $0x1420] sm:$0xff]
        %v1126 = vld [vmem:[%s237 + $0x1428] sm:$0xff]
        %v1127 = vld [vmem:[%s237 + $0x1430] sm:$0xff]
        %v1128 = vld [vmem:[%s237 + $0x1438] sm:$0xff]
        %v1129 = vld [vmem:[%s237 + $0x1440] sm:$0xff]
        %v1130 = vld [vmem:[%s237 + $0x1448] sm:$0xff]
        %v1131 = vld [vmem:[%s237 + $0x1450] sm:$0xff]
        %v1132 = vld [vmem:[%s237 + $0x1458] sm:$0xff]
        %v1133 = vld [vmem:[%s237 + $0x1460] sm:$0xff]
        %v1134 = vld [vmem:[%s237 + $0x1468] sm:$0xff]
        %v1135 = vld [vmem:[%s237 + $0x1470] sm:$0xff]
        %v1136 = vld [vmem:[%s237 + $0x1478] sm:$0xff]
        %v1137 = vld [vmem:[%s237 + $0x1480] sm:$0xff]
        %v1138 = vld [vmem:[%s237 + $0x1488] sm:$0xff]
        %v1139 = vld [vmem:[%s237 + $0x1490] sm:$0xff]
        %v1140 = vld [vmem:[%s237 + $0x1498] sm:$0xff]
        %v1141 = vld [vmem:[%s237 + $0x14a0] sm:$0xff]
        %v1142 = vld [vmem:[%s237 + $0x14a8] sm:$0xff]
        %v1143 = vld [vmem:[%s237 + $0x14b0] sm:$0xff]
        %v1144 = vld [vmem:[%s237 + $0x14b8] sm:$0xff]
        %v1145 = vld [vmem:[%s237 + $0x14c0] sm:$0xff]
        %v1146 = vld [vmem:[%s237 + $0x14c8] sm:$0xff]
        %v1147 = vld [vmem:[%s237 + $0x14d0] sm:$0xff]
        %v1148 = vld [vmem:[%s237 + $0x14d8] sm:$0xff]
        %v1149 = vld [vmem:[%s237 + $0x14e0] sm:$0xff]
        %v1150 = vld [vmem:[%s237 + $0x14e8] sm:$0xff]
        %v1151 = vld [vmem:[%s237 + $0x14f0] sm:$0xff]
        %v1152 = vld [vmem:[%s237 + $0x14f8] sm:$0xff]
        %v1153 = vld [vmem:[%s237 + $0x1500] sm:$0xff]
        %v1154 = vld [vmem:[%s237 + $0x1508] sm:$0xff]
        %v1155 = vld [vmem:[%s237 + $0x1510] sm:$0xff]
        %v1156 = vld [vmem:[%s237 + $0x1518] sm:$0xff]
        %v1157 = vld [vmem:[%s237 + $0x1520] sm:$0xff]
        %v1158 = vld [vmem:[%s237 + $0x1528] sm:$0xff]
        %v1159 = vld [vmem:[%s237 + $0x1530] sm:$0xff]
        %v1160 = vld [vmem:[%s237 + $0x1538] sm:$0xff]
        %v1161 = vld [vmem:[%s237 + $0x1540] sm:$0xff]
        %v1162 = vld [vmem:[%s237 + $0x1548] sm:$0xff]
        %v1163 = vld [vmem:[%s237 + $0x1550] sm:$0xff]
        %v1164 = vld [vmem:[%s237 + $0x1558] sm:$0xff]
        %v1165 = vld [vmem:[%s237 + $0x1560] sm:$0xff]
        %v1166 = vld [vmem:[%s237 + $0x1568] sm:$0xff]
        %v1167 = vld [vmem:[%s237 + $0x1570] sm:$0xff]
        %v1168 = vld [vmem:[%s237 + $0x1578] sm:$0xff]
        %v1169 = vld [vmem:[%s237 + $0x1580] sm:$0xff]
        %v1170 = vld [vmem:[%s237 + $0x1588] sm:$0xff]
        %v1171 = vld [vmem:[%s237 + $0x1590] sm:$0xff]
        %v1172 = vld [vmem:[%s237 + $0x1598] sm:$0xff]
        %v1173 = vld [vmem:[%s237 + $0x15a0] sm:$0xff]
        %v1174 = vld [vmem:[%s237 + $0x15a8] sm:$0xff]
        %v1175 = vld [vmem:[%s237 + $0x15b0] sm:$0xff]
        %v1176 = vld [vmem:[%s237 + $0x15b8] sm:$0xff]
        %v1177 = vld [vmem:[%s237 + $0x15c0] sm:$0xff]
        %v1178 = vld [vmem:[%s237 + $0x15c8] sm:$0xff]
        %v1179 = vld [vmem:[%s237 + $0x15d0] sm:$0xff]
        %v1180 = vld [vmem:[%s237 + $0x15d8] sm:$0xff]
        %v1181 = vld [vmem:[%s237 + $0x15e0] sm:$0xff]
        %v1182 = vld [vmem:[%s237 + $0x15e8] sm:$0xff]
        %v1183 = vld [vmem:[%s237 + $0x15f0] sm:$0xff]
        %v1184 = vld [vmem:[%s237 + $0x15f8] sm:$0xff]
        %v1185 = vld [vmem:[%s237 + $0x1600] sm:$0xff]
        %v1186 = vld [vmem:[%s237 + $0x1608] sm:$0xff]
        %v1187 = vld [vmem:[%s237 + $0x1610] sm:$0xff]
        %v1188 = vld [vmem:[%s237 + $0x1618] sm:$0xff]
        %v1189 = vld [vmem:[%s237 + $0x1620] sm:$0xff]
        %v1190 = vld [vmem:[%s237 + $0x1628] sm:$0xff]
        %v1191 = vld [vmem:[%s237 + $0x1630] sm:$0xff]
        %v1192 = vld [vmem:[%s237 + $0x1638] sm:$0xff]
        %v1193 = vld [vmem:[%s237 + $0x1640] sm:$0xff]
        %v1194 = vld [vmem:[%s237 + $0x1648] sm:$0xff]
        %v1195 = vld [vmem:[%s237 + $0x1650] sm:$0xff]
        %v1196 = vld [vmem:[%s237 + $0x1658] sm:$0xff]
        %v1197 = vld [vmem:[%s237 + $0x1660] sm:$0xff]
        %v1198 = vld [vmem:[%s237 + $0x1668] sm:$0xff]
        %v1199 = vld [vmem:[%s237 + $0x1670] sm:$0xff]
        %v1200 = vld [vmem:[%s237 + $0x1678] sm:$0xff]
        %v1201 = vld [vmem:[%s237 + $0x1680] sm:$0xff]
        %v1202 = vld [vmem:[%s237 + $0x1688] sm:$0xff]
        %v1203 = vld [vmem:[%s237 + $0x1690] sm:$0xff]
        %v1204 = vld [vmem:[%s237 + $0x1698] sm:$0xff]
        %v1205 = vld [vmem:[%s237 + $0x16a0] sm:$0xff]
        %v1206 = vld [vmem:[%s237 + $0x16a8] sm:$0xff]
        %v1207 = vld [vmem:[%s237 + $0x16b0] sm:$0xff]
        %v1208 = vld [vmem:[%s237 + $0x16b8] sm:$0xff]
        %v1209 = vld [vmem:[%s237 + $0x16c0] sm:$0xff]
        %v1210 = vld [vmem:[%s237 + $0x16c8] sm:$0xff]
        %v1211 = vld [vmem:[%s237 + $0x16d0] sm:$0xff]
        %v1212 = vld [vmem:[%s237 + $0x16d8] sm:$0xff]
        %v1213 = vld [vmem:[%s237 + $0x16e0] sm:$0xff]
        %v1214 = vld [vmem:[%s237 + $0x16e8] sm:$0xff]
        %v1215 = vld [vmem:[%s237 + $0x16f0] sm:$0xff]
        %v1216 = vld [vmem:[%s237 + $0x16f8] sm:$0xff]
        %v1217 = vld [vmem:[%s237 + $0x1700] sm:$0xff]
        %v1218 = vld [vmem:[%s237 + $0x1708] sm:$0xff]
        %v1219 = vld [vmem:[%s237 + $0x1710] sm:$0xff]
        %v1220 = vld [vmem:[%s237 + $0x1718] sm:$0xff]
        %v1221 = vld [vmem:[%s237 + $0x1720] sm:$0xff]
        %v1222 = vld [vmem:[%s237 + $0x1728] sm:$0xff]
        %v1223 = vld [vmem:[%s237 + $0x1730] sm:$0xff]
        %v1224 = vld [vmem:[%s237 + $0x1738] sm:$0xff]
        %v1225 = vld [vmem:[%s237 + $0x1740] sm:$0xff]
        %v1226 = vld [vmem:[%s237 + $0x1748] sm:$0xff]
        %v1227 = vld [vmem:[%s237 + $0x1750] sm:$0xff]
        %v1228 = vld [vmem:[%s237 + $0x1758] sm:$0xff]
        %v1229 = vld [vmem:[%s237 + $0x1760] sm:$0xff]
        %v1230 = vld [vmem:[%s237 + $0x1768] sm:$0xff]
        %v1231 = vld [vmem:[%s237 + $0x1770] sm:$0xff]
        %v1232 = vld [vmem:[%s237 + $0x1778] sm:$0xff]
        %v1233 = vld [vmem:[%s237 + $0x1780] sm:$0xff]
        %v1234 = vld [vmem:[%s237 + $0x1788] sm:$0xff]
        %v1235 = vld [vmem:[%s237 + $0x1790] sm:$0xff]
        %v1236 = vld [vmem:[%s237 + $0x1798] sm:$0xff]
        %v1237 = vld [vmem:[%s237 + $0x17a0] sm:$0xff]
        %v1238 = vld [vmem:[%s237 + $0x17a8] sm:$0xff]
        %v1239 = vld [vmem:[%s237 + $0x17b0] sm:$0xff]
        %v1240 = vld [vmem:[%s237 + $0x17b8] sm:$0xff]
        %v1241 = vld [vmem:[%s237 + $0x17c0] sm:$0xff]
        %v1242 = vld [vmem:[%s237 + $0x17c8] sm:$0xff]
        %v1243 = vld [vmem:[%s237 + $0x17d0] sm:$0xff]
        %v1244 = vld [vmem:[%s237 + $0x17d8] sm:$0xff]
        %v1245 = vld [vmem:[%s237 + $0x17e0] sm:$0xff]
        %v1246 = vld [vmem:[%s237 + $0x17e8] sm:$0xff]
        %v1247 = vld [vmem:[%s237 + $0x17f0] sm:$0xff]
        %v1248 = vld [vmem:[%s237 + $0x17f8] sm:$0xff]
        %v1249 = vld [vmem:[%s237 + $0x1800] sm:$0xff]
        %v1250 = vld [vmem:[%s237 + $0x1808] sm:$0xff]
        %v1251 = vld [vmem:[%s237 + $0x1810] sm:$0xff]
        %v1252 = vld [vmem:[%s237 + $0x1818] sm:$0xff]
        %v1253 = vld [vmem:[%s237 + $0x1820] sm:$0xff]
        %v1254 = vld [vmem:[%s237 + $0x1828] sm:$0xff]
        %v1255 = vld [vmem:[%s237 + $0x1830] sm:$0xff]
        %v1256 = vld [vmem:[%s237 + $0x1838] sm:$0xff]
        %v1257 = vld [vmem:[%s237 + $0x1840] sm:$0xff]
        %v1258 = vld [vmem:[%s237 + $0x1848] sm:$0xff]
        %v1259 = vld [vmem:[%s237 + $0x1850] sm:$0xff]
        %v1260 = vld [vmem:[%s237 + $0x1858] sm:$0xff]
        %v1261 = vld [vmem:[%s237 + $0x1860] sm:$0xff]
        %v1262 = vld [vmem:[%s237 + $0x1868] sm:$0xff]
        %v1263 = vld [vmem:[%s237 + $0x1870] sm:$0xff]
        %v1264 = vld [vmem:[%s237 + $0x1878] sm:$0xff]
        %v1265 = vld [vmem:[%s237 + $0x1880] sm:$0xff]
        %v1266 = vld [vmem:[%s237 + $0x1888] sm:$0xff]
        %v1267 = vld [vmem:[%s237 + $0x1890] sm:$0xff]
        %v1268 = vld [vmem:[%s237 + $0x1898] sm:$0xff]
        %v1269 = vld [vmem:[%s237 + $0x18a0] sm:$0xff]
        %v1270 = vld [vmem:[%s237 + $0x18a8] sm:$0xff]
        %v1271 = vld [vmem:[%s237 + $0x18b0] sm:$0xff]
        %v1272 = vld [vmem:[%s237 + $0x18b8] sm:$0xff]
        %v1273 = vld [vmem:[%s237 + $0x18c0] sm:$0xff]
        %v1274 = vld [vmem:[%s237 + $0x18c8] sm:$0xff]
        %v1275 = vld [vmem:[%s237 + $0x18d0] sm:$0xff]
        %v1276 = vld [vmem:[%s237 + $0x18d8] sm:$0xff]
        %v1277 = vld [vmem:[%s237 + $0x18e0] sm:$0xff]
        %v1278 = vld [vmem:[%s237 + $0x18e8] sm:$0xff]
        %v1279 = vld [vmem:[%s237 + $0x18f0] sm:$0xff]
        %v1280 = vld [vmem:[%s237 + $0x18f8] sm:$0xff]
        %v1281 = vld [vmem:[%s237 + $0x1900] sm:$0xff]
        %v1282 = vld [vmem:[%s237 + $0x1908] sm:$0xff]
        %v1283 = vld [vmem:[%s237 + $0x1910] sm:$0xff]
        %v1284 = vld [vmem:[%s237 + $0x1918] sm:$0xff]
        %v1285 = vld [vmem:[%s237 + $0x1920] sm:$0xff]
        %v1286 = vld [vmem:[%s237 + $0x1928] sm:$0xff]
        %v1287 = vld [vmem:[%s237 + $0x1930] sm:$0xff]
        %v1288 = vld [vmem:[%s237 + $0x1938] sm:$0xff]
        %v1289 = vld [vmem:[%s237 + $0x1940] sm:$0xff]
        %v1290 = vld [vmem:[%s237 + $0x1948] sm:$0xff]
        %v1291 = vld [vmem:[%s237 + $0x1950] sm:$0xff]
        %v1292 = vld [vmem:[%s237 + $0x1958] sm:$0xff]
        %v1293 = vld [vmem:[%s237 + $0x1960] sm:$0xff]
        %v1294 = vld [vmem:[%s237 + $0x1968] sm:$0xff]
        %v1295 = vld [vmem:[%s237 + $0x1970] sm:$0xff]
        %v1296 = vld [vmem:[%s237 + $0x1978] sm:$0xff]
        %v1297 = vld [vmem:[%s237 + $0x1980] sm:$0xff]
        %v1298 = vld [vmem:[%s237 + $0x1988] sm:$0xff]
        %v1299 = vld [vmem:[%s237 + $0x1990] sm:$0xff]
        %v1300 = vld [vmem:[%s237 + $0x1998] sm:$0xff]
        %v1301 = vld [vmem:[%s237 + $0x19a0] sm:$0xff]
        %v1302 = vld [vmem:[%s237 + $0x19a8] sm:$0xff]
        %v1303 = vld [vmem:[%s237 + $0x19b0] sm:$0xff]
        %v1304 = vld [vmem:[%s237 + $0x19b8] sm:$0xff]
        %v1305 = vld [vmem:[%s237 + $0x19c0] sm:$0xff]
        %v1306 = vld [vmem:[%s237 + $0x19c8] sm:$0xff]
        %v1307 = vld [vmem:[%s237 + $0x19d0] sm:$0xff]
        %v1308 = vld [vmem:[%s237 + $0x19d8] sm:$0xff]
        %v1309 = vld [vmem:[%s237 + $0x19e0] sm:$0xff]
        %v1310 = vld [vmem:[%s237 + $0x19e8] sm:$0xff]
        %v1311 = vld [vmem:[%s237 + $0x19f0] sm:$0xff]
        %v1312 = vld [vmem:[%s237 + $0x19f8] sm:$0xff]
        %v1313 = vld [vmem:[%s237 + $0x1a00] sm:$0xff]
        %v1314 = vld [vmem:[%s237 + $0x1a08] sm:$0xff]
        %v1315 = vld [vmem:[%s237 + $0x1a10] sm:$0xff]
        %v1316 = vld [vmem:[%s237 + $0x1a18] sm:$0xff]
        %v1317 = vld [vmem:[%s237 + $0x1a20] sm:$0xff]
        %v1318 = vld [vmem:[%s237 + $0x1a28] sm:$0xff]
        %v1319 = vld [vmem:[%s237 + $0x1a30] sm:$0xff]
        %v1320 = vld [vmem:[%s237 + $0x1a38] sm:$0xff]
        %v1321 = vld [vmem:[%s237 + $0x1a40] sm:$0xff]
        %v1322 = vld [vmem:[%s237 + $0x1a48] sm:$0xff]
        %v1323 = vld [vmem:[%s237 + $0x1a50] sm:$0xff]
        %v1324 = vld [vmem:[%s237 + $0x1a58] sm:$0xff]
        %v1325 = vld [vmem:[%s237 + $0x1a60] sm:$0xff]
        %v1326 = vld [vmem:[%s237 + $0x1a68] sm:$0xff]
        %v1327 = vld [vmem:[%s237 + $0x1a70] sm:$0xff]
        %v1328 = vld [vmem:[%s237 + $0x1a78] sm:$0xff]
        %v1329 = vld [vmem:[%s237 + $0x1a80] sm:$0xff]
        %v1330 = vld [vmem:[%s237 + $0x1a88] sm:$0xff]
        %v1331 = vld [vmem:[%s237 + $0x1a90] sm:$0xff]
        %v1332 = vld [vmem:[%s237 + $0x1a98] sm:$0xff]
        %v1333 = vld [vmem:[%s237 + $0x1aa0] sm:$0xff]
        %v1334 = vld [vmem:[%s237 + $0x1aa8] sm:$0xff]
        %v1335 = vld [vmem:[%s237 + $0x1ab0] sm:$0xff]
        %v1336 = vld [vmem:[%s237 + $0x1ab8] sm:$0xff]
        %v1337 = vld [vmem:[%s237 + $0x1ac0] sm:$0xff]
        %v1338 = vld [vmem:[%s237 + $0x1ac8] sm:$0xff]
        %v1339 = vld [vmem:[%s237 + $0x1ad0] sm:$0xff]
        %v1340 = vld [vmem:[%s237 + $0x1ad8] sm:$0xff]
        %v1341 = vld [vmem:[%s237 + $0x1ae0] sm:$0xff]
        %v1342 = vld [vmem:[%s237 + $0x1ae8] sm:$0xff]
        %v1343 = vld [vmem:[%s237 + $0x1af0] sm:$0xff]
        %v1344 = vld [vmem:[%s237 + $0x1af8] sm:$0xff]
        %v1345 = vld [vmem:[%s237 + $0x1b00] sm:$0xff]
        %v1346 = vld [vmem:[%s237 + $0x1b08] sm:$0xff]
        %v1347 = vld [vmem:[%s237 + $0x1b10] sm:$0xff]
        %v1348 = vld [vmem:[%s237 + $0x1b18] sm:$0xff]
        %v1349 = vld [vmem:[%s237 + $0x1b20] sm:$0xff]
        %v1350 = vld [vmem:[%s237 + $0x1b28] sm:$0xff]
        %v1351 = vld [vmem:[%s237 + $0x1b30] sm:$0xff]
        %v1352 = vld [vmem:[%s237 + $0x1b38] sm:$0xff]
        %v1353 = vld [vmem:[%s237 + $0x1b40] sm:$0xff]
        %v1354 = vld [vmem:[%s237 + $0x1b48] sm:$0xff]
        %v1355 = vld [vmem:[%s237 + $0x1b50] sm:$0xff]
        %v1356 = vld [vmem:[%s237 + $0x1b58] sm:$0xff]
        %v1357 = vld [vmem:[%s237 + $0x1b60] sm:$0xff]
        %v1358 = vld [vmem:[%s237 + $0x1b68] sm:$0xff]
        %v1359 = vld [vmem:[%s237 + $0x1b70] sm:$0xff]
        %v1360 = vld [vmem:[%s237 + $0x1b78] sm:$0xff]
        %v1361 = vld [vmem:[%s237 + $0x1b80] sm:$0xff]
        %v1362 = vld [vmem:[%s237 + $0x1b88] sm:$0xff]
        %v1363 = vld [vmem:[%s237 + $0x1b90] sm:$0xff]
        %v1364 = vld [vmem:[%s237 + $0x1b98] sm:$0xff]
        %v1365 = vld [vmem:[%s237 + $0x1ba0] sm:$0xff]
        %v1366 = vld [vmem:[%s237 + $0x1ba8] sm:$0xff]
        %v1367 = vld [vmem:[%s237 + $0x1bb0] sm:$0xff]
        %v1368 = vld [vmem:[%s237 + $0x1bb8] sm:$0xff]
        %v1369 = vld [vmem:[%s237 + $0x1bc0] sm:$0xff]
        %v1370 = vld [vmem:[%s237 + $0x1bc8] sm:$0xff]
        %v1371 = vld [vmem:[%s237 + $0x1bd0] sm:$0xff]
        %v1372 = vld [vmem:[%s237 + $0x1bd8] sm:$0xff]
        %v1373 = vld [vmem:[%s237 + $0x1be0] sm:$0xff]
        %v1374 = vld [vmem:[%s237 + $0x1be8] sm:$0xff]
        %v1375 = vld [vmem:[%s237 + $0x1bf0] sm:$0xff]
        %v1376 = vld [vmem:[%s237 + $0x1bf8] sm:$0xff]
        %v1377 = vld [vmem:[%s237 + $0x1c00] sm:$0xff]
        %v1378 = vld [vmem:[%s237 + $0x1c08] sm:$0xff]
        %v1379 = vld [vmem:[%s237 + $0x1c10] sm:$0xff]
        %v1380 = vld [vmem:[%s237 + $0x1c18] sm:$0xff]
        %v1381 = vld [vmem:[%s237 + $0x1c20] sm:$0xff]
        %v1382 = vld [vmem:[%s237 + $0x1c28] sm:$0xff]
        %v1383 = vld [vmem:[%s237 + $0x1c30] sm:$0xff]
        %v1384 = vld [vmem:[%s237 + $0x1c38] sm:$0xff]
        %v1385 = vld [vmem:[%s237 + $0x1c40] sm:$0xff]
        %v1386 = vld [vmem:[%s237 + $0x1c48] sm:$0xff]
        %v1387 = vld [vmem:[%s237 + $0x1c50] sm:$0xff]
        %v1388 = vld [vmem:[%s237 + $0x1c58] sm:$0xff]
        %v1389 = vld [vmem:[%s237 + $0x1c60] sm:$0xff]
        %v1390 = vld [vmem:[%s237 + $0x1c68] sm:$0xff]
        %v1391 = vld [vmem:[%s237 + $0x1c70] sm:$0xff]
        %v1392 = vld [vmem:[%s237 + $0x1c78] sm:$0xff]
        %v1393 = vld [vmem:[%s237 + $0x1c80] sm:$0xff]
        %v1394 = vld [vmem:[%s237 + $0x1c88] sm:$0xff]
        %v1395 = vld [vmem:[%s237 + $0x1c90] sm:$0xff]
        %v1396 = vld [vmem:[%s237 + $0x1c98] sm:$0xff]
        %v1397 = vld [vmem:[%s237 + $0x1ca0] sm:$0xff]
        %v1398 = vld [vmem:[%s237 + $0x1ca8] sm:$0xff]
        %v1399 = vld [vmem:[%s237 + $0x1cb0] sm:$0xff]
        %v1400 = vld [vmem:[%s237 + $0x1cb8] sm:$0xff]
        %v1401 = vld [vmem:[%s237 + $0x1cc0] sm:$0xff]
        %v1402 = vld [vmem:[%s237 + $0x1cc8] sm:$0xff]
        %v1403 = vld [vmem:[%s237 + $0x1cd0] sm:$0xff]
        %v1404 = vld [vmem:[%s237 + $0x1cd8] sm:$0xff]
        %v1405 = vld [vmem:[%s237 + $0x1ce0] sm:$0xff]
        %v1406 = vld [vmem:[%s237 + $0x1ce8] sm:$0xff]
        %v1407 = vld [vmem:[%s237 + $0x1cf0] sm:$0xff]
        %v1408 = vld [vmem:[%s237 + $0x1cf8] sm:$0xff]
        %v1409 = vld [vmem:[%s237 + $0x1d00] sm:$0xff]
        %v1410 = vld [vmem:[%s237 + $0x1d08] sm:$0xff]
        %v1411 = vld [vmem:[%s237 + $0x1d10] sm:$0xff]
        %v1412 = vld [vmem:[%s237 + $0x1d18] sm:$0xff]
        %v1413 = vld [vmem:[%s237 + $0x1d20] sm:$0xff]
        %v1414 = vld [vmem:[%s237 + $0x1d28] sm:$0xff]
        %v1415 = vld [vmem:[%s237 + $0x1d30] sm:$0xff]
        %v1416 = vld [vmem:[%s237 + $0x1d38] sm:$0xff]
        %v1417 = vld [vmem:[%s237 + $0x1d40] sm:$0xff]
        %v1418 = vld [vmem:[%s237 + $0x1d48] sm:$0xff]
        %v1419 = vld [vmem:[%s237 + $0x1d50] sm:$0xff]
        %v1420 = vld [vmem:[%s237 + $0x1d58] sm:$0xff]
        %v1421 = vld [vmem:[%s237 + $0x1d60] sm:$0xff]
        %v1422 = vld [vmem:[%s237 + $0x1d68] sm:$0xff]
        %v1423 = vld [vmem:[%s237 + $0x1d70] sm:$0xff]
        %v1424 = vld [vmem:[%s237 + $0x1d78] sm:$0xff]
        %v1425 = vld [vmem:[%s237 + $0x1d80] sm:$0xff]
        %v1426 = vld [vmem:[%s237 + $0x1d88] sm:$0xff]
        %v1427 = vld [vmem:[%s237 + $0x1d90] sm:$0xff]
        %v1428 = vld [vmem:[%s237 + $0x1d98] sm:$0xff]
        %v1429 = vld [vmem:[%s237 + $0x1da0] sm:$0xff]
        %v1430 = vld [vmem:[%s237 + $0x1da8] sm:$0xff]
        %v1431 = vld [vmem:[%s237 + $0x1db0] sm:$0xff]
        %v1432 = vld [vmem:[%s237 + $0x1db8] sm:$0xff]
        %v1433 = vld [vmem:[%s237 + $0x1dc0] sm:$0xff]
        %v1434 = vld [vmem:[%s237 + $0x1dc8] sm:$0xff]
        %v1435 = vld [vmem:[%s237 + $0x1dd0] sm:$0xff]
        %v1436 = vld [vmem:[%s237 + $0x1dd8] sm:$0xff]
        %v1437 = vld [vmem:[%s237 + $0x1de0] sm:$0xff]
        %v1438 = vld [vmem:[%s237 + $0x1de8] sm:$0xff]
        %v1439 = vld [vmem:[%s237 + $0x1df0] sm:$0xff]
        %v1440 = vld [vmem:[%s237 + $0x1df8] sm:$0xff]
        %v1441 = vld [vmem:[%s237 + $0x1e00] sm:$0xff]
        %v1442 = vld [vmem:[%s237 + $0x1e08] sm:$0xff]
        %v1443 = vld [vmem:[%s237 + $0x1e10] sm:$0xff]
        %v1444 = vld [vmem:[%s237 + $0x1e18] sm:$0xff]
        %v1445 = vld [vmem:[%s237 + $0x1e20] sm:$0xff]
        %v1446 = vld [vmem:[%s237 + $0x1e28] sm:$0xff]
        %v1447 = vld [vmem:[%s237 + $0x1e30] sm:$0xff]
        %v1448 = vld [vmem:[%s237 + $0x1e38] sm:$0xff]
        %v1449 = vld [vmem:[%s237 + $0x1e40] sm:$0xff]
        %v1450 = vld [vmem:[%s237 + $0x1e48] sm:$0xff]
        %v1451 = vld [vmem:[%s237 + $0x1e50] sm:$0xff]
        %v1452 = vld [vmem:[%s237 + $0x1e58] sm:$0xff]
        %v1453 = vld [vmem:[%s237 + $0x1e60] sm:$0xff]
        %v1454 = vld [vmem:[%s237 + $0x1e68] sm:$0xff]
        %v1455 = vld [vmem:[%s237 + $0x1e70] sm:$0xff]
        %v1456 = vld [vmem:[%s237 + $0x1e78] sm:$0xff]
        %v1457 = vld [vmem:[%s237 + $0x1e80] sm:$0xff]
        %v1458 = vld [vmem:[%s237 + $0x1e88] sm:$0xff]
        %v1459 = vld [vmem:[%s237 + $0x1e90] sm:$0xff]
        %v1460 = vld [vmem:[%s237 + $0x1e98] sm:$0xff]
        %v1461 = vld [vmem:[%s237 + $0x1ea0] sm:$0xff]
        %v1462 = vld [vmem:[%s237 + $0x1ea8] sm:$0xff]
        %v1463 = vld [vmem:[%s237 + $0x1eb0] sm:$0xff]
        %v1464 = vld [vmem:[%s237 + $0x1eb8] sm:$0xff]
        %v1465 = vld [vmem:[%s237 + $0x1ec0] sm:$0xff]
        %v1466 = vld [vmem:[%s237 + $0x1ec8] sm:$0xff]
        %v1467 = vld [vmem:[%s237 + $0x1ed0] sm:$0xff]
        %v1468 = vld [vmem:[%s237 + $0x1ed8] sm:$0xff]
        %v1469 = vld [vmem:[%s237 + $0x1ee0] sm:$0xff]
        %v1470 = vld [vmem:[%s237 + $0x1ee8] sm:$0xff]
        %v1471 = vld [vmem:[%s237 + $0x1ef0] sm:$0xff]
        %v1472 = vld [vmem:[%s237 + $0x1ef8] sm:$0xff]
        %v1473 = vld [vmem:[%s237 + $0x1f00] sm:$0xff]
        %v1474 = vld [vmem:[%s237 + $0x1f08] sm:$0xff]
        %v1475 = vld [vmem:[%s237 + $0x1f10] sm:$0xff]
        %v1476 = vld [vmem:[%s237 + $0x1f18] sm:$0xff]
        %v1477 = vld [vmem:[%s237 + $0x1f20] sm:$0xff]
        %v1478 = vld [vmem:[%s237 + $0x1f28] sm:$0xff]
        %v1479 = vld [vmem:[%s237 + $0x1f30] sm:$0xff]
        %v1480 = vld [vmem:[%s237 + $0x1f38] sm:$0xff]
        %v1481 = vld [vmem:[%s237 + $0x1f40] sm:$0xff]
        %v1482 = vld [vmem:[%s237 + $0x1f48] sm:$0xff]
        %v1483 = vld [vmem:[%s237 + $0x1f50] sm:$0xff]
        %v1484 = vld [vmem:[%s237 + $0x1f58] sm:$0xff]
        %v1485 = vld [vmem:[%s237 + $0x1f60] sm:$0xff]
        %v1486 = vld [vmem:[%s237 + $0x1f68] sm:$0xff]
        %v1487 = vld [vmem:[%s237 + $0x1f70] sm:$0xff]
        %v1488 = vld [vmem:[%s237 + $0x1f78] sm:$0xff]
        %v1489 = vld [vmem:[%s237 + $0x1f80] sm:$0xff]
        %v1490 = vld [vmem:[%s237 + $0x1f88] sm:$0xff]
        %v1491 = vld [vmem:[%s237 + $0x1f90] sm:$0xff]
        %v1492 = vld [vmem:[%s237 + $0x1f98] sm:$0xff]
        %v1493 = vld [vmem:[%s237 + $0x1fa0] sm:$0xff]
        %v1494 = vld [vmem:[%s237 + $0x1fa8] sm:$0xff]
        %v1495 = vld [vmem:[%s237 + $0x1fb0] sm:$0xff]
        %v1496 = vld [vmem:[%s237 + $0x1fb8] sm:$0xff]
        %v1497 = vld [vmem:[%s237 + $0x1fc0] sm:$0xff]
        %v1498 = vld [vmem:[%s237 + $0x1fc8] sm:$0xff]
        %v1499 = vld [vmem:[%s237 + $0x1fd0] sm:$0xff]
        %v1500 = vld [vmem:[%s237 + $0x1fd8] sm:$0xff]
        %v1501 = vld [vmem:[%s237 + $0x1fe0] sm:$0xff]
        %v1502 = vld [vmem:[%s237 + $0x1fe8] sm:$0xff]
        %v1503 = vld [vmem:[%s237 + $0x1ff0] sm:$0xff]
        %v1504 = vld [vmem:[%s237 + $0x1ff8] sm:$0xff]
        %v1505 = vld [vmem:[%s237 + $0x2000] sm:$0xff]
        %v1506 = vld [vmem:[%s237 + $0x2008] sm:$0xff]
        %v1507 = vld [vmem:[%s237 + $0x2010] sm:$0xff]
        %v1508 = vld [vmem:[%s237 + $0x2018] sm:$0xff]
        %v1509 = vld [vmem:[%s237 + $0x2020] sm:$0xff]
        %v1510 = vld [vmem:[%s237 + $0x2028] sm:$0xff]
        %v1511 = vld [vmem:[%s237 + $0x2030] sm:$0xff]
        %v1512 = vld [vmem:[%s237 + $0x2038] sm:$0xff]
        %v1513 = vld [vmem:[%s237 + $0x2040] sm:$0xff]
        %v1514 = vld [vmem:[%s237 + $0x2048] sm:$0xff]
        %v1515 = vld [vmem:[%s237 + $0x2050] sm:$0xff]
        %v1516 = vld [vmem:[%s237 + $0x2058] sm:$0xff]
        %v1517 = vld [vmem:[%s237 + $0x2060] sm:$0xff]
        %v1518 = vld [vmem:[%s237 + $0x2068] sm:$0xff]
        %v1519 = vld [vmem:[%s237 + $0x2070] sm:$0xff]
        %v1520 = vld [vmem:[%s237 + $0x2078] sm:$0xff]
        %v1521 = vld [vmem:[%s237 + $0x2080] sm:$0xff]
        %v1522 = vld [vmem:[%s237 + $0x2088] sm:$0xff]
        %v1523 = vld [vmem:[%s237 + $0x2090] sm:$0xff]
        %v1524 = vld [vmem:[%s237 + $0x2098] sm:$0xff]
        %v1525 = vld [vmem:[%s237 + $0x20a0] sm:$0xff]
        %v1526 = vld [vmem:[%s237 + $0x20a8] sm:$0xff]
        %v1527 = vld [vmem:[%s237 + $0x20b0] sm:$0xff]
        %v1528 = vld [vmem:[%s237 + $0x20b8] sm:$0xff]
        %v1529 = vld [vmem:[%s237 + $0x20c0] sm:$0xff]
        %v1530 = vld [vmem:[%s237 + $0x20c8] sm:$0xff]
        %v1531 = vld [vmem:[%s237 + $0x20d0] sm:$0xff]
        %v1532 = vld [vmem:[%s237 + $0x20d8] sm:$0xff]
        %v1533 = vld [vmem:[%s237 + $0x20e0] sm:$0xff]
        %v1534 = vld [vmem:[%s237 + $0x20e8] sm:$0xff]
        %v1535 = vld [vmem:[%s237 + $0x20f0] sm:$0xff]
        %v1536 = vld [vmem:[%s237 + $0x20f8] sm:$0xff]
        %v1537 = vld [vmem:[%s237 + $0x2100] sm:$0xff]
        %v1538 = vld [vmem:[%s237 + $0x2108] sm:$0xff]
        %v1539 = vld [vmem:[%s237 + $0x2110] sm:$0xff]
        %v1540 = vld [vmem:[%s237 + $0x2118] sm:$0xff]
        %v1541 = vld [vmem:[%s237 + $0x2120] sm:$0xff]
        %v1542 = vld [vmem:[%s237 + $0x2128] sm:$0xff]
        %v1543 = vld [vmem:[%s237 + $0x2130] sm:$0xff]
        %v1544 = vld [vmem:[%s237 + $0x2138] sm:$0xff]
        %v1545 = vld [vmem:[%s237 + $0x2140] sm:$0xff]
        %v1546 = vld [vmem:[%s237 + $0x2148] sm:$0xff]
        %v1547 = vld [vmem:[%s237 + $0x2150] sm:$0xff]
        %v1548 = vld [vmem:[%s237 + $0x2158] sm:$0xff]
        %v1549 = vld [vmem:[%s237 + $0x2160] sm:$0xff]
        %v1550 = vld [vmem:[%s237 + $0x2168] sm:$0xff]
        %v1551 = vld [vmem:[%s237 + $0x2170] sm:$0xff]
        %v1552 = vld [vmem:[%s237 + $0x2178] sm:$0xff]
        %v1553 = vld [vmem:[%s237 + $0x2180] sm:$0xff]
        %v1554 = vld [vmem:[%s237 + $0x2188] sm:$0xff]
        %v1555 = vld [vmem:[%s237 + $0x2190] sm:$0xff]
        %v1556 = vld [vmem:[%s237 + $0x2198] sm:$0xff]
        %v1557 = vld [vmem:[%s237 + $0x21a0] sm:$0xff]
        %v1558 = vld [vmem:[%s237 + $0x21a8] sm:$0xff]
        %v1559 = vld [vmem:[%s237 + $0x21b0] sm:$0xff]
        %v1560 = vld [vmem:[%s237 + $0x21b8] sm:$0xff]
        %v1561 = vld [vmem:[%s237 + $0x21c0] sm:$0xff]
        %v1562 = vld [vmem:[%s237 + $0x21c8] sm:$0xff]
        %v1563 = vld [vmem:[%s237 + $0x21d0] sm:$0xff]
        %v1564 = vld [vmem:[%s237 + $0x21d8] sm:$0xff]
        %v1565 = vld [vmem:[%s237 + $0x21e0] sm:$0xff]
        %v1566 = vld [vmem:[%s237 + $0x21e8] sm:$0xff]
        %v1567 = vld [vmem:[%s237 + $0x21f0] sm:$0xff]
        %v1568 = vld [vmem:[%s237 + $0x21f8] sm:$0xff]
        %v1569 = vld [vmem:[%s237 + $0x2200] sm:$0xff]
        %v1570 = vld [vmem:[%s237 + $0x2208] sm:$0xff]
        %v1571 = vld [vmem:[%s237 + $0x2210] sm:$0xff]
        %v1572 = vld [vmem:[%s237 + $0x2218] sm:$0xff]
        %v1573 = vld [vmem:[%s237 + $0x2220] sm:$0xff]
        %v1574 = vld [vmem:[%s237 + $0x2228] sm:$0xff]
        %v1575 = vld [vmem:[%s237 + $0x2230] sm:$0xff]
        %v1576 = vld [vmem:[%s237 + $0x2238] sm:$0xff]
        %v1577 = vld [vmem:[%s237 + $0x2240] sm:$0xff]
        %v1578 = vld [vmem:[%s237 + $0x2248] sm:$0xff]
        %v1579 = vld [vmem:[%s237 + $0x2250] sm:$0xff]
        %v1580 = vld [vmem:[%s237 + $0x2258] sm:$0xff]
        %v1581 = vld [vmem:[%s237 + $0x2260] sm:$0xff]
        %v1582 = vld [vmem:[%s237 + $0x2268] sm:$0xff]
        %v1583 = vld [vmem:[%s237 + $0x2270] sm:$0xff]
        %v1584 = vld [vmem:[%s237 + $0x2278] sm:$0xff]
        %v1585 = vld [vmem:[%s237 + $0x2280] sm:$0xff]
        %v1586 = vld [vmem:[%s237 + $0x2288] sm:$0xff]
        %v1587 = vld [vmem:[%s237 + $0x2290] sm:$0xff]
        %v1588 = vld [vmem:[%s237 + $0x2298] sm:$0xff]
        %v1589 = vld [vmem:[%s237 + $0x22a0] sm:$0xff]
        %v1590 = vld [vmem:[%s237 + $0x22a8] sm:$0xff]
        %v1591 = vld [vmem:[%s237 + $0x22b0] sm:$0xff]
        %v1592 = vld [vmem:[%s237 + $0x22b8] sm:$0xff]
        %v1593 = vld [vmem:[%s237 + $0x22c0] sm:$0xff]
        %v1594 = vld [vmem:[%s237 + $0x22c8] sm:$0xff]
        %v1595 = vld [vmem:[%s237 + $0x22d0] sm:$0xff]
        %v1596 = vld [vmem:[%s237 + $0x22d8] sm:$0xff]
        %v1597 = vld [vmem:[%s237 + $0x22e0] sm:$0xff]
        %v1598 = vld [vmem:[%s237 + $0x22e8] sm:$0xff]
        %v1599 = vld [vmem:[%s237 + $0x22f0] sm:$0xff]
        %v1600 = vld [vmem:[%s237 + $0x22f8] sm:$0xff]
        %v1601 = vld [vmem:[%s237 + $0x2300] sm:$0xff]
        %v1602 = vld [vmem:[%s237 + $0x2308] sm:$0xff]
        %v1603 = vld [vmem:[%s237 + $0x2310] sm:$0xff]
        %v1604 = vld [vmem:[%s237 + $0x2318] sm:$0xff]
        %v1605 = vld [vmem:[%s237 + $0x2320] sm:$0xff]
        %v1606 = vld [vmem:[%s237 + $0x2328] sm:$0xff]
        %v1607 = vld [vmem:[%s237 + $0x2330] sm:$0xff]
        %v1608 = vld [vmem:[%s237 + $0x2338] sm:$0xff]
        %v1609 = vld [vmem:[%s237 + $0x2340] sm:$0xff]
        %v1610 = vld [vmem:[%s237 + $0x2348] sm:$0xff]
        %v1611 = vld [vmem:[%s237 + $0x2350] sm:$0xff]
        %v1612 = vld [vmem:[%s237 + $0x2358] sm:$0xff]
        %v1613 = vld [vmem:[%s237 + $0x2360] sm:$0xff]
        %v1614 = vld [vmem:[%s237 + $0x2368] sm:$0xff]
        %v1615 = vld [vmem:[%s237 + $0x2370] sm:$0xff]
        %v1616 = vld [vmem:[%s237 + $0x2378] sm:$0xff]
        %v1617 = vld [vmem:[%s237 + $0x2380] sm:$0xff]
        %v1618 = vld [vmem:[%s237 + $0x2388] sm:$0xff]
        %v1619 = vld [vmem:[%s237 + $0x2390] sm:$0xff]
        %v1620 = vld [vmem:[%s237 + $0x2398] sm:$0xff]
        %v1621 = vld [vmem:[%s237 + $0x23a0] sm:$0xff]
        %v1622 = vld [vmem:[%s237 + $0x23a8] sm:$0xff]
        %v1623 = vld [vmem:[%s237 + $0x23b0] sm:$0xff]
        %v1624 = vld [vmem:[%s237 + $0x23b8] sm:$0xff]
        %v1625 = vld [vmem:[%s237 + $0x23c0] sm:$0xff]
        %v1626 = vld [vmem:[%s237 + $0x23c8] sm:$0xff]
        %v1627 = vld [vmem:[%s237 + $0x23d0] sm:$0xff]
        %v1628 = vld [vmem:[%s237 + $0x23d8] sm:$0xff]
        %v1629 = vld [vmem:[%s237 + $0x23e0] sm:$0xff]
        %v1630 = vld [vmem:[%s237 + $0x23e8] sm:$0xff]
        %v1631 = vld [vmem:[%s237 + $0x23f0] sm:$0xff]
        %v1632 = vld [vmem:[%s237 + $0x23f8] sm:$0xff]
        %v1633 = vld [vmem:[%s237 + $0x2400] sm:$0xff]
        %v1634 = vld [vmem:[%s237 + $0x2408] sm:$0xff]
        %v1635 = vld [vmem:[%s237 + $0x2410] sm:$0xff]
        %v1636 = vld [vmem:[%s237 + $0x2418] sm:$0xff]
        %v1637 = vld [vmem:[%s237 + $0x2420] sm:$0xff]
        %v1638 = vld [vmem:[%s237 + $0x2428] sm:$0xff]
        %v1639 = vld [vmem:[%s237 + $0x2430] sm:$0xff]
        %v1640 = vld [vmem:[%s237 + $0x2438] sm:$0xff]
        %v1641 = vld [vmem:[%s237 + $0x2440] sm:$0xff]
        %v1642 = vld [vmem:[%s237 + $0x2448] sm:$0xff]
        %v1643 = vld [vmem:[%s237 + $0x2450] sm:$0xff]
        %v1644 = vld [vmem:[%s237 + $0x2458] sm:$0xff]
        %v1645 = vld [vmem:[%s237 + $0x2460] sm:$0xff]
        %v1646 = vld [vmem:[%s237 + $0x2468] sm:$0xff]
        %v1647 = vld [vmem:[%s237 + $0x2470] sm:$0xff]
        %v1648 = vld [vmem:[%s237 + $0x2478] sm:$0xff]
        %v1649 = vld [vmem:[%s237 + $0x2480] sm:$0xff]
        %v1650 = vld [vmem:[%s237 + $0x2488] sm:$0xff]
        %v1651 = vld [vmem:[%s237 + $0x2490] sm:$0xff]
        %v1652 = vld [vmem:[%s237 + $0x2498] sm:$0xff]
        %v1653 = vld [vmem:[%s237 + $0x24a0] sm:$0xff]
        %v1654 = vld [vmem:[%s237 + $0x24a8] sm:$0xff]
        %v1655 = vld [vmem:[%s237 + $0x24b0] sm:$0xff]
        %v1656 = vld [vmem:[%s237 + $0x24b8] sm:$0xff]
        %v1657 = vld [vmem:[%s237 + $0x24c0] sm:$0xff]
        %v1658 = vld [vmem:[%s237 + $0x24c8] sm:$0xff]
        %v1659 = vld [vmem:[%s237 + $0x24d0] sm:$0xff]
        %v1660 = vld [vmem:[%s237 + $0x24d8] sm:$0xff]
        %v1661 = vld [vmem:[%s237 + $0x24e0] sm:$0xff]
        %v1662 = vld [vmem:[%s237 + $0x24e8] sm:$0xff]
        %v1663 = vld [vmem:[%s237 + $0x24f0] sm:$0xff]
        %v1664 = vld [vmem:[%s237 + $0x24f8] sm:$0xff]
        %v1665 = vld [vmem:[%s237 + $0x2500] sm:$0xff]
        %v1666 = vld [vmem:[%s237 + $0x2508] sm:$0xff]
        %v1667 = vld [vmem:[%s237 + $0x2510] sm:$0xff]
        %v1668 = vld [vmem:[%s237 + $0x2518] sm:$0xff]
        %v1669 = vld [vmem:[%s237 + $0x2520] sm:$0xff]
        %v1670 = vld [vmem:[%s237 + $0x2528] sm:$0xff]
        %v1671 = vld [vmem:[%s237 + $0x2530] sm:$0xff]
        %v1672 = vld [vmem:[%s237 + $0x2538] sm:$0xff]
        %v1673 = vld [vmem:[%s237 + $0x2540] sm:$0xff]
        %v1674 = vld [vmem:[%s237 + $0x2548] sm:$0xff]
        %v1675 = vld [vmem:[%s237 + $0x2550] sm:$0xff]
        %v1676 = vld [vmem:[%s237 + $0x2558] sm:$0xff]
        %v1677 = vld [vmem:[%s237 + $0x2560] sm:$0xff]
        %v1678 = vld [vmem:[%s237 + $0x2568] sm:$0xff]
        %v1679 = vld [vmem:[%s237 + $0x2570] sm:$0xff]
        %v1680 = vld [vmem:[%s237 + $0x2578] sm:$0xff]
        %v1681 = vld [vmem:[%s237 + $0x2580] sm:$0xff]
        %v1682 = vld [vmem:[%s237 + $0x2588] sm:$0xff]
        %v1683 = vld [vmem:[%s237 + $0x2590] sm:$0xff]
        %v1684 = vld [vmem:[%s237 + $0x2598] sm:$0xff]
        %v1685 = vld [vmem:[%s237 + $0x25a0] sm:$0xff]
        %v1686 = vld [vmem:[%s237 + $0x25a8] sm:$0xff]
        %v1687 = vld [vmem:[%s237 + $0x25b0] sm:$0xff]
        %v1688 = vld [vmem:[%s237 + $0x25b8] sm:$0xff]
        %v1689 = vld [vmem:[%s237 + $0x25c0] sm:$0xff]
        %v1690 = vld [vmem:[%s237 + $0x25c8] sm:$0xff]
        %v1691 = vld [vmem:[%s237 + $0x25d0] sm:$0xff]
        %v1692 = vld [vmem:[%s237 + $0x25d8] sm:$0xff]
        %v1693 = vld [vmem:[%s237 + $0x25e0] sm:$0xff]
        %v1694 = vld [vmem:[%s237 + $0x25e8] sm:$0xff]
        %v1695 = vld [vmem:[%s237 + $0x25f0] sm:$0xff]
        %v1696 = vld [vmem:[%s237 + $0x25f8] sm:$0xff]
        %v1697 = vld [vmem:[%s237 + $0x2600] sm:$0xff]
        %v1698 = vld [vmem:[%s237 + $0x2608] sm:$0xff]
        %v1699 = vld [vmem:[%s237 + $0x2610] sm:$0xff]
        %v1700 = vld [vmem:[%s237 + $0x2618] sm:$0xff]
        %v1701 = vld [vmem:[%s237 + $0x2620] sm:$0xff]
        %v1702 = vld [vmem:[%s237 + $0x2628] sm:$0xff]
        %v1703 = vld [vmem:[%s237 + $0x2630] sm:$0xff]
        %v1704 = vld [vmem:[%s237 + $0x2638] sm:$0xff]
        %v1705 = vld [vmem:[%s237 + $0x2640] sm:$0xff]
        %v1706 = vld [vmem:[%s237 + $0x2648] sm:$0xff]
        %v1707 = vld [vmem:[%s237 + $0x2650] sm:$0xff]
        %v1708 = vld [vmem:[%s237 + $0x2658] sm:$0xff]
        %v1709 = vld [vmem:[%s237 + $0x2660] sm:$0xff]
        %v1710 = vld [vmem:[%s237 + $0x2668] sm:$0xff]
        %v1711 = vld [vmem:[%s237 + $0x2670] sm:$0xff]
        %v1712 = vld [vmem:[%s237 + $0x2678] sm:$0xff]
        %v1713 = vld [vmem:[%s237 + $0x2680] sm:$0xff]
        %v1714 = vld [vmem:[%s237 + $0x2688] sm:$0xff]
        %v1715 = vld [vmem:[%s237 + $0x2690] sm:$0xff]
        %v1716 = vld [vmem:[%s237 + $0x2698] sm:$0xff]
        %v1717 = vld [vmem:[%s237 + $0x26a0] sm:$0xff]
        %v1718 = vld [vmem:[%s237 + $0x26a8] sm:$0xff]
        %v1719 = vld [vmem:[%s237 + $0x26b0] sm:$0xff]
        %v1720 = vld [vmem:[%s237 + $0x26b8] sm:$0xff]
        %v1721 = vld [vmem:[%s237 + $0x26c0] sm:$0xff]
        %v1722 = vld [vmem:[%s237 + $0x26c8] sm:$0xff]
        %v1723 = vld [vmem:[%s237 + $0x26d0] sm:$0xff]
        %v1724 = vld [vmem:[%s237 + $0x26d8] sm:$0xff]
        %v1725 = vld [vmem:[%s237 + $0x26e0] sm:$0xff]
        %v1726 = vld [vmem:[%s237 + $0x26e8] sm:$0xff]
        %v1727 = vld [vmem:[%s237 + $0x26f0] sm:$0xff]
        %v1728 = vld [vmem:[%s237 + $0x26f8] sm:$0xff]
        %v1729 = vld [vmem:[%s237 + $0x2700] sm:$0xff]
        %v1730 = vld [vmem:[%s237 + $0x2708] sm:$0xff]
        %v1731 = vld [vmem:[%s237 + $0x2710] sm:$0xff]
        %v1732 = vld [vmem:[%s237 + $0x2718] sm:$0xff]
        %v1733 = vld [vmem:[%s237 + $0x2720] sm:$0xff]
        %v1734 = vld [vmem:[%s237 + $0x2728] sm:$0xff]
        %v1735 = vld [vmem:[%s237 + $0x2730] sm:$0xff]
        %v1736 = vld [vmem:[%s237 + $0x2738] sm:$0xff]
        %v1737 = vld [vmem:[%s237 + $0x2740] sm:$0xff]
        %v1738 = vld [vmem:[%s237 + $0x2748] sm:$0xff]
        %v1739 = vld [vmem:[%s237 + $0x2750] sm:$0xff]
        %v1740 = vld [vmem:[%s237 + $0x2758] sm:$0xff]
        %v1741 = vld [vmem:[%s237 + $0x2760] sm:$0xff]
        %v1742 = vld [vmem:[%s237 + $0x2768] sm:$0xff]
        %v1743 = vld [vmem:[%s237 + $0x2770] sm:$0xff]
        %v1744 = vld [vmem:[%s237 + $0x2778] sm:$0xff]
        %v1745 = vld [vmem:[%s237 + $0x2780] sm:$0xff]
        %v1746 = vld [vmem:[%s237 + $0x2788] sm:$0xff]
        %v1747 = vld [vmem:[%s237 + $0x2790] sm:$0xff]
        %v1748 = vld [vmem:[%s237 + $0x2798] sm:$0xff]
        %v1749 = vld [vmem:[%s237 + $0x27a0] sm:$0xff]
        %v1750 = vld [vmem:[%s237 + $0x27a8] sm:$0xff]
        %v1751 = vld [vmem:[%s237 + $0x27b0] sm:$0xff]
        %v1752 = vld [vmem:[%s237 + $0x27b8] sm:$0xff]
        %v1753 = vld [vmem:[%s237 + $0x27c0] sm:$0xff]
        %v1754 = vld [vmem:[%s237 + $0x27c8] sm:$0xff]
        %v1755 = vld [vmem:[%s237 + $0x27d0] sm:$0xff]
        %v1756 = vld [vmem:[%s237 + $0x27d8] sm:$0xff]
        %v1757 = vld [vmem:[%s237 + $0x27e0] sm:$0xff]
        %v1758 = vld [vmem:[%s237 + $0x27e8] sm:$0xff]
        %v1759 = vld [vmem:[%s237 + $0x27f0] sm:$0xff]
        %v1760 = vld [vmem:[%s237 + $0x27f8] sm:$0xff]
        %v1761 = vld [vmem:[%s237 + $0x2800] sm:$0xff]
        %v1762 = vld [vmem:[%s237 + $0x2808] sm:$0xff]
        %v1763 = vld [vmem:[%s237 + $0x2810] sm:$0xff]
        %v1764 = vld [vmem:[%s237 + $0x2818] sm:$0xff]
        %v1765 = vld [vmem:[%s237 + $0x2820] sm:$0xff]
        %v1766 = vld [vmem:[%s237 + $0x2828] sm:$0xff]
        %v1767 = vld [vmem:[%s237 + $0x2830] sm:$0xff]
        %v1768 = vld [vmem:[%s237 + $0x2838] sm:$0xff]
        %v1769 = vld [vmem:[%s237 + $0x2840] sm:$0xff]
        %v1770 = vld [vmem:[%s237 + $0x2848] sm:$0xff]
        %v1771 = vld [vmem:[%s237 + $0x2850] sm:$0xff]
        %v1772 = vld [vmem:[%s237 + $0x2858] sm:$0xff]
        %v1773 = vld [vmem:[%s237 + $0x2860] sm:$0xff]
        %v1774 = vld [vmem:[%s237 + $0x2868] sm:$0xff]
        %v1775 = vld [vmem:[%s237 + $0x2870] sm:$0xff]
        %v1776 = vld [vmem:[%s237 + $0x2878] sm:$0xff]
        %v1777 = vld [vmem:[%s237 + $0x2880] sm:$0xff]
        %v1778 = vld [vmem:[%s237 + $0x2888] sm:$0xff]
        %v1779 = vld [vmem:[%s237 + $0x2890] sm:$0xff]
        %v1780 = vld [vmem:[%s237 + $0x2898] sm:$0xff]
        %v1781 = vld [vmem:[%s237 + $0x28a0] sm:$0xff]
        %v1782 = vld [vmem:[%s237 + $0x28a8] sm:$0xff]
        %v1783 = vld [vmem:[%s237 + $0x28b0] sm:$0xff]
        %v1784 = vld [vmem:[%s237 + $0x28b8] sm:$0xff]
        %v1785 = vld [vmem:[%s237 + $0x28c0] sm:$0xff]
        %v1786 = vld [vmem:[%s237 + $0x28c8] sm:$0xff]
        %v1787 = vld [vmem:[%s237 + $0x28d0] sm:$0xff]
        %v1788 = vld [vmem:[%s237 + $0x28d8] sm:$0xff]
        %v1789 = vld [vmem:[%s237 + $0x28e0] sm:$0xff]
        %v1790 = vld [vmem:[%s237 + $0x28e8] sm:$0xff]
        %v1791 = vld [vmem:[%s237 + $0x28f0] sm:$0xff]
        %v1792 = vld [vmem:[%s237 + $0x28f8] sm:$0xff]
        %v1793 = vld [vmem:[%s237 + $0x2900] sm:$0xff]
        %v1794 = vld [vmem:[%s237 + $0x2908] sm:$0xff]
        %v1795 = vld [vmem:[%s237 + $0x2910] sm:$0xff]
        %v1796 = vld [vmem:[%s237 + $0x2918] sm:$0xff]
        %v1797 = vld [vmem:[%s237 + $0x2920] sm:$0xff]
        %v1798 = vld [vmem:[%s237 + $0x2928] sm:$0xff]
        %v1799 = vld [vmem:[%s237 + $0x2930] sm:$0xff]
        %v1800 = vld [vmem:[%s237 + $0x2938] sm:$0xff]
        %v1801 = vld [vmem:[%s237 + $0x2940] sm:$0xff]
        %v1802 = vld [vmem:[%s237 + $0x2948] sm:$0xff]
        %v1803 = vld [vmem:[%s237 + $0x2950] sm:$0xff]
        %v1804 = vld [vmem:[%s237 + $0x2958] sm:$0xff]
        %v1805 = vld [vmem:[%s237 + $0x2960] sm:$0xff]
        %v1806 = vld [vmem:[%s237 + $0x2968] sm:$0xff]
        %v1807 = vld [vmem:[%s237 + $0x2970] sm:$0xff]
        %v1808 = vld [vmem:[%s237 + $0x2978] sm:$0xff]
        %v1809 = vld [vmem:[%s237 + $0x2980] sm:$0xff]
        %v1810 = vld [vmem:[%s237 + $0x2988] sm:$0xff]
        %v1811 = vld [vmem:[%s237 + $0x2990] sm:$0xff]
        %v1812 = vld [vmem:[%s237 + $0x2998] sm:$0xff]
        %v1813 = vld [vmem:[%s237 + $0x29a0] sm:$0xff]
        %v1814 = vld [vmem:[%s237 + $0x29a8] sm:$0xff]
        %v1815 = vld [vmem:[%s237 + $0x29b0] sm:$0xff]
        %v1816 = vld [vmem:[%s237 + $0x29b8] sm:$0xff]
        %v1817 = vld [vmem:[%s237 + $0x29c0] sm:$0xff]
        %v1818 = vld [vmem:[%s237 + $0x29c8] sm:$0xff]
        %v1819 = vld [vmem:[%s237 + $0x29d0] sm:$0xff]
        %v1820 = vld [vmem:[%s237 + $0x29d8] sm:$0xff]
        %v1821 = vld [vmem:[%s237 + $0x29e0] sm:$0xff]
        %v1822 = vld [vmem:[%s237 + $0x29e8] sm:$0xff]
        %v1823 = vld [vmem:[%s237 + $0x29f0] sm:$0xff]
        %v1824 = vld [vmem:[%s237 + $0x29f8] sm:$0xff]
        %v1825 = vld [vmem:[%s237 + $0x2a00] sm:$0xff]
        %v1826 = vld [vmem:[%s237 + $0x2a08] sm:$0xff]
        %v1827 = vld [vmem:[%s237 + $0x2a10] sm:$0xff]
        %v1828 = vld [vmem:[%s237 + $0x2a18] sm:$0xff]
        %v1829 = vld [vmem:[%s237 + $0x2a20] sm:$0xff]
        %v1830 = vld [vmem:[%s237 + $0x2a28] sm:$0xff]
        %v1831 = vld [vmem:[%s237 + $0x2a30] sm:$0xff]
        %v1832 = vld [vmem:[%s237 + $0x2a38] sm:$0xff]
        %v1833 = vld [vmem:[%s237 + $0x2a40] sm:$0xff]
        %v1834 = vld [vmem:[%s237 + $0x2a48] sm:$0xff]
        %v1835 = vld [vmem:[%s237 + $0x2a50] sm:$0xff]
        %v1836 = vld [vmem:[%s237 + $0x2a58] sm:$0xff]
        %v1837 = vld [vmem:[%s237 + $0x2a60] sm:$0xff]
        %v1838 = vld [vmem:[%s237 + $0x2a68] sm:$0xff]
        %v1839 = vld [vmem:[%s237 + $0x2a70] sm:$0xff]
        %v1840 = vld [vmem:[%s237 + $0x2a78] sm:$0xff]
        %v1841 = vld [vmem:[%s237 + $0x2a80] sm:$0xff]
        %v1842 = vld [vmem:[%s237 + $0x2a88] sm:$0xff]
        %v1843 = vld [vmem:[%s237 + $0x2a90] sm:$0xff]
        %v1844 = vld [vmem:[%s237 + $0x2a98] sm:$0xff]
        %v1845 = vld [vmem:[%s237 + $0x2aa0] sm:$0xff]
        %v1846 = vld [vmem:[%s237 + $0x2aa8] sm:$0xff]
        %v1847 = vld [vmem:[%s237 + $0x2ab0] sm:$0xff]
        %v1848 = vld [vmem:[%s237 + $0x2ab8] sm:$0xff]
        %v1849 = vld [vmem:[%s237 + $0x2ac0] sm:$0xff]
        %v1850 = vld [vmem:[%s237 + $0x2ac8] sm:$0xff]
        %v1851 = vld [vmem:[%s237 + $0x2ad0] sm:$0xff]
        %v1852 = vld [vmem:[%s237 + $0x2ad8] sm:$0xff]
        %v1853 = vld [vmem:[%s237 + $0x2ae0] sm:$0xff]
        %v1854 = vld [vmem:[%s237 + $0x2ae8] sm:$0xff]
        %v1855 = vld [vmem:[%s237 + $0x2af0] sm:$0xff]
        %v1856 = vld [vmem:[%s237 + $0x2af8] sm:$0xff]
        %v1857 = vld [vmem:[%s237 + $0x2b00] sm:$0xff]
        %v1858 = vld [vmem:[%s237 + $0x2b08] sm:$0xff]
        %v1859 = vld [vmem:[%s237 + $0x2b10] sm:$0xff]
        %v1860 = vld [vmem:[%s237 + $0x2b18] sm:$0xff]
        %v1861 = vld [vmem:[%s237 + $0x2b20] sm:$0xff]
        %v1862 = vld [vmem:[%s237 + $0x2b28] sm:$0xff]
        %v1863 = vld [vmem:[%s237 + $0x2b30] sm:$0xff]
        %v1864 = vld [vmem:[%s237 + $0x2b38] sm:$0xff]
        %v1865 = vld [vmem:[%s237 + $0x2b40] sm:$0xff]
        %v1866 = vld [vmem:[%s237 + $0x2b48] sm:$0xff]
        %v1867 = vld [vmem:[%s237 + $0x2b50] sm:$0xff]
        %v1868 = vld [vmem:[%s237 + $0x2b58] sm:$0xff]
        %v1869 = vld [vmem:[%s237 + $0x2b60] sm:$0xff]
        %v1870 = vld [vmem:[%s237 + $0x2b68] sm:$0xff]
        %v1871 = vld [vmem:[%s237 + $0x2b70] sm:$0xff]
        %v1872 = vld [vmem:[%s237 + $0x2b78] sm:$0xff]
        %v1873 = vld [vmem:[%s237 + $0x2b80] sm:$0xff]
        %v1874 = vld [vmem:[%s237 + $0x2b88] sm:$0xff]
        %v1875 = vld [vmem:[%s237 + $0x2b90] sm:$0xff]
        %v1876 = vld [vmem:[%s237 + $0x2b98] sm:$0xff]
        %v1877 = vld [vmem:[%s237 + $0x2ba0] sm:$0xff]
        %v1878 = vld [vmem:[%s237 + $0x2ba8] sm:$0xff]
        %v1879 = vld [vmem:[%s237 + $0x2bb0] sm:$0xff]
        %v1880 = vld [vmem:[%s237 + $0x2bb8] sm:$0xff]
        %v1881 = vld [vmem:[%s237 + $0x2bc0] sm:$0xff]
        %v1882 = vld [vmem:[%s237 + $0x2bc8] sm:$0xff]
        %v1883 = vld [vmem:[%s237 + $0x2bd0] sm:$0xff]
        %v1884 = vld [vmem:[%s237 + $0x2bd8] sm:$0xff]
        %v1885 = vld [vmem:[%s237 + $0x2be0] sm:$0xff]
        %v1886 = vld [vmem:[%s237 + $0x2be8] sm:$0xff]
        %v1887 = vld [vmem:[%s237 + $0x2bf0] sm:$0xff]
        %v1888 = vld [vmem:[%s237 + $0x2bf8] sm:$0xff]
        %v1889 = vld [vmem:[%s237 + $0x2c00] sm:$0xff]
        %v1890 = vld [vmem:[%s237 + $0x2c08] sm:$0xff]
        %v1891 = vld [vmem:[%s237 + $0x2c10] sm:$0xff]
        %v1892 = vld [vmem:[%s237 + $0x2c18] sm:$0xff]
        %v1893 = vld [vmem:[%s237 + $0x2c20] sm:$0xff]
        %v1894 = vld [vmem:[%s237 + $0x2c28] sm:$0xff]
        %v1895 = vld [vmem:[%s237 + $0x2c30] sm:$0xff]
        %v1896 = vld [vmem:[%s237 + $0x2c38] sm:$0xff]
        %v1897 = vld [vmem:[%s237 + $0x2c40] sm:$0xff]
        %v1898 = vld [vmem:[%s237 + $0x2c48] sm:$0xff]
        %v1899 = vld [vmem:[%s237 + $0x2c50] sm:$0xff]
        %v1900 = vld [vmem:[%s237 + $0x2c58] sm:$0xff]
        %v1901 = vld [vmem:[%s237 + $0x2c60] sm:$0xff]
        %v1902 = vld [vmem:[%s237 + $0x2c68] sm:$0xff]
        %v1903 = vld [vmem:[%s237 + $0x2c70] sm:$0xff]
        %v1904 = vld [vmem:[%s237 + $0x2c78] sm:$0xff]
        %v1905 = vld [vmem:[%s237 + $0x2c80] sm:$0xff]
        %v1906 = vld [vmem:[%s237 + $0x2c88] sm:$0xff]
        %v1907 = vld [vmem:[%s237 + $0x2c90] sm:$0xff]
        %v1908 = vld [vmem:[%s237 + $0x2c98] sm:$0xff]
        %v1909 = vld [vmem:[%s237 + $0x2ca0] sm:$0xff]
        %v1910 = vld [vmem:[%s237 + $0x2ca8] sm:$0xff]
        %v1911 = vld [vmem:[%s237 + $0x2cb0] sm:$0xff]
        %v1912 = vld [vmem:[%s237 + $0x2cb8] sm:$0xff]
        %v1913 = vld [vmem:[%s237 + $0x2cc0] sm:$0xff]
        %v1914 = vld [vmem:[%s237 + $0x2cc8] sm:$0xff]
        %v1915 = vld [vmem:[%s237 + $0x2cd0] sm:$0xff]
        %v1916 = vld [vmem:[%s237 + $0x2cd8] sm:$0xff]
        %v1917 = vld [vmem:[%s237 + $0x2ce0] sm:$0xff]
        %v1918 = vld [vmem:[%s237 + $0x2ce8] sm:$0xff]
        %v1919 = vld [vmem:[%s237 + $0x2cf0] sm:$0xff]
        %v1920 = vld [vmem:[%s237 + $0x2cf8] sm:$0xff]
        %v1921 = vld [vmem:[%s237 + $0x2d00] sm:$0xff]
        %v1922 = vld [vmem:[%s237 + $0x2d08] sm:$0xff]
        %v1923 = vld [vmem:[%s237 + $0x2d10] sm:$0xff]
        %v1924 = vld [vmem:[%s237 + $0x2d18] sm:$0xff]
        %v1925 = vld [vmem:[%s237 + $0x2d20] sm:$0xff]
        %v1926 = vld [vmem:[%s237 + $0x2d28] sm:$0xff]
        %v1927 = vld [vmem:[%s237 + $0x2d30] sm:$0xff]
        %v1928 = vld [vmem:[%s237 + $0x2d38] sm:$0xff]
        %v1929 = vld [vmem:[%s237 + $0x2d40] sm:$0xff]
        %v1930 = vld [vmem:[%s237 + $0x2d48] sm:$0xff]
        %v1931 = vld [vmem:[%s237 + $0x2d50] sm:$0xff]
        %v1932 = vld [vmem:[%s237 + $0x2d58] sm:$0xff]
        %v1933 = vld [vmem:[%s237 + $0x2d60] sm:$0xff]
        %v1934 = vld [vmem:[%s237 + $0x2d68] sm:$0xff]
        %v1935 = vld [vmem:[%s237 + $0x2d70] sm:$0xff]
        %v1936 = vld [vmem:[%s237 + $0x2d78] sm:$0xff]
        %v1937 = vld [vmem:[%s237 + $0x2d80] sm:$0xff]
        %v1938 = vld [vmem:[%s237 + $0x2d88] sm:$0xff]
        %v1939 = vld [vmem:[%s237 + $0x2d90] sm:$0xff]
        %v1940 = vld [vmem:[%s237 + $0x2d98] sm:$0xff]
        %v1941 = vld [vmem:[%s237 + $0x2da0] sm:$0xff]
        %v1942 = vld [vmem:[%s237 + $0x2da8] sm:$0xff]
        %v1943 = vld [vmem:[%s237 + $0x2db0] sm:$0xff]
        %v1944 = vld [vmem:[%s237 + $0x2db8] sm:$0xff]
        %v1945 = vld [vmem:[%s237 + $0x2dc0] sm:$0xff]
        %v1946 = vld [vmem:[%s237 + $0x2dc8] sm:$0xff]
        %v1947 = vld [vmem:[%s237 + $0x2dd0] sm:$0xff]
        %v1948 = vld [vmem:[%s237 + $0x2dd8] sm:$0xff]
        %v1949 = vld [vmem:[%s237 + $0x2de0] sm:$0xff]
        %v1950 = vld [vmem:[%s237 + $0x2de8] sm:$0xff]
        %v1951 = vld [vmem:[%s237 + $0x2df0] sm:$0xff]
        %v1952 = vld [vmem:[%s237 + $0x2df8] sm:$0xff]
        %v1953 = vld [vmem:[%s237 + $0x2e00] sm:$0xff]
        %v1954 = vld [vmem:[%s237 + $0x2e08] sm:$0xff]
        %v1955 = vld [vmem:[%s237 + $0x2e10] sm:$0xff]
        %v1956 = vld [vmem:[%s237 + $0x2e18] sm:$0xff]
        %v1957 = vld [vmem:[%s237 + $0x2e20] sm:$0xff]
        %v1958 = vld [vmem:[%s237 + $0x2e28] sm:$0xff]
        %v1959 = vld [vmem:[%s237 + $0x2e30] sm:$0xff]
        %v1960 = vld [vmem:[%s237 + $0x2e38] sm:$0xff]
        %v1961 = vld [vmem:[%s237 + $0x2e40] sm:$0xff]
        %v1962 = vld [vmem:[%s237 + $0x2e48] sm:$0xff]
        %v1963 = vld [vmem:[%s237 + $0x2e50] sm:$0xff]
        %v1964 = vld [vmem:[%s237 + $0x2e58] sm:$0xff]
        %v1965 = vld [vmem:[%s237 + $0x2e60] sm:$0xff]
        %v1966 = vld [vmem:[%s237 + $0x2e68] sm:$0xff]
        %v1967 = vld [vmem:[%s237 + $0x2e70] sm:$0xff]
        %v1968 = vld [vmem:[%s237 + $0x2e78] sm:$0xff]
        %v1969 = vld [vmem:[%s237 + $0x2e80] sm:$0xff]
        %v1970 = vld [vmem:[%s237 + $0x2e88] sm:$0xff]
        %v1971 = vld [vmem:[%s237 + $0x2e90] sm:$0xff]
        %v1972 = vld [vmem:[%s237 + $0x2e98] sm:$0xff]
        %v1973 = vld [vmem:[%s237 + $0x2ea0] sm:$0xff]
        %v1974 = vld [vmem:[%s237 + $0x2ea8] sm:$0xff]
        %v1975 = vld [vmem:[%s237 + $0x2eb0] sm:$0xff]
        %v1976 = vld [vmem:[%s237 + $0x2eb8] sm:$0xff]
        %v1977 = vld [vmem:[%s237 + $0x2ec0] sm:$0xff]
        %v1978 = vld [vmem:[%s237 + $0x2ec8] sm:$0xff]
        %v1979 = vld [vmem:[%s237 + $0x2ed0] sm:$0xff]
        %v1980 = vld [vmem:[%s237 + $0x2ed8] sm:$0xff]
        %v1981 = vld [vmem:[%s237 + $0x2ee0] sm:$0xff]
        %v1982 = vld [vmem:[%s237 + $0x2ee8] sm:$0xff]
        %v1983 = vld [vmem:[%s237 + $0x2ef0] sm:$0xff]
        %v1984 = vld [vmem:[%s237 + $0x2ef8] sm:$0xff]
        %v1985 = vld [vmem:[%s237 + $0x2f00] sm:$0xff]
        %v1986 = vld [vmem:[%s237 + $0x2f08] sm:$0xff]
        %v1987 = vld [vmem:[%s237 + $0x2f10] sm:$0xff]
        %v1988 = vld [vmem:[%s237 + $0x2f18] sm:$0xff]
        %v1989 = vld [vmem:[%s237 + $0x2f20] sm:$0xff]
        %v1990 = vld [vmem:[%s237 + $0x2f28] sm:$0xff]
        %v1991 = vld [vmem:[%s237 + $0x2f30] sm:$0xff]
        %v1992 = vld [vmem:[%s237 + $0x2f38] sm:$0xff]
        %v1993 = vld [vmem:[%s237 + $0x2f40] sm:$0xff]
        %v1994 = vld [vmem:[%s237 + $0x2f48] sm:$0xff]
        %v1995 = vld [vmem:[%s237 + $0x2f50] sm:$0xff]
        %v1996 = vld [vmem:[%s237 + $0x2f58] sm:$0xff]
        %v1997 = vld [vmem:[%s237 + $0x2f60] sm:$0xff]
        %v1998 = vld [vmem:[%s237 + $0x2f68] sm:$0xff]
        %v1999 = vld [vmem:[%s237 + $0x2f70] sm:$0xff]
        %v2000 = vld [vmem:[%s237 + $0x2f78] sm:$0xff]
        %v2001 = vld [vmem:[%s237 + $0x2f80] sm:$0xff]
        %v2002 = vld [vmem:[%s237 + $0x2f88] sm:$0xff]
        %v2003 = vld [vmem:[%s237 + $0x2f90] sm:$0xff]
        %v2004 = vld [vmem:[%s237 + $0x2f98] sm:$0xff]
        %v2005 = vld [vmem:[%s237 + $0x2fa0] sm:$0xff]
        %v2006 = vld [vmem:[%s237 + $0x2fa8] sm:$0xff]
        %v2007 = vld [vmem:[%s237 + $0x2fb0] sm:$0xff]
        %v2008 = vld [vmem:[%s237 + $0x2fb8] sm:$0xff]
        %v2009 = vld [vmem:[%s237 + $0x2fc0] sm:$0xff]
        %v2010 = vld [vmem:[%s237 + $0x2fc8] sm:$0xff]
        %v2011 = vld [vmem:[%s237 + $0x2fd0] sm:$0xff]
        %v2012 = vld [vmem:[%s237 + $0x2fd8] sm:$0xff]
        %v2013 = vld [vmem:[%s237 + $0x2fe0] sm:$0xff]
        %v2014 = vld [vmem:[%s237 + $0x2fe8] sm:$0xff]
        %v2015 = vld [vmem:[%s237 + $0x2ff0] sm:$0xff]
        %v2016 = vld [vmem:[%s237 + $0x2ff8] sm:$0xff]
        %v2017 = vld [vmem:[%s237 + $0x3000] sm:$0xff]
        %v2018 = vld [vmem:[%s237 + $0x3008] sm:$0xff]
        %v2019 = vld [vmem:[%s237 + $0x3010] sm:$0xff]
        %v2020 = vld [vmem:[%s237 + $0x3018] sm:$0xff]
        %v2021 = vld [vmem:[%s237 + $0x3020] sm:$0xff]
        %v2022 = vld [vmem:[%s237 + $0x3028] sm:$0xff]
        %v2023 = vld [vmem:[%s237 + $0x3030] sm:$0xff]
        %v2024 = vld [vmem:[%s237 + $0x3038] sm:$0xff]
        %v2025 = vld [vmem:[%s237 + $0x3040] sm:$0xff]
        %v2026 = vld [vmem:[%s237 + $0x3048] sm:$0xff]
        %v2027 = vld [vmem:[%s237 + $0x3050] sm:$0xff]
        %v2028 = vld [vmem:[%s237 + $0x3058] sm:$0xff]
        %v2029 = vld [vmem:[%s237 + $0x3060] sm:$0xff]
        %v2030 = vld [vmem:[%s237 + $0x3068] sm:$0xff]
        %v2031 = vld [vmem:[%s237 + $0x3070] sm:$0xff]
        %v2032 = vld [vmem:[%s237 + $0x3078] sm:$0xff]
        %v2033 = vld [vmem:[%s237 + $0x3080] sm:$0xff]
        %v2034 = vld [vmem:[%s237 + $0x3088] sm:$0xff]
        %v2035 = vld [vmem:[%s237 + $0x3090] sm:$0xff]
        %v2036 = vld [vmem:[%s237 + $0x3098] sm:$0xff]
        %v2037 = vld [vmem:[%s237 + $0x30a0] sm:$0xff]
        %v2038 = vld [vmem:[%s237 + $0x30a8] sm:$0xff]
        %v2039 = vld [vmem:[%s237 + $0x30b0] sm:$0xff]
        %v2040 = vld [vmem:[%s237 + $0x30b8] sm:$0xff]
        %v2041 = vld [vmem:[%s237 + $0x30c0] sm:$0xff]
        %v2042 = vld [vmem:[%s237 + $0x30c8] sm:$0xff]
        %v2043 = vld [vmem:[%s237 + $0x30d0] sm:$0xff]
        %v2044 = vld [vmem:[%s237 + $0x30d8] sm:$0xff]
        %v2045 = vld [vmem:[%s237 + $0x30e0] sm:$0xff]
        %v2046 = vld [vmem:[%s237 + $0x30e8] sm:$0xff]
        %v2047 = vld [vmem:[%s237 + $0x30f0] sm:$0xff]
        %v2048 = vld [vmem:[%s237 + $0x30f8] sm:$0xff]
        %v2049 = vld [vmem:[%s237 + $0x3100] sm:$0xff]
        %v2050 = vld [vmem:[%s237 + $0x3108] sm:$0xff]
        %v2051 = vld [vmem:[%s237 + $0x3110] sm:$0xff]
        %v2052 = vld [vmem:[%s237 + $0x3118] sm:$0xff]
        %v2053 = vld [vmem:[%s237 + $0x3120] sm:$0xff]
        %v2054 = vld [vmem:[%s237 + $0x3128] sm:$0xff]
        %v2055 = vld [vmem:[%s237 + $0x3130] sm:$0xff]
        %v2056 = vld [vmem:[%s237 + $0x3138] sm:$0xff]
        %v2057 = vld [vmem:[%s237 + $0x3140] sm:$0xff]
        %v2058 = vld [vmem:[%s237 + $0x3148] sm:$0xff]
        %v2059 = vld [vmem:[%s237 + $0x3150] sm:$0xff]
        %v2060 = vld [vmem:[%s237 + $0x3158] sm:$0xff]
        %v2061 = vld [vmem:[%s237 + $0x3160] sm:$0xff]
        %v2062 = vld [vmem:[%s237 + $0x3168] sm:$0xff]
        %v2063 = vld [vmem:[%s237 + $0x3170] sm:$0xff]
        %v2064 = vld [vmem:[%s237 + $0x3178] sm:$0xff]
        %v2065 = vld [vmem:[%s237 + $0x3180] sm:$0xff]
        %v2066 = vld [vmem:[%s237 + $0x3188] sm:$0xff]
        %v2067 = vld [vmem:[%s237 + $0x3190] sm:$0xff]
        %v2068 = vld [vmem:[%s237 + $0x3198] sm:$0xff]
        %v2069 = vld [vmem:[%s237 + $0x31a0] sm:$0xff]
        %v2070 = vld [vmem:[%s237 + $0x31a8] sm:$0xff]
        %v2071 = vld [vmem:[%s237 + $0x31b0] sm:$0xff]
        %v2072 = vld [vmem:[%s237 + $0x31b8] sm:$0xff]
        %v2073 = vld [vmem:[%s237 + $0x31c0] sm:$0xff]
        %v2074 = vld [vmem:[%s237 + $0x31c8] sm:$0xff]
        %v2075 = vld [vmem:[%s237 + $0x31d0] sm:$0xff]
        %v2076 = vld [vmem:[%s237 + $0x31d8] sm:$0xff]
        %v2077 = vld [vmem:[%s237 + $0x31e0] sm:$0xff]
        %v2078 = vld [vmem:[%s237 + $0x31e8] sm:$0xff]
        %v2079 = vld [vmem:[%s237 + $0x31f0] sm:$0xff]
        %v2080 = vld [vmem:[%s237 + $0x31f8] sm:$0xff]
        %v2081 = vld [vmem:[%s237 + $0x3200] sm:$0xff]
        %v2082 = vld [vmem:[%s237 + $0x3208] sm:$0xff]
        %v2083 = vld [vmem:[%s237 + $0x3210] sm:$0xff]
        %v2084 = vld [vmem:[%s237 + $0x3218] sm:$0xff]
        %v2085 = vld [vmem:[%s237 + $0x3220] sm:$0xff]
        %v2086 = vld [vmem:[%s237 + $0x3228] sm:$0xff]
        %v2087 = vld [vmem:[%s237 + $0x3230] sm:$0xff]
        %v2088 = vld [vmem:[%s237 + $0x3238] sm:$0xff]
        %v2089 = vld [vmem:[%s237 + $0x3240] sm:$0xff]
        %v2090 = vld [vmem:[%s237 + $0x3248] sm:$0xff]
        %v2091 = vld [vmem:[%s237 + $0x3250] sm:$0xff]
        %v2092 = vld [vmem:[%s237 + $0x3258] sm:$0xff]
        %v2093 = vld [vmem:[%s237 + $0x3260] sm:$0xff]
        %v2094 = vld [vmem:[%s237 + $0x3268] sm:$0xff]
        %v2095 = vld [vmem:[%s237 + $0x3270] sm:$0xff]
        %v2096 = vld [vmem:[%s237 + $0x3278] sm:$0xff]
        %v2097 = vld [vmem:[%s237 + $0x3280] sm:$0xff]
        %v2098 = vld [vmem:[%s237 + $0x3288] sm:$0xff]
        %v2099 = vld [vmem:[%s237 + $0x3290] sm:$0xff]
        %v2100 = vld [vmem:[%s237 + $0x3298] sm:$0xff]
        %v2101 = vld [vmem:[%s237 + $0x32a0] sm:$0xff]
        %v2102 = vld [vmem:[%s237 + $0x32a8] sm:$0xff]
        %v2103 = vld [vmem:[%s237 + $0x32b0] sm:$0xff]
        %v2104 = vld [vmem:[%s237 + $0x32b8] sm:$0xff]
        %v2105 = vld [vmem:[%s237 + $0x32c0] sm:$0xff]
        %v2106 = vld [vmem:[%s237 + $0x32c8] sm:$0xff]
        %v2107 = vld [vmem:[%s237 + $0x32d0] sm:$0xff]
        %v2108 = vld [vmem:[%s237 + $0x32d8] sm:$0xff]
        %v2109 = vld [vmem:[%s237 + $0x32e0] sm:$0xff]
        %v2110 = vld [vmem:[%s237 + $0x32e8] sm:$0xff]
        %v2111 = vld [vmem:[%s237 + $0x32f0] sm:$0xff]
        %v2112 = vld [vmem:[%s237 + $0x32f8] sm:$0xff]
        %v2113 = vld [vmem:[%s237 + $0x3300] sm:$0xff]
        %v2114 = vld [vmem:[%s237 + $0x3308] sm:$0xff]
        %v2115 = vld [vmem:[%s237 + $0x3310] sm:$0xff]
        %v2116 = vld [vmem:[%s237 + $0x3318] sm:$0xff]
        %v2117 = vld [vmem:[%s237 + $0x3320] sm:$0xff]
        %v2118 = vld [vmem:[%s237 + $0x3328] sm:$0xff]
        %v2119 = vld [vmem:[%s237 + $0x3330] sm:$0xff]
        %v2120 = vld [vmem:[%s237 + $0x3338] sm:$0xff]
        %v2121 = vld [vmem:[%s237 + $0x3340] sm:$0xff]
        %v2122 = vld [vmem:[%s237 + $0x3348] sm:$0xff]
        %v2123 = vld [vmem:[%s237 + $0x3350] sm:$0xff]
        %v2124 = vld [vmem:[%s237 + $0x3358] sm:$0xff]
        %v2125 = vld [vmem:[%s237 + $0x3360] sm:$0xff]
        %v2126 = vld [vmem:[%s237 + $0x3368] sm:$0xff]
        %v2127 = vld [vmem:[%s237 + $0x3370] sm:$0xff]
        %v2128 = vld [vmem:[%s237 + $0x3378] sm:$0xff]
        %v2129 = vld [vmem:[%s237 + $0x3380] sm:$0xff]
        %v2130 = vld [vmem:[%s237 + $0x3388] sm:$0xff]
        %v2131 = vld [vmem:[%s237 + $0x3390] sm:$0xff]
        %v2132 = vld [vmem:[%s237 + $0x3398] sm:$0xff]
        %v2133 = vld [vmem:[%s237 + $0x33a0] sm:$0xff]
        %v2134 = vld [vmem:[%s237 + $0x33a8] sm:$0xff]
        %v2135 = vld [vmem:[%s237 + $0x33b0] sm:$0xff]
        %v2136 = vld [vmem:[%s237 + $0x33b8] sm:$0xff]
        %v2137 = vld [vmem:[%s237 + $0x33c0] sm:$0xff]
        %v2138 = vld [vmem:[%s237 + $0x33c8] sm:$0xff]
        %v2139 = vld [vmem:[%s237 + $0x33d0] sm:$0xff]
        %v2140 = vld [vmem:[%s237 + $0x33d8] sm:$0xff]
        %v2141 = vld [vmem:[%s237 + $0x33e0] sm:$0xff]
        %v2142 = vld [vmem:[%s237 + $0x33e8] sm:$0xff]
        %v2143 = vld [vmem:[%s237 + $0x33f0] sm:$0xff]
        %v2144 = vld [vmem:[%s237 + $0x33f8] sm:$0xff]
        %v2145 = vld [vmem:[%s237 + $0x3400] sm:$0xff]
        %v2146 = vld [vmem:[%s237 + $0x3408] sm:$0xff]
        %v2147 = vld [vmem:[%s237 + $0x3410] sm:$0xff]
        %v2148 = vld [vmem:[%s237 + $0x3418] sm:$0xff]
        %v2149 = vld [vmem:[%s237 + $0x3420] sm:$0xff]
        %v2150 = vld [vmem:[%s237 + $0x3428] sm:$0xff]
        %v2151 = vld [vmem:[%s237 + $0x3430] sm:$0xff]
        %v2152 = vld [vmem:[%s237 + $0x3438] sm:$0xff]
        %v2153 = vld [vmem:[%s237 + $0x3440] sm:$0xff]
        %v2154 = vld [vmem:[%s237 + $0x3448] sm:$0xff]
        %v2155 = vld [vmem:[%s237 + $0x3450] sm:$0xff]
        %v2156 = vld [vmem:[%s237 + $0x3458] sm:$0xff]
        %v2157 = vld [vmem:[%s237 + $0x3460] sm:$0xff]
        %v2158 = vld [vmem:[%s237 + $0x3468] sm:$0xff]
        %v2159 = vld [vmem:[%s237 + $0x3470] sm:$0xff]
        %v2160 = vld [vmem:[%s237 + $0x3478] sm:$0xff]
        %v2161 = vld [vmem:[%s237 + $0x3480] sm:$0xff]
        %v2162 = vld [vmem:[%s237 + $0x3488] sm:$0xff]
        %v2163 = vld [vmem:[%s237 + $0x3490] sm:$0xff]
        %v2164 = vld [vmem:[%s237 + $0x3498] sm:$0xff]
        %v2165 = vld [vmem:[%s237 + $0x34a0] sm:$0xff]
        %v2166 = vld [vmem:[%s237 + $0x34a8] sm:$0xff]
        %v2167 = vld [vmem:[%s237 + $0x34b0] sm:$0xff]
        %v2168 = vld [vmem:[%s237 + $0x34b8] sm:$0xff]
        %v2169 = vld [vmem:[%s237 + $0x34c0] sm:$0xff]
        %v2170 = vld [vmem:[%s237 + $0x34c8] sm:$0xff]
        %v2171 = vld [vmem:[%s237 + $0x34d0] sm:$0xff]
        %v2172 = vld [vmem:[%s237 + $0x34d8] sm:$0xff]
        %v2173 = vld [vmem:[%s237 + $0x34e0] sm:$0xff]
        %v2174 = vld [vmem:[%s237 + $0x34e8] sm:$0xff]
        %v2175 = vld [vmem:[%s237 + $0x34f0] sm:$0xff]
        %v2176 = vld [vmem:[%s237 + $0x34f8] sm:$0xff]
        %v2177 = vld [vmem:[%s237 + $0x3500] sm:$0xff]
        %v2178 = vld [vmem:[%s237 + $0x3508] sm:$0xff]
        %v2179 = vld [vmem:[%s237 + $0x3510] sm:$0xff]
        %v2180 = vld [vmem:[%s237 + $0x3518] sm:$0xff]
        %v2181 = vld [vmem:[%s237 + $0x3520] sm:$0xff]
        %v2182 = vld [vmem:[%s237 + $0x3528] sm:$0xff]
        %v2183 = vld [vmem:[%s237 + $0x3530] sm:$0xff]
        %v2184 = vld [vmem:[%s237 + $0x3538] sm:$0xff]
        %v2185 = vld [vmem:[%s237 + $0x3540] sm:$0xff]
        %v2186 = vld [vmem:[%s237 + $0x3548] sm:$0xff]
        %v2187 = vld [vmem:[%s237 + $0x3550] sm:$0xff]
        %v2188 = vld [vmem:[%s237 + $0x3558] sm:$0xff]
        %v2189 = vld [vmem:[%s237 + $0x3560] sm:$0xff]
        %v2190 = vld [vmem:[%s237 + $0x3568] sm:$0xff]
        %v2191 = vld [vmem:[%s237 + $0x3570] sm:$0xff]
        %v2192 = vld [vmem:[%s237 + $0x3578] sm:$0xff]
        %v2193 = vld [vmem:[%s237 + $0x3580] sm:$0xff]
        %v2194 = vld [vmem:[%s237 + $0x3588] sm:$0xff]
        %v2195 = vld [vmem:[%s237 + $0x3590] sm:$0xff]
        %v2196 = vld [vmem:[%s237 + $0x3598] sm:$0xff]
        %v2197 = vld [vmem:[%s237 + $0x35a0] sm:$0xff]
        %v2198 = vld [vmem:[%s237 + $0x35a8] sm:$0xff]
        %v2199 = vld [vmem:[%s237 + $0x35b0] sm:$0xff]
        %v2200 = vld [vmem:[%s237 + $0x35b8] sm:$0xff]
        %v2201 = vld [vmem:[%s237 + $0x35c0] sm:$0xff]
        %v2202 = vld [vmem:[%s237 + $0x35c8] sm:$0xff]
        %v2203 = vld [vmem:[%s237 + $0x35d0] sm:$0xff]
        %v2204 = vld [vmem:[%s237 + $0x35d8] sm:$0xff]
        %v2205 = vld [vmem:[%s237 + $0x35e0] sm:$0xff]
        %v2206 = vld [vmem:[%s237 + $0x35e8] sm:$0xff]
        %v2207 = vld [vmem:[%s237 + $0x35f0] sm:$0xff]
        %v2208 = vld [vmem:[%s237 + $0x35f8] sm:$0xff]
        %v2209 = vld [vmem:[%s237 + $0x3600] sm:$0xff]
        %v2210 = vld [vmem:[%s237 + $0x3608] sm:$0xff]
        %v2211 = vld [vmem:[%s237 + $0x3610] sm:$0xff]
        %v2212 = vld [vmem:[%s237 + $0x3618] sm:$0xff]
        %v2213 = vld [vmem:[%s237 + $0x3620] sm:$0xff]
        %v2214 = vld [vmem:[%s237 + $0x3628] sm:$0xff]
        %v2215 = vld [vmem:[%s237 + $0x3630] sm:$0xff]
        %v2216 = vld [vmem:[%s237 + $0x3638] sm:$0xff]
        %v2217 = vld [vmem:[%s237 + $0x3640] sm:$0xff]
        %v2218 = vld [vmem:[%s237 + $0x3648] sm:$0xff]
        %v2219 = vld [vmem:[%s237 + $0x3650] sm:$0xff]
        %v2220 = vld [vmem:[%s237 + $0x3658] sm:$0xff]
        %v2221 = vld [vmem:[%s237 + $0x3660] sm:$0xff]
        %v2222 = vld [vmem:[%s237 + $0x3668] sm:$0xff]
        %v2223 = vld [vmem:[%s237 + $0x3670] sm:$0xff]
        %v2224 = vld [vmem:[%s237 + $0x3678] sm:$0xff]
        %v2225 = vld [vmem:[%s237 + $0x3680] sm:$0xff]
        %v2226 = vld [vmem:[%s237 + $0x3688] sm:$0xff]
        %v2227 = vld [vmem:[%s237 + $0x3690] sm:$0xff]
        %v2228 = vld [vmem:[%s237 + $0x3698] sm:$0xff]
        %v2229 = vld [vmem:[%s237 + $0x36a0] sm:$0xff]
        %v2230 = vld [vmem:[%s237 + $0x36a8] sm:$0xff]
        %v2231 = vld [vmem:[%s237 + $0x36b0] sm:$0xff]
        %v2232 = vld [vmem:[%s237 + $0x36b8] sm:$0xff]
        %v2233 = vld [vmem:[%s237 + $0x36c0] sm:$0xff]
        %v2234 = vld [vmem:[%s237 + $0x36c8] sm:$0xff]
        %v2235 = vld [vmem:[%s237 + $0x36d0] sm:$0xff]
        %v2236 = vld [vmem:[%s237 + $0x36d8] sm:$0xff]
        %v2237 = vld [vmem:[%s237 + $0x36e0] sm:$0xff]
        %v2238 = vld [vmem:[%s237 + $0x36e8] sm:$0xff]
        %v2239 = vld [vmem:[%s237 + $0x36f0] sm:$0xff]
        %v2240 = vld [vmem:[%s237 + $0x36f8] sm:$0xff]
        %v2241 = vld [vmem:[%s237 + $0x3700] sm:$0xff]
        %v2242 = vld [vmem:[%s237 + $0x3708] sm:$0xff]
        %v2243 = vld [vmem:[%s237 + $0x3710] sm:$0xff]
        %v2244 = vld [vmem:[%s237 + $0x3718] sm:$0xff]
        %v2245 = vld [vmem:[%s237 + $0x3720] sm:$0xff]
        %v2246 = vld [vmem:[%s237 + $0x3728] sm:$0xff]
        %v2247 = vld [vmem:[%s237 + $0x3730] sm:$0xff]
        %v2248 = vld [vmem:[%s237 + $0x3738] sm:$0xff]
        %v2249 = vld [vmem:[%s237 + $0x3740] sm:$0xff]
        %v2250 = vld [vmem:[%s237 + $0x3748] sm:$0xff]
        %v2251 = vld [vmem:[%s237 + $0x3750] sm:$0xff]
        %v2252 = vld [vmem:[%s237 + $0x3758] sm:$0xff]
        %v2253 = vld [vmem:[%s237 + $0x3760] sm:$0xff]
        %v2254 = vld [vmem:[%s237 + $0x3768] sm:$0xff]
        %v2255 = vld [vmem:[%s237 + $0x3770] sm:$0xff]
        %v2256 = vld [vmem:[%s237 + $0x3778] sm:$0xff]
        %v2257 = vld [vmem:[%s237 + $0x3780] sm:$0xff]
        %v2258 = vld [vmem:[%s237 + $0x3788] sm:$0xff]
        %v2259 = vld [vmem:[%s237 + $0x3790] sm:$0xff]
        %v2260 = vld [vmem:[%s237 + $0x3798] sm:$0xff]
        %v2261 = vld [vmem:[%s237 + $0x37a0] sm:$0xff]
        %v2262 = vld [vmem:[%s237 + $0x37a8] sm:$0xff]
        %v2263 = vld [vmem:[%s237 + $0x37b0] sm:$0xff]
        %v2264 = vld [vmem:[%s237 + $0x37b8] sm:$0xff]
        %v2265 = vld [vmem:[%s237 + $0x37c0] sm:$0xff]
        %v2266 = vld [vmem:[%s237 + $0x37c8] sm:$0xff]
        %v2267 = vld [vmem:[%s237 + $0x37d0] sm:$0xff]
        %v2268 = vld [vmem:[%s237 + $0x37d8] sm:$0xff]
        %v2269 = vld [vmem:[%s237 + $0x37e0] sm:$0xff]
        %v2270 = vld [vmem:[%s237 + $0x37e8] sm:$0xff]
        %v2271 = vld [vmem:[%s237 + $0x37f0] sm:$0xff]
        %v2272 = vld [vmem:[%s237 + $0x37f8] sm:$0xff]
        %v4065 = vunpack.c.l.b16 %v481
        %v4066 = vunpack.c.h.b16 %v481
        %v4067 = vunpack.c.l.b16 %v482
        %v4068 = vunpack.c.h.b16 %v482
        %v4069 = vunpack.c.l.b16 %v483
        %v4070 = vunpack.c.h.b16 %v483
        %v4071 = vunpack.c.l.b16 %v484
        %v4072 = vunpack.c.h.b16 %v484
        %v4073 = vunpack.c.l.b16 %v485
        %v4074 = vunpack.c.h.b16 %v485
        %v4075 = vunpack.c.l.b16 %v486
        %v4076 = vunpack.c.h.b16 %v486
        %v4077 = vunpack.c.l.b16 %v487
        %v4078 = vunpack.c.h.b16 %v487
        %v4079 = vunpack.c.l.b16 %v488
        %v4080 = vunpack.c.h.b16 %v488
        %v4081 = vunpack.c.l.b16 %v489
        %v4082 = vunpack.c.h.b16 %v489
        %v4083 = vunpack.c.l.b16 %v490
        %v4084 = vunpack.c.h.b16 %v490
        %v4085 = vunpack.c.l.b16 %v491
        %v4086 = vunpack.c.h.b16 %v491
        %v4087 = vunpack.c.l.b16 %v492
        %v4088 = vunpack.c.h.b16 %v492
        %v4089 = vunpack.c.l.b16 %v493
        %v4090 = vunpack.c.h.b16 %v493
        %v4091 = vunpack.c.l.b16 %v494
        %v4092 = vunpack.c.h.b16 %v494
        %v4093 = vunpack.c.l.b16 %v495
        %v4094 = vunpack.c.h.b16 %v495
        %v4095 = vunpack.c.l.b16 %v496
        %v4096 = vunpack.c.h.b16 %v496
        %v4097 = vunpack.c.l.b16 %v497
        %v4098 = vunpack.c.h.b16 %v497
        %v4099 = vunpack.c.l.b16 %v498
        %v4100 = vunpack.c.h.b16 %v498
        %v4101 = vunpack.c.l.b16 %v499
        %v4102 = vunpack.c.h.b16 %v499
        %v4103 = vunpack.c.l.b16 %v500
        %v4104 = vunpack.c.h.b16 %v500
        %v4105 = vunpack.c.l.b16 %v501
        %v4106 = vunpack.c.h.b16 %v501
        %v4107 = vunpack.c.l.b16 %v502
        %v4108 = vunpack.c.h.b16 %v502
        %v4109 = vunpack.c.l.b16 %v503
        %v4110 = vunpack.c.h.b16 %v503
        %v4111 = vunpack.c.l.b16 %v504
        %v4112 = vunpack.c.h.b16 %v504
        %v4113 = vunpack.c.l.b16 %v505
        %v4114 = vunpack.c.h.b16 %v505
        %v4115 = vunpack.c.l.b16 %v506
        %v4116 = vunpack.c.h.b16 %v506
        %v4117 = vunpack.c.l.b16 %v507
        %v4118 = vunpack.c.h.b16 %v507
        %v4119 = vunpack.c.l.b16 %v508
        %v4120 = vunpack.c.h.b16 %v508
        %v4121 = vunpack.c.l.b16 %v509
        %v4122 = vunpack.c.h.b16 %v509
        %v4123 = vunpack.c.l.b16 %v510
        %v4124 = vunpack.c.h.b16 %v510
        %v4125 = vunpack.c.l.b16 %v511
        %v4126 = vunpack.c.h.b16 %v511
        %v4127 = vunpack.c.l.b16 %v512
        %v4128 = vunpack.c.h.b16 %v512
        %v4129 = vunpack.c.l.b16 %v513
        %v4130 = vunpack.c.h.b16 %v513
        %v4131 = vunpack.c.l.b16 %v514
        %v4132 = vunpack.c.h.b16 %v514
        %v4133 = vunpack.c.l.b16 %v515
        %v4134 = vunpack.c.h.b16 %v515
        %v4135 = vunpack.c.l.b16 %v516
        %v4136 = vunpack.c.h.b16 %v516
        %v4137 = vunpack.c.l.b16 %v517
        %v4138 = vunpack.c.h.b16 %v517
        %v4139 = vunpack.c.l.b16 %v518
        %v4140 = vunpack.c.h.b16 %v518
        %v4141 = vunpack.c.l.b16 %v519
        %v4142 = vunpack.c.h.b16 %v519
        %v4143 = vunpack.c.l.b16 %v520
        %v4144 = vunpack.c.h.b16 %v520
        %v4145 = vunpack.c.l.b16 %v521
        %v4146 = vunpack.c.h.b16 %v521
        %v4147 = vunpack.c.l.b16 %v522
        %v4148 = vunpack.c.h.b16 %v522
        %v4149 = vunpack.c.l.b16 %v523
        %v4150 = vunpack.c.h.b16 %v523
        %v4151 = vunpack.c.l.b16 %v524
        %v4152 = vunpack.c.h.b16 %v524
        %v4153 = vunpack.c.l.b16 %v525
        %v4154 = vunpack.c.h.b16 %v525
        %v4155 = vunpack.c.l.b16 %v526
        %v4156 = vunpack.c.h.b16 %v526
        %v4157 = vunpack.c.l.b16 %v527
        %v4158 = vunpack.c.h.b16 %v527
        %v4159 = vunpack.c.l.b16 %v528
        %v4160 = vunpack.c.h.b16 %v528
        %v4161 = vunpack.c.l.b16 %v529
        %v4162 = vunpack.c.h.b16 %v529
        %v4163 = vunpack.c.l.b16 %v530
        %v4164 = vunpack.c.h.b16 %v530
        %v4165 = vunpack.c.l.b16 %v531
        %v4166 = vunpack.c.h.b16 %v531
        %v4167 = vunpack.c.l.b16 %v532
        %v4168 = vunpack.c.h.b16 %v532
        %v4169 = vunpack.c.l.b16 %v533
        %v4170 = vunpack.c.h.b16 %v533
        %v4171 = vunpack.c.l.b16 %v534
        %v4172 = vunpack.c.h.b16 %v534
        %v4173 = vunpack.c.l.b16 %v535
        %v4174 = vunpack.c.h.b16 %v535
        %v4175 = vunpack.c.l.b16 %v536
        %v4176 = vunpack.c.h.b16 %v536
        %v4177 = vunpack.c.l.b16 %v537
        %v4178 = vunpack.c.h.b16 %v537
        %v4179 = vunpack.c.l.b16 %v538
        %v4180 = vunpack.c.h.b16 %v538
        %v4181 = vunpack.c.l.b16 %v539
        %v4182 = vunpack.c.h.b16 %v539
        %v4183 = vunpack.c.l.b16 %v540
        %v4184 = vunpack.c.h.b16 %v540
        %v4185 = vunpack.c.l.b16 %v541
        %v4186 = vunpack.c.h.b16 %v541
        %v4187 = vunpack.c.l.b16 %v542
        %v4188 = vunpack.c.h.b16 %v542
        %v4189 = vunpack.c.l.b16 %v543
        %v4190 = vunpack.c.h.b16 %v543
        %v4191 = vunpack.c.l.b16 %v544
        %v4192 = vunpack.c.h.b16 %v544
        %v4193 = vunpack.c.l.b16 %v545
        %v4194 = vunpack.c.h.b16 %v545
        %v4195 = vunpack.c.l.b16 %v546
        %v4196 = vunpack.c.h.b16 %v546
        %v4197 = vunpack.c.l.b16 %v547
        %v4198 = vunpack.c.h.b16 %v547
        %v4199 = vunpack.c.l.b16 %v548
        %v4200 = vunpack.c.h.b16 %v548
        %v4201 = vunpack.c.l.b16 %v549
        %v4202 = vunpack.c.h.b16 %v549
        %v4203 = vunpack.c.l.b16 %v550
        %v4204 = vunpack.c.h.b16 %v550
        %v4205 = vunpack.c.l.b16 %v551
        %v4206 = vunpack.c.h.b16 %v551
        %v4207 = vunpack.c.l.b16 %v552
        %v4208 = vunpack.c.h.b16 %v552
        %v4209 = vunpack.c.l.b16 %v553
        %v4210 = vunpack.c.h.b16 %v553
        %v4211 = vunpack.c.l.b16 %v554
        %v4212 = vunpack.c.h.b16 %v554
        %v4213 = vunpack.c.l.b16 %v555
        %v4214 = vunpack.c.h.b16 %v555
        %v4215 = vunpack.c.l.b16 %v556
        %v4216 = vunpack.c.h.b16 %v556
        %v4217 = vunpack.c.l.b16 %v557
        %v4218 = vunpack.c.h.b16 %v557
        %v4219 = vunpack.c.l.b16 %v558
        %v4220 = vunpack.c.h.b16 %v558
        %v4221 = vunpack.c.l.b16 %v559
        %v4222 = vunpack.c.h.b16 %v559
        %v4223 = vunpack.c.l.b16 %v560
        %v4224 = vunpack.c.h.b16 %v560
        %v4225 = vunpack.c.l.b16 %v561
        %v4226 = vunpack.c.h.b16 %v561
        %v4227 = vunpack.c.l.b16 %v562
        %v4228 = vunpack.c.h.b16 %v562
        %v4229 = vunpack.c.l.b16 %v563
        %v4230 = vunpack.c.h.b16 %v563
        %v4231 = vunpack.c.l.b16 %v564
        %v4232 = vunpack.c.h.b16 %v564
        %v4233 = vunpack.c.l.b16 %v565
        %v4234 = vunpack.c.h.b16 %v565
        %v4235 = vunpack.c.l.b16 %v566
        %v4236 = vunpack.c.h.b16 %v566
        %v4237 = vunpack.c.l.b16 %v567
        %v4238 = vunpack.c.h.b16 %v567
        %v4239 = vunpack.c.l.b16 %v568
        %v4240 = vunpack.c.h.b16 %v568
        %v4241 = vunpack.c.l.b16 %v569
        %v4242 = vunpack.c.h.b16 %v569
        %v4243 = vunpack.c.l.b16 %v570
        %v4244 = vunpack.c.h.b16 %v570
        %v4245 = vunpack.c.l.b16 %v571
        %v4246 = vunpack.c.h.b16 %v571
        %v4247 = vunpack.c.l.b16 %v572
        %v4248 = vunpack.c.h.b16 %v572
        %v4249 = vunpack.c.l.b16 %v573
        %v4250 = vunpack.c.h.b16 %v573
        %v4251 = vunpack.c.l.b16 %v574
        %v4252 = vunpack.c.h.b16 %v574
        %v4253 = vunpack.c.l.b16 %v575
        %v4254 = vunpack.c.h.b16 %v575
        %v4255 = vunpack.c.l.b16 %v576
        %v4256 = vunpack.c.h.b16 %v576
        %v4257 = vunpack.c.l.b16 %v577
        %v4258 = vunpack.c.h.b16 %v577
        %v4259 = vunpack.c.l.b16 %v578
        %v4260 = vunpack.c.h.b16 %v578
        %v4261 = vunpack.c.l.b16 %v579
        %v4262 = vunpack.c.h.b16 %v579
        %v4263 = vunpack.c.l.b16 %v580
        %v4264 = vunpack.c.h.b16 %v580
        %v4265 = vunpack.c.l.b16 %v581
        %v4266 = vunpack.c.h.b16 %v581
        %v4267 = vunpack.c.l.b16 %v582
        %v4268 = vunpack.c.h.b16 %v582
        %v4269 = vunpack.c.l.b16 %v583
        %v4270 = vunpack.c.h.b16 %v583
        %v4271 = vunpack.c.l.b16 %v584
        %v4272 = vunpack.c.h.b16 %v584
        %v4273 = vunpack.c.l.b16 %v585
        %v4274 = vunpack.c.h.b16 %v585
        %v4275 = vunpack.c.l.b16 %v586
        %v4276 = vunpack.c.h.b16 %v586
        %v4277 = vunpack.c.l.b16 %v587
        %v4278 = vunpack.c.h.b16 %v587
        %v4279 = vunpack.c.l.b16 %v588
        %v4280 = vunpack.c.h.b16 %v588
        %v4281 = vunpack.c.l.b16 %v589
        %v4282 = vunpack.c.h.b16 %v589
        %v4283 = vunpack.c.l.b16 %v590
        %v4284 = vunpack.c.h.b16 %v590
        %v4285 = vunpack.c.l.b16 %v591
        %v4286 = vunpack.c.h.b16 %v591
        %v4287 = vunpack.c.l.b16 %v592
        %v4288 = vunpack.c.h.b16 %v592
        %v4289 = vunpack.c.l.b16 %v593
        %v4290 = vunpack.c.h.b16 %v593
        %v4291 = vunpack.c.l.b16 %v594
        %v4292 = vunpack.c.h.b16 %v594
        %v4293 = vunpack.c.l.b16 %v595
        %v4294 = vunpack.c.h.b16 %v595
        %v4295 = vunpack.c.l.b16 %v596
        %v4296 = vunpack.c.h.b16 %v596
        %v4297 = vunpack.c.l.b16 %v597
        %v4298 = vunpack.c.h.b16 %v597
        %v4299 = vunpack.c.l.b16 %v598
        %v4300 = vunpack.c.h.b16 %v598
        %v4301 = vunpack.c.l.b16 %v599
        %v4302 = vunpack.c.h.b16 %v599
        %v4303 = vunpack.c.l.b16 %v600
        %v4304 = vunpack.c.h.b16 %v600
        %v4305 = vunpack.c.l.b16 %v601
        %v4306 = vunpack.c.h.b16 %v601
        %v4307 = vunpack.c.l.b16 %v602
        %v4308 = vunpack.c.h.b16 %v602
        %v4309 = vunpack.c.l.b16 %v603
        %v4310 = vunpack.c.h.b16 %v603
        %v4311 = vunpack.c.l.b16 %v604
        %v4312 = vunpack.c.h.b16 %v604
        %v4313 = vunpack.c.l.b16 %v605
        %v4314 = vunpack.c.h.b16 %v605
        %v4315 = vunpack.c.l.b16 %v606
        %v4316 = vunpack.c.h.b16 %v606
        %v4317 = vunpack.c.l.b16 %v607
        %v4318 = vunpack.c.h.b16 %v607
        %v4319 = vunpack.c.l.b16 %v608
        %v4320 = vunpack.c.h.b16 %v608
        %v4321 = vunpack.c.l.b16 %v609
        %v4322 = vunpack.c.h.b16 %v609
        %v4323 = vunpack.c.l.b16 %v610
        %v4324 = vunpack.c.h.b16 %v610
        %v4325 = vunpack.c.l.b16 %v611
        %v4326 = vunpack.c.h.b16 %v611
        %v4327 = vunpack.c.l.b16 %v612
        %v4328 = vunpack.c.h.b16 %v612
        %v4329 = vunpack.c.l.b16 %v613
        %v4330 = vunpack.c.h.b16 %v613
        %v4331 = vunpack.c.l.b16 %v614
        %v4332 = vunpack.c.h.b16 %v614
        %v4333 = vunpack.c.l.b16 %v615
        %v4334 = vunpack.c.h.b16 %v615
        %v4335 = vunpack.c.l.b16 %v616
        %v4336 = vunpack.c.h.b16 %v616
        %v4337 = vunpack.c.l.b16 %v617
        %v4338 = vunpack.c.h.b16 %v617
        %v4339 = vunpack.c.l.b16 %v618
        %v4340 = vunpack.c.h.b16 %v618
        %v4341 = vunpack.c.l.b16 %v619
        %v4342 = vunpack.c.h.b16 %v619
        %v4343 = vunpack.c.l.b16 %v620
        %v4344 = vunpack.c.h.b16 %v620
        %v4345 = vunpack.c.l.b16 %v621
        %v4346 = vunpack.c.h.b16 %v621
        %v4347 = vunpack.c.l.b16 %v622
        %v4348 = vunpack.c.h.b16 %v622
        %v4349 = vunpack.c.l.b16 %v623
        %v4350 = vunpack.c.h.b16 %v623
        %v4351 = vunpack.c.l.b16 %v624
        %v4352 = vunpack.c.h.b16 %v624
        %v4353 = vunpack.c.l.b16 %v625
        %v4354 = vunpack.c.h.b16 %v625
        %v4355 = vunpack.c.l.b16 %v626
        %v4356 = vunpack.c.h.b16 %v626
        %v4357 = vunpack.c.l.b16 %v627
        %v4358 = vunpack.c.h.b16 %v627
        %v4359 = vunpack.c.l.b16 %v628
        %v4360 = vunpack.c.h.b16 %v628
        %v4361 = vunpack.c.l.b16 %v629
        %v4362 = vunpack.c.h.b16 %v629
        %v4363 = vunpack.c.l.b16 %v630
        %v4364 = vunpack.c.h.b16 %v630
        %v4365 = vunpack.c.l.b16 %v631
        %v4366 = vunpack.c.h.b16 %v631
        %v4367 = vunpack.c.l.b16 %v632
        %v4368 = vunpack.c.h.b16 %v632
        %v4369 = vunpack.c.l.b16 %v633
        %v4370 = vunpack.c.h.b16 %v633
        %v4371 = vunpack.c.l.b16 %v634
        %v4372 = vunpack.c.h.b16 %v634
        %v4373 = vunpack.c.l.b16 %v635
        %v4374 = vunpack.c.h.b16 %v635
        %v4375 = vunpack.c.l.b16 %v636
        %v4376 = vunpack.c.h.b16 %v636
        %v4377 = vunpack.c.l.b16 %v637
        %v4378 = vunpack.c.h.b16 %v637
        %v4379 = vunpack.c.l.b16 %v638
        %v4380 = vunpack.c.h.b16 %v638
        %v4381 = vunpack.c.l.b16 %v639
        %v4382 = vunpack.c.h.b16 %v639
        %v4383 = vunpack.c.l.b16 %v640
        %v4384 = vunpack.c.h.b16 %v640
        %v4385 = vunpack.c.l.b16 %v641
        %v4386 = vunpack.c.h.b16 %v641
        %v4387 = vunpack.c.l.b16 %v642
        %v4388 = vunpack.c.h.b16 %v642
        %v4389 = vunpack.c.l.b16 %v643
        %v4390 = vunpack.c.h.b16 %v643
        %v4391 = vunpack.c.l.b16 %v644
        %v4392 = vunpack.c.h.b16 %v644
        %v4393 = vunpack.c.l.b16 %v645
        %v4394 = vunpack.c.h.b16 %v645
        %v4395 = vunpack.c.l.b16 %v646
        %v4396 = vunpack.c.h.b16 %v646
        %v4397 = vunpack.c.l.b16 %v647
        %v4398 = vunpack.c.h.b16 %v647
        %v4399 = vunpack.c.l.b16 %v648
        %v4400 = vunpack.c.h.b16 %v648
        %v4401 = vunpack.c.l.b16 %v649
        %v4402 = vunpack.c.h.b16 %v649
        %v4403 = vunpack.c.l.b16 %v650
        %v4404 = vunpack.c.h.b16 %v650
        %v4405 = vunpack.c.l.b16 %v651
        %v4406 = vunpack.c.h.b16 %v651
        %v4407 = vunpack.c.l.b16 %v652
        %v4408 = vunpack.c.h.b16 %v652
        %v4409 = vunpack.c.l.b16 %v653
        %v4410 = vunpack.c.h.b16 %v653
        %v4411 = vunpack.c.l.b16 %v654
        %v4412 = vunpack.c.h.b16 %v654
        %v4413 = vunpack.c.l.b16 %v655
        %v4414 = vunpack.c.h.b16 %v655
        %v4415 = vunpack.c.l.b16 %v656
        %v4416 = vunpack.c.h.b16 %v656
        %v4417 = vunpack.c.l.b16 %v657
        %v4418 = vunpack.c.h.b16 %v657
        %v4419 = vunpack.c.l.b16 %v658
        %v4420 = vunpack.c.h.b16 %v658
        %v4421 = vunpack.c.l.b16 %v659
        %v4422 = vunpack.c.h.b16 %v659
        %v4423 = vunpack.c.l.b16 %v660
        %v4424 = vunpack.c.h.b16 %v660
        %v4425 = vunpack.c.l.b16 %v661
        %v4426 = vunpack.c.h.b16 %v661
        %v4427 = vunpack.c.l.b16 %v662
        %v4428 = vunpack.c.h.b16 %v662
        %v4429 = vunpack.c.l.b16 %v663
        %v4430 = vunpack.c.h.b16 %v663
        %v4431 = vunpack.c.l.b16 %v664
        %v4432 = vunpack.c.h.b16 %v664
        %v4433 = vunpack.c.l.b16 %v665
        %v4434 = vunpack.c.h.b16 %v665
        %v4435 = vunpack.c.l.b16 %v666
        %v4436 = vunpack.c.h.b16 %v666
        %v4437 = vunpack.c.l.b16 %v667
        %v4438 = vunpack.c.h.b16 %v667
        %v4439 = vunpack.c.l.b16 %v668
        %v4440 = vunpack.c.h.b16 %v668
        %v4441 = vunpack.c.l.b16 %v669
        %v4442 = vunpack.c.h.b16 %v669
        %v4443 = vunpack.c.l.b16 %v670
        %v4444 = vunpack.c.h.b16 %v670
        %v4445 = vunpack.c.l.b16 %v671
        %v4446 = vunpack.c.h.b16 %v671
        %v4447 = vunpack.c.l.b16 %v672
        %v4448 = vunpack.c.h.b16 %v672
        %v4449 = vunpack.c.l.b16 %v673
        %v4450 = vunpack.c.h.b16 %v673
        %v4451 = vunpack.c.l.b16 %v674
        %v4452 = vunpack.c.h.b16 %v674
        %v4453 = vunpack.c.l.b16 %v675
        %v4454 = vunpack.c.h.b16 %v675
        %v4455 = vunpack.c.l.b16 %v676
        %v4456 = vunpack.c.h.b16 %v676
        %v4457 = vunpack.c.l.b16 %v677
        %v4458 = vunpack.c.h.b16 %v677
        %v4459 = vunpack.c.l.b16 %v678
        %v4460 = vunpack.c.h.b16 %v678
        %v4461 = vunpack.c.l.b16 %v679
        %v4462 = vunpack.c.h.b16 %v679
        %v4463 = vunpack.c.l.b16 %v680
        %v4464 = vunpack.c.h.b16 %v680
        %v4465 = vunpack.c.l.b16 %v681
        %v4466 = vunpack.c.h.b16 %v681
        %v4467 = vunpack.c.l.b16 %v682
        %v4468 = vunpack.c.h.b16 %v682
        %v4469 = vunpack.c.l.b16 %v683
        %v4470 = vunpack.c.h.b16 %v683
        %v4471 = vunpack.c.l.b16 %v684
        %v4472 = vunpack.c.h.b16 %v684
        %v4473 = vunpack.c.l.b16 %v685
        %v4474 = vunpack.c.h.b16 %v685
        %v4475 = vunpack.c.l.b16 %v686
        %v4476 = vunpack.c.h.b16 %v686
        %v4477 = vunpack.c.l.b16 %v687
        %v4478 = vunpack.c.h.b16 %v687
        %v4479 = vunpack.c.l.b16 %v688
        %v4480 = vunpack.c.h.b16 %v688
        %v4481 = vunpack.c.l.b16 %v689
        %v4482 = vunpack.c.h.b16 %v689
        %v4483 = vunpack.c.l.b16 %v690
        %v4484 = vunpack.c.h.b16 %v690
        %v4485 = vunpack.c.l.b16 %v691
        %v4486 = vunpack.c.h.b16 %v691
        %v4487 = vunpack.c.l.b16 %v692
        %v4488 = vunpack.c.h.b16 %v692
        %v4489 = vunpack.c.l.b16 %v693
        %v4490 = vunpack.c.h.b16 %v693
        %v4491 = vunpack.c.l.b16 %v694
        %v4492 = vunpack.c.h.b16 %v694
        %v4493 = vunpack.c.l.b16 %v695
        %v4494 = vunpack.c.h.b16 %v695
        %v4495 = vunpack.c.l.b16 %v696
        %v4496 = vunpack.c.h.b16 %v696
        %v4497 = vunpack.c.l.b16 %v697
        %v4498 = vunpack.c.h.b16 %v697
        %v4499 = vunpack.c.l.b16 %v698
        %v4500 = vunpack.c.h.b16 %v698
        %v4501 = vunpack.c.l.b16 %v699
        %v4502 = vunpack.c.h.b16 %v699
        %v4503 = vunpack.c.l.b16 %v700
        %v4504 = vunpack.c.h.b16 %v700
        %v4505 = vunpack.c.l.b16 %v701
        %v4506 = vunpack.c.h.b16 %v701
        %v4507 = vunpack.c.l.b16 %v702
        %v4508 = vunpack.c.h.b16 %v702
        %v4509 = vunpack.c.l.b16 %v703
        %v4510 = vunpack.c.h.b16 %v703
        %v4511 = vunpack.c.l.b16 %v704
        %v4512 = vunpack.c.h.b16 %v704
        %v4513 = vunpack.c.l.b16 %v705
        %v4514 = vunpack.c.h.b16 %v705
        %v4515 = vunpack.c.l.b16 %v706
        %v4516 = vunpack.c.h.b16 %v706
        %v4517 = vunpack.c.l.b16 %v707
        %v4518 = vunpack.c.h.b16 %v707
        %v4519 = vunpack.c.l.b16 %v708
        %v4520 = vunpack.c.h.b16 %v708
        %v4521 = vunpack.c.l.b16 %v709
        %v4522 = vunpack.c.h.b16 %v709
        %v4523 = vunpack.c.l.b16 %v710
        %v4524 = vunpack.c.h.b16 %v710
        %v4525 = vunpack.c.l.b16 %v711
        %v4526 = vunpack.c.h.b16 %v711
        %v4527 = vunpack.c.l.b16 %v712
        %v4528 = vunpack.c.h.b16 %v712
        %v4529 = vunpack.c.l.b16 %v713
        %v4530 = vunpack.c.h.b16 %v713
        %v4531 = vunpack.c.l.b16 %v714
        %v4532 = vunpack.c.h.b16 %v714
        %v4533 = vunpack.c.l.b16 %v715
        %v4534 = vunpack.c.h.b16 %v715
        %v4535 = vunpack.c.l.b16 %v716
        %v4536 = vunpack.c.h.b16 %v716
        %v4537 = vunpack.c.l.b16 %v717
        %v4538 = vunpack.c.h.b16 %v717
        %v4539 = vunpack.c.l.b16 %v718
        %v4540 = vunpack.c.h.b16 %v718
        %v4541 = vunpack.c.l.b16 %v719
        %v4542 = vunpack.c.h.b16 %v719
        %v4543 = vunpack.c.l.b16 %v720
        %v4544 = vunpack.c.h.b16 %v720
        %v4545 = vunpack.c.l.b16 %v721
        %v4546 = vunpack.c.h.b16 %v721
        %v4547 = vunpack.c.l.b16 %v722
        %v4548 = vunpack.c.h.b16 %v722
        %v4549 = vunpack.c.l.b16 %v723
        %v4550 = vunpack.c.h.b16 %v723
        %v4551 = vunpack.c.l.b16 %v724
        %v4552 = vunpack.c.h.b16 %v724
        %v4553 = vunpack.c.l.b16 %v725
        %v4554 = vunpack.c.h.b16 %v725
        %v4555 = vunpack.c.l.b16 %v726
        %v4556 = vunpack.c.h.b16 %v726
        %v4557 = vunpack.c.l.b16 %v727
        %v4558 = vunpack.c.h.b16 %v727
        %v4559 = vunpack.c.l.b16 %v728
        %v4560 = vunpack.c.h.b16 %v728
        %v4561 = vunpack.c.l.b16 %v729
        %v4562 = vunpack.c.h.b16 %v729
        %v4563 = vunpack.c.l.b16 %v730
        %v4564 = vunpack.c.h.b16 %v730
        %v4565 = vunpack.c.l.b16 %v731
        %v4566 = vunpack.c.h.b16 %v731
        %v4567 = vunpack.c.l.b16 %v732
        %v4568 = vunpack.c.h.b16 %v732
        %v4569 = vunpack.c.l.b16 %v733
        %v4570 = vunpack.c.h.b16 %v733
        %v4571 = vunpack.c.l.b16 %v734
        %v4572 = vunpack.c.h.b16 %v734
        %v4573 = vunpack.c.l.b16 %v735
        %v4574 = vunpack.c.h.b16 %v735
        %v4575 = vunpack.c.l.b16 %v736
        %v4576 = vunpack.c.h.b16 %v736
        %v4577 = vunpack.c.l.b16 %v737
        %v4578 = vunpack.c.h.b16 %v737
        %v4579 = vunpack.c.l.b16 %v738
        %v4580 = vunpack.c.h.b16 %v738
        %v4581 = vunpack.c.l.b16 %v739
        %v4582 = vunpack.c.h.b16 %v739
        %v4583 = vunpack.c.l.b16 %v740
        %v4584 = vunpack.c.h.b16 %v740
        %v4585 = vunpack.c.l.b16 %v741
        %v4586 = vunpack.c.h.b16 %v741
        %v4587 = vunpack.c.l.b16 %v742
        %v4588 = vunpack.c.h.b16 %v742
        %v4589 = vunpack.c.l.b16 %v743
        %v4590 = vunpack.c.h.b16 %v743
        %v4591 = vunpack.c.l.b16 %v744
        %v4592 = vunpack.c.h.b16 %v744
        %v4593 = vunpack.c.l.b16 %v745
        %v4594 = vunpack.c.h.b16 %v745
        %v4595 = vunpack.c.l.b16 %v746
        %v4596 = vunpack.c.h.b16 %v746
        %v4597 = vunpack.c.l.b16 %v747
        %v4598 = vunpack.c.h.b16 %v747
        %v4599 = vunpack.c.l.b16 %v748
        %v4600 = vunpack.c.h.b16 %v748
        %v4601 = vunpack.c.l.b16 %v749
        %v4602 = vunpack.c.h.b16 %v749
        %v4603 = vunpack.c.l.b16 %v750
        %v4604 = vunpack.c.h.b16 %v750
        %v4605 = vunpack.c.l.b16 %v751
        %v4606 = vunpack.c.h.b16 %v751
        %v4607 = vunpack.c.l.b16 %v752
        %v4608 = vunpack.c.h.b16 %v752
        %v4609 = vunpack.c.l.b16 %v753
        %v4610 = vunpack.c.h.b16 %v753
        %v4611 = vunpack.c.l.b16 %v754
        %v4612 = vunpack.c.h.b16 %v754
        %v4613 = vunpack.c.l.b16 %v755
        %v4614 = vunpack.c.h.b16 %v755
        %v4615 = vunpack.c.l.b16 %v756
        %v4616 = vunpack.c.h.b16 %v756
        %v4617 = vunpack.c.l.b16 %v757
        %v4618 = vunpack.c.h.b16 %v757
        %v4619 = vunpack.c.l.b16 %v758
        %v4620 = vunpack.c.h.b16 %v758
        %v4621 = vunpack.c.l.b16 %v759
        %v4622 = vunpack.c.h.b16 %v759
        %v4623 = vunpack.c.l.b16 %v760
        %v4624 = vunpack.c.h.b16 %v760
        %v4625 = vunpack.c.l.b16 %v761
        %v4626 = vunpack.c.h.b16 %v761
        %v4627 = vunpack.c.l.b16 %v762
        %v4628 = vunpack.c.h.b16 %v762
        %v4629 = vunpack.c.l.b16 %v763
        %v4630 = vunpack.c.h.b16 %v763
        %v4631 = vunpack.c.l.b16 %v764
        %v4632 = vunpack.c.h.b16 %v764
        %v4633 = vunpack.c.l.b16 %v765
        %v4634 = vunpack.c.h.b16 %v765
        %v4635 = vunpack.c.l.b16 %v766
        %v4636 = vunpack.c.h.b16 %v766
        %v4637 = vunpack.c.l.b16 %v767
        %v4638 = vunpack.c.h.b16 %v767
        %v4639 = vunpack.c.l.b16 %v768
        %v4640 = vunpack.c.h.b16 %v768
        %v4641 = vunpack.c.l.b16 %v769
        %v4642 = vunpack.c.h.b16 %v769
        %v4643 = vunpack.c.l.b16 %v770
        %v4644 = vunpack.c.h.b16 %v770
        %v4645 = vunpack.c.l.b16 %v771
        %v4646 = vunpack.c.h.b16 %v771
        %v4647 = vunpack.c.l.b16 %v772
        %v4648 = vunpack.c.h.b16 %v772
        %v4649 = vunpack.c.l.b16 %v773
        %v4650 = vunpack.c.h.b16 %v773
        %v4651 = vunpack.c.l.b16 %v774
        %v4652 = vunpack.c.h.b16 %v774
        %v4653 = vunpack.c.l.b16 %v775
        %v4654 = vunpack.c.h.b16 %v775
        %v4655 = vunpack.c.l.b16 %v776
        %v4656 = vunpack.c.h.b16 %v776
        %v4657 = vunpack.c.l.b16 %v777
        %v4658 = vunpack.c.h.b16 %v777
        %v4659 = vunpack.c.l.b16 %v778
        %v4660 = vunpack.c.h.b16 %v778
        %v4661 = vunpack.c.l.b16 %v779
        %v4662 = vunpack.c.h.b16 %v779
        %v4663 = vunpack.c.l.b16 %v780
        %v4664 = vunpack.c.h.b16 %v780
        %v4665 = vunpack.c.l.b16 %v781
        %v4666 = vunpack.c.h.b16 %v781
        %v4667 = vunpack.c.l.b16 %v782
        %v4668 = vunpack.c.h.b16 %v782
        %v4669 = vunpack.c.l.b16 %v783
        %v4670 = vunpack.c.h.b16 %v783
        %v4671 = vunpack.c.l.b16 %v784
        %v4672 = vunpack.c.h.b16 %v784
        %v4673 = vunpack.c.l.b16 %v785
        %v4674 = vunpack.c.h.b16 %v785
        %v4675 = vunpack.c.l.b16 %v786
        %v4676 = vunpack.c.h.b16 %v786
        %v4677 = vunpack.c.l.b16 %v787
        %v4678 = vunpack.c.h.b16 %v787
        %v4679 = vunpack.c.l.b16 %v788
        %v4680 = vunpack.c.h.b16 %v788
        %v4681 = vunpack.c.l.b16 %v789
        %v4682 = vunpack.c.h.b16 %v789
        %v4683 = vunpack.c.l.b16 %v790
        %v4684 = vunpack.c.h.b16 %v790
        %v4685 = vunpack.c.l.b16 %v791
        %v4686 = vunpack.c.h.b16 %v791
        %v4687 = vunpack.c.l.b16 %v792
        %v4688 = vunpack.c.h.b16 %v792
        %v4689 = vunpack.c.l.b16 %v793
        %v4690 = vunpack.c.h.b16 %v793
        %v4691 = vunpack.c.l.b16 %v794
        %v4692 = vunpack.c.h.b16 %v794
        %v4693 = vunpack.c.l.b16 %v795
        %v4694 = vunpack.c.h.b16 %v795
        %v4695 = vunpack.c.l.b16 %v796
        %v4696 = vunpack.c.h.b16 %v796
        %v4697 = vunpack.c.l.b16 %v797
        %v4698 = vunpack.c.h.b16 %v797
        %v4699 = vunpack.c.l.b16 %v798
        %v4700 = vunpack.c.h.b16 %v798
        %v4701 = vunpack.c.l.b16 %v799
        %v4702 = vunpack.c.h.b16 %v799
        %v4703 = vunpack.c.l.b16 %v800
        %v4704 = vunpack.c.h.b16 %v800
        %v4705 = vunpack.c.l.b16 %v801
        %v4706 = vunpack.c.h.b16 %v801
        %v4707 = vunpack.c.l.b16 %v802
        %v4708 = vunpack.c.h.b16 %v802
        %v4709 = vunpack.c.l.b16 %v803
        %v4710 = vunpack.c.h.b16 %v803
        %v4711 = vunpack.c.l.b16 %v804
        %v4712 = vunpack.c.h.b16 %v804
        %v4713 = vunpack.c.l.b16 %v805
        %v4714 = vunpack.c.h.b16 %v805
        %v4715 = vunpack.c.l.b16 %v806
        %v4716 = vunpack.c.h.b16 %v806
        %v4717 = vunpack.c.l.b16 %v807
        %v4718 = vunpack.c.h.b16 %v807
        %v4719 = vunpack.c.l.b16 %v808
        %v4720 = vunpack.c.h.b16 %v808
        %v4721 = vunpack.c.l.b16 %v809
        %v4722 = vunpack.c.h.b16 %v809
        %v4723 = vunpack.c.l.b16 %v810
        %v4724 = vunpack.c.h.b16 %v810
        %v4725 = vunpack.c.l.b16 %v811
        %v4726 = vunpack.c.h.b16 %v811
        %v4727 = vunpack.c.l.b16 %v812
        %v4728 = vunpack.c.h.b16 %v812
        %v4729 = vunpack.c.l.b16 %v813
        %v4730 = vunpack.c.h.b16 %v813
        %v4731 = vunpack.c.l.b16 %v814
        %v4732 = vunpack.c.h.b16 %v814
        %v4733 = vunpack.c.l.b16 %v815
        %v4734 = vunpack.c.h.b16 %v815
        %v4735 = vunpack.c.l.b16 %v816
        %v4736 = vunpack.c.h.b16 %v816
        %v4737 = vunpack.c.l.b16 %v817
        %v4738 = vunpack.c.h.b16 %v817
        %v4739 = vunpack.c.l.b16 %v818
        %v4740 = vunpack.c.h.b16 %v818
        %v4741 = vunpack.c.l.b16 %v819
        %v4742 = vunpack.c.h.b16 %v819
        %v4743 = vunpack.c.l.b16 %v820
        %v4744 = vunpack.c.h.b16 %v820
        %v4745 = vunpack.c.l.b16 %v821
        %v4746 = vunpack.c.h.b16 %v821
        %v4747 = vunpack.c.l.b16 %v822
        %v4748 = vunpack.c.h.b16 %v822
        %v4749 = vunpack.c.l.b16 %v823
        %v4750 = vunpack.c.h.b16 %v823
        %v4751 = vunpack.c.l.b16 %v824
        %v4752 = vunpack.c.h.b16 %v824
        %v4753 = vunpack.c.l.b16 %v825
        %v4754 = vunpack.c.h.b16 %v825
        %v4755 = vunpack.c.l.b16 %v826
        %v4756 = vunpack.c.h.b16 %v826
        %v4757 = vunpack.c.l.b16 %v827
        %v4758 = vunpack.c.h.b16 %v827
        %v4759 = vunpack.c.l.b16 %v828
        %v4760 = vunpack.c.h.b16 %v828
        %v4761 = vunpack.c.l.b16 %v829
        %v4762 = vunpack.c.h.b16 %v829
        %v4763 = vunpack.c.l.b16 %v830
        %v4764 = vunpack.c.h.b16 %v830
        %v4765 = vunpack.c.l.b16 %v831
        %v4766 = vunpack.c.h.b16 %v831
        %v4767 = vunpack.c.l.b16 %v832
        %v4768 = vunpack.c.h.b16 %v832
        %v4769 = vunpack.c.l.b16 %v833
        %v4770 = vunpack.c.h.b16 %v833
        %v4771 = vunpack.c.l.b16 %v834
        %v4772 = vunpack.c.h.b16 %v834
        %v4773 = vunpack.c.l.b16 %v835
        %v4774 = vunpack.c.h.b16 %v835
        %v4775 = vunpack.c.l.b16 %v836
        %v4776 = vunpack.c.h.b16 %v836
        %v4777 = vunpack.c.l.b16 %v837
        %v4778 = vunpack.c.h.b16 %v837
        %v4779 = vunpack.c.l.b16 %v838
        %v4780 = vunpack.c.h.b16 %v838
        %v4781 = vunpack.c.l.b16 %v839
        %v4782 = vunpack.c.h.b16 %v839
        %v4783 = vunpack.c.l.b16 %v840
        %v4784 = vunpack.c.h.b16 %v840
        %v4785 = vunpack.c.l.b16 %v841
        %v4786 = vunpack.c.h.b16 %v841
        %v4787 = vunpack.c.l.b16 %v842
        %v4788 = vunpack.c.h.b16 %v842
        %v4789 = vunpack.c.l.b16 %v843
        %v4790 = vunpack.c.h.b16 %v843
        %v4791 = vunpack.c.l.b16 %v844
        %v4792 = vunpack.c.h.b16 %v844
        %v4793 = vunpack.c.l.b16 %v845
        %v4794 = vunpack.c.h.b16 %v845
        %v4795 = vunpack.c.l.b16 %v846
        %v4796 = vunpack.c.h.b16 %v846
        %v4797 = vunpack.c.l.b16 %v847
        %v4798 = vunpack.c.h.b16 %v847
        %v4799 = vunpack.c.l.b16 %v848
        %v4800 = vunpack.c.h.b16 %v848
        %v4801 = vunpack.c.l.b16 %v849
        %v4802 = vunpack.c.h.b16 %v849
        %v4803 = vunpack.c.l.b16 %v850
        %v4804 = vunpack.c.h.b16 %v850
        %v4805 = vunpack.c.l.b16 %v851
        %v4806 = vunpack.c.h.b16 %v851
        %v4807 = vunpack.c.l.b16 %v852
        %v4808 = vunpack.c.h.b16 %v852
        %v4809 = vunpack.c.l.b16 %v853
        %v4810 = vunpack.c.h.b16 %v853
        %v4811 = vunpack.c.l.b16 %v854
        %v4812 = vunpack.c.h.b16 %v854
        %v4813 = vunpack.c.l.b16 %v855
        %v4814 = vunpack.c.h.b16 %v855
        %v4815 = vunpack.c.l.b16 %v856
        %v4816 = vunpack.c.h.b16 %v856
        %v4817 = vunpack.c.l.b16 %v857
        %v4818 = vunpack.c.h.b16 %v857
        %v4819 = vunpack.c.l.b16 %v858
        %v4820 = vunpack.c.h.b16 %v858
        %v4821 = vunpack.c.l.b16 %v859
        %v4822 = vunpack.c.h.b16 %v859
        %v4823 = vunpack.c.l.b16 %v860
        %v4824 = vunpack.c.h.b16 %v860
        %v4825 = vunpack.c.l.b16 %v861
        %v4826 = vunpack.c.h.b16 %v861
        %v4827 = vunpack.c.l.b16 %v862
        %v4828 = vunpack.c.h.b16 %v862
        %v4829 = vunpack.c.l.b16 %v863
        %v4830 = vunpack.c.h.b16 %v863
        %v4831 = vunpack.c.l.b16 %v864
        %v4832 = vunpack.c.h.b16 %v864
        %v4833 = vunpack.c.l.b16 %v865
        %v4834 = vunpack.c.h.b16 %v865
        %v4835 = vunpack.c.l.b16 %v866
        %v4836 = vunpack.c.h.b16 %v866
        %v4837 = vunpack.c.l.b16 %v867
        %v4838 = vunpack.c.h.b16 %v867
        %v4839 = vunpack.c.l.b16 %v868
        %v4840 = vunpack.c.h.b16 %v868
        %v4841 = vunpack.c.l.b16 %v869
        %v4842 = vunpack.c.h.b16 %v869
        %v4843 = vunpack.c.l.b16 %v870
        %v4844 = vunpack.c.h.b16 %v870
        %v4845 = vunpack.c.l.b16 %v871
        %v4846 = vunpack.c.h.b16 %v871
        %v4847 = vunpack.c.l.b16 %v872
        %v4848 = vunpack.c.h.b16 %v872
        %v4849 = vunpack.c.l.b16 %v873
        %v4850 = vunpack.c.h.b16 %v873
        %v4851 = vunpack.c.l.b16 %v874
        %v4852 = vunpack.c.h.b16 %v874
        %v4853 = vunpack.c.l.b16 %v875
        %v4854 = vunpack.c.h.b16 %v875
        %v4855 = vunpack.c.l.b16 %v876
        %v4856 = vunpack.c.h.b16 %v876
        %v4857 = vunpack.c.l.b16 %v877
        %v4858 = vunpack.c.h.b16 %v877
        %v4859 = vunpack.c.l.b16 %v878
        %v4860 = vunpack.c.h.b16 %v878
        %v4861 = vunpack.c.l.b16 %v879
        %v4862 = vunpack.c.h.b16 %v879
        %v4863 = vunpack.c.l.b16 %v880
        %v4864 = vunpack.c.h.b16 %v880
        %v4865 = vunpack.c.l.b16 %v881
        %v4866 = vunpack.c.h.b16 %v881
        %v4867 = vunpack.c.l.b16 %v882
        %v4868 = vunpack.c.h.b16 %v882
        %v4869 = vunpack.c.l.b16 %v883
        %v4870 = vunpack.c.h.b16 %v883
        %v4871 = vunpack.c.l.b16 %v884
        %v4872 = vunpack.c.h.b16 %v884
        %v4873 = vunpack.c.l.b16 %v885
        %v4874 = vunpack.c.h.b16 %v885
        %v4875 = vunpack.c.l.b16 %v886
        %v4876 = vunpack.c.h.b16 %v886
        %v4877 = vunpack.c.l.b16 %v887
        %v4878 = vunpack.c.h.b16 %v887
        %v4879 = vunpack.c.l.b16 %v888
        %v4880 = vunpack.c.h.b16 %v888
        %v4881 = vunpack.c.l.b16 %v889
        %v4882 = vunpack.c.h.b16 %v889
        %v4883 = vunpack.c.l.b16 %v890
        %v4884 = vunpack.c.h.b16 %v890
        %v4885 = vunpack.c.l.b16 %v891
        %v4886 = vunpack.c.h.b16 %v891
        %v4887 = vunpack.c.l.b16 %v892
        %v4888 = vunpack.c.h.b16 %v892
        %v4889 = vunpack.c.l.b16 %v893
        %v4890 = vunpack.c.h.b16 %v893
        %v4891 = vunpack.c.l.b16 %v894
        %v4892 = vunpack.c.h.b16 %v894
        %v4893 = vunpack.c.l.b16 %v895
        %v4894 = vunpack.c.h.b16 %v895
        %v4895 = vunpack.c.l.b16 %v896
        %v4896 = vunpack.c.h.b16 %v896
        %v4897 = vunpack.c.l.b16 %v897
        %v4898 = vunpack.c.h.b16 %v897
        %v4899 = vunpack.c.l.b16 %v898
        %v4900 = vunpack.c.h.b16 %v898
        %v4901 = vunpack.c.l.b16 %v899
        %v4902 = vunpack.c.h.b16 %v899
        %v4903 = vunpack.c.l.b16 %v900
        %v4904 = vunpack.c.h.b16 %v900
        %v4905 = vunpack.c.l.b16 %v901
        %v4906 = vunpack.c.h.b16 %v901
        %v4907 = vunpack.c.l.b16 %v902
        %v4908 = vunpack.c.h.b16 %v902
        %v4909 = vunpack.c.l.b16 %v903
        %v4910 = vunpack.c.h.b16 %v903
        %v4911 = vunpack.c.l.b16 %v904
        %v4912 = vunpack.c.h.b16 %v904
        %v4913 = vunpack.c.l.b16 %v905
        %v4914 = vunpack.c.h.b16 %v905
        %v4915 = vunpack.c.l.b16 %v906
        %v4916 = vunpack.c.h.b16 %v906
        %v4917 = vunpack.c.l.b16 %v907
        %v4918 = vunpack.c.h.b16 %v907
        %v4919 = vunpack.c.l.b16 %v908
        %v4920 = vunpack.c.h.b16 %v908
        %v4921 = vunpack.c.l.b16 %v909
        %v4922 = vunpack.c.h.b16 %v909
        %v4923 = vunpack.c.l.b16 %v910
        %v4924 = vunpack.c.h.b16 %v910
        %v4925 = vunpack.c.l.b16 %v911
        %v4926 = vunpack.c.h.b16 %v911
        %v4927 = vunpack.c.l.b16 %v912
        %v4928 = vunpack.c.h.b16 %v912
        %v4929 = vunpack.c.l.b16 %v913
        %v4930 = vunpack.c.h.b16 %v913
        %v4931 = vunpack.c.l.b16 %v914
        %v4932 = vunpack.c.h.b16 %v914
        %v4933 = vunpack.c.l.b16 %v915
        %v4934 = vunpack.c.h.b16 %v915
        %v4935 = vunpack.c.l.b16 %v916
        %v4936 = vunpack.c.h.b16 %v916
        %v4937 = vunpack.c.l.b16 %v917
        %v4938 = vunpack.c.h.b16 %v917
        %v4939 = vunpack.c.l.b16 %v918
        %v4940 = vunpack.c.h.b16 %v918
        %v4941 = vunpack.c.l.b16 %v919
        %v4942 = vunpack.c.h.b16 %v919
        %v4943 = vunpack.c.l.b16 %v920
        %v4944 = vunpack.c.h.b16 %v920
        %v4945 = vunpack.c.l.b16 %v921
        %v4946 = vunpack.c.h.b16 %v921
        %v4947 = vunpack.c.l.b16 %v922
        %v4948 = vunpack.c.h.b16 %v922
        %v4949 = vunpack.c.l.b16 %v923
        %v4950 = vunpack.c.h.b16 %v923
        %v4951 = vunpack.c.l.b16 %v924
        %v4952 = vunpack.c.h.b16 %v924
        %v4953 = vunpack.c.l.b16 %v925
        %v4954 = vunpack.c.h.b16 %v925
        %v4955 = vunpack.c.l.b16 %v926
        %v4956 = vunpack.c.h.b16 %v926
        %v4957 = vunpack.c.l.b16 %v927
        %v4958 = vunpack.c.h.b16 %v927
        %v4959 = vunpack.c.l.b16 %v928
        %v4960 = vunpack.c.h.b16 %v928
        %v4961 = vunpack.c.l.b16 %v929
        %v4962 = vunpack.c.h.b16 %v929
        %v4963 = vunpack.c.l.b16 %v930
        %v4964 = vunpack.c.h.b16 %v930
        %v4965 = vunpack.c.l.b16 %v931
        %v4966 = vunpack.c.h.b16 %v931
        %v4967 = vunpack.c.l.b16 %v932
        %v4968 = vunpack.c.h.b16 %v932
        %v4969 = vunpack.c.l.b16 %v933
        %v4970 = vunpack.c.h.b16 %v933
        %v4971 = vunpack.c.l.b16 %v934
        %v4972 = vunpack.c.h.b16 %v934
        %v4973 = vunpack.c.l.b16 %v935
        %v4974 = vunpack.c.h.b16 %v935
        %v4975 = vunpack.c.l.b16 %v936
        %v4976 = vunpack.c.h.b16 %v936
        %v4977 = vunpack.c.l.b16 %v937
        %v4978 = vunpack.c.h.b16 %v937
        %v4979 = vunpack.c.l.b16 %v938
        %v4980 = vunpack.c.h.b16 %v938
        %v4981 = vunpack.c.l.b16 %v939
        %v4982 = vunpack.c.h.b16 %v939
        %v4983 = vunpack.c.l.b16 %v940
        %v4984 = vunpack.c.h.b16 %v940
        %v4985 = vunpack.c.l.b16 %v941
        %v4986 = vunpack.c.h.b16 %v941
        %v4987 = vunpack.c.l.b16 %v942
        %v4988 = vunpack.c.h.b16 %v942
        %v4989 = vunpack.c.l.b16 %v943
        %v4990 = vunpack.c.h.b16 %v943
        %v4991 = vunpack.c.l.b16 %v944
        %v4992 = vunpack.c.h.b16 %v944
        %v4993 = vunpack.c.l.b16 %v945
        %v4994 = vunpack.c.h.b16 %v945
        %v4995 = vunpack.c.l.b16 %v946
        %v4996 = vunpack.c.h.b16 %v946
        %v4997 = vunpack.c.l.b16 %v947
        %v4998 = vunpack.c.h.b16 %v947
        %v4999 = vunpack.c.l.b16 %v948
        %v5000 = vunpack.c.h.b16 %v948
        %v5001 = vunpack.c.l.b16 %v949
        %v5002 = vunpack.c.h.b16 %v949
        %v5003 = vunpack.c.l.b16 %v950
        %v5004 = vunpack.c.h.b16 %v950
        %v5005 = vunpack.c.l.b16 %v951
        %v5006 = vunpack.c.h.b16 %v951
        %v5007 = vunpack.c.l.b16 %v952
        %v5008 = vunpack.c.h.b16 %v952
        %v5009 = vunpack.c.l.b16 %v953
        %v5010 = vunpack.c.h.b16 %v953
        %v5011 = vunpack.c.l.b16 %v954
        %v5012 = vunpack.c.h.b16 %v954
        %v5013 = vunpack.c.l.b16 %v955
        %v5014 = vunpack.c.h.b16 %v955
        %v5015 = vunpack.c.l.b16 %v956
        %v5016 = vunpack.c.h.b16 %v956
        %v5017 = vunpack.c.l.b16 %v957
        %v5018 = vunpack.c.h.b16 %v957
        %v5019 = vunpack.c.l.b16 %v958
        %v5020 = vunpack.c.h.b16 %v958
        %v5021 = vunpack.c.l.b16 %v959
        %v5022 = vunpack.c.h.b16 %v959
        %v5023 = vunpack.c.l.b16 %v960
        %v5024 = vunpack.c.h.b16 %v960
        %v5025 = vunpack.c.l.b16 %v961
        %v5026 = vunpack.c.h.b16 %v961
        %v5027 = vunpack.c.l.b16 %v962
        %v5028 = vunpack.c.h.b16 %v962
        %v5029 = vunpack.c.l.b16 %v963
        %v5030 = vunpack.c.h.b16 %v963
        %v5031 = vunpack.c.l.b16 %v964
        %v5032 = vunpack.c.h.b16 %v964
        %v5033 = vunpack.c.l.b16 %v965
        %v5034 = vunpack.c.h.b16 %v965
        %v5035 = vunpack.c.l.b16 %v966
        %v5036 = vunpack.c.h.b16 %v966
        %v5037 = vunpack.c.l.b16 %v967
        %v5038 = vunpack.c.h.b16 %v967
        %v5039 = vunpack.c.l.b16 %v968
        %v5040 = vunpack.c.h.b16 %v968
        %v5041 = vunpack.c.l.b16 %v969
        %v5042 = vunpack.c.h.b16 %v969
        %v5043 = vunpack.c.l.b16 %v970
        %v5044 = vunpack.c.h.b16 %v970
        %v5045 = vunpack.c.l.b16 %v971
        %v5046 = vunpack.c.h.b16 %v971
        %v5047 = vunpack.c.l.b16 %v972
        %v5048 = vunpack.c.h.b16 %v972
        %v5049 = vunpack.c.l.b16 %v973
        %v5050 = vunpack.c.h.b16 %v973
        %v5051 = vunpack.c.l.b16 %v974
        %v5052 = vunpack.c.h.b16 %v974
        %v5053 = vunpack.c.l.b16 %v975
        %v5054 = vunpack.c.h.b16 %v975
        %v5055 = vunpack.c.l.b16 %v976
        %v5056 = vunpack.c.h.b16 %v976
        %v5057 = vunpack.c.l.b16 %v977
        %v5058 = vunpack.c.h.b16 %v977
        %v5059 = vunpack.c.l.b16 %v978
        %v5060 = vunpack.c.h.b16 %v978
        %v5061 = vunpack.c.l.b16 %v979
        %v5062 = vunpack.c.h.b16 %v979
        %v5063 = vunpack.c.l.b16 %v980
        %v5064 = vunpack.c.h.b16 %v980
        %v5065 = vunpack.c.l.b16 %v981
        %v5066 = vunpack.c.h.b16 %v981
        %v5067 = vunpack.c.l.b16 %v982
        %v5068 = vunpack.c.h.b16 %v982
        %v5069 = vunpack.c.l.b16 %v983
        %v5070 = vunpack.c.h.b16 %v983
        %v5071 = vunpack.c.l.b16 %v984
        %v5072 = vunpack.c.h.b16 %v984
        %v5073 = vunpack.c.l.b16 %v985
        %v5074 = vunpack.c.h.b16 %v985
        %v5075 = vunpack.c.l.b16 %v986
        %v5076 = vunpack.c.h.b16 %v986
        %v5077 = vunpack.c.l.b16 %v987
        %v5078 = vunpack.c.h.b16 %v987
        %v5079 = vunpack.c.l.b16 %v988
        %v5080 = vunpack.c.h.b16 %v988
        %v5081 = vunpack.c.l.b16 %v989
        %v5082 = vunpack.c.h.b16 %v989
        %v5083 = vunpack.c.l.b16 %v990
        %v5084 = vunpack.c.h.b16 %v990
        %v5085 = vunpack.c.l.b16 %v991
        %v5086 = vunpack.c.h.b16 %v991
        %v5087 = vunpack.c.l.b16 %v992
        %v5088 = vunpack.c.h.b16 %v992
        %v5089 = vunpack.c.l.b16 %v993
        %v5090 = vunpack.c.h.b16 %v993
        %v5091 = vunpack.c.l.b16 %v994
        %v5092 = vunpack.c.h.b16 %v994
        %v5093 = vunpack.c.l.b16 %v995
        %v5094 = vunpack.c.h.b16 %v995
        %v5095 = vunpack.c.l.b16 %v996
        %v5096 = vunpack.c.h.b16 %v996
        %v5097 = vunpack.c.l.b16 %v997
        %v5098 = vunpack.c.h.b16 %v997
        %v5099 = vunpack.c.l.b16 %v998
        %v5100 = vunpack.c.h.b16 %v998
        %v5101 = vunpack.c.l.b16 %v999
        %v5102 = vunpack.c.h.b16 %v999
        %v5103 = vunpack.c.l.b16 %v1000
        %v5104 = vunpack.c.h.b16 %v1000
        %v5105 = vunpack.c.l.b16 %v1001
        %v5106 = vunpack.c.h.b16 %v1001
        %v5107 = vunpack.c.l.b16 %v1002
        %v5108 = vunpack.c.h.b16 %v1002
        %v5109 = vunpack.c.l.b16 %v1003
        %v5110 = vunpack.c.h.b16 %v1003
        %v5111 = vunpack.c.l.b16 %v1004
        %v5112 = vunpack.c.h.b16 %v1004
        %v5113 = vunpack.c.l.b16 %v1005
        %v5114 = vunpack.c.h.b16 %v1005
        %v5115 = vunpack.c.l.b16 %v1006
        %v5116 = vunpack.c.h.b16 %v1006
        %v5117 = vunpack.c.l.b16 %v1007
        %v5118 = vunpack.c.h.b16 %v1007
        %v5119 = vunpack.c.l.b16 %v1008
        %v5120 = vunpack.c.h.b16 %v1008
        %v5121 = vunpack.c.l.b16 %v1009
        %v5122 = vunpack.c.h.b16 %v1009
        %v5123 = vunpack.c.l.b16 %v1010
        %v5124 = vunpack.c.h.b16 %v1010
        %v5125 = vunpack.c.l.b16 %v1011
        %v5126 = vunpack.c.h.b16 %v1011
        %v5127 = vunpack.c.l.b16 %v1012
        %v5128 = vunpack.c.h.b16 %v1012
        %v5129 = vunpack.c.l.b16 %v1013
        %v5130 = vunpack.c.h.b16 %v1013
        %v5131 = vunpack.c.l.b16 %v1014
        %v5132 = vunpack.c.h.b16 %v1014
        %v5133 = vunpack.c.l.b16 %v1015
        %v5134 = vunpack.c.h.b16 %v1015
        %v5135 = vunpack.c.l.b16 %v1016
        %v5136 = vunpack.c.h.b16 %v1016
        %v5137 = vunpack.c.l.b16 %v1017
        %v5138 = vunpack.c.h.b16 %v1017
        %v5139 = vunpack.c.l.b16 %v1018
        %v5140 = vunpack.c.h.b16 %v1018
        %v5141 = vunpack.c.l.b16 %v1019
        %v5142 = vunpack.c.h.b16 %v1019
        %v5143 = vunpack.c.l.b16 %v1020
        %v5144 = vunpack.c.h.b16 %v1020
        %v5145 = vunpack.c.l.b16 %v1021
        %v5146 = vunpack.c.h.b16 %v1021
        %v5147 = vunpack.c.l.b16 %v1022
        %v5148 = vunpack.c.h.b16 %v1022
        %v5149 = vunpack.c.l.b16 %v1023
        %v5150 = vunpack.c.h.b16 %v1023
        %v5151 = vunpack.c.l.b16 %v1024
        %v5152 = vunpack.c.h.b16 %v1024
        %v5153 = vunpack.c.l.b16 %v1025
        %v5154 = vunpack.c.h.b16 %v1025
        %v5155 = vunpack.c.l.b16 %v1026
        %v5156 = vunpack.c.h.b16 %v1026
        %v5157 = vunpack.c.l.b16 %v1027
        %v5158 = vunpack.c.h.b16 %v1027
        %v5159 = vunpack.c.l.b16 %v1028
        %v5160 = vunpack.c.h.b16 %v1028
        %v5161 = vunpack.c.l.b16 %v1029
        %v5162 = vunpack.c.h.b16 %v1029
        %v5163 = vunpack.c.l.b16 %v1030
        %v5164 = vunpack.c.h.b16 %v1030
        %v5165 = vunpack.c.l.b16 %v1031
        %v5166 = vunpack.c.h.b16 %v1031
        %v5167 = vunpack.c.l.b16 %v1032
        %v5168 = vunpack.c.h.b16 %v1032
        %v5169 = vunpack.c.l.b16 %v1033
        %v5170 = vunpack.c.h.b16 %v1033
        %v5171 = vunpack.c.l.b16 %v1034
        %v5172 = vunpack.c.h.b16 %v1034
        %v5173 = vunpack.c.l.b16 %v1035
        %v5174 = vunpack.c.h.b16 %v1035
        %v5175 = vunpack.c.l.b16 %v1036
        %v5176 = vunpack.c.h.b16 %v1036
        %v5177 = vunpack.c.l.b16 %v1037
        %v5178 = vunpack.c.h.b16 %v1037
        %v5179 = vunpack.c.l.b16 %v1038
        %v5180 = vunpack.c.h.b16 %v1038
        %v5181 = vunpack.c.l.b16 %v1039
        %v5182 = vunpack.c.h.b16 %v1039
        %v5183 = vunpack.c.l.b16 %v1040
        %v5184 = vunpack.c.h.b16 %v1040
        %v5185 = vunpack.c.l.b16 %v1041
        %v5186 = vunpack.c.h.b16 %v1041
        %v5187 = vunpack.c.l.b16 %v1042
        %v5188 = vunpack.c.h.b16 %v1042
        %v5189 = vunpack.c.l.b16 %v1043
        %v5190 = vunpack.c.h.b16 %v1043
        %v5191 = vunpack.c.l.b16 %v1044
        %v5192 = vunpack.c.h.b16 %v1044
        %v5193 = vunpack.c.l.b16 %v1045
        %v5194 = vunpack.c.h.b16 %v1045
        %v5195 = vunpack.c.l.b16 %v1046
        %v5196 = vunpack.c.h.b16 %v1046
        %v5197 = vunpack.c.l.b16 %v1047
        %v5198 = vunpack.c.h.b16 %v1047
        %v5199 = vunpack.c.l.b16 %v1048
        %v5200 = vunpack.c.h.b16 %v1048
        %v5201 = vunpack.c.l.b16 %v1049
        %v5202 = vunpack.c.h.b16 %v1049
        %v5203 = vunpack.c.l.b16 %v1050
        %v5204 = vunpack.c.h.b16 %v1050
        %v5205 = vunpack.c.l.b16 %v1051
        %v5206 = vunpack.c.h.b16 %v1051
        %v5207 = vunpack.c.l.b16 %v1052
        %v5208 = vunpack.c.h.b16 %v1052
        %v5209 = vunpack.c.l.b16 %v1053
        %v5210 = vunpack.c.h.b16 %v1053
        %v5211 = vunpack.c.l.b16 %v1054
        %v5212 = vunpack.c.h.b16 %v1054
        %v5213 = vunpack.c.l.b16 %v1055
        %v5214 = vunpack.c.h.b16 %v1055
        %v5215 = vunpack.c.l.b16 %v1056
        %v5216 = vunpack.c.h.b16 %v1056
        %v5217 = vunpack.c.l.b16 %v1057
        %v5218 = vunpack.c.h.b16 %v1057
        %v5219 = vunpack.c.l.b16 %v1058
        %v5220 = vunpack.c.h.b16 %v1058
        %v5221 = vunpack.c.l.b16 %v1059
        %v5222 = vunpack.c.h.b16 %v1059
        %v5223 = vunpack.c.l.b16 %v1060
        %v5224 = vunpack.c.h.b16 %v1060
        %v5225 = vunpack.c.l.b16 %v1061
        %v5226 = vunpack.c.h.b16 %v1061
        %v5227 = vunpack.c.l.b16 %v1062
        %v5228 = vunpack.c.h.b16 %v1062
        %v5229 = vunpack.c.l.b16 %v1063
        %v5230 = vunpack.c.h.b16 %v1063
        %v5231 = vunpack.c.l.b16 %v1064
        %v5232 = vunpack.c.h.b16 %v1064
        %v5233 = vunpack.c.l.b16 %v1065
        %v5234 = vunpack.c.h.b16 %v1065
        %v5235 = vunpack.c.l.b16 %v1066
        %v5236 = vunpack.c.h.b16 %v1066
        %v5237 = vunpack.c.l.b16 %v1067
        %v5238 = vunpack.c.h.b16 %v1067
        %v5239 = vunpack.c.l.b16 %v1068
        %v5240 = vunpack.c.h.b16 %v1068
        %v5241 = vunpack.c.l.b16 %v1069
        %v5242 = vunpack.c.h.b16 %v1069
        %v5243 = vunpack.c.l.b16 %v1070
        %v5244 = vunpack.c.h.b16 %v1070
        %v5245 = vunpack.c.l.b16 %v1071
        %v5246 = vunpack.c.h.b16 %v1071
        %v5247 = vunpack.c.l.b16 %v1072
        %v5248 = vunpack.c.h.b16 %v1072
        %v5249 = vunpack.c.l.b16 %v1073
        %v5250 = vunpack.c.h.b16 %v1073
        %v5251 = vunpack.c.l.b16 %v1074
        %v5252 = vunpack.c.h.b16 %v1074
        %v5253 = vunpack.c.l.b16 %v1075
        %v5254 = vunpack.c.h.b16 %v1075
        %v5255 = vunpack.c.l.b16 %v1076
        %v5256 = vunpack.c.h.b16 %v1076
        %v5257 = vunpack.c.l.b16 %v1077
        %v5258 = vunpack.c.h.b16 %v1077
        %v5259 = vunpack.c.l.b16 %v1078
        %v5260 = vunpack.c.h.b16 %v1078
        %v5261 = vunpack.c.l.b16 %v1079
        %v5262 = vunpack.c.h.b16 %v1079
        %v5263 = vunpack.c.l.b16 %v1080
        %v5264 = vunpack.c.h.b16 %v1080
        %v5265 = vunpack.c.l.b16 %v1081
        %v5266 = vunpack.c.h.b16 %v1081
        %v5267 = vunpack.c.l.b16 %v1082
        %v5268 = vunpack.c.h.b16 %v1082
        %v5269 = vunpack.c.l.b16 %v1083
        %v5270 = vunpack.c.h.b16 %v1083
        %v5271 = vunpack.c.l.b16 %v1084
        %v5272 = vunpack.c.h.b16 %v1084
        %v5273 = vunpack.c.l.b16 %v1085
        %v5274 = vunpack.c.h.b16 %v1085
        %v5275 = vunpack.c.l.b16 %v1086
        %v5276 = vunpack.c.h.b16 %v1086
        %v5277 = vunpack.c.l.b16 %v1087
        %v5278 = vunpack.c.h.b16 %v1087
        %v5279 = vunpack.c.l.b16 %v1088
        %v5280 = vunpack.c.h.b16 %v1088
        %v5281 = vunpack.c.l.b16 %v1089
        %v5282 = vunpack.c.h.b16 %v1089
        %v5283 = vunpack.c.l.b16 %v1090
        %v5284 = vunpack.c.h.b16 %v1090
        %v5285 = vunpack.c.l.b16 %v1091
        %v5286 = vunpack.c.h.b16 %v1091
        %v5287 = vunpack.c.l.b16 %v1092
        %v5288 = vunpack.c.h.b16 %v1092
        %v5289 = vunpack.c.l.b16 %v1093
        %v5290 = vunpack.c.h.b16 %v1093
        %v5291 = vunpack.c.l.b16 %v1094
        %v5292 = vunpack.c.h.b16 %v1094
        %v5293 = vunpack.c.l.b16 %v1095
        %v5294 = vunpack.c.h.b16 %v1095
        %v5295 = vunpack.c.l.b16 %v1096
        %v5296 = vunpack.c.h.b16 %v1096
        %v5297 = vunpack.c.l.b16 %v1097
        %v5298 = vunpack.c.h.b16 %v1097
        %v5299 = vunpack.c.l.b16 %v1098
        %v5300 = vunpack.c.h.b16 %v1098
        %v5301 = vunpack.c.l.b16 %v1099
        %v5302 = vunpack.c.h.b16 %v1099
        %v5303 = vunpack.c.l.b16 %v1100
        %v5304 = vunpack.c.h.b16 %v1100
        %v5305 = vunpack.c.l.b16 %v1101
        %v5306 = vunpack.c.h.b16 %v1101
        %v5307 = vunpack.c.l.b16 %v1102
        %v5308 = vunpack.c.h.b16 %v1102
        %v5309 = vunpack.c.l.b16 %v1103
        %v5310 = vunpack.c.h.b16 %v1103
        %v5311 = vunpack.c.l.b16 %v1104
        %v5312 = vunpack.c.h.b16 %v1104
        %v5313 = vunpack.c.l.b16 %v1105
        %v5314 = vunpack.c.h.b16 %v1105
        %v5315 = vunpack.c.l.b16 %v1106
        %v5316 = vunpack.c.h.b16 %v1106
        %v5317 = vunpack.c.l.b16 %v1107
        %v5318 = vunpack.c.h.b16 %v1107
        %v5319 = vunpack.c.l.b16 %v1108
        %v5320 = vunpack.c.h.b16 %v1108
        %v5321 = vunpack.c.l.b16 %v1109
        %v5322 = vunpack.c.h.b16 %v1109
        %v5323 = vunpack.c.l.b16 %v1110
        %v5324 = vunpack.c.h.b16 %v1110
        %v5325 = vunpack.c.l.b16 %v1111
        %v5326 = vunpack.c.h.b16 %v1111
        %v5327 = vunpack.c.l.b16 %v1112
        %v5328 = vunpack.c.h.b16 %v1112
        %v5329 = vunpack.c.l.b16 %v1113
        %v5330 = vunpack.c.h.b16 %v1113
        %v5331 = vunpack.c.l.b16 %v1114
        %v5332 = vunpack.c.h.b16 %v1114
        %v5333 = vunpack.c.l.b16 %v1115
        %v5334 = vunpack.c.h.b16 %v1115
        %v5335 = vunpack.c.l.b16 %v1116
        %v5336 = vunpack.c.h.b16 %v1116
        %v5337 = vunpack.c.l.b16 %v1117
        %v5338 = vunpack.c.h.b16 %v1117
        %v5339 = vunpack.c.l.b16 %v1118
        %v5340 = vunpack.c.h.b16 %v1118
        %v5341 = vunpack.c.l.b16 %v1119
        %v5342 = vunpack.c.h.b16 %v1119
        %v5343 = vunpack.c.l.b16 %v1120
        %v5344 = vunpack.c.h.b16 %v1120
        %v5345 = vunpack.c.l.b16 %v1121
        %v5346 = vunpack.c.h.b16 %v1121
        %v5347 = vunpack.c.l.b16 %v1122
        %v5348 = vunpack.c.h.b16 %v1122
        %v5349 = vunpack.c.l.b16 %v1123
        %v5350 = vunpack.c.h.b16 %v1123
        %v5351 = vunpack.c.l.b16 %v1124
        %v5352 = vunpack.c.h.b16 %v1124
        %v5353 = vunpack.c.l.b16 %v1125
        %v5354 = vunpack.c.h.b16 %v1125
        %v5355 = vunpack.c.l.b16 %v1126
        %v5356 = vunpack.c.h.b16 %v1126
        %v5357 = vunpack.c.l.b16 %v1127
        %v5358 = vunpack.c.h.b16 %v1127
        %v5359 = vunpack.c.l.b16 %v1128
        %v5360 = vunpack.c.h.b16 %v1128
        %v5361 = vunpack.c.l.b16 %v1129
        %v5362 = vunpack.c.h.b16 %v1129
        %v5363 = vunpack.c.l.b16 %v1130
        %v5364 = vunpack.c.h.b16 %v1130
        %v5365 = vunpack.c.l.b16 %v1131
        %v5366 = vunpack.c.h.b16 %v1131
        %v5367 = vunpack.c.l.b16 %v1132
        %v5368 = vunpack.c.h.b16 %v1132
        %v5369 = vunpack.c.l.b16 %v1133
        %v5370 = vunpack.c.h.b16 %v1133
        %v5371 = vunpack.c.l.b16 %v1134
        %v5372 = vunpack.c.h.b16 %v1134
        %v5373 = vunpack.c.l.b16 %v1135
        %v5374 = vunpack.c.h.b16 %v1135
        %v5375 = vunpack.c.l.b16 %v1136
        %v5376 = vunpack.c.h.b16 %v1136
        %v5377 = vunpack.c.l.b16 %v1137
        %v5378 = vunpack.c.h.b16 %v1137
        %v5379 = vunpack.c.l.b16 %v1138
        %v5380 = vunpack.c.h.b16 %v1138
        %v5381 = vunpack.c.l.b16 %v1139
        %v5382 = vunpack.c.h.b16 %v1139
        %v5383 = vunpack.c.l.b16 %v1140
        %v5384 = vunpack.c.h.b16 %v1140
        %v5385 = vunpack.c.l.b16 %v1141
        %v5386 = vunpack.c.h.b16 %v1141
        %v5387 = vunpack.c.l.b16 %v1142
        %v5388 = vunpack.c.h.b16 %v1142
        %v5389 = vunpack.c.l.b16 %v1143
        %v5390 = vunpack.c.h.b16 %v1143
        %v5391 = vunpack.c.l.b16 %v1144
        %v5392 = vunpack.c.h.b16 %v1144
        %v5393 = vunpack.c.l.b16 %v1145
        %v5394 = vunpack.c.h.b16 %v1145
        %v5395 = vunpack.c.l.b16 %v1146
        %v5396 = vunpack.c.h.b16 %v1146
        %v5397 = vunpack.c.l.b16 %v1147
        %v5398 = vunpack.c.h.b16 %v1147
        %v5399 = vunpack.c.l.b16 %v1148
        %v5400 = vunpack.c.h.b16 %v1148
        %v5401 = vunpack.c.l.b16 %v1149
        %v5402 = vunpack.c.h.b16 %v1149
        %v5403 = vunpack.c.l.b16 %v1150
        %v5404 = vunpack.c.h.b16 %v1150
        %v5405 = vunpack.c.l.b16 %v1151
        %v5406 = vunpack.c.h.b16 %v1151
        %v5407 = vunpack.c.l.b16 %v1152
        %v5408 = vunpack.c.h.b16 %v1152
        %v5409 = vunpack.c.l.b16 %v1153
        %v5410 = vunpack.c.h.b16 %v1153
        %v5411 = vunpack.c.l.b16 %v1154
        %v5412 = vunpack.c.h.b16 %v1154
        %v5413 = vunpack.c.l.b16 %v1155
        %v5414 = vunpack.c.h.b16 %v1155
        %v5415 = vunpack.c.l.b16 %v1156
        %v5416 = vunpack.c.h.b16 %v1156
        %v5417 = vunpack.c.l.b16 %v1157
        %v5418 = vunpack.c.h.b16 %v1157
        %v5419 = vunpack.c.l.b16 %v1158
        %v5420 = vunpack.c.h.b16 %v1158
        %v5421 = vunpack.c.l.b16 %v1159
        %v5422 = vunpack.c.h.b16 %v1159
        %v5423 = vunpack.c.l.b16 %v1160
        %v5424 = vunpack.c.h.b16 %v1160
        %v5425 = vunpack.c.l.b16 %v1161
        %v5426 = vunpack.c.h.b16 %v1161
        %v5427 = vunpack.c.l.b16 %v1162
        %v5428 = vunpack.c.h.b16 %v1162
        %v5429 = vunpack.c.l.b16 %v1163
        %v5430 = vunpack.c.h.b16 %v1163
        %v5431 = vunpack.c.l.b16 %v1164
        %v5432 = vunpack.c.h.b16 %v1164
        %v5433 = vunpack.c.l.b16 %v1165
        %v5434 = vunpack.c.h.b16 %v1165
        %v5435 = vunpack.c.l.b16 %v1166
        %v5436 = vunpack.c.h.b16 %v1166
        %v5437 = vunpack.c.l.b16 %v1167
        %v5438 = vunpack.c.h.b16 %v1167
        %v5439 = vunpack.c.l.b16 %v1168
        %v5440 = vunpack.c.h.b16 %v1168
        %v5441 = vunpack.c.l.b16 %v1169
        %v5442 = vunpack.c.h.b16 %v1169
        %v5443 = vunpack.c.l.b16 %v1170
        %v5444 = vunpack.c.h.b16 %v1170
        %v5445 = vunpack.c.l.b16 %v1171
        %v5446 = vunpack.c.h.b16 %v1171
        %v5447 = vunpack.c.l.b16 %v1172
        %v5448 = vunpack.c.h.b16 %v1172
        %v5449 = vunpack.c.l.b16 %v1173
        %v5450 = vunpack.c.h.b16 %v1173
        %v5451 = vunpack.c.l.b16 %v1174
        %v5452 = vunpack.c.h.b16 %v1174
        %v5453 = vunpack.c.l.b16 %v1175
        %v5454 = vunpack.c.h.b16 %v1175
        %v5455 = vunpack.c.l.b16 %v1176
        %v5456 = vunpack.c.h.b16 %v1176
        %v5457 = vunpack.c.l.b16 %v1177
        %v5458 = vunpack.c.h.b16 %v1177
        %v5459 = vunpack.c.l.b16 %v1178
        %v5460 = vunpack.c.h.b16 %v1178
        %v5461 = vunpack.c.l.b16 %v1179
        %v5462 = vunpack.c.h.b16 %v1179
        %v5463 = vunpack.c.l.b16 %v1180
        %v5464 = vunpack.c.h.b16 %v1180
        %v5465 = vunpack.c.l.b16 %v1181
        %v5466 = vunpack.c.h.b16 %v1181
        %v5467 = vunpack.c.l.b16 %v1182
        %v5468 = vunpack.c.h.b16 %v1182
        %v5469 = vunpack.c.l.b16 %v1183
        %v5470 = vunpack.c.h.b16 %v1183
        %v5471 = vunpack.c.l.b16 %v1184
        %v5472 = vunpack.c.h.b16 %v1184
        %v5473 = vunpack.c.l.b16 %v1185
        %v5474 = vunpack.c.h.b16 %v1185
        %v5475 = vunpack.c.l.b16 %v1186
        %v5476 = vunpack.c.h.b16 %v1186
        %v5477 = vunpack.c.l.b16 %v1187
        %v5478 = vunpack.c.h.b16 %v1187
        %v5479 = vunpack.c.l.b16 %v1188
        %v5480 = vunpack.c.h.b16 %v1188
        %v5481 = vunpack.c.l.b16 %v1189
        %v5482 = vunpack.c.h.b16 %v1189
        %v5483 = vunpack.c.l.b16 %v1190
        %v5484 = vunpack.c.h.b16 %v1190
        %v5485 = vunpack.c.l.b16 %v1191
        %v5486 = vunpack.c.h.b16 %v1191
        %v5487 = vunpack.c.l.b16 %v1192
        %v5488 = vunpack.c.h.b16 %v1192
        %v5489 = vunpack.c.l.b16 %v1193
        %v5490 = vunpack.c.h.b16 %v1193
        %v5491 = vunpack.c.l.b16 %v1194
        %v5492 = vunpack.c.h.b16 %v1194
        %v5493 = vunpack.c.l.b16 %v1195
        %v5494 = vunpack.c.h.b16 %v1195
        %v5495 = vunpack.c.l.b16 %v1196
        %v5496 = vunpack.c.h.b16 %v1196
        %v5497 = vunpack.c.l.b16 %v1197
        %v5498 = vunpack.c.h.b16 %v1197
        %v5499 = vunpack.c.l.b16 %v1198
        %v5500 = vunpack.c.h.b16 %v1198
        %v5501 = vunpack.c.l.b16 %v1199
        %v5502 = vunpack.c.h.b16 %v1199
        %v5503 = vunpack.c.l.b16 %v1200
        %v5504 = vunpack.c.h.b16 %v1200
        %v5505 = vunpack.c.l.b16 %v1201
        %v5506 = vunpack.c.h.b16 %v1201
        %v5507 = vunpack.c.l.b16 %v1202
        %v5508 = vunpack.c.h.b16 %v1202
        %v5509 = vunpack.c.l.b16 %v1203
        %v5510 = vunpack.c.h.b16 %v1203
        %v5511 = vunpack.c.l.b16 %v1204
        %v5512 = vunpack.c.h.b16 %v1204
        %v5513 = vunpack.c.l.b16 %v1205
        %v5514 = vunpack.c.h.b16 %v1205
        %v5515 = vunpack.c.l.b16 %v1206
        %v5516 = vunpack.c.h.b16 %v1206
        %v5517 = vunpack.c.l.b16 %v1207
        %v5518 = vunpack.c.h.b16 %v1207
        %v5519 = vunpack.c.l.b16 %v1208
        %v5520 = vunpack.c.h.b16 %v1208
        %v5521 = vunpack.c.l.b16 %v1209
        %v5522 = vunpack.c.h.b16 %v1209
        %v5523 = vunpack.c.l.b16 %v1210
        %v5524 = vunpack.c.h.b16 %v1210
        %v5525 = vunpack.c.l.b16 %v1211
        %v5526 = vunpack.c.h.b16 %v1211
        %v5527 = vunpack.c.l.b16 %v1212
        %v5528 = vunpack.c.h.b16 %v1212
        %v5529 = vunpack.c.l.b16 %v1213
        %v5530 = vunpack.c.h.b16 %v1213
        %v5531 = vunpack.c.l.b16 %v1214
        %v5532 = vunpack.c.h.b16 %v1214
        %v5533 = vunpack.c.l.b16 %v1215
        %v5534 = vunpack.c.h.b16 %v1215
        %v5535 = vunpack.c.l.b16 %v1216
        %v5536 = vunpack.c.h.b16 %v1216
        %v5537 = vunpack.c.l.b16 %v1217
        %v5538 = vunpack.c.h.b16 %v1217
        %v5539 = vunpack.c.l.b16 %v1218
        %v5540 = vunpack.c.h.b16 %v1218
        %v5541 = vunpack.c.l.b16 %v1219
        %v5542 = vunpack.c.h.b16 %v1219
        %v5543 = vunpack.c.l.b16 %v1220
        %v5544 = vunpack.c.h.b16 %v1220
        %v5545 = vunpack.c.l.b16 %v1221
        %v5546 = vunpack.c.h.b16 %v1221
        %v5547 = vunpack.c.l.b16 %v1222
        %v5548 = vunpack.c.h.b16 %v1222
        %v5549 = vunpack.c.l.b16 %v1223
        %v5550 = vunpack.c.h.b16 %v1223
        %v5551 = vunpack.c.l.b16 %v1224
        %v5552 = vunpack.c.h.b16 %v1224
        %v5553 = vunpack.c.l.b16 %v1225
        %v5554 = vunpack.c.h.b16 %v1225
        %v5555 = vunpack.c.l.b16 %v1226
        %v5556 = vunpack.c.h.b16 %v1226
        %v5557 = vunpack.c.l.b16 %v1227
        %v5558 = vunpack.c.h.b16 %v1227
        %v5559 = vunpack.c.l.b16 %v1228
        %v5560 = vunpack.c.h.b16 %v1228
        %v5561 = vunpack.c.l.b16 %v1229
        %v5562 = vunpack.c.h.b16 %v1229
        %v5563 = vunpack.c.l.b16 %v1230
        %v5564 = vunpack.c.h.b16 %v1230
        %v5565 = vunpack.c.l.b16 %v1231
        %v5566 = vunpack.c.h.b16 %v1231
        %v5567 = vunpack.c.l.b16 %v1232
        %v5568 = vunpack.c.h.b16 %v1232
        %v5569 = vunpack.c.l.b16 %v1233
        %v5570 = vunpack.c.h.b16 %v1233
        %v5571 = vunpack.c.l.b16 %v1234
        %v5572 = vunpack.c.h.b16 %v1234
        %v5573 = vunpack.c.l.b16 %v1235
        %v5574 = vunpack.c.h.b16 %v1235
        %v5575 = vunpack.c.l.b16 %v1236
        %v5576 = vunpack.c.h.b16 %v1236
        %v5577 = vunpack.c.l.b16 %v1237
        %v5578 = vunpack.c.h.b16 %v1237
        %v5579 = vunpack.c.l.b16 %v1238
        %v5580 = vunpack.c.h.b16 %v1238
        %v5581 = vunpack.c.l.b16 %v1239
        %v5582 = vunpack.c.h.b16 %v1239
        %v5583 = vunpack.c.l.b16 %v1240
        %v5584 = vunpack.c.h.b16 %v1240
        %v5585 = vunpack.c.l.b16 %v1241
        %v5586 = vunpack.c.h.b16 %v1241
        %v5587 = vunpack.c.l.b16 %v1242
        %v5588 = vunpack.c.h.b16 %v1242
        %v5589 = vunpack.c.l.b16 %v1243
        %v5590 = vunpack.c.h.b16 %v1243
        %v5591 = vunpack.c.l.b16 %v1244
        %v5592 = vunpack.c.h.b16 %v1244
        %v5593 = vunpack.c.l.b16 %v1245
        %v5594 = vunpack.c.h.b16 %v1245
        %v5595 = vunpack.c.l.b16 %v1246
        %v5596 = vunpack.c.h.b16 %v1246
        %v5597 = vunpack.c.l.b16 %v1247
        %v5598 = vunpack.c.h.b16 %v1247
        %v5599 = vunpack.c.l.b16 %v1248
        %v5600 = vunpack.c.h.b16 %v1248
        %v5601 = vunpack.c.l.b16 %v1249
        %v5602 = vunpack.c.h.b16 %v1249
        %v5603 = vunpack.c.l.b16 %v1250
        %v5604 = vunpack.c.h.b16 %v1250
        %v5605 = vunpack.c.l.b16 %v1251
        %v5606 = vunpack.c.h.b16 %v1251
        %v5607 = vunpack.c.l.b16 %v1252
        %v5608 = vunpack.c.h.b16 %v1252
        %v5609 = vunpack.c.l.b16 %v1253
        %v5610 = vunpack.c.h.b16 %v1253
        %v5611 = vunpack.c.l.b16 %v1254
        %v5612 = vunpack.c.h.b16 %v1254
        %v5613 = vunpack.c.l.b16 %v1255
        %v5614 = vunpack.c.h.b16 %v1255
        %v5615 = vunpack.c.l.b16 %v1256
        %v5616 = vunpack.c.h.b16 %v1256
        %v5617 = vunpack.c.l.b16 %v1257
        %v5618 = vunpack.c.h.b16 %v1257
        %v5619 = vunpack.c.l.b16 %v1258
        %v5620 = vunpack.c.h.b16 %v1258
        %v5621 = vunpack.c.l.b16 %v1259
        %v5622 = vunpack.c.h.b16 %v1259
        %v5623 = vunpack.c.l.b16 %v1260
        %v5624 = vunpack.c.h.b16 %v1260
        %v5625 = vunpack.c.l.b16 %v1261
        %v5626 = vunpack.c.h.b16 %v1261
        %v5627 = vunpack.c.l.b16 %v1262
        %v5628 = vunpack.c.h.b16 %v1262
        %v5629 = vunpack.c.l.b16 %v1263
        %v5630 = vunpack.c.h.b16 %v1263
        %v5631 = vunpack.c.l.b16 %v1264
        %v5632 = vunpack.c.h.b16 %v1264
        %v5633 = vunpack.c.l.b16 %v1265
        %v5634 = vunpack.c.h.b16 %v1265
        %v5635 = vunpack.c.l.b16 %v1266
        %v5636 = vunpack.c.h.b16 %v1266
        %v5637 = vunpack.c.l.b16 %v1267
        %v5638 = vunpack.c.h.b16 %v1267
        %v5639 = vunpack.c.l.b16 %v1268
        %v5640 = vunpack.c.h.b16 %v1268
        %v5641 = vunpack.c.l.b16 %v1269
        %v5642 = vunpack.c.h.b16 %v1269
        %v5643 = vunpack.c.l.b16 %v1270
        %v5644 = vunpack.c.h.b16 %v1270
        %v5645 = vunpack.c.l.b16 %v1271
        %v5646 = vunpack.c.h.b16 %v1271
        %v5647 = vunpack.c.l.b16 %v1272
        %v5648 = vunpack.c.h.b16 %v1272
        %v5649 = vunpack.c.l.b16 %v1273
        %v5650 = vunpack.c.h.b16 %v1273
        %v5651 = vunpack.c.l.b16 %v1274
        %v5652 = vunpack.c.h.b16 %v1274
        %v5653 = vunpack.c.l.b16 %v1275
        %v5654 = vunpack.c.h.b16 %v1275
        %v5655 = vunpack.c.l.b16 %v1276
        %v5656 = vunpack.c.h.b16 %v1276
        %v5657 = vunpack.c.l.b16 %v1277
        %v5658 = vunpack.c.h.b16 %v1277
        %v5659 = vunpack.c.l.b16 %v1278
        %v5660 = vunpack.c.h.b16 %v1278
        %v5661 = vunpack.c.l.b16 %v1279
        %v5662 = vunpack.c.h.b16 %v1279
        %v5663 = vunpack.c.l.b16 %v1280
        %v5664 = vunpack.c.h.b16 %v1280
        %v5665 = vunpack.c.l.b16 %v1281
        %v5666 = vunpack.c.h.b16 %v1281
        %v5667 = vunpack.c.l.b16 %v1282
        %v5668 = vunpack.c.h.b16 %v1282
        %v5669 = vunpack.c.l.b16 %v1283
        %v5670 = vunpack.c.h.b16 %v1283
        %v5671 = vunpack.c.l.b16 %v1284
        %v5672 = vunpack.c.h.b16 %v1284
        %v5673 = vunpack.c.l.b16 %v1285
        %v5674 = vunpack.c.h.b16 %v1285
        %v5675 = vunpack.c.l.b16 %v1286
        %v5676 = vunpack.c.h.b16 %v1286
        %v5677 = vunpack.c.l.b16 %v1287
        %v5678 = vunpack.c.h.b16 %v1287
        %v5679 = vunpack.c.l.b16 %v1288
        %v5680 = vunpack.c.h.b16 %v1288
        %v5681 = vunpack.c.l.b16 %v1289
        %v5682 = vunpack.c.h.b16 %v1289
        %v5683 = vunpack.c.l.b16 %v1290
        %v5684 = vunpack.c.h.b16 %v1290
        %v5685 = vunpack.c.l.b16 %v1291
        %v5686 = vunpack.c.h.b16 %v1291
        %v5687 = vunpack.c.l.b16 %v1292
        %v5688 = vunpack.c.h.b16 %v1292
        %v5689 = vunpack.c.l.b16 %v1293
        %v5690 = vunpack.c.h.b16 %v1293
        %v5691 = vunpack.c.l.b16 %v1294
        %v5692 = vunpack.c.h.b16 %v1294
        %v5693 = vunpack.c.l.b16 %v1295
        %v5694 = vunpack.c.h.b16 %v1295
        %v5695 = vunpack.c.l.b16 %v1296
        %v5696 = vunpack.c.h.b16 %v1296
        %v5697 = vunpack.c.l.b16 %v1297
        %v5698 = vunpack.c.h.b16 %v1297
        %v5699 = vunpack.c.l.b16 %v1298
        %v5700 = vunpack.c.h.b16 %v1298
        %v5701 = vunpack.c.l.b16 %v1299
        %v5702 = vunpack.c.h.b16 %v1299
        %v5703 = vunpack.c.l.b16 %v1300
        %v5704 = vunpack.c.h.b16 %v1300
        %v5705 = vunpack.c.l.b16 %v1301
        %v5706 = vunpack.c.h.b16 %v1301
        %v5707 = vunpack.c.l.b16 %v1302
        %v5708 = vunpack.c.h.b16 %v1302
        %v5709 = vunpack.c.l.b16 %v1303
        %v5710 = vunpack.c.h.b16 %v1303
        %v5711 = vunpack.c.l.b16 %v1304
        %v5712 = vunpack.c.h.b16 %v1304
        %v5713 = vunpack.c.l.b16 %v1305
        %v5714 = vunpack.c.h.b16 %v1305
        %v5715 = vunpack.c.l.b16 %v1306
        %v5716 = vunpack.c.h.b16 %v1306
        %v5717 = vunpack.c.l.b16 %v1307
        %v5718 = vunpack.c.h.b16 %v1307
        %v5719 = vunpack.c.l.b16 %v1308
        %v5720 = vunpack.c.h.b16 %v1308
        %v5721 = vunpack.c.l.b16 %v1309
        %v5722 = vunpack.c.h.b16 %v1309
        %v5723 = vunpack.c.l.b16 %v1310
        %v5724 = vunpack.c.h.b16 %v1310
        %v5725 = vunpack.c.l.b16 %v1311
        %v5726 = vunpack.c.h.b16 %v1311
        %v5727 = vunpack.c.l.b16 %v1312
        %v5728 = vunpack.c.h.b16 %v1312
        %v5729 = vunpack.c.l.b16 %v1313
        %v5730 = vunpack.c.h.b16 %v1313
        %v5731 = vunpack.c.l.b16 %v1314
        %v5732 = vunpack.c.h.b16 %v1314
        %v5733 = vunpack.c.l.b16 %v1315
        %v5734 = vunpack.c.h.b16 %v1315
        %v5735 = vunpack.c.l.b16 %v1316
        %v5736 = vunpack.c.h.b16 %v1316
        %v5737 = vunpack.c.l.b16 %v1317
        %v5738 = vunpack.c.h.b16 %v1317
        %v5739 = vunpack.c.l.b16 %v1318
        %v5740 = vunpack.c.h.b16 %v1318
        %v5741 = vunpack.c.l.b16 %v1319
        %v5742 = vunpack.c.h.b16 %v1319
        %v5743 = vunpack.c.l.b16 %v1320
        %v5744 = vunpack.c.h.b16 %v1320
        %v5745 = vunpack.c.l.b16 %v1321
        %v5746 = vunpack.c.h.b16 %v1321
        %v5747 = vunpack.c.l.b16 %v1322
        %v5748 = vunpack.c.h.b16 %v1322
        %v5749 = vunpack.c.l.b16 %v1323
        %v5750 = vunpack.c.h.b16 %v1323
        %v5751 = vunpack.c.l.b16 %v1324
        %v5752 = vunpack.c.h.b16 %v1324
        %v5753 = vunpack.c.l.b16 %v1325
        %v5754 = vunpack.c.h.b16 %v1325
        %v5755 = vunpack.c.l.b16 %v1326
        %v5756 = vunpack.c.h.b16 %v1326
        %v5757 = vunpack.c.l.b16 %v1327
        %v5758 = vunpack.c.h.b16 %v1327
        %v5759 = vunpack.c.l.b16 %v1328
        %v5760 = vunpack.c.h.b16 %v1328
        %v5761 = vunpack.c.l.b16 %v1329
        %v5762 = vunpack.c.h.b16 %v1329
        %v5763 = vunpack.c.l.b16 %v1330
        %v5764 = vunpack.c.h.b16 %v1330
        %v5765 = vunpack.c.l.b16 %v1331
        %v5766 = vunpack.c.h.b16 %v1331
        %v5767 = vunpack.c.l.b16 %v1332
        %v5768 = vunpack.c.h.b16 %v1332
        %v5769 = vunpack.c.l.b16 %v1333
        %v5770 = vunpack.c.h.b16 %v1333
        %v5771 = vunpack.c.l.b16 %v1334
        %v5772 = vunpack.c.h.b16 %v1334
        %v5773 = vunpack.c.l.b16 %v1335
        %v5774 = vunpack.c.h.b16 %v1335
        %v5775 = vunpack.c.l.b16 %v1336
        %v5776 = vunpack.c.h.b16 %v1336
        %v5777 = vunpack.c.l.b16 %v1337
        %v5778 = vunpack.c.h.b16 %v1337
        %v5779 = vunpack.c.l.b16 %v1338
        %v5780 = vunpack.c.h.b16 %v1338
        %v5781 = vunpack.c.l.b16 %v1339
        %v5782 = vunpack.c.h.b16 %v1339
        %v5783 = vunpack.c.l.b16 %v1340
        %v5784 = vunpack.c.h.b16 %v1340
        %v5785 = vunpack.c.l.b16 %v1341
        %v5786 = vunpack.c.h.b16 %v1341
        %v5787 = vunpack.c.l.b16 %v1342
        %v5788 = vunpack.c.h.b16 %v1342
        %v5789 = vunpack.c.l.b16 %v1343
        %v5790 = vunpack.c.h.b16 %v1343
        %v5791 = vunpack.c.l.b16 %v1344
        %v5792 = vunpack.c.h.b16 %v1344
        %v5793 = vunpack.c.l.b16 %v1345
        %v5794 = vunpack.c.h.b16 %v1345
        %v5795 = vunpack.c.l.b16 %v1346
        %v5796 = vunpack.c.h.b16 %v1346
        %v5797 = vunpack.c.l.b16 %v1347
        %v5798 = vunpack.c.h.b16 %v1347
        %v5799 = vunpack.c.l.b16 %v1348
        %v5800 = vunpack.c.h.b16 %v1348
        %v5801 = vunpack.c.l.b16 %v1349
        %v5802 = vunpack.c.h.b16 %v1349
        %v5803 = vunpack.c.l.b16 %v1350
        %v5804 = vunpack.c.h.b16 %v1350
        %v5805 = vunpack.c.l.b16 %v1351
        %v5806 = vunpack.c.h.b16 %v1351
        %v5807 = vunpack.c.l.b16 %v1352
        %v5808 = vunpack.c.h.b16 %v1352
        %v5809 = vunpack.c.l.b16 %v1353
        %v5810 = vunpack.c.h.b16 %v1353
        %v5811 = vunpack.c.l.b16 %v1354
        %v5812 = vunpack.c.h.b16 %v1354
        %v5813 = vunpack.c.l.b16 %v1355
        %v5814 = vunpack.c.h.b16 %v1355
        %v5815 = vunpack.c.l.b16 %v1356
        %v5816 = vunpack.c.h.b16 %v1356
        %v5817 = vunpack.c.l.b16 %v1357
        %v5818 = vunpack.c.h.b16 %v1357
        %v5819 = vunpack.c.l.b16 %v1358
        %v5820 = vunpack.c.h.b16 %v1358
        %v5821 = vunpack.c.l.b16 %v1359
        %v5822 = vunpack.c.h.b16 %v1359
        %v5823 = vunpack.c.l.b16 %v1360
        %v5824 = vunpack.c.h.b16 %v1360
        %v5825 = vunpack.c.l.b16 %v1361
        %v5826 = vunpack.c.h.b16 %v1361
        %v5827 = vunpack.c.l.b16 %v1362
        %v5828 = vunpack.c.h.b16 %v1362
        %v5829 = vunpack.c.l.b16 %v1363
        %v5830 = vunpack.c.h.b16 %v1363
        %v5831 = vunpack.c.l.b16 %v1364
        %v5832 = vunpack.c.h.b16 %v1364
        %v5833 = vunpack.c.l.b16 %v1365
        %v5834 = vunpack.c.h.b16 %v1365
        %v5835 = vunpack.c.l.b16 %v1366
        %v5836 = vunpack.c.h.b16 %v1366
        %v5837 = vunpack.c.l.b16 %v1367
        %v5838 = vunpack.c.h.b16 %v1367
        %v5839 = vunpack.c.l.b16 %v1368
        %v5840 = vunpack.c.h.b16 %v1368
        %v5841 = vunpack.c.l.b16 %v1369
        %v5842 = vunpack.c.h.b16 %v1369
        %v5843 = vunpack.c.l.b16 %v1370
        %v5844 = vunpack.c.h.b16 %v1370
        %v5845 = vunpack.c.l.b16 %v1371
        %v5846 = vunpack.c.h.b16 %v1371
        %v5847 = vunpack.c.l.b16 %v1372
        %v5848 = vunpack.c.h.b16 %v1372
        %v5849 = vunpack.c.l.b16 %v1373
        %v5850 = vunpack.c.h.b16 %v1373
        %v5851 = vunpack.c.l.b16 %v1374
        %v5852 = vunpack.c.h.b16 %v1374
        %v5853 = vunpack.c.l.b16 %v1375
        %v5854 = vunpack.c.h.b16 %v1375
        %v5855 = vunpack.c.l.b16 %v1376
        %v5856 = vunpack.c.h.b16 %v1376
        %v5857 = vunpack.c.l.b16 %v1377
        %v5858 = vunpack.c.h.b16 %v1377
        %v5859 = vunpack.c.l.b16 %v1378
        %v5860 = vunpack.c.h.b16 %v1378
        %v5861 = vunpack.c.l.b16 %v1379
        %v5862 = vunpack.c.h.b16 %v1379
        %v5863 = vunpack.c.l.b16 %v1380
        %v5864 = vunpack.c.h.b16 %v1380
        %v5865 = vunpack.c.l.b16 %v1381
        %v5866 = vunpack.c.h.b16 %v1381
        %v5867 = vunpack.c.l.b16 %v1382
        %v5868 = vunpack.c.h.b16 %v1382
        %v5869 = vunpack.c.l.b16 %v1383
        %v5870 = vunpack.c.h.b16 %v1383
        %v5871 = vunpack.c.l.b16 %v1384
        %v5872 = vunpack.c.h.b16 %v1384
        %v5873 = vunpack.c.l.b16 %v1385
        %v5874 = vunpack.c.h.b16 %v1385
        %v5875 = vunpack.c.l.b16 %v1386
        %v5876 = vunpack.c.h.b16 %v1386
        %v5877 = vunpack.c.l.b16 %v1387
        %v5878 = vunpack.c.h.b16 %v1387
        %v5879 = vunpack.c.l.b16 %v1388
        %v5880 = vunpack.c.h.b16 %v1388
        %v5881 = vunpack.c.l.b16 %v1389
        %v5882 = vunpack.c.h.b16 %v1389
        %v5883 = vunpack.c.l.b16 %v1390
        %v5884 = vunpack.c.h.b16 %v1390
        %v5885 = vunpack.c.l.b16 %v1391
        %v5886 = vunpack.c.h.b16 %v1391
        %v5887 = vunpack.c.l.b16 %v1392
        %v5888 = vunpack.c.h.b16 %v1392
        %v5889 = vunpack.c.l.b16 %v1393
        %v5890 = vunpack.c.h.b16 %v1393
        %v5891 = vunpack.c.l.b16 %v1394
        %v5892 = vunpack.c.h.b16 %v1394
        %v5893 = vunpack.c.l.b16 %v1395
        %v5894 = vunpack.c.h.b16 %v1395
        %v5895 = vunpack.c.l.b16 %v1396
        %v5896 = vunpack.c.h.b16 %v1396
        %v5897 = vunpack.c.l.b16 %v1397
        %v5898 = vunpack.c.h.b16 %v1397
        %v5899 = vunpack.c.l.b16 %v1398
        %v5900 = vunpack.c.h.b16 %v1398
        %v5901 = vunpack.c.l.b16 %v1399
        %v5902 = vunpack.c.h.b16 %v1399
        %v5903 = vunpack.c.l.b16 %v1400
        %v5904 = vunpack.c.h.b16 %v1400
        %v5905 = vunpack.c.l.b16 %v1401
        %v5906 = vunpack.c.h.b16 %v1401
        %v5907 = vunpack.c.l.b16 %v1402
        %v5908 = vunpack.c.h.b16 %v1402
        %v5909 = vunpack.c.l.b16 %v1403
        %v5910 = vunpack.c.h.b16 %v1403
        %v5911 = vunpack.c.l.b16 %v1404
        %v5912 = vunpack.c.h.b16 %v1404
        %v5913 = vunpack.c.l.b16 %v1405
        %v5914 = vunpack.c.h.b16 %v1405
        %v5915 = vunpack.c.l.b16 %v1406
        %v5916 = vunpack.c.h.b16 %v1406
        %v5917 = vunpack.c.l.b16 %v1407
        %v5918 = vunpack.c.h.b16 %v1407
        %v5919 = vunpack.c.l.b16 %v1408
        %v5920 = vunpack.c.h.b16 %v1408
        %v5921 = vunpack.c.l.b16 %v1409
        %v5922 = vunpack.c.h.b16 %v1409
        %v5923 = vunpack.c.l.b16 %v1410
        %v5924 = vunpack.c.h.b16 %v1410
        %v5925 = vunpack.c.l.b16 %v1411
        %v5926 = vunpack.c.h.b16 %v1411
        %v5927 = vunpack.c.l.b16 %v1412
        %v5928 = vunpack.c.h.b16 %v1412
        %v5929 = vunpack.c.l.b16 %v1413
        %v5930 = vunpack.c.h.b16 %v1413
        %v5931 = vunpack.c.l.b16 %v1414
        %v5932 = vunpack.c.h.b16 %v1414
        %v5933 = vunpack.c.l.b16 %v1415
        %v5934 = vunpack.c.h.b16 %v1415
        %v5935 = vunpack.c.l.b16 %v1416
        %v5936 = vunpack.c.h.b16 %v1416
        %v5937 = vunpack.c.l.b16 %v1417
        %v5938 = vunpack.c.h.b16 %v1417
        %v5939 = vunpack.c.l.b16 %v1418
        %v5940 = vunpack.c.h.b16 %v1418
        %v5941 = vunpack.c.l.b16 %v1419
        %v5942 = vunpack.c.h.b16 %v1419
        %v5943 = vunpack.c.l.b16 %v1420
        %v5944 = vunpack.c.h.b16 %v1420
        %v5945 = vunpack.c.l.b16 %v1421
        %v5946 = vunpack.c.h.b16 %v1421
        %v5947 = vunpack.c.l.b16 %v1422
        %v5948 = vunpack.c.h.b16 %v1422
        %v5949 = vunpack.c.l.b16 %v1423
        %v5950 = vunpack.c.h.b16 %v1423
        %v5951 = vunpack.c.l.b16 %v1424
        %v5952 = vunpack.c.h.b16 %v1424
        %v5953 = vunpack.c.l.b16 %v1425
        %v5954 = vunpack.c.h.b16 %v1425
        %v5955 = vunpack.c.l.b16 %v1426
        %v5956 = vunpack.c.h.b16 %v1426
        %v5957 = vunpack.c.l.b16 %v1427
        %v5958 = vunpack.c.h.b16 %v1427
        %v5959 = vunpack.c.l.b16 %v1428
        %v5960 = vunpack.c.h.b16 %v1428
        %v5961 = vunpack.c.l.b16 %v1429
        %v5962 = vunpack.c.h.b16 %v1429
        %v5963 = vunpack.c.l.b16 %v1430
        %v5964 = vunpack.c.h.b16 %v1430
        %v5965 = vunpack.c.l.b16 %v1431
        %v5966 = vunpack.c.h.b16 %v1431
        %v5967 = vunpack.c.l.b16 %v1432
        %v5968 = vunpack.c.h.b16 %v1432
        %v5969 = vunpack.c.l.b16 %v1433
        %v5970 = vunpack.c.h.b16 %v1433
        %v5971 = vunpack.c.l.b16 %v1434
        %v5972 = vunpack.c.h.b16 %v1434
        %v5973 = vunpack.c.l.b16 %v1435
        %v5974 = vunpack.c.h.b16 %v1435
        %v5975 = vunpack.c.l.b16 %v1436
        %v5976 = vunpack.c.h.b16 %v1436
        %v5977 = vunpack.c.l.b16 %v1437
        %v5978 = vunpack.c.h.b16 %v1437
        %v5979 = vunpack.c.l.b16 %v1438
        %v5980 = vunpack.c.h.b16 %v1438
        %v5981 = vunpack.c.l.b16 %v1439
        %v5982 = vunpack.c.h.b16 %v1439
        %v5983 = vunpack.c.l.b16 %v1440
        %v5984 = vunpack.c.h.b16 %v1440
        %v5985 = vunpack.c.l.b16 %v1441
        %v5986 = vunpack.c.h.b16 %v1441
        %v5987 = vunpack.c.l.b16 %v1442
        %v5988 = vunpack.c.h.b16 %v1442
        %v5989 = vunpack.c.l.b16 %v1443
        %v5990 = vunpack.c.h.b16 %v1443
        %v5991 = vunpack.c.l.b16 %v1444
        %v5992 = vunpack.c.h.b16 %v1444
        %v5993 = vunpack.c.l.b16 %v1445
        %v5994 = vunpack.c.h.b16 %v1445
        %v5995 = vunpack.c.l.b16 %v1446
        %v5996 = vunpack.c.h.b16 %v1446
        %v5997 = vunpack.c.l.b16 %v1447
        %v5998 = vunpack.c.h.b16 %v1447
        %v5999 = vunpack.c.l.b16 %v1448
        %v6000 = vunpack.c.h.b16 %v1448
        %v6001 = vunpack.c.l.b16 %v1449
        %v6002 = vunpack.c.h.b16 %v1449
        %v6003 = vunpack.c.l.b16 %v1450
        %v6004 = vunpack.c.h.b16 %v1450
        %v6005 = vunpack.c.l.b16 %v1451
        %v6006 = vunpack.c.h.b16 %v1451
        %v6007 = vunpack.c.l.b16 %v1452
        %v6008 = vunpack.c.h.b16 %v1452
        %v6009 = vunpack.c.l.b16 %v1453
        %v6010 = vunpack.c.h.b16 %v1453
        %v6011 = vunpack.c.l.b16 %v1454
        %v6012 = vunpack.c.h.b16 %v1454
        %v6013 = vunpack.c.l.b16 %v1455
        %v6014 = vunpack.c.h.b16 %v1455
        %v6015 = vunpack.c.l.b16 %v1456
        %v6016 = vunpack.c.h.b16 %v1456
        %v6017 = vunpack.c.l.b16 %v1457
        %v6018 = vunpack.c.h.b16 %v1457
        %v6019 = vunpack.c.l.b16 %v1458
        %v6020 = vunpack.c.h.b16 %v1458
        %v6021 = vunpack.c.l.b16 %v1459
        %v6022 = vunpack.c.h.b16 %v1459
        %v6023 = vunpack.c.l.b16 %v1460
        %v6024 = vunpack.c.h.b16 %v1460
        %v6025 = vunpack.c.l.b16 %v1461
        %v6026 = vunpack.c.h.b16 %v1461
        %v6027 = vunpack.c.l.b16 %v1462
        %v6028 = vunpack.c.h.b16 %v1462
        %v6029 = vunpack.c.l.b16 %v1463
        %v6030 = vunpack.c.h.b16 %v1463
        %v6031 = vunpack.c.l.b16 %v1464
        %v6032 = vunpack.c.h.b16 %v1464
        %v6033 = vunpack.c.l.b16 %v1465
        %v6034 = vunpack.c.h.b16 %v1465
        %v6035 = vunpack.c.l.b16 %v1466
        %v6036 = vunpack.c.h.b16 %v1466
        %v6037 = vunpack.c.l.b16 %v1467
        %v6038 = vunpack.c.h.b16 %v1467
        %v6039 = vunpack.c.l.b16 %v1468
        %v6040 = vunpack.c.h.b16 %v1468
        %v6041 = vunpack.c.l.b16 %v1469
        %v6042 = vunpack.c.h.b16 %v1469
        %v6043 = vunpack.c.l.b16 %v1470
        %v6044 = vunpack.c.h.b16 %v1470
        %v6045 = vunpack.c.l.b16 %v1471
        %v6046 = vunpack.c.h.b16 %v1471
        %v6047 = vunpack.c.l.b16 %v1472
        %v6048 = vunpack.c.h.b16 %v1472
        %v6049 = vunpack.c.l.b16 %v1473
        %v6050 = vunpack.c.h.b16 %v1473
        %v6051 = vunpack.c.l.b16 %v1474
        %v6052 = vunpack.c.h.b16 %v1474
        %v6053 = vunpack.c.l.b16 %v1475
        %v6054 = vunpack.c.h.b16 %v1475
        %v6055 = vunpack.c.l.b16 %v1476
        %v6056 = vunpack.c.h.b16 %v1476
        %v6057 = vunpack.c.l.b16 %v1477
        %v6058 = vunpack.c.h.b16 %v1477
        %v6059 = vunpack.c.l.b16 %v1478
        %v6060 = vunpack.c.h.b16 %v1478
        %v6061 = vunpack.c.l.b16 %v1479
        %v6062 = vunpack.c.h.b16 %v1479
        %v6063 = vunpack.c.l.b16 %v1480
        %v6064 = vunpack.c.h.b16 %v1480
        %v6065 = vunpack.c.l.b16 %v1481
        %v6066 = vunpack.c.h.b16 %v1481
        %v6067 = vunpack.c.l.b16 %v1482
        %v6068 = vunpack.c.h.b16 %v1482
        %v6069 = vunpack.c.l.b16 %v1483
        %v6070 = vunpack.c.h.b16 %v1483
        %v6071 = vunpack.c.l.b16 %v1484
        %v6072 = vunpack.c.h.b16 %v1484
        %v6073 = vunpack.c.l.b16 %v1485
        %v6074 = vunpack.c.h.b16 %v1485
        %v6075 = vunpack.c.l.b16 %v1486
        %v6076 = vunpack.c.h.b16 %v1486
        %v6077 = vunpack.c.l.b16 %v1487
        %v6078 = vunpack.c.h.b16 %v1487
        %v6079 = vunpack.c.l.b16 %v1488
        %v6080 = vunpack.c.h.b16 %v1488
        %v6081 = vunpack.c.l.b16 %v1489
        %v6082 = vunpack.c.h.b16 %v1489
        %v6083 = vunpack.c.l.b16 %v1490
        %v6084 = vunpack.c.h.b16 %v1490
        %v6085 = vunpack.c.l.b16 %v1491
        %v6086 = vunpack.c.h.b16 %v1491
        %v6087 = vunpack.c.l.b16 %v1492
        %v6088 = vunpack.c.h.b16 %v1492
        %v6089 = vunpack.c.l.b16 %v1493
        %v6090 = vunpack.c.h.b16 %v1493
        %v6091 = vunpack.c.l.b16 %v1494
        %v6092 = vunpack.c.h.b16 %v1494
        %v6093 = vunpack.c.l.b16 %v1495
        %v6094 = vunpack.c.h.b16 %v1495
        %v6095 = vunpack.c.l.b16 %v1496
        %v6096 = vunpack.c.h.b16 %v1496
        %v6097 = vunpack.c.l.b16 %v1497
        %v6098 = vunpack.c.h.b16 %v1497
        %v6099 = vunpack.c.l.b16 %v1498
        %v6100 = vunpack.c.h.b16 %v1498
        %v6101 = vunpack.c.l.b16 %v1499
        %v6102 = vunpack.c.h.b16 %v1499
        %v6103 = vunpack.c.l.b16 %v1500
        %v6104 = vunpack.c.h.b16 %v1500
        %v6105 = vunpack.c.l.b16 %v1501
        %v6106 = vunpack.c.h.b16 %v1501
        %v6107 = vunpack.c.l.b16 %v1502
        %v6108 = vunpack.c.h.b16 %v1502
        %v6109 = vunpack.c.l.b16 %v1503
        %v6110 = vunpack.c.h.b16 %v1503
        %v6111 = vunpack.c.l.b16 %v1504
        %v6112 = vunpack.c.h.b16 %v1504
        %v6113 = vunpack.c.l.b16 %v1505
        %v6114 = vunpack.c.h.b16 %v1505
        %v6115 = vunpack.c.l.b16 %v1506
        %v6116 = vunpack.c.h.b16 %v1506
        %v6117 = vunpack.c.l.b16 %v1507
        %v6118 = vunpack.c.h.b16 %v1507
        %v6119 = vunpack.c.l.b16 %v1508
        %v6120 = vunpack.c.h.b16 %v1508
        %v6121 = vunpack.c.l.b16 %v1509
        %v6122 = vunpack.c.h.b16 %v1509
        %v6123 = vunpack.c.l.b16 %v1510
        %v6124 = vunpack.c.h.b16 %v1510
        %v6125 = vunpack.c.l.b16 %v1511
        %v6126 = vunpack.c.h.b16 %v1511
        %v6127 = vunpack.c.l.b16 %v1512
        %v6128 = vunpack.c.h.b16 %v1512
        %v6129 = vunpack.c.l.b16 %v1513
        %v6130 = vunpack.c.h.b16 %v1513
        %v6131 = vunpack.c.l.b16 %v1514
        %v6132 = vunpack.c.h.b16 %v1514
        %v6133 = vunpack.c.l.b16 %v1515
        %v6134 = vunpack.c.h.b16 %v1515
        %v6135 = vunpack.c.l.b16 %v1516
        %v6136 = vunpack.c.h.b16 %v1516
        %v6137 = vunpack.c.l.b16 %v1517
        %v6138 = vunpack.c.h.b16 %v1517
        %v6139 = vunpack.c.l.b16 %v1518
        %v6140 = vunpack.c.h.b16 %v1518
        %v6141 = vunpack.c.l.b16 %v1519
        %v6142 = vunpack.c.h.b16 %v1519
        %v6143 = vunpack.c.l.b16 %v1520
        %v6144 = vunpack.c.h.b16 %v1520
        %v6145 = vunpack.c.l.b16 %v1521
        %v6146 = vunpack.c.h.b16 %v1521
        %v6147 = vunpack.c.l.b16 %v1522
        %v6148 = vunpack.c.h.b16 %v1522
        %v6149 = vunpack.c.l.b16 %v1523
        %v6150 = vunpack.c.h.b16 %v1523
        %v6151 = vunpack.c.l.b16 %v1524
        %v6152 = vunpack.c.h.b16 %v1524
        %v6153 = vunpack.c.l.b16 %v1525
        %v6154 = vunpack.c.h.b16 %v1525
        %v6155 = vunpack.c.l.b16 %v1526
        %v6156 = vunpack.c.h.b16 %v1526
        %v6157 = vunpack.c.l.b16 %v1527
        %v6158 = vunpack.c.h.b16 %v1527
        %v6159 = vunpack.c.l.b16 %v1528
        %v6160 = vunpack.c.h.b16 %v1528
        %v6161 = vunpack.c.l.b16 %v1529
        %v6162 = vunpack.c.h.b16 %v1529
        %v6163 = vunpack.c.l.b16 %v1530
        %v6164 = vunpack.c.h.b16 %v1530
        %v6165 = vunpack.c.l.b16 %v1531
        %v6166 = vunpack.c.h.b16 %v1531
        %v6167 = vunpack.c.l.b16 %v1532
        %v6168 = vunpack.c.h.b16 %v1532
        %v6169 = vunpack.c.l.b16 %v1533
        %v6170 = vunpack.c.h.b16 %v1533
        %v6171 = vunpack.c.l.b16 %v1534
        %v6172 = vunpack.c.h.b16 %v1534
        %v6173 = vunpack.c.l.b16 %v1535
        %v6174 = vunpack.c.h.b16 %v1535
        %v6175 = vunpack.c.l.b16 %v1536
        %v6176 = vunpack.c.h.b16 %v1536
        %v6177 = vunpack.c.l.b16 %v1537
        %v6178 = vunpack.c.h.b16 %v1537
        %v6179 = vunpack.c.l.b16 %v1538
        %v6180 = vunpack.c.h.b16 %v1538
        %v6181 = vunpack.c.l.b16 %v1539
        %v6182 = vunpack.c.h.b16 %v1539
        %v6183 = vunpack.c.l.b16 %v1540
        %v6184 = vunpack.c.h.b16 %v1540
        %v6185 = vunpack.c.l.b16 %v1541
        %v6186 = vunpack.c.h.b16 %v1541
        %v6187 = vunpack.c.l.b16 %v1542
        %v6188 = vunpack.c.h.b16 %v1542
        %v6189 = vunpack.c.l.b16 %v1543
        %v6190 = vunpack.c.h.b16 %v1543
        %v6191 = vunpack.c.l.b16 %v1544
        %v6192 = vunpack.c.h.b16 %v1544
        %v6193 = vunpack.c.l.b16 %v1545
        %v6194 = vunpack.c.h.b16 %v1545
        %v6195 = vunpack.c.l.b16 %v1546
        %v6196 = vunpack.c.h.b16 %v1546
        %v6197 = vunpack.c.l.b16 %v1547
        %v6198 = vunpack.c.h.b16 %v1547
        %v6199 = vunpack.c.l.b16 %v1548
        %v6200 = vunpack.c.h.b16 %v1548
        %v6201 = vunpack.c.l.b16 %v1549
        %v6202 = vunpack.c.h.b16 %v1549
        %v6203 = vunpack.c.l.b16 %v1550
        %v6204 = vunpack.c.h.b16 %v1550
        %v6205 = vunpack.c.l.b16 %v1551
        %v6206 = vunpack.c.h.b16 %v1551
        %v6207 = vunpack.c.l.b16 %v1552
        %v6208 = vunpack.c.h.b16 %v1552
        %v6209 = vunpack.c.l.b16 %v1553
        %v6210 = vunpack.c.h.b16 %v1553
        %v6211 = vunpack.c.l.b16 %v1554
        %v6212 = vunpack.c.h.b16 %v1554
        %v6213 = vunpack.c.l.b16 %v1555
        %v6214 = vunpack.c.h.b16 %v1555
        %v6215 = vunpack.c.l.b16 %v1556
        %v6216 = vunpack.c.h.b16 %v1556
        %v6217 = vunpack.c.l.b16 %v1557
        %v6218 = vunpack.c.h.b16 %v1557
        %v6219 = vunpack.c.l.b16 %v1558
        %v6220 = vunpack.c.h.b16 %v1558
        %v6221 = vunpack.c.l.b16 %v1559
        %v6222 = vunpack.c.h.b16 %v1559
        %v6223 = vunpack.c.l.b16 %v1560
        %v6224 = vunpack.c.h.b16 %v1560
        %v6225 = vunpack.c.l.b16 %v1561
        %v6226 = vunpack.c.h.b16 %v1561
        %v6227 = vunpack.c.l.b16 %v1562
        %v6228 = vunpack.c.h.b16 %v1562
        %v6229 = vunpack.c.l.b16 %v1563
        %v6230 = vunpack.c.h.b16 %v1563
        %v6231 = vunpack.c.l.b16 %v1564
        %v6232 = vunpack.c.h.b16 %v1564
        %v6233 = vunpack.c.l.b16 %v1565
        %v6234 = vunpack.c.h.b16 %v1565
        %v6235 = vunpack.c.l.b16 %v1566
        %v6236 = vunpack.c.h.b16 %v1566
        %v6237 = vunpack.c.l.b16 %v1567
        %v6238 = vunpack.c.h.b16 %v1567
        %v6239 = vunpack.c.l.b16 %v1568
        %v6240 = vunpack.c.h.b16 %v1568
        %v6241 = vunpack.c.l.b16 %v1569
        %v6242 = vunpack.c.h.b16 %v1569
        %v6243 = vunpack.c.l.b16 %v1570
        %v6244 = vunpack.c.h.b16 %v1570
        %v6245 = vunpack.c.l.b16 %v1571
        %v6246 = vunpack.c.h.b16 %v1571
        %v6247 = vunpack.c.l.b16 %v1572
        %v6248 = vunpack.c.h.b16 %v1572
        %v6249 = vunpack.c.l.b16 %v1573
        %v6250 = vunpack.c.h.b16 %v1573
        %v6251 = vunpack.c.l.b16 %v1574
        %v6252 = vunpack.c.h.b16 %v1574
        %v6253 = vunpack.c.l.b16 %v1575
        %v6254 = vunpack.c.h.b16 %v1575
        %v6255 = vunpack.c.l.b16 %v1576
        %v6256 = vunpack.c.h.b16 %v1576
        %v6257 = vunpack.c.l.b16 %v1577
        %v6258 = vunpack.c.h.b16 %v1577
        %v6259 = vunpack.c.l.b16 %v1578
        %v6260 = vunpack.c.h.b16 %v1578
        %v6261 = vunpack.c.l.b16 %v1579
        %v6262 = vunpack.c.h.b16 %v1579
        %v6263 = vunpack.c.l.b16 %v1580
        %v6264 = vunpack.c.h.b16 %v1580
        %v6265 = vunpack.c.l.b16 %v1581
        %v6266 = vunpack.c.h.b16 %v1581
        %v6267 = vunpack.c.l.b16 %v1582
        %v6268 = vunpack.c.h.b16 %v1582
        %v6269 = vunpack.c.l.b16 %v1583
        %v6270 = vunpack.c.h.b16 %v1583
        %v6271 = vunpack.c.l.b16 %v1584
        %v6272 = vunpack.c.h.b16 %v1584
        %v6273 = vunpack.c.l.b16 %v1585
        %v6274 = vunpack.c.h.b16 %v1585
        %v6275 = vunpack.c.l.b16 %v1586
        %v6276 = vunpack.c.h.b16 %v1586
        %v6277 = vunpack.c.l.b16 %v1587
        %v6278 = vunpack.c.h.b16 %v1587
        %v6279 = vunpack.c.l.b16 %v1588
        %v6280 = vunpack.c.h.b16 %v1588
        %v6281 = vunpack.c.l.b16 %v1589
        %v6282 = vunpack.c.h.b16 %v1589
        %v6283 = vunpack.c.l.b16 %v1590
        %v6284 = vunpack.c.h.b16 %v1590
        %v6285 = vunpack.c.l.b16 %v1591
        %v6286 = vunpack.c.h.b16 %v1591
        %v6287 = vunpack.c.l.b16 %v1592
        %v6288 = vunpack.c.h.b16 %v1592
        %v6289 = vunpack.c.l.b16 %v1593
        %v6290 = vunpack.c.h.b16 %v1593
        %v6291 = vunpack.c.l.b16 %v1594
        %v6292 = vunpack.c.h.b16 %v1594
        %v6293 = vunpack.c.l.b16 %v1595
        %v6294 = vunpack.c.h.b16 %v1595
        %v6295 = vunpack.c.l.b16 %v1596
        %v6296 = vunpack.c.h.b16 %v1596
        %v6297 = vunpack.c.l.b16 %v1597
        %v6298 = vunpack.c.h.b16 %v1597
        %v6299 = vunpack.c.l.b16 %v1598
        %v6300 = vunpack.c.h.b16 %v1598
        %v6301 = vunpack.c.l.b16 %v1599
        %v6302 = vunpack.c.h.b16 %v1599
        %v6303 = vunpack.c.l.b16 %v1600
        %v6304 = vunpack.c.h.b16 %v1600
        %v6305 = vunpack.c.l.b16 %v1601
        %v6306 = vunpack.c.h.b16 %v1601
        %v6307 = vunpack.c.l.b16 %v1602
        %v6308 = vunpack.c.h.b16 %v1602
        %v6309 = vunpack.c.l.b16 %v1603
        %v6310 = vunpack.c.h.b16 %v1603
        %v6311 = vunpack.c.l.b16 %v1604
        %v6312 = vunpack.c.h.b16 %v1604
        %v6313 = vunpack.c.l.b16 %v1605
        %v6314 = vunpack.c.h.b16 %v1605
        %v6315 = vunpack.c.l.b16 %v1606
        %v6316 = vunpack.c.h.b16 %v1606
        %v6317 = vunpack.c.l.b16 %v1607
        %v6318 = vunpack.c.h.b16 %v1607
        %v6319 = vunpack.c.l.b16 %v1608
        %v6320 = vunpack.c.h.b16 %v1608
        %v6321 = vunpack.c.l.b16 %v1609
        %v6322 = vunpack.c.h.b16 %v1609
        %v6323 = vunpack.c.l.b16 %v1610
        %v6324 = vunpack.c.h.b16 %v1610
        %v6325 = vunpack.c.l.b16 %v1611
        %v6326 = vunpack.c.h.b16 %v1611
        %v6327 = vunpack.c.l.b16 %v1612
        %v6328 = vunpack.c.h.b16 %v1612
        %v6329 = vunpack.c.l.b16 %v1613
        %v6330 = vunpack.c.h.b16 %v1613
        %v6331 = vunpack.c.l.b16 %v1614
        %v6332 = vunpack.c.h.b16 %v1614
        %v6333 = vunpack.c.l.b16 %v1615
        %v6334 = vunpack.c.h.b16 %v1615
        %v6335 = vunpack.c.l.b16 %v1616
        %v6336 = vunpack.c.h.b16 %v1616
        %v6337 = vunpack.c.l.b16 %v1617
        %v6338 = vunpack.c.h.b16 %v1617
        %v6339 = vunpack.c.l.b16 %v1618
        %v6340 = vunpack.c.h.b16 %v1618
        %v6341 = vunpack.c.l.b16 %v1619
        %v6342 = vunpack.c.h.b16 %v1619
        %v6343 = vunpack.c.l.b16 %v1620
        %v6344 = vunpack.c.h.b16 %v1620
        %v6345 = vunpack.c.l.b16 %v1621
        %v6346 = vunpack.c.h.b16 %v1621
        %v6347 = vunpack.c.l.b16 %v1622
        %v6348 = vunpack.c.h.b16 %v1622
        %v6349 = vunpack.c.l.b16 %v1623
        %v6350 = vunpack.c.h.b16 %v1623
        %v6351 = vunpack.c.l.b16 %v1624
        %v6352 = vunpack.c.h.b16 %v1624
        %v6353 = vunpack.c.l.b16 %v1625
        %v6354 = vunpack.c.h.b16 %v1625
        %v6355 = vunpack.c.l.b16 %v1626
        %v6356 = vunpack.c.h.b16 %v1626
        %v6357 = vunpack.c.l.b16 %v1627
        %v6358 = vunpack.c.h.b16 %v1627
        %v6359 = vunpack.c.l.b16 %v1628
        %v6360 = vunpack.c.h.b16 %v1628
        %v6361 = vunpack.c.l.b16 %v1629
        %v6362 = vunpack.c.h.b16 %v1629
        %v6363 = vunpack.c.l.b16 %v1630
        %v6364 = vunpack.c.h.b16 %v1630
        %v6365 = vunpack.c.l.b16 %v1631
        %v6366 = vunpack.c.h.b16 %v1631
        %v6367 = vunpack.c.l.b16 %v1632
        %v6368 = vunpack.c.h.b16 %v1632
        %v6369 = vunpack.c.l.b16 %v1633
        %v6370 = vunpack.c.h.b16 %v1633
        %v6371 = vunpack.c.l.b16 %v1634
        %v6372 = vunpack.c.h.b16 %v1634
        %v6373 = vunpack.c.l.b16 %v1635
        %v6374 = vunpack.c.h.b16 %v1635
        %v6375 = vunpack.c.l.b16 %v1636
        %v6376 = vunpack.c.h.b16 %v1636
        %v6377 = vunpack.c.l.b16 %v1637
        %v6378 = vunpack.c.h.b16 %v1637
        %v6379 = vunpack.c.l.b16 %v1638
        %v6380 = vunpack.c.h.b16 %v1638
        %v6381 = vunpack.c.l.b16 %v1639
        %v6382 = vunpack.c.h.b16 %v1639
        %v6383 = vunpack.c.l.b16 %v1640
        %v6384 = vunpack.c.h.b16 %v1640
        %v6385 = vunpack.c.l.b16 %v1641
        %v6386 = vunpack.c.h.b16 %v1641
        %v6387 = vunpack.c.l.b16 %v1642
        %v6388 = vunpack.c.h.b16 %v1642
        %v6389 = vunpack.c.l.b16 %v1643
        %v6390 = vunpack.c.h.b16 %v1643
        %v6391 = vunpack.c.l.b16 %v1644
        %v6392 = vunpack.c.h.b16 %v1644
        %v6393 = vunpack.c.l.b16 %v1645
        %v6394 = vunpack.c.h.b16 %v1645
        %v6395 = vunpack.c.l.b16 %v1646
        %v6396 = vunpack.c.h.b16 %v1646
        %v6397 = vunpack.c.l.b16 %v1647
        %v6398 = vunpack.c.h.b16 %v1647
        %v6399 = vunpack.c.l.b16 %v1648
        %v6400 = vunpack.c.h.b16 %v1648
        %v6401 = vunpack.c.l.b16 %v1649
        %v6402 = vunpack.c.h.b16 %v1649
        %v6403 = vunpack.c.l.b16 %v1650
        %v6404 = vunpack.c.h.b16 %v1650
        %v6405 = vunpack.c.l.b16 %v1651
        %v6406 = vunpack.c.h.b16 %v1651
        %v6407 = vunpack.c.l.b16 %v1652
        %v6408 = vunpack.c.h.b16 %v1652
        %v6409 = vunpack.c.l.b16 %v1653
        %v6410 = vunpack.c.h.b16 %v1653
        %v6411 = vunpack.c.l.b16 %v1654
        %v6412 = vunpack.c.h.b16 %v1654
        %v6413 = vunpack.c.l.b16 %v1655
        %v6414 = vunpack.c.h.b16 %v1655
        %v6415 = vunpack.c.l.b16 %v1656
        %v6416 = vunpack.c.h.b16 %v1656
        %v6417 = vunpack.c.l.b16 %v1657
        %v6418 = vunpack.c.h.b16 %v1657
        %v6419 = vunpack.c.l.b16 %v1658
        %v6420 = vunpack.c.h.b16 %v1658
        %v6421 = vunpack.c.l.b16 %v1659
        %v6422 = vunpack.c.h.b16 %v1659
        %v6423 = vunpack.c.l.b16 %v1660
        %v6424 = vunpack.c.h.b16 %v1660
        %v6425 = vunpack.c.l.b16 %v1661
        %v6426 = vunpack.c.h.b16 %v1661
        %v6427 = vunpack.c.l.b16 %v1662
        %v6428 = vunpack.c.h.b16 %v1662
        %v6429 = vunpack.c.l.b16 %v1663
        %v6430 = vunpack.c.h.b16 %v1663
        %v6431 = vunpack.c.l.b16 %v1664
        %v6432 = vunpack.c.h.b16 %v1664
        %v6433 = vunpack.c.l.b16 %v1665
        %v6434 = vunpack.c.h.b16 %v1665
        %v6435 = vunpack.c.l.b16 %v1666
        %v6436 = vunpack.c.h.b16 %v1666
        %v6437 = vunpack.c.l.b16 %v1667
        %v6438 = vunpack.c.h.b16 %v1667
        %v6439 = vunpack.c.l.b16 %v1668
        %v6440 = vunpack.c.h.b16 %v1668
        %v6441 = vunpack.c.l.b16 %v1669
        %v6442 = vunpack.c.h.b16 %v1669
        %v6443 = vunpack.c.l.b16 %v1670
        %v6444 = vunpack.c.h.b16 %v1670
        %v6445 = vunpack.c.l.b16 %v1671
        %v6446 = vunpack.c.h.b16 %v1671
        %v6447 = vunpack.c.l.b16 %v1672
        %v6448 = vunpack.c.h.b16 %v1672
        %v6449 = vunpack.c.l.b16 %v1673
        %v6450 = vunpack.c.h.b16 %v1673
        %v6451 = vunpack.c.l.b16 %v1674
        %v6452 = vunpack.c.h.b16 %v1674
        %v6453 = vunpack.c.l.b16 %v1675
        %v6454 = vunpack.c.h.b16 %v1675
        %v6455 = vunpack.c.l.b16 %v1676
        %v6456 = vunpack.c.h.b16 %v1676
        %v6457 = vunpack.c.l.b16 %v1677
        %v6458 = vunpack.c.h.b16 %v1677
        %v6459 = vunpack.c.l.b16 %v1678
        %v6460 = vunpack.c.h.b16 %v1678
        %v6461 = vunpack.c.l.b16 %v1679
        %v6462 = vunpack.c.h.b16 %v1679
        %v6463 = vunpack.c.l.b16 %v1680
        %v6464 = vunpack.c.h.b16 %v1680
        %v6465 = vunpack.c.l.b16 %v1681
        %v6466 = vunpack.c.h.b16 %v1681
        %v6467 = vunpack.c.l.b16 %v1682
        %v6468 = vunpack.c.h.b16 %v1682
        %v6469 = vunpack.c.l.b16 %v1683
        %v6470 = vunpack.c.h.b16 %v1683
        %v6471 = vunpack.c.l.b16 %v1684
        %v6472 = vunpack.c.h.b16 %v1684
        %v6473 = vunpack.c.l.b16 %v1685
        %v6474 = vunpack.c.h.b16 %v1685
        %v6475 = vunpack.c.l.b16 %v1686
        %v6476 = vunpack.c.h.b16 %v1686
        %v6477 = vunpack.c.l.b16 %v1687
        %v6478 = vunpack.c.h.b16 %v1687
        %v6479 = vunpack.c.l.b16 %v1688
        %v6480 = vunpack.c.h.b16 %v1688
        %v6481 = vunpack.c.l.b16 %v1689
        %v6482 = vunpack.c.h.b16 %v1689
        %v6483 = vunpack.c.l.b16 %v1690
        %v6484 = vunpack.c.h.b16 %v1690
        %v6485 = vunpack.c.l.b16 %v1691
        %v6486 = vunpack.c.h.b16 %v1691
        %v6487 = vunpack.c.l.b16 %v1692
        %v6488 = vunpack.c.h.b16 %v1692
        %v6489 = vunpack.c.l.b16 %v1693
        %v6490 = vunpack.c.h.b16 %v1693
        %v6491 = vunpack.c.l.b16 %v1694
        %v6492 = vunpack.c.h.b16 %v1694
        %v6493 = vunpack.c.l.b16 %v1695
        %v6494 = vunpack.c.h.b16 %v1695
        %v6495 = vunpack.c.l.b16 %v1696
        %v6496 = vunpack.c.h.b16 %v1696
        %v6497 = vunpack.c.l.b16 %v1697
        %v6498 = vunpack.c.h.b16 %v1697
        %v6499 = vunpack.c.l.b16 %v1698
        %v6500 = vunpack.c.h.b16 %v1698
        %v6501 = vunpack.c.l.b16 %v1699
        %v6502 = vunpack.c.h.b16 %v1699
        %v6503 = vunpack.c.l.b16 %v1700
        %v6504 = vunpack.c.h.b16 %v1700
        %v6505 = vunpack.c.l.b16 %v1701
        %v6506 = vunpack.c.h.b16 %v1701
        %v6507 = vunpack.c.l.b16 %v1702
        %v6508 = vunpack.c.h.b16 %v1702
        %v6509 = vunpack.c.l.b16 %v1703
        %v6510 = vunpack.c.h.b16 %v1703
        %v6511 = vunpack.c.l.b16 %v1704
        %v6512 = vunpack.c.h.b16 %v1704
        %v6513 = vunpack.c.l.b16 %v1705
        %v6514 = vunpack.c.h.b16 %v1705
        %v6515 = vunpack.c.l.b16 %v1706
        %v6516 = vunpack.c.h.b16 %v1706
        %v6517 = vunpack.c.l.b16 %v1707
        %v6518 = vunpack.c.h.b16 %v1707
        %v6519 = vunpack.c.l.b16 %v1708
        %v6520 = vunpack.c.h.b16 %v1708
        %v6521 = vunpack.c.l.b16 %v1709
        %v6522 = vunpack.c.h.b16 %v1709
        %v6523 = vunpack.c.l.b16 %v1710
        %v6524 = vunpack.c.h.b16 %v1710
        %v6525 = vunpack.c.l.b16 %v1711
        %v6526 = vunpack.c.h.b16 %v1711
        %v6527 = vunpack.c.l.b16 %v1712
        %v6528 = vunpack.c.h.b16 %v1712
        %v6529 = vunpack.c.l.b16 %v1713
        %v6530 = vunpack.c.h.b16 %v1713
        %v6531 = vunpack.c.l.b16 %v1714
        %v6532 = vunpack.c.h.b16 %v1714
        %v6533 = vunpack.c.l.b16 %v1715
        %v6534 = vunpack.c.h.b16 %v1715
        %v6535 = vunpack.c.l.b16 %v1716
        %v6536 = vunpack.c.h.b16 %v1716
        %v6537 = vunpack.c.l.b16 %v1717
        %v6538 = vunpack.c.h.b16 %v1717
        %v6539 = vunpack.c.l.b16 %v1718
        %v6540 = vunpack.c.h.b16 %v1718
        %v6541 = vunpack.c.l.b16 %v1719
        %v6542 = vunpack.c.h.b16 %v1719
        %v6543 = vunpack.c.l.b16 %v1720
        %v6544 = vunpack.c.h.b16 %v1720
        %v6545 = vunpack.c.l.b16 %v1721
        %v6546 = vunpack.c.h.b16 %v1721
        %v6547 = vunpack.c.l.b16 %v1722
        %v6548 = vunpack.c.h.b16 %v1722
        %v6549 = vunpack.c.l.b16 %v1723
        %v6550 = vunpack.c.h.b16 %v1723
        %v6551 = vunpack.c.l.b16 %v1724
        %v6552 = vunpack.c.h.b16 %v1724
        %v6553 = vunpack.c.l.b16 %v1725
        %v6554 = vunpack.c.h.b16 %v1725
        %v6555 = vunpack.c.l.b16 %v1726
        %v6556 = vunpack.c.h.b16 %v1726
        %v6557 = vunpack.c.l.b16 %v1727
        %v6558 = vunpack.c.h.b16 %v1727
        %v6559 = vunpack.c.l.b16 %v1728
        %v6560 = vunpack.c.h.b16 %v1728
        %v6561 = vunpack.c.l.b16 %v1729
        %v6562 = vunpack.c.h.b16 %v1729
        %v6563 = vunpack.c.l.b16 %v1730
        %v6564 = vunpack.c.h.b16 %v1730
        %v6565 = vunpack.c.l.b16 %v1731
        %v6566 = vunpack.c.h.b16 %v1731
        %v6567 = vunpack.c.l.b16 %v1732
        %v6568 = vunpack.c.h.b16 %v1732
        %v6569 = vunpack.c.l.b16 %v1733
        %v6570 = vunpack.c.h.b16 %v1733
        %v6571 = vunpack.c.l.b16 %v1734
        %v6572 = vunpack.c.h.b16 %v1734
        %v6573 = vunpack.c.l.b16 %v1735
        %v6574 = vunpack.c.h.b16 %v1735
        %v6575 = vunpack.c.l.b16 %v1736
        %v6576 = vunpack.c.h.b16 %v1736
        %v6577 = vunpack.c.l.b16 %v1737
        %v6578 = vunpack.c.h.b16 %v1737
        %v6579 = vunpack.c.l.b16 %v1738
        %v6580 = vunpack.c.h.b16 %v1738
        %v6581 = vunpack.c.l.b16 %v1739
        %v6582 = vunpack.c.h.b16 %v1739
        %v6583 = vunpack.c.l.b16 %v1740
        %v6584 = vunpack.c.h.b16 %v1740
        %v6585 = vunpack.c.l.b16 %v1741
        %v6586 = vunpack.c.h.b16 %v1741
        %v6587 = vunpack.c.l.b16 %v1742
        %v6588 = vunpack.c.h.b16 %v1742
        %v6589 = vunpack.c.l.b16 %v1743
        %v6590 = vunpack.c.h.b16 %v1743
        %v6591 = vunpack.c.l.b16 %v1744
        %v6592 = vunpack.c.h.b16 %v1744
        %v6593 = vunpack.c.l.b16 %v1745
        %v6594 = vunpack.c.h.b16 %v1745
        %v6595 = vunpack.c.l.b16 %v1746
        %v6596 = vunpack.c.h.b16 %v1746
        %v6597 = vunpack.c.l.b16 %v1747
        %v6598 = vunpack.c.h.b16 %v1747
        %v6599 = vunpack.c.l.b16 %v1748
        %v6600 = vunpack.c.h.b16 %v1748
        %v6601 = vunpack.c.l.b16 %v1749
        %v6602 = vunpack.c.h.b16 %v1749
        %v6603 = vunpack.c.l.b16 %v1750
        %v6604 = vunpack.c.h.b16 %v1750
        %v6605 = vunpack.c.l.b16 %v1751
        %v6606 = vunpack.c.h.b16 %v1751
        %v6607 = vunpack.c.l.b16 %v1752
        %v6608 = vunpack.c.h.b16 %v1752
        %v6609 = vunpack.c.l.b16 %v1753
        %v6610 = vunpack.c.h.b16 %v1753
        %v6611 = vunpack.c.l.b16 %v1754
        %v6612 = vunpack.c.h.b16 %v1754
        %v6613 = vunpack.c.l.b16 %v1755
        %v6614 = vunpack.c.h.b16 %v1755
        %v6615 = vunpack.c.l.b16 %v1756
        %v6616 = vunpack.c.h.b16 %v1756
        %v6617 = vunpack.c.l.b16 %v1757
        %v6618 = vunpack.c.h.b16 %v1757
        %v6619 = vunpack.c.l.b16 %v1758
        %v6620 = vunpack.c.h.b16 %v1758
        %v6621 = vunpack.c.l.b16 %v1759
        %v6622 = vunpack.c.h.b16 %v1759
        %v6623 = vunpack.c.l.b16 %v1760
        %v6624 = vunpack.c.h.b16 %v1760
        %v6625 = vunpack.c.l.b16 %v1761
        %v6626 = vunpack.c.h.b16 %v1761
        %v6627 = vunpack.c.l.b16 %v1762
        %v6628 = vunpack.c.h.b16 %v1762
        %v6629 = vunpack.c.l.b16 %v1763
        %v6630 = vunpack.c.h.b16 %v1763
        %v6631 = vunpack.c.l.b16 %v1764
        %v6632 = vunpack.c.h.b16 %v1764
        %v6633 = vunpack.c.l.b16 %v1765
        %v6634 = vunpack.c.h.b16 %v1765
        %v6635 = vunpack.c.l.b16 %v1766
        %v6636 = vunpack.c.h.b16 %v1766
        %v6637 = vunpack.c.l.b16 %v1767
        %v6638 = vunpack.c.h.b16 %v1767
        %v6639 = vunpack.c.l.b16 %v1768
        %v6640 = vunpack.c.h.b16 %v1768
        %v6641 = vunpack.c.l.b16 %v1769
        %v6642 = vunpack.c.h.b16 %v1769
        %v6643 = vunpack.c.l.b16 %v1770
        %v6644 = vunpack.c.h.b16 %v1770
        %v6645 = vunpack.c.l.b16 %v1771
        %v6646 = vunpack.c.h.b16 %v1771
        %v6647 = vunpack.c.l.b16 %v1772
        %v6648 = vunpack.c.h.b16 %v1772
        %v6649 = vunpack.c.l.b16 %v1773
        %v6650 = vunpack.c.h.b16 %v1773
        %v6651 = vunpack.c.l.b16 %v1774
        %v6652 = vunpack.c.h.b16 %v1774
        %v6653 = vunpack.c.l.b16 %v1775
        %v6654 = vunpack.c.h.b16 %v1775
        %v6655 = vunpack.c.l.b16 %v1776
        %v6656 = vunpack.c.h.b16 %v1776
        %v6657 = vunpack.c.l.b16 %v1777
        %v6658 = vunpack.c.h.b16 %v1777
        %v6659 = vunpack.c.l.b16 %v1778
        %v6660 = vunpack.c.h.b16 %v1778
        %v6661 = vunpack.c.l.b16 %v1779
        %v6662 = vunpack.c.h.b16 %v1779
        %v6663 = vunpack.c.l.b16 %v1780
        %v6664 = vunpack.c.h.b16 %v1780
        %v6665 = vunpack.c.l.b16 %v1781
        %v6666 = vunpack.c.h.b16 %v1781
        %v6667 = vunpack.c.l.b16 %v1782
        %v6668 = vunpack.c.h.b16 %v1782
        %v6669 = vunpack.c.l.b16 %v1783
        %v6670 = vunpack.c.h.b16 %v1783
        %v6671 = vunpack.c.l.b16 %v1784
        %v6672 = vunpack.c.h.b16 %v1784
        %v6673 = vunpack.c.l.b16 %v1785
        %v6674 = vunpack.c.h.b16 %v1785
        %v6675 = vunpack.c.l.b16 %v1786
        %v6676 = vunpack.c.h.b16 %v1786
        %v6677 = vunpack.c.l.b16 %v1787
        %v6678 = vunpack.c.h.b16 %v1787
        %v6679 = vunpack.c.l.b16 %v1788
        %v6680 = vunpack.c.h.b16 %v1788
        %v6681 = vunpack.c.l.b16 %v1789
        %v6682 = vunpack.c.h.b16 %v1789
        %v6683 = vunpack.c.l.b16 %v1790
        %v6684 = vunpack.c.h.b16 %v1790
        %v6685 = vunpack.c.l.b16 %v1791
        %v6686 = vunpack.c.h.b16 %v1791
        %v6687 = vunpack.c.l.b16 %v1792
        %v6688 = vunpack.c.h.b16 %v1792
        %v6689 = vunpack.c.l.b16 %v1793
        %v6690 = vunpack.c.h.b16 %v1793
        %v6691 = vunpack.c.l.b16 %v1794
        %v6692 = vunpack.c.h.b16 %v1794
        %v6693 = vunpack.c.l.b16 %v1795
        %v6694 = vunpack.c.h.b16 %v1795
        %v6695 = vunpack.c.l.b16 %v1796
        %v6696 = vunpack.c.h.b16 %v1796
        %v6697 = vunpack.c.l.b16 %v1797
        %v6698 = vunpack.c.h.b16 %v1797
        %v6699 = vunpack.c.l.b16 %v1798
        %v6700 = vunpack.c.h.b16 %v1798
        %v6701 = vunpack.c.l.b16 %v1799
        %v6702 = vunpack.c.h.b16 %v1799
        %v6703 = vunpack.c.l.b16 %v1800
        %v6704 = vunpack.c.h.b16 %v1800
        %v6705 = vunpack.c.l.b16 %v1801
        %v6706 = vunpack.c.h.b16 %v1801
        %v6707 = vunpack.c.l.b16 %v1802
        %v6708 = vunpack.c.h.b16 %v1802
        %v6709 = vunpack.c.l.b16 %v1803
        %v6710 = vunpack.c.h.b16 %v1803
        %v6711 = vunpack.c.l.b16 %v1804
        %v6712 = vunpack.c.h.b16 %v1804
        %v6713 = vunpack.c.l.b16 %v1805
        %v6714 = vunpack.c.h.b16 %v1805
        %v6715 = vunpack.c.l.b16 %v1806
        %v6716 = vunpack.c.h.b16 %v1806
        %v6717 = vunpack.c.l.b16 %v1807
        %v6718 = vunpack.c.h.b16 %v1807
        %v6719 = vunpack.c.l.b16 %v1808
        %v6720 = vunpack.c.h.b16 %v1808
        %v6721 = vunpack.c.l.b16 %v1809
        %v6722 = vunpack.c.h.b16 %v1809
        %v6723 = vunpack.c.l.b16 %v1810
        %v6724 = vunpack.c.h.b16 %v1810
        %v6725 = vunpack.c.l.b16 %v1811
        %v6726 = vunpack.c.h.b16 %v1811
        %v6727 = vunpack.c.l.b16 %v1812
        %v6728 = vunpack.c.h.b16 %v1812
        %v6729 = vunpack.c.l.b16 %v1813
        %v6730 = vunpack.c.h.b16 %v1813
        %v6731 = vunpack.c.l.b16 %v1814
        %v6732 = vunpack.c.h.b16 %v1814
        %v6733 = vunpack.c.l.b16 %v1815
        %v6734 = vunpack.c.h.b16 %v1815
        %v6735 = vunpack.c.l.b16 %v1816
        %v6736 = vunpack.c.h.b16 %v1816
        %v6737 = vunpack.c.l.b16 %v1817
        %v6738 = vunpack.c.h.b16 %v1817
        %v6739 = vunpack.c.l.b16 %v1818
        %v6740 = vunpack.c.h.b16 %v1818
        %v6741 = vunpack.c.l.b16 %v1819
        %v6742 = vunpack.c.h.b16 %v1819
        %v6743 = vunpack.c.l.b16 %v1820
        %v6744 = vunpack.c.h.b16 %v1820
        %v6745 = vunpack.c.l.b16 %v1821
        %v6746 = vunpack.c.h.b16 %v1821
        %v6747 = vunpack.c.l.b16 %v1822
        %v6748 = vunpack.c.h.b16 %v1822
        %v6749 = vunpack.c.l.b16 %v1823
        %v6750 = vunpack.c.h.b16 %v1823
        %v6751 = vunpack.c.l.b16 %v1824
        %v6752 = vunpack.c.h.b16 %v1824
        %v6753 = vunpack.c.l.b16 %v1825
        %v6754 = vunpack.c.h.b16 %v1825
        %v6755 = vunpack.c.l.b16 %v1826
        %v6756 = vunpack.c.h.b16 %v1826
        %v6757 = vunpack.c.l.b16 %v1827
        %v6758 = vunpack.c.h.b16 %v1827
        %v6759 = vunpack.c.l.b16 %v1828
        %v6760 = vunpack.c.h.b16 %v1828
        %v6761 = vunpack.c.l.b16 %v1829
        %v6762 = vunpack.c.h.b16 %v1829
        %v6763 = vunpack.c.l.b16 %v1830
        %v6764 = vunpack.c.h.b16 %v1830
        %v6765 = vunpack.c.l.b16 %v1831
        %v6766 = vunpack.c.h.b16 %v1831
        %v6767 = vunpack.c.l.b16 %v1832
        %v6768 = vunpack.c.h.b16 %v1832
        %v6769 = vunpack.c.l.b16 %v1833
        %v6770 = vunpack.c.h.b16 %v1833
        %v6771 = vunpack.c.l.b16 %v1834
        %v6772 = vunpack.c.h.b16 %v1834
        %v6773 = vunpack.c.l.b16 %v1835
        %v6774 = vunpack.c.h.b16 %v1835
        %v6775 = vunpack.c.l.b16 %v1836
        %v6776 = vunpack.c.h.b16 %v1836
        %v6777 = vunpack.c.l.b16 %v1837
        %v6778 = vunpack.c.h.b16 %v1837
        %v6779 = vunpack.c.l.b16 %v1838
        %v6780 = vunpack.c.h.b16 %v1838
        %v6781 = vunpack.c.l.b16 %v1839
        %v6782 = vunpack.c.h.b16 %v1839
        %v6783 = vunpack.c.l.b16 %v1840
        %v6784 = vunpack.c.h.b16 %v1840
        %v6785 = vunpack.c.l.b16 %v1841
        %v6786 = vunpack.c.h.b16 %v1841
        %v6787 = vunpack.c.l.b16 %v1842
        %v6788 = vunpack.c.h.b16 %v1842
        %v6789 = vunpack.c.l.b16 %v1843
        %v6790 = vunpack.c.h.b16 %v1843
        %v6791 = vunpack.c.l.b16 %v1844
        %v6792 = vunpack.c.h.b16 %v1844
        %v6793 = vunpack.c.l.b16 %v1845
        %v6794 = vunpack.c.h.b16 %v1845
        %v6795 = vunpack.c.l.b16 %v1846
        %v6796 = vunpack.c.h.b16 %v1846
        %v6797 = vunpack.c.l.b16 %v1847
        %v6798 = vunpack.c.h.b16 %v1847
        %v6799 = vunpack.c.l.b16 %v1848
        %v6800 = vunpack.c.h.b16 %v1848
        %v6801 = vunpack.c.l.b16 %v1849
        %v6802 = vunpack.c.h.b16 %v1849
        %v6803 = vunpack.c.l.b16 %v1850
        %v6804 = vunpack.c.h.b16 %v1850
        %v6805 = vunpack.c.l.b16 %v1851
        %v6806 = vunpack.c.h.b16 %v1851
        %v6807 = vunpack.c.l.b16 %v1852
        %v6808 = vunpack.c.h.b16 %v1852
        %v6809 = vunpack.c.l.b16 %v1853
        %v6810 = vunpack.c.h.b16 %v1853
        %v6811 = vunpack.c.l.b16 %v1854
        %v6812 = vunpack.c.h.b16 %v1854
        %v6813 = vunpack.c.l.b16 %v1855
        %v6814 = vunpack.c.h.b16 %v1855
        %v6815 = vunpack.c.l.b16 %v1856
        %v6816 = vunpack.c.h.b16 %v1856
        %v6817 = vunpack.c.l.b16 %v1857
        %v6818 = vunpack.c.h.b16 %v1857
        %v6819 = vunpack.c.l.b16 %v1858
        %v6820 = vunpack.c.h.b16 %v1858
        %v6821 = vunpack.c.l.b16 %v1859
        %v6822 = vunpack.c.h.b16 %v1859
        %v6823 = vunpack.c.l.b16 %v1860
        %v6824 = vunpack.c.h.b16 %v1860
        %v6825 = vunpack.c.l.b16 %v1861
        %v6826 = vunpack.c.h.b16 %v1861
        %v6827 = vunpack.c.l.b16 %v1862
        %v6828 = vunpack.c.h.b16 %v1862
        %v6829 = vunpack.c.l.b16 %v1863
        %v6830 = vunpack.c.h.b16 %v1863
        %v6831 = vunpack.c.l.b16 %v1864
        %v6832 = vunpack.c.h.b16 %v1864
        %v6833 = vunpack.c.l.b16 %v1865
        %v6834 = vunpack.c.h.b16 %v1865
        %v6835 = vunpack.c.l.b16 %v1866
        %v6836 = vunpack.c.h.b16 %v1866
        %v6837 = vunpack.c.l.b16 %v1867
        %v6838 = vunpack.c.h.b16 %v1867
        %v6839 = vunpack.c.l.b16 %v1868
        %v6840 = vunpack.c.h.b16 %v1868
        %v6841 = vunpack.c.l.b16 %v1869
        %v6842 = vunpack.c.h.b16 %v1869
        %v6843 = vunpack.c.l.b16 %v1870
        %v6844 = vunpack.c.h.b16 %v1870
        %v6845 = vunpack.c.l.b16 %v1871
        %v6846 = vunpack.c.h.b16 %v1871
        %v6847 = vunpack.c.l.b16 %v1872
        %v6848 = vunpack.c.h.b16 %v1872
        %v6849 = vunpack.c.l.b16 %v1873
        %v6850 = vunpack.c.h.b16 %v1873
        %v6851 = vunpack.c.l.b16 %v1874
        %v6852 = vunpack.c.h.b16 %v1874
        %v6853 = vunpack.c.l.b16 %v1875
        %v6854 = vunpack.c.h.b16 %v1875
        %v6855 = vunpack.c.l.b16 %v1876
        %v6856 = vunpack.c.h.b16 %v1876
        %v6857 = vunpack.c.l.b16 %v1877
        %v6858 = vunpack.c.h.b16 %v1877
        %v6859 = vunpack.c.l.b16 %v1878
        %v6860 = vunpack.c.h.b16 %v1878
        %v6861 = vunpack.c.l.b16 %v1879
        %v6862 = vunpack.c.h.b16 %v1879
        %v6863 = vunpack.c.l.b16 %v1880
        %v6864 = vunpack.c.h.b16 %v1880
        %v6865 = vunpack.c.l.b16 %v1881
        %v6866 = vunpack.c.h.b16 %v1881
        %v6867 = vunpack.c.l.b16 %v1882
        %v6868 = vunpack.c.h.b16 %v1882
        %v6869 = vunpack.c.l.b16 %v1883
        %v6870 = vunpack.c.h.b16 %v1883
        %v6871 = vunpack.c.l.b16 %v1884
        %v6872 = vunpack.c.h.b16 %v1884
        %v6873 = vunpack.c.l.b16 %v1885
        %v6874 = vunpack.c.h.b16 %v1885
        %v6875 = vunpack.c.l.b16 %v1886
        %v6876 = vunpack.c.h.b16 %v1886
        %v6877 = vunpack.c.l.b16 %v1887
        %v6878 = vunpack.c.h.b16 %v1887
        %v6879 = vunpack.c.l.b16 %v1888
        %v6880 = vunpack.c.h.b16 %v1888
        %v6881 = vunpack.c.l.b16 %v1889
        %v6882 = vunpack.c.h.b16 %v1889
        %v6883 = vunpack.c.l.b16 %v1890
        %v6884 = vunpack.c.h.b16 %v1890
        %v6885 = vunpack.c.l.b16 %v1891
        %v6886 = vunpack.c.h.b16 %v1891
        %v6887 = vunpack.c.l.b16 %v1892
        %v6888 = vunpack.c.h.b16 %v1892
        %v6889 = vunpack.c.l.b16 %v1893
        %v6890 = vunpack.c.h.b16 %v1893
        %v6891 = vunpack.c.l.b16 %v1894
        %v6892 = vunpack.c.h.b16 %v1894
        %v6893 = vunpack.c.l.b16 %v1895
        %v6894 = vunpack.c.h.b16 %v1895
        %v6895 = vunpack.c.l.b16 %v1896
        %v6896 = vunpack.c.h.b16 %v1896
        %v6897 = vunpack.c.l.b16 %v1897
        %v6898 = vunpack.c.h.b16 %v1897
        %v6899 = vunpack.c.l.b16 %v1898
        %v6900 = vunpack.c.h.b16 %v1898
        %v6901 = vunpack.c.l.b16 %v1899
        %v6902 = vunpack.c.h.b16 %v1899
        %v6903 = vunpack.c.l.b16 %v1900
        %v6904 = vunpack.c.h.b16 %v1900
        %v6905 = vunpack.c.l.b16 %v1901
        %v6906 = vunpack.c.h.b16 %v1901
        %v6907 = vunpack.c.l.b16 %v1902
        %v6908 = vunpack.c.h.b16 %v1902
        %v6909 = vunpack.c.l.b16 %v1903
        %v6910 = vunpack.c.h.b16 %v1903
        %v6911 = vunpack.c.l.b16 %v1904
        %v6912 = vunpack.c.h.b16 %v1904
        %v6913 = vunpack.c.l.b16 %v1905
        %v6914 = vunpack.c.h.b16 %v1905
        %v6915 = vunpack.c.l.b16 %v1906
        %v6916 = vunpack.c.h.b16 %v1906
        %v6917 = vunpack.c.l.b16 %v1907
        %v6918 = vunpack.c.h.b16 %v1907
        %v6919 = vunpack.c.l.b16 %v1908
        %v6920 = vunpack.c.h.b16 %v1908
        %v6921 = vunpack.c.l.b16 %v1909
        %v6922 = vunpack.c.h.b16 %v1909
        %v6923 = vunpack.c.l.b16 %v1910
        %v6924 = vunpack.c.h.b16 %v1910
        %v6925 = vunpack.c.l.b16 %v1911
        %v6926 = vunpack.c.h.b16 %v1911
        %v6927 = vunpack.c.l.b16 %v1912
        %v6928 = vunpack.c.h.b16 %v1912
        %v6929 = vunpack.c.l.b16 %v1913
        %v6930 = vunpack.c.h.b16 %v1913
        %v6931 = vunpack.c.l.b16 %v1914
        %v6932 = vunpack.c.h.b16 %v1914
        %v6933 = vunpack.c.l.b16 %v1915
        %v6934 = vunpack.c.h.b16 %v1915
        %v6935 = vunpack.c.l.b16 %v1916
        %v6936 = vunpack.c.h.b16 %v1916
        %v6937 = vunpack.c.l.b16 %v1917
        %v6938 = vunpack.c.h.b16 %v1917
        %v6939 = vunpack.c.l.b16 %v1918
        %v6940 = vunpack.c.h.b16 %v1918
        %v6941 = vunpack.c.l.b16 %v1919
        %v6942 = vunpack.c.h.b16 %v1919
        %v6943 = vunpack.c.l.b16 %v1920
        %v6944 = vunpack.c.h.b16 %v1920
        %v6945 = vunpack.c.l.b16 %v1921
        %v6946 = vunpack.c.h.b16 %v1921
        %v6947 = vunpack.c.l.b16 %v1922
        %v6948 = vunpack.c.h.b16 %v1922
        %v6949 = vunpack.c.l.b16 %v1923
        %v6950 = vunpack.c.h.b16 %v1923
        %v6951 = vunpack.c.l.b16 %v1924
        %v6952 = vunpack.c.h.b16 %v1924
        %v6953 = vunpack.c.l.b16 %v1925
        %v6954 = vunpack.c.h.b16 %v1925
        %v6955 = vunpack.c.l.b16 %v1926
        %v6956 = vunpack.c.h.b16 %v1926
        %v6957 = vunpack.c.l.b16 %v1927
        %v6958 = vunpack.c.h.b16 %v1927
        %v6959 = vunpack.c.l.b16 %v1928
        %v6960 = vunpack.c.h.b16 %v1928
        %v6961 = vunpack.c.l.b16 %v1929
        %v6962 = vunpack.c.h.b16 %v1929
        %v6963 = vunpack.c.l.b16 %v1930
        %v6964 = vunpack.c.h.b16 %v1930
        %v6965 = vunpack.c.l.b16 %v1931
        %v6966 = vunpack.c.h.b16 %v1931
        %v6967 = vunpack.c.l.b16 %v1932
        %v6968 = vunpack.c.h.b16 %v1932
        %v6969 = vunpack.c.l.b16 %v1933
        %v6970 = vunpack.c.h.b16 %v1933
        %v6971 = vunpack.c.l.b16 %v1934
        %v6972 = vunpack.c.h.b16 %v1934
        %v6973 = vunpack.c.l.b16 %v1935
        %v6974 = vunpack.c.h.b16 %v1935
        %v6975 = vunpack.c.l.b16 %v1936
        %v6976 = vunpack.c.h.b16 %v1936
        %v6977 = vunpack.c.l.b16 %v1937
        %v6978 = vunpack.c.h.b16 %v1937
        %v6979 = vunpack.c.l.b16 %v1938
        %v6980 = vunpack.c.h.b16 %v1938
        %v6981 = vunpack.c.l.b16 %v1939
        %v6982 = vunpack.c.h.b16 %v1939
        %v6983 = vunpack.c.l.b16 %v1940
        %v6984 = vunpack.c.h.b16 %v1940
        %v6985 = vunpack.c.l.b16 %v1941
        %v6986 = vunpack.c.h.b16 %v1941
        %v6987 = vunpack.c.l.b16 %v1942
        %v6988 = vunpack.c.h.b16 %v1942
        %v6989 = vunpack.c.l.b16 %v1943
        %v6990 = vunpack.c.h.b16 %v1943
        %v6991 = vunpack.c.l.b16 %v1944
        %v6992 = vunpack.c.h.b16 %v1944
        %v6993 = vunpack.c.l.b16 %v1945
        %v6994 = vunpack.c.h.b16 %v1945
        %v6995 = vunpack.c.l.b16 %v1946
        %v6996 = vunpack.c.h.b16 %v1946
        %v6997 = vunpack.c.l.b16 %v1947
        %v6998 = vunpack.c.h.b16 %v1947
        %v6999 = vunpack.c.l.b16 %v1948
        %v7000 = vunpack.c.h.b16 %v1948
        %v7001 = vunpack.c.l.b16 %v1949
        %v7002 = vunpack.c.h.b16 %v1949
        %v7003 = vunpack.c.l.b16 %v1950
        %v7004 = vunpack.c.h.b16 %v1950
        %v7005 = vunpack.c.l.b16 %v1951
        %v7006 = vunpack.c.h.b16 %v1951
        %v7007 = vunpack.c.l.b16 %v1952
        %v7008 = vunpack.c.h.b16 %v1952
        %v7009 = vunpack.c.l.b16 %v1953
        %v7010 = vunpack.c.h.b16 %v1953
        %v7011 = vunpack.c.l.b16 %v1954
        %v7012 = vunpack.c.h.b16 %v1954
        %v7013 = vunpack.c.l.b16 %v1955
        %v7014 = vunpack.c.h.b16 %v1955
        %v7015 = vunpack.c.l.b16 %v1956
        %v7016 = vunpack.c.h.b16 %v1956
        %v7017 = vunpack.c.l.b16 %v1957
        %v7018 = vunpack.c.h.b16 %v1957
        %v7019 = vunpack.c.l.b16 %v1958
        %v7020 = vunpack.c.h.b16 %v1958
        %v7021 = vunpack.c.l.b16 %v1959
        %v7022 = vunpack.c.h.b16 %v1959
        %v7023 = vunpack.c.l.b16 %v1960
        %v7024 = vunpack.c.h.b16 %v1960
        %v7025 = vunpack.c.l.b16 %v1961
        %v7026 = vunpack.c.h.b16 %v1961
        %v7027 = vunpack.c.l.b16 %v1962
        %v7028 = vunpack.c.h.b16 %v1962
        %v7029 = vunpack.c.l.b16 %v1963
        %v7030 = vunpack.c.h.b16 %v1963
        %v7031 = vunpack.c.l.b16 %v1964
        %v7032 = vunpack.c.h.b16 %v1964
        %v7033 = vunpack.c.l.b16 %v1965
        %v7034 = vunpack.c.h.b16 %v1965
        %v7035 = vunpack.c.l.b16 %v1966
        %v7036 = vunpack.c.h.b16 %v1966
        %v7037 = vunpack.c.l.b16 %v1967
        %v7038 = vunpack.c.h.b16 %v1967
        %v7039 = vunpack.c.l.b16 %v1968
        %v7040 = vunpack.c.h.b16 %v1968
        %v7041 = vunpack.c.l.b16 %v1969
        %v7042 = vunpack.c.h.b16 %v1969
        %v7043 = vunpack.c.l.b16 %v1970
        %v7044 = vunpack.c.h.b16 %v1970
        %v7045 = vunpack.c.l.b16 %v1971
        %v7046 = vunpack.c.h.b16 %v1971
        %v7047 = vunpack.c.l.b16 %v1972
        %v7048 = vunpack.c.h.b16 %v1972
        %v7049 = vunpack.c.l.b16 %v1973
        %v7050 = vunpack.c.h.b16 %v1973
        %v7051 = vunpack.c.l.b16 %v1974
        %v7052 = vunpack.c.h.b16 %v1974
        %v7053 = vunpack.c.l.b16 %v1975
        %v7054 = vunpack.c.h.b16 %v1975
        %v7055 = vunpack.c.l.b16 %v1976
        %v7056 = vunpack.c.h.b16 %v1976
        %v7057 = vunpack.c.l.b16 %v1977
        %v7058 = vunpack.c.h.b16 %v1977
        %v7059 = vunpack.c.l.b16 %v1978
        %v7060 = vunpack.c.h.b16 %v1978
        %v7061 = vunpack.c.l.b16 %v1979
        %v7062 = vunpack.c.h.b16 %v1979
        %v7063 = vunpack.c.l.b16 %v1980
        %v7064 = vunpack.c.h.b16 %v1980
        %v7065 = vunpack.c.l.b16 %v1981
        %v7066 = vunpack.c.h.b16 %v1981
        %v7067 = vunpack.c.l.b16 %v1982
        %v7068 = vunpack.c.h.b16 %v1982
        %v7069 = vunpack.c.l.b16 %v1983
        %v7070 = vunpack.c.h.b16 %v1983
        %v7071 = vunpack.c.l.b16 %v1984
        %v7072 = vunpack.c.h.b16 %v1984
        %v7073 = vunpack.c.l.b16 %v1985
        %v7074 = vunpack.c.h.b16 %v1985
        %v7075 = vunpack.c.l.b16 %v1986
        %v7076 = vunpack.c.h.b16 %v1986
        %v7077 = vunpack.c.l.b16 %v1987
        %v7078 = vunpack.c.h.b16 %v1987
        %v7079 = vunpack.c.l.b16 %v1988
        %v7080 = vunpack.c.h.b16 %v1988
        %v7081 = vunpack.c.l.b16 %v1989
        %v7082 = vunpack.c.h.b16 %v1989
        %v7083 = vunpack.c.l.b16 %v1990
        %v7084 = vunpack.c.h.b16 %v1990
        %v7085 = vunpack.c.l.b16 %v1991
        %v7086 = vunpack.c.h.b16 %v1991
        %v7087 = vunpack.c.l.b16 %v1992
        %v7088 = vunpack.c.h.b16 %v1992
        %v7089 = vunpack.c.l.b16 %v1993
        %v7090 = vunpack.c.h.b16 %v1993
        %v7091 = vunpack.c.l.b16 %v1994
        %v7092 = vunpack.c.h.b16 %v1994
        %v7093 = vunpack.c.l.b16 %v1995
        %v7094 = vunpack.c.h.b16 %v1995
        %v7095 = vunpack.c.l.b16 %v1996
        %v7096 = vunpack.c.h.b16 %v1996
        %v7097 = vunpack.c.l.b16 %v1997
        %v7098 = vunpack.c.h.b16 %v1997
        %v7099 = vunpack.c.l.b16 %v1998
        %v7100 = vunpack.c.h.b16 %v1998
        %v7101 = vunpack.c.l.b16 %v1999
        %v7102 = vunpack.c.h.b16 %v1999
        %v7103 = vunpack.c.l.b16 %v2000
        %v7104 = vunpack.c.h.b16 %v2000
        %v7105 = vunpack.c.l.b16 %v2001
        %v7106 = vunpack.c.h.b16 %v2001
        %v7107 = vunpack.c.l.b16 %v2002
        %v7108 = vunpack.c.h.b16 %v2002
        %v7109 = vunpack.c.l.b16 %v2003
        %v7110 = vunpack.c.h.b16 %v2003
        %v7111 = vunpack.c.l.b16 %v2004
        %v7112 = vunpack.c.h.b16 %v2004
        %v7113 = vunpack.c.l.b16 %v2005
        %v7114 = vunpack.c.h.b16 %v2005
        %v7115 = vunpack.c.l.b16 %v2006
        %v7116 = vunpack.c.h.b16 %v2006
        %v7117 = vunpack.c.l.b16 %v2007
        %v7118 = vunpack.c.h.b16 %v2007
        %v7119 = vunpack.c.l.b16 %v2008
        %v7120 = vunpack.c.h.b16 %v2008
        %v7121 = vunpack.c.l.b16 %v2009
        %v7122 = vunpack.c.h.b16 %v2009
        %v7123 = vunpack.c.l.b16 %v2010
        %v7124 = vunpack.c.h.b16 %v2010
        %v7125 = vunpack.c.l.b16 %v2011
        %v7126 = vunpack.c.h.b16 %v2011
        %v7127 = vunpack.c.l.b16 %v2012
        %v7128 = vunpack.c.h.b16 %v2012
        %v7129 = vunpack.c.l.b16 %v2013
        %v7130 = vunpack.c.h.b16 %v2013
        %v7131 = vunpack.c.l.b16 %v2014
        %v7132 = vunpack.c.h.b16 %v2014
        %v7133 = vunpack.c.l.b16 %v2015
        %v7134 = vunpack.c.h.b16 %v2015
        %v7135 = vunpack.c.l.b16 %v2016
        %v7136 = vunpack.c.h.b16 %v2016
        %v7137 = vunpack.c.l.b16 %v2017
        %v7138 = vunpack.c.h.b16 %v2017
        %v7139 = vunpack.c.l.b16 %v2018
        %v7140 = vunpack.c.h.b16 %v2018
        %v7141 = vunpack.c.l.b16 %v2019
        %v7142 = vunpack.c.h.b16 %v2019
        %v7143 = vunpack.c.l.b16 %v2020
        %v7144 = vunpack.c.h.b16 %v2020
        %v7145 = vunpack.c.l.b16 %v2021
        %v7146 = vunpack.c.h.b16 %v2021
        %v7147 = vunpack.c.l.b16 %v2022
        %v7148 = vunpack.c.h.b16 %v2022
        %v7149 = vunpack.c.l.b16 %v2023
        %v7150 = vunpack.c.h.b16 %v2023
        %v7151 = vunpack.c.l.b16 %v2024
        %v7152 = vunpack.c.h.b16 %v2024
        %v7153 = vunpack.c.l.b16 %v2025
        %v7154 = vunpack.c.h.b16 %v2025
        %v7155 = vunpack.c.l.b16 %v2026
        %v7156 = vunpack.c.h.b16 %v2026
        %v7157 = vunpack.c.l.b16 %v2027
        %v7158 = vunpack.c.h.b16 %v2027
        %v7159 = vunpack.c.l.b16 %v2028
        %v7160 = vunpack.c.h.b16 %v2028
        %v7161 = vunpack.c.l.b16 %v2029
        %v7162 = vunpack.c.h.b16 %v2029
        %v7163 = vunpack.c.l.b16 %v2030
        %v7164 = vunpack.c.h.b16 %v2030
        %v7165 = vunpack.c.l.b16 %v2031
        %v7166 = vunpack.c.h.b16 %v2031
        %v7167 = vunpack.c.l.b16 %v2032
        %v7168 = vunpack.c.h.b16 %v2032
        %v7169 = vunpack.c.l.b16 %v2033
        %v7170 = vunpack.c.h.b16 %v2033
        %v7171 = vunpack.c.l.b16 %v2034
        %v7172 = vunpack.c.h.b16 %v2034
        %v7173 = vunpack.c.l.b16 %v2035
        %v7174 = vunpack.c.h.b16 %v2035
        %v7175 = vunpack.c.l.b16 %v2036
        %v7176 = vunpack.c.h.b16 %v2036
        %v7177 = vunpack.c.l.b16 %v2037
        %v7178 = vunpack.c.h.b16 %v2037
        %v7179 = vunpack.c.l.b16 %v2038
        %v7180 = vunpack.c.h.b16 %v2038
        %v7181 = vunpack.c.l.b16 %v2039
        %v7182 = vunpack.c.h.b16 %v2039
        %v7183 = vunpack.c.l.b16 %v2040
        %v7184 = vunpack.c.h.b16 %v2040
        %v7185 = vunpack.c.l.b16 %v2041
        %v7186 = vunpack.c.h.b16 %v2041
        %v7187 = vunpack.c.l.b16 %v2042
        %v7188 = vunpack.c.h.b16 %v2042
        %v7189 = vunpack.c.l.b16 %v2043
        %v7190 = vunpack.c.h.b16 %v2043
        %v7191 = vunpack.c.l.b16 %v2044
        %v7192 = vunpack.c.h.b16 %v2044
        %v7193 = vunpack.c.l.b16 %v2045
        %v7194 = vunpack.c.h.b16 %v2045
        %v7195 = vunpack.c.l.b16 %v2046
        %v7196 = vunpack.c.h.b16 %v2046
        %v7197 = vunpack.c.l.b16 %v2047
        %v7198 = vunpack.c.h.b16 %v2047
        %v7199 = vunpack.c.l.b16 %v2048
        %v7200 = vunpack.c.h.b16 %v2048
        %v7201 = vunpack.c.l.b16 %v2049
        %v7202 = vunpack.c.h.b16 %v2049
        %v7203 = vunpack.c.l.b16 %v2050
        %v7204 = vunpack.c.h.b16 %v2050
        %v7205 = vunpack.c.l.b16 %v2051
        %v7206 = vunpack.c.h.b16 %v2051
        %v7207 = vunpack.c.l.b16 %v2052
        %v7208 = vunpack.c.h.b16 %v2052
        %v7209 = vunpack.c.l.b16 %v2053
        %v7210 = vunpack.c.h.b16 %v2053
        %v7211 = vunpack.c.l.b16 %v2054
        %v7212 = vunpack.c.h.b16 %v2054
        %v7213 = vunpack.c.l.b16 %v2055
        %v7214 = vunpack.c.h.b16 %v2055
        %v7215 = vunpack.c.l.b16 %v2056
        %v7216 = vunpack.c.h.b16 %v2056
        %v7217 = vunpack.c.l.b16 %v2057
        %v7218 = vunpack.c.h.b16 %v2057
        %v7219 = vunpack.c.l.b16 %v2058
        %v7220 = vunpack.c.h.b16 %v2058
        %v7221 = vunpack.c.l.b16 %v2059
        %v7222 = vunpack.c.h.b16 %v2059
        %v7223 = vunpack.c.l.b16 %v2060
        %v7224 = vunpack.c.h.b16 %v2060
        %v7225 = vunpack.c.l.b16 %v2061
        %v7226 = vunpack.c.h.b16 %v2061
        %v7227 = vunpack.c.l.b16 %v2062
        %v7228 = vunpack.c.h.b16 %v2062
        %v7229 = vunpack.c.l.b16 %v2063
        %v7230 = vunpack.c.h.b16 %v2063
        %v7231 = vunpack.c.l.b16 %v2064
        %v7232 = vunpack.c.h.b16 %v2064
        %v7233 = vunpack.c.l.b16 %v2065
        %v7234 = vunpack.c.h.b16 %v2065
        %v7235 = vunpack.c.l.b16 %v2066
        %v7236 = vunpack.c.h.b16 %v2066
        %v7237 = vunpack.c.l.b16 %v2067
        %v7238 = vunpack.c.h.b16 %v2067
        %v7239 = vunpack.c.l.b16 %v2068
        %v7240 = vunpack.c.h.b16 %v2068
        %v7241 = vunpack.c.l.b16 %v2069
        %v7242 = vunpack.c.h.b16 %v2069
        %v7243 = vunpack.c.l.b16 %v2070
        %v7244 = vunpack.c.h.b16 %v2070
        %v7245 = vunpack.c.l.b16 %v2071
        %v7246 = vunpack.c.h.b16 %v2071
        %v7247 = vunpack.c.l.b16 %v2072
        %v7248 = vunpack.c.h.b16 %v2072
        %v7249 = vunpack.c.l.b16 %v2073
        %v7250 = vunpack.c.h.b16 %v2073
        %v7251 = vunpack.c.l.b16 %v2074
        %v7252 = vunpack.c.h.b16 %v2074
        %v7253 = vunpack.c.l.b16 %v2075
        %v7254 = vunpack.c.h.b16 %v2075
        %v7255 = vunpack.c.l.b16 %v2076
        %v7256 = vunpack.c.h.b16 %v2076
        %v7257 = vunpack.c.l.b16 %v2077
        %v7258 = vunpack.c.h.b16 %v2077
        %v7259 = vunpack.c.l.b16 %v2078
        %v7260 = vunpack.c.h.b16 %v2078
        %v7261 = vunpack.c.l.b16 %v2079
        %v7262 = vunpack.c.h.b16 %v2079
        %v7263 = vunpack.c.l.b16 %v2080
        %v7264 = vunpack.c.h.b16 %v2080
        %v7265 = vunpack.c.l.b16 %v2081
        %v7266 = vunpack.c.h.b16 %v2081
        %v7267 = vunpack.c.l.b16 %v2082
        %v7268 = vunpack.c.h.b16 %v2082
        %v7269 = vunpack.c.l.b16 %v2083
        %v7270 = vunpack.c.h.b16 %v2083
        %v7271 = vunpack.c.l.b16 %v2084
        %v7272 = vunpack.c.h.b16 %v2084
        %v7273 = vunpack.c.l.b16 %v2085
        %v7274 = vunpack.c.h.b16 %v2085
        %v7275 = vunpack.c.l.b16 %v2086
        %v7276 = vunpack.c.h.b16 %v2086
        %v7277 = vunpack.c.l.b16 %v2087
        %v7278 = vunpack.c.h.b16 %v2087
        %v7279 = vunpack.c.l.b16 %v2088
        %v7280 = vunpack.c.h.b16 %v2088
        %v7281 = vunpack.c.l.b16 %v2089
        %v7282 = vunpack.c.h.b16 %v2089
        %v7283 = vunpack.c.l.b16 %v2090
        %v7284 = vunpack.c.h.b16 %v2090
        %v7285 = vunpack.c.l.b16 %v2091
        %v7286 = vunpack.c.h.b16 %v2091
        %v7287 = vunpack.c.l.b16 %v2092
        %v7288 = vunpack.c.h.b16 %v2092
        %v7289 = vunpack.c.l.b16 %v2093
        %v7290 = vunpack.c.h.b16 %v2093
        %v7291 = vunpack.c.l.b16 %v2094
        %v7292 = vunpack.c.h.b16 %v2094
        %v7293 = vunpack.c.l.b16 %v2095
        %v7294 = vunpack.c.h.b16 %v2095
        %v7295 = vunpack.c.l.b16 %v2096
        %v7296 = vunpack.c.h.b16 %v2096
        %v7297 = vunpack.c.l.b16 %v2097
        %v7298 = vunpack.c.h.b16 %v2097
        %v7299 = vunpack.c.l.b16 %v2098
        %v7300 = vunpack.c.h.b16 %v2098
        %v7301 = vunpack.c.l.b16 %v2099
        %v7302 = vunpack.c.h.b16 %v2099
        %v7303 = vunpack.c.l.b16 %v2100
        %v7304 = vunpack.c.h.b16 %v2100
        %v7305 = vunpack.c.l.b16 %v2101
        %v7306 = vunpack.c.h.b16 %v2101
        %v7307 = vunpack.c.l.b16 %v2102
        %v7308 = vunpack.c.h.b16 %v2102
        %v7309 = vunpack.c.l.b16 %v2103
        %v7310 = vunpack.c.h.b16 %v2103
        %v7311 = vunpack.c.l.b16 %v2104
        %v7312 = vunpack.c.h.b16 %v2104
        %v7313 = vunpack.c.l.b16 %v2105
        %v7314 = vunpack.c.h.b16 %v2105
        %v7315 = vunpack.c.l.b16 %v2106
        %v7316 = vunpack.c.h.b16 %v2106
        %v7317 = vunpack.c.l.b16 %v2107
        %v7318 = vunpack.c.h.b16 %v2107
        %v7319 = vunpack.c.l.b16 %v2108
        %v7320 = vunpack.c.h.b16 %v2108
        %v7321 = vunpack.c.l.b16 %v2109
        %v7322 = vunpack.c.h.b16 %v2109
        %v7323 = vunpack.c.l.b16 %v2110
        %v7324 = vunpack.c.h.b16 %v2110
        %v7325 = vunpack.c.l.b16 %v2111
        %v7326 = vunpack.c.h.b16 %v2111
        %v7327 = vunpack.c.l.b16 %v2112
        %v7328 = vunpack.c.h.b16 %v2112
        %v7329 = vunpack.c.l.b16 %v2113
        %v7330 = vunpack.c.h.b16 %v2113
        %v7331 = vunpack.c.l.b16 %v2114
        %v7332 = vunpack.c.h.b16 %v2114
        %v7333 = vunpack.c.l.b16 %v2115
        %v7334 = vunpack.c.h.b16 %v2115
        %v7335 = vunpack.c.l.b16 %v2116
        %v7336 = vunpack.c.h.b16 %v2116
        %v7337 = vunpack.c.l.b16 %v2117
        %v7338 = vunpack.c.h.b16 %v2117
        %v7339 = vunpack.c.l.b16 %v2118
        %v7340 = vunpack.c.h.b16 %v2118
        %v7341 = vunpack.c.l.b16 %v2119
        %v7342 = vunpack.c.h.b16 %v2119
        %v7343 = vunpack.c.l.b16 %v2120
        %v7344 = vunpack.c.h.b16 %v2120
        %v7345 = vunpack.c.l.b16 %v2121
        %v7346 = vunpack.c.h.b16 %v2121
        %v7347 = vunpack.c.l.b16 %v2122
        %v7348 = vunpack.c.h.b16 %v2122
        %v7349 = vunpack.c.l.b16 %v2123
        %v7350 = vunpack.c.h.b16 %v2123
        %v7351 = vunpack.c.l.b16 %v2124
        %v7352 = vunpack.c.h.b16 %v2124
        %v7353 = vunpack.c.l.b16 %v2125
        %v7354 = vunpack.c.h.b16 %v2125
        %v7355 = vunpack.c.l.b16 %v2126
        %v7356 = vunpack.c.h.b16 %v2126
        %v7357 = vunpack.c.l.b16 %v2127
        %v7358 = vunpack.c.h.b16 %v2127
        %v7359 = vunpack.c.l.b16 %v2128
        %v7360 = vunpack.c.h.b16 %v2128
        %v7361 = vunpack.c.l.b16 %v2129
        %v7362 = vunpack.c.h.b16 %v2129
        %v7363 = vunpack.c.l.b16 %v2130
        %v7364 = vunpack.c.h.b16 %v2130
        %v7365 = vunpack.c.l.b16 %v2131
        %v7366 = vunpack.c.h.b16 %v2131
        %v7367 = vunpack.c.l.b16 %v2132
        %v7368 = vunpack.c.h.b16 %v2132
        %v7369 = vunpack.c.l.b16 %v2133
        %v7370 = vunpack.c.h.b16 %v2133
        %v7371 = vunpack.c.l.b16 %v2134
        %v7372 = vunpack.c.h.b16 %v2134
        %v7373 = vunpack.c.l.b16 %v2135
        %v7374 = vunpack.c.h.b16 %v2135
        %v7375 = vunpack.c.l.b16 %v2136
        %v7376 = vunpack.c.h.b16 %v2136
        %v7377 = vunpack.c.l.b16 %v2137
        %v7378 = vunpack.c.h.b16 %v2137
        %v7379 = vunpack.c.l.b16 %v2138
        %v7380 = vunpack.c.h.b16 %v2138
        %v7381 = vunpack.c.l.b16 %v2139
        %v7382 = vunpack.c.h.b16 %v2139
        %v7383 = vunpack.c.l.b16 %v2140
        %v7384 = vunpack.c.h.b16 %v2140
        %v7385 = vunpack.c.l.b16 %v2141
        %v7386 = vunpack.c.h.b16 %v2141
        %v7387 = vunpack.c.l.b16 %v2142
        %v7388 = vunpack.c.h.b16 %v2142
        %v7389 = vunpack.c.l.b16 %v2143
        %v7390 = vunpack.c.h.b16 %v2143
        %v7391 = vunpack.c.l.b16 %v2144
        %v7392 = vunpack.c.h.b16 %v2144
        %v7393 = vunpack.c.l.b16 %v2145
        %v7394 = vunpack.c.h.b16 %v2145
        %v7395 = vunpack.c.l.b16 %v2146
        %v7396 = vunpack.c.h.b16 %v2146
        %v7397 = vunpack.c.l.b16 %v2147
        %v7398 = vunpack.c.h.b16 %v2147
        %v7399 = vunpack.c.l.b16 %v2148
        %v7400 = vunpack.c.h.b16 %v2148
        %v7401 = vunpack.c.l.b16 %v2149
        %v7402 = vunpack.c.h.b16 %v2149
        %v7403 = vunpack.c.l.b16 %v2150
        %v7404 = vunpack.c.h.b16 %v2150
        %v7405 = vunpack.c.l.b16 %v2151
        %v7406 = vunpack.c.h.b16 %v2151
        %v7407 = vunpack.c.l.b16 %v2152
        %v7408 = vunpack.c.h.b16 %v2152
        %v7409 = vunpack.c.l.b16 %v2153
        %v7410 = vunpack.c.h.b16 %v2153
        %v7411 = vunpack.c.l.b16 %v2154
        %v7412 = vunpack.c.h.b16 %v2154
        %v7413 = vunpack.c.l.b16 %v2155
        %v7414 = vunpack.c.h.b16 %v2155
        %v7415 = vunpack.c.l.b16 %v2156
        %v7416 = vunpack.c.h.b16 %v2156
        %v7417 = vunpack.c.l.b16 %v2157
        %v7418 = vunpack.c.h.b16 %v2157
        %v7419 = vunpack.c.l.b16 %v2158
        %v7420 = vunpack.c.h.b16 %v2158
        %v7421 = vunpack.c.l.b16 %v2159
        %v7422 = vunpack.c.h.b16 %v2159
        %v7423 = vunpack.c.l.b16 %v2160
        %v7424 = vunpack.c.h.b16 %v2160
        %v7425 = vunpack.c.l.b16 %v2161
        %v7426 = vunpack.c.h.b16 %v2161
        %v7427 = vunpack.c.l.b16 %v2162
        %v7428 = vunpack.c.h.b16 %v2162
        %v7429 = vunpack.c.l.b16 %v2163
        %v7430 = vunpack.c.h.b16 %v2163
        %v7431 = vunpack.c.l.b16 %v2164
        %v7432 = vunpack.c.h.b16 %v2164
        %v7433 = vunpack.c.l.b16 %v2165
        %v7434 = vunpack.c.h.b16 %v2165
        %v7435 = vunpack.c.l.b16 %v2166
        %v7436 = vunpack.c.h.b16 %v2166
        %v7437 = vunpack.c.l.b16 %v2167
        %v7438 = vunpack.c.h.b16 %v2167
        %v7439 = vunpack.c.l.b16 %v2168
        %v7440 = vunpack.c.h.b16 %v2168
        %v7441 = vunpack.c.l.b16 %v2169
        %v7442 = vunpack.c.h.b16 %v2169
        %v7443 = vunpack.c.l.b16 %v2170
        %v7444 = vunpack.c.h.b16 %v2170
        %v7445 = vunpack.c.l.b16 %v2171
        %v7446 = vunpack.c.h.b16 %v2171
        %v7447 = vunpack.c.l.b16 %v2172
        %v7448 = vunpack.c.h.b16 %v2172
        %v7449 = vunpack.c.l.b16 %v2173
        %v7450 = vunpack.c.h.b16 %v2173
        %v7451 = vunpack.c.l.b16 %v2174
        %v7452 = vunpack.c.h.b16 %v2174
        %v7453 = vunpack.c.l.b16 %v2175
        %v7454 = vunpack.c.h.b16 %v2175
        %v7455 = vunpack.c.l.b16 %v2176
        %v7456 = vunpack.c.h.b16 %v2176
        %v7457 = vunpack.c.l.b16 %v2177
        %v7458 = vunpack.c.h.b16 %v2177
        %v7459 = vunpack.c.l.b16 %v2178
        %v7460 = vunpack.c.h.b16 %v2178
        %v7461 = vunpack.c.l.b16 %v2179
        %v7462 = vunpack.c.h.b16 %v2179
        %v7463 = vunpack.c.l.b16 %v2180
        %v7464 = vunpack.c.h.b16 %v2180
        %v7465 = vunpack.c.l.b16 %v2181
        %v7466 = vunpack.c.h.b16 %v2181
        %v7467 = vunpack.c.l.b16 %v2182
        %v7468 = vunpack.c.h.b16 %v2182
        %v7469 = vunpack.c.l.b16 %v2183
        %v7470 = vunpack.c.h.b16 %v2183
        %v7471 = vunpack.c.l.b16 %v2184
        %v7472 = vunpack.c.h.b16 %v2184
        %v7473 = vunpack.c.l.b16 %v2185
        %v7474 = vunpack.c.h.b16 %v2185
        %v7475 = vunpack.c.l.b16 %v2186
        %v7476 = vunpack.c.h.b16 %v2186
        %v7477 = vunpack.c.l.b16 %v2187
        %v7478 = vunpack.c.h.b16 %v2187
        %v7479 = vunpack.c.l.b16 %v2188
        %v7480 = vunpack.c.h.b16 %v2188
        %v7481 = vunpack.c.l.b16 %v2189
        %v7482 = vunpack.c.h.b16 %v2189
        %v7483 = vunpack.c.l.b16 %v2190
        %v7484 = vunpack.c.h.b16 %v2190
        %v7485 = vunpack.c.l.b16 %v2191
        %v7486 = vunpack.c.h.b16 %v2191
        %v7487 = vunpack.c.l.b16 %v2192
        %v7488 = vunpack.c.h.b16 %v2192
        %v7489 = vunpack.c.l.b16 %v2193
        %v7490 = vunpack.c.h.b16 %v2193
        %v7491 = vunpack.c.l.b16 %v2194
        %v7492 = vunpack.c.h.b16 %v2194
        %v7493 = vunpack.c.l.b16 %v2195
        %v7494 = vunpack.c.h.b16 %v2195
        %v7495 = vunpack.c.l.b16 %v2196
        %v7496 = vunpack.c.h.b16 %v2196
        %v7497 = vunpack.c.l.b16 %v2197
        %v7498 = vunpack.c.h.b16 %v2197
        %v7499 = vunpack.c.l.b16 %v2198
        %v7500 = vunpack.c.h.b16 %v2198
        %v7501 = vunpack.c.l.b16 %v2199
        %v7502 = vunpack.c.h.b16 %v2199
        %v7503 = vunpack.c.l.b16 %v2200
        %v7504 = vunpack.c.h.b16 %v2200
        %v7505 = vunpack.c.l.b16 %v2201
        %v7506 = vunpack.c.h.b16 %v2201
        %v7507 = vunpack.c.l.b16 %v2202
        %v7508 = vunpack.c.h.b16 %v2202
        %v7509 = vunpack.c.l.b16 %v2203
        %v7510 = vunpack.c.h.b16 %v2203
        %v7511 = vunpack.c.l.b16 %v2204
        %v7512 = vunpack.c.h.b16 %v2204
        %v7513 = vunpack.c.l.b16 %v2205
        %v7514 = vunpack.c.h.b16 %v2205
        %v7515 = vunpack.c.l.b16 %v2206
        %v7516 = vunpack.c.h.b16 %v2206
        %v7517 = vunpack.c.l.b16 %v2207
        %v7518 = vunpack.c.h.b16 %v2207
        %v7519 = vunpack.c.l.b16 %v2208
        %v7520 = vunpack.c.h.b16 %v2208
        %v7521 = vunpack.c.l.b16 %v2209
        %v7522 = vunpack.c.h.b16 %v2209
        %v7523 = vunpack.c.l.b16 %v2210
        %v7524 = vunpack.c.h.b16 %v2210
        %v7525 = vunpack.c.l.b16 %v2211
        %v7526 = vunpack.c.h.b16 %v2211
        %v7527 = vunpack.c.l.b16 %v2212
        %v7528 = vunpack.c.h.b16 %v2212
        %v7529 = vunpack.c.l.b16 %v2213
        %v7530 = vunpack.c.h.b16 %v2213
        %v7531 = vunpack.c.l.b16 %v2214
        %v7532 = vunpack.c.h.b16 %v2214
        %v7533 = vunpack.c.l.b16 %v2215
        %v7534 = vunpack.c.h.b16 %v2215
        %v7535 = vunpack.c.l.b16 %v2216
        %v7536 = vunpack.c.h.b16 %v2216
        %v7537 = vunpack.c.l.b16 %v2217
        %v7538 = vunpack.c.h.b16 %v2217
        %v7539 = vunpack.c.l.b16 %v2218
        %v7540 = vunpack.c.h.b16 %v2218
        %v7541 = vunpack.c.l.b16 %v2219
        %v7542 = vunpack.c.h.b16 %v2219
        %v7543 = vunpack.c.l.b16 %v2220
        %v7544 = vunpack.c.h.b16 %v2220
        %v7545 = vunpack.c.l.b16 %v2221
        %v7546 = vunpack.c.h.b16 %v2221
        %v7547 = vunpack.c.l.b16 %v2222
        %v7548 = vunpack.c.h.b16 %v2222
        %v7549 = vunpack.c.l.b16 %v2223
        %v7550 = vunpack.c.h.b16 %v2223
        %v7551 = vunpack.c.l.b16 %v2224
        %v7552 = vunpack.c.h.b16 %v2224
        %v7553 = vunpack.c.l.b16 %v2225
        %v7554 = vunpack.c.h.b16 %v2225
        %v7555 = vunpack.c.l.b16 %v2226
        %v7556 = vunpack.c.h.b16 %v2226
        %v7557 = vunpack.c.l.b16 %v2227
        %v7558 = vunpack.c.h.b16 %v2227
        %v7559 = vunpack.c.l.b16 %v2228
        %v7560 = vunpack.c.h.b16 %v2228
        %v7561 = vunpack.c.l.b16 %v2229
        %v7562 = vunpack.c.h.b16 %v2229
        %v7563 = vunpack.c.l.b16 %v2230
        %v7564 = vunpack.c.h.b16 %v2230
        %v7565 = vunpack.c.l.b16 %v2231
        %v7566 = vunpack.c.h.b16 %v2231
        %v7567 = vunpack.c.l.b16 %v2232
        %v7568 = vunpack.c.h.b16 %v2232
        %v7569 = vunpack.c.l.b16 %v2233
        %v7570 = vunpack.c.h.b16 %v2233
        %v7571 = vunpack.c.l.b16 %v2234
        %v7572 = vunpack.c.h.b16 %v2234
        %v7573 = vunpack.c.l.b16 %v2235
        %v7574 = vunpack.c.h.b16 %v2235
        %v7575 = vunpack.c.l.b16 %v2236
        %v7576 = vunpack.c.h.b16 %v2236
        %v7577 = vunpack.c.l.b16 %v2237
        %v7578 = vunpack.c.h.b16 %v2237
        %v7579 = vunpack.c.l.b16 %v2238
        %v7580 = vunpack.c.h.b16 %v2238
        %v7581 = vunpack.c.l.b16 %v2239
        %v7582 = vunpack.c.h.b16 %v2239
        %v7583 = vunpack.c.l.b16 %v2240
        %v7584 = vunpack.c.h.b16 %v2240
        %v7585 = vunpack.c.l.b16 %v2241
        %v7586 = vunpack.c.h.b16 %v2241
        %v7587 = vunpack.c.l.b16 %v2242
        %v7588 = vunpack.c.h.b16 %v2242
        %v7589 = vunpack.c.l.b16 %v2243
        %v7590 = vunpack.c.h.b16 %v2243
        %v7591 = vunpack.c.l.b16 %v2244
        %v7592 = vunpack.c.h.b16 %v2244
        %v7593 = vunpack.c.l.b16 %v2245
        %v7594 = vunpack.c.h.b16 %v2245
        %v7595 = vunpack.c.l.b16 %v2246
        %v7596 = vunpack.c.h.b16 %v2246
        %v7597 = vunpack.c.l.b16 %v2247
        %v7598 = vunpack.c.h.b16 %v2247
        %v7599 = vunpack.c.l.b16 %v2248
        %v7600 = vunpack.c.h.b16 %v2248
        %v7601 = vunpack.c.l.b16 %v2249
        %v7602 = vunpack.c.h.b16 %v2249
        %v7603 = vunpack.c.l.b16 %v2250
        %v7604 = vunpack.c.h.b16 %v2250
        %v7605 = vunpack.c.l.b16 %v2251
        %v7606 = vunpack.c.h.b16 %v2251
        %v7607 = vunpack.c.l.b16 %v2252
        %v7608 = vunpack.c.h.b16 %v2252
        %v7609 = vunpack.c.l.b16 %v2253
        %v7610 = vunpack.c.h.b16 %v2253
        %v7611 = vunpack.c.l.b16 %v2254
        %v7612 = vunpack.c.h.b16 %v2254
        %v7613 = vunpack.c.l.b16 %v2255
        %v7614 = vunpack.c.h.b16 %v2255
        %v7615 = vunpack.c.l.b16 %v2256
        %v7616 = vunpack.c.h.b16 %v2256
        %v7617 = vunpack.c.l.b16 %v2257
        %v7618 = vunpack.c.h.b16 %v2257
        %v7619 = vunpack.c.l.b16 %v2258
        %v7620 = vunpack.c.h.b16 %v2258
        %v7621 = vunpack.c.l.b16 %v2259
        %v7622 = vunpack.c.h.b16 %v2259
        %v7623 = vunpack.c.l.b16 %v2260
        %v7624 = vunpack.c.h.b16 %v2260
        %v7625 = vunpack.c.l.b16 %v2261
        %v7626 = vunpack.c.h.b16 %v2261
        %v7627 = vunpack.c.l.b16 %v2262
        %v7628 = vunpack.c.h.b16 %v2262
        %v7629 = vunpack.c.l.b16 %v2263
        %v7630 = vunpack.c.h.b16 %v2263
        %v7631 = vunpack.c.l.b16 %v2264
        %v7632 = vunpack.c.h.b16 %v2264
        %v7633 = vunpack.c.l.b16 %v2265
        %v7634 = vunpack.c.h.b16 %v2265
        %v7635 = vunpack.c.l.b16 %v2266
        %v7636 = vunpack.c.h.b16 %v2266
        %v7637 = vunpack.c.l.b16 %v2267
        %v7638 = vunpack.c.h.b16 %v2267
        %v7639 = vunpack.c.l.b16 %v2268
        %v7640 = vunpack.c.h.b16 %v2268
        %v7641 = vunpack.c.l.b16 %v2269
        %v7642 = vunpack.c.h.b16 %v2269
        %v7643 = vunpack.c.l.b16 %v2270
        %v7644 = vunpack.c.h.b16 %v2270
        %v7645 = vunpack.c.l.b16 %v2271
        %v7646 = vunpack.c.h.b16 %v2271
        %v7647 = vunpack.c.l.b16 %v2272
        %v7648 = vunpack.c.h.b16 %v2272
        %v7649 = vpack.c.b16 %v4073, %v4065
        %v7650 = vpack.c.b16 %v4074, %v4066
        %v7651 = vpack.c.b16 %v4075, %v4067
        %v7652 = vpack.c.b16 %v4076, %v4068
        %v7653 = vpack.c.b16 %v4077, %v4069
        %v7654 = vpack.c.b16 %v4078, %v4070
        %v7655 = vpack.c.b16 %v4079, %v4071
        %v7656 = vpack.c.b16 %v4080, %v4072
        %v7657 = vpack.c.b16 %v4089, %v4081
        %v7658 = vpack.c.b16 %v4090, %v4082
        %v7659 = vpack.c.b16 %v4091, %v4083
        %v7660 = vpack.c.b16 %v4092, %v4084
        %v7661 = vpack.c.b16 %v4093, %v4085
        %v7662 = vpack.c.b16 %v4094, %v4086
        %v7663 = vpack.c.b16 %v4095, %v4087
        %v7664 = vpack.c.b16 %v4096, %v4088
        %v7665 = vpack.c.b16 %v4105, %v4097
        %v7666 = vpack.c.b16 %v4106, %v4098
        %v7667 = vpack.c.b16 %v4107, %v4099
        %v7668 = vpack.c.b16 %v4108, %v4100
        %v7669 = vpack.c.b16 %v4109, %v4101
        %v7670 = vpack.c.b16 %v4110, %v4102
        %v7671 = vpack.c.b16 %v4111, %v4103
        %v7672 = vpack.c.b16 %v4112, %v4104
        %v7673 = vpack.c.b16 %v4121, %v4113
        %v7674 = vpack.c.b16 %v4122, %v4114
        %v7675 = vpack.c.b16 %v4123, %v4115
        %v7676 = vpack.c.b16 %v4124, %v4116
        %v7677 = vpack.c.b16 %v4125, %v4117
        %v7678 = vpack.c.b16 %v4126, %v4118
        %v7679 = vpack.c.b16 %v4127, %v4119
        %v7680 = vpack.c.b16 %v4128, %v4120
        %v7681 = vpack.c.b16 %v4137, %v4129
        %v7682 = vpack.c.b16 %v4138, %v4130
        %v7683 = vpack.c.b16 %v4139, %v4131
        %v7684 = vpack.c.b16 %v4140, %v4132
        %v7685 = vpack.c.b16 %v4141, %v4133
        %v7686 = vpack.c.b16 %v4142, %v4134
        %v7687 = vpack.c.b16 %v4143, %v4135
        %v7688 = vpack.c.b16 %v4144, %v4136
        %v7689 = vpack.c.b16 %v4153, %v4145
        %v7690 = vpack.c.b16 %v4154, %v4146
        %v7691 = vpack.c.b16 %v4155, %v4147
        %v7692 = vpack.c.b16 %v4156, %v4148
        %v7693 = vpack.c.b16 %v4157, %v4149
        %v7694 = vpack.c.b16 %v4158, %v4150
        %v7695 = vpack.c.b16 %v4159, %v4151
        %v7696 = vpack.c.b16 %v4160, %v4152
        %v7697 = vpack.c.b16 %v4169, %v4161
        %v7698 = vpack.c.b16 %v4170, %v4162
        %v7699 = vpack.c.b16 %v4171, %v4163
        %v7700 = vpack.c.b16 %v4172, %v4164
        %v7701 = vpack.c.b16 %v4173, %v4165
        %v7702 = vpack.c.b16 %v4174, %v4166
        %v7703 = vpack.c.b16 %v4175, %v4167
        %v7704 = vpack.c.b16 %v4176, %v4168
        %v7705 = vpack.c.b16 %v4185, %v4177
        %v7706 = vpack.c.b16 %v4186, %v4178
        %v7707 = vpack.c.b16 %v4187, %v4179
        %v7708 = vpack.c.b16 %v4188, %v4180
        %v7709 = vpack.c.b16 %v4189, %v4181
        %v7710 = vpack.c.b16 %v4190, %v4182
        %v7711 = vpack.c.b16 %v4191, %v4183
        %v7712 = vpack.c.b16 %v4192, %v4184
        %v7713 = vpack.c.b16 %v4201, %v4193
        %v7714 = vpack.c.b16 %v4202, %v4194
        %v7715 = vpack.c.b16 %v4203, %v4195
        %v7716 = vpack.c.b16 %v4204, %v4196
        %v7717 = vpack.c.b16 %v4205, %v4197
        %v7718 = vpack.c.b16 %v4206, %v4198
        %v7719 = vpack.c.b16 %v4207, %v4199
        %v7720 = vpack.c.b16 %v4208, %v4200
        %v7721 = vpack.c.b16 %v4217, %v4209
        %v7722 = vpack.c.b16 %v4218, %v4210
        %v7723 = vpack.c.b16 %v4219, %v4211
        %v7724 = vpack.c.b16 %v4220, %v4212
        %v7725 = vpack.c.b16 %v4221, %v4213
        %v7726 = vpack.c.b16 %v4222, %v4214
        %v7727 = vpack.c.b16 %v4223, %v4215
        %v7728 = vpack.c.b16 %v4224, %v4216
        %v7729 = vpack.c.b16 %v4233, %v4225
        %v7730 = vpack.c.b16 %v4234, %v4226
        %v7731 = vpack.c.b16 %v4235, %v4227
        %v7732 = vpack.c.b16 %v4236, %v4228
        %v7733 = vpack.c.b16 %v4237, %v4229
        %v7734 = vpack.c.b16 %v4238, %v4230
        %v7735 = vpack.c.b16 %v4239, %v4231
        %v7736 = vpack.c.b16 %v4240, %v4232
        %v7737 = vpack.c.b16 %v4249, %v4241
        %v7738 = vpack.c.b16 %v4250, %v4242
        %v7739 = vpack.c.b16 %v4251, %v4243
        %v7740 = vpack.c.b16 %v4252, %v4244
        %v7741 = vpack.c.b16 %v4253, %v4245
        %v7742 = vpack.c.b16 %v4254, %v4246
        %v7743 = vpack.c.b16 %v4255, %v4247
        %v7744 = vpack.c.b16 %v4256, %v4248
        %v7745 = vpack.c.b16 %v4265, %v4257
        %v7746 = vpack.c.b16 %v4266, %v4258
        %v7747 = vpack.c.b16 %v4267, %v4259
        %v7748 = vpack.c.b16 %v4268, %v4260
        %v7749 = vpack.c.b16 %v4269, %v4261
        %v7750 = vpack.c.b16 %v4270, %v4262
        %v7751 = vpack.c.b16 %v4271, %v4263
        %v7752 = vpack.c.b16 %v4272, %v4264
        %v7753 = vpack.c.b16 %v4281, %v4273
        %v7754 = vpack.c.b16 %v4282, %v4274
        %v7755 = vpack.c.b16 %v4283, %v4275
        %v7756 = vpack.c.b16 %v4284, %v4276
        %v7757 = vpack.c.b16 %v4285, %v4277
        %v7758 = vpack.c.b16 %v4286, %v4278
        %v7759 = vpack.c.b16 %v4287, %v4279
        %v7760 = vpack.c.b16 %v4288, %v4280
        %v7761 = vpack.c.b16 %v4297, %v4289
        %v7762 = vpack.c.b16 %v4298, %v4290
        %v7763 = vpack.c.b16 %v4299, %v4291
        %v7764 = vpack.c.b16 %v4300, %v4292
        %v7765 = vpack.c.b16 %v4301, %v4293
        %v7766 = vpack.c.b16 %v4302, %v4294
        %v7767 = vpack.c.b16 %v4303, %v4295
        %v7768 = vpack.c.b16 %v4304, %v4296
        %v7769 = vpack.c.b16 %v4313, %v4305
        %v7770 = vpack.c.b16 %v4314, %v4306
        %v7771 = vpack.c.b16 %v4315, %v4307
        %v7772 = vpack.c.b16 %v4316, %v4308
        %v7773 = vpack.c.b16 %v4317, %v4309
        %v7774 = vpack.c.b16 %v4318, %v4310
        %v7775 = vpack.c.b16 %v4319, %v4311
        %v7776 = vpack.c.b16 %v4320, %v4312
        %v7777 = vpack.c.b16 %v4329, %v4321
        %v7778 = vpack.c.b16 %v4330, %v4322
        %v7779 = vpack.c.b16 %v4331, %v4323
        %v7780 = vpack.c.b16 %v4332, %v4324
        %v7781 = vpack.c.b16 %v4333, %v4325
        %v7782 = vpack.c.b16 %v4334, %v4326
        %v7783 = vpack.c.b16 %v4335, %v4327
        %v7784 = vpack.c.b16 %v4336, %v4328
        %v7785 = vpack.c.b16 %v4345, %v4337
        %v7786 = vpack.c.b16 %v4346, %v4338
        %v7787 = vpack.c.b16 %v4347, %v4339
        %v7788 = vpack.c.b16 %v4348, %v4340
        %v7789 = vpack.c.b16 %v4349, %v4341
        %v7790 = vpack.c.b16 %v4350, %v4342
        %v7791 = vpack.c.b16 %v4351, %v4343
        %v7792 = vpack.c.b16 %v4352, %v4344
        %v7793 = vpack.c.b16 %v4361, %v4353
        %v7794 = vpack.c.b16 %v4362, %v4354
        %v7795 = vpack.c.b16 %v4363, %v4355
        %v7796 = vpack.c.b16 %v4364, %v4356
        %v7797 = vpack.c.b16 %v4365, %v4357
        %v7798 = vpack.c.b16 %v4366, %v4358
        %v7799 = vpack.c.b16 %v4367, %v4359
        %v7800 = vpack.c.b16 %v4368, %v4360
        %v7801 = vpack.c.b16 %v4377, %v4369
        %v7802 = vpack.c.b16 %v4378, %v4370
        %v7803 = vpack.c.b16 %v4379, %v4371
        %v7804 = vpack.c.b16 %v4380, %v4372
        %v7805 = vpack.c.b16 %v4381, %v4373
        %v7806 = vpack.c.b16 %v4382, %v4374
        %v7807 = vpack.c.b16 %v4383, %v4375
        %v7808 = vpack.c.b16 %v4384, %v4376
        %v7809 = vpack.c.b16 %v4393, %v4385
        %v7810 = vpack.c.b16 %v4394, %v4386
        %v7811 = vpack.c.b16 %v4395, %v4387
        %v7812 = vpack.c.b16 %v4396, %v4388
        %v7813 = vpack.c.b16 %v4397, %v4389
        %v7814 = vpack.c.b16 %v4398, %v4390
        %v7815 = vpack.c.b16 %v4399, %v4391
        %v7816 = vpack.c.b16 %v4400, %v4392
        %v7817 = vpack.c.b16 %v4409, %v4401
        %v7818 = vpack.c.b16 %v4410, %v4402
        %v7819 = vpack.c.b16 %v4411, %v4403
        %v7820 = vpack.c.b16 %v4412, %v4404
        %v7821 = vpack.c.b16 %v4413, %v4405
        %v7822 = vpack.c.b16 %v4414, %v4406
        %v7823 = vpack.c.b16 %v4415, %v4407
        %v7824 = vpack.c.b16 %v4416, %v4408
        %v7825 = vpack.c.b16 %v4425, %v4417
        %v7826 = vpack.c.b16 %v4426, %v4418
        %v7827 = vpack.c.b16 %v4427, %v4419
        %v7828 = vpack.c.b16 %v4428, %v4420
        %v7829 = vpack.c.b16 %v4429, %v4421
        %v7830 = vpack.c.b16 %v4430, %v4422
        %v7831 = vpack.c.b16 %v4431, %v4423
        %v7832 = vpack.c.b16 %v4432, %v4424
        %v7833 = vpack.c.b16 %v4441, %v4433
        %v7834 = vpack.c.b16 %v4442, %v4434
        %v7835 = vpack.c.b16 %v4443, %v4435
        %v7836 = vpack.c.b16 %v4444, %v4436
        %v7837 = vpack.c.b16 %v4445, %v4437
        %v7838 = vpack.c.b16 %v4446, %v4438
        %v7839 = vpack.c.b16 %v4447, %v4439
        %v7840 = vpack.c.b16 %v4448, %v4440
        %v7841 = vpack.c.b16 %v4457, %v4449
        %v7842 = vpack.c.b16 %v4458, %v4450
        %v7843 = vpack.c.b16 %v4459, %v4451
        %v7844 = vpack.c.b16 %v4460, %v4452
        %v7845 = vpack.c.b16 %v4461, %v4453
        %v7846 = vpack.c.b16 %v4462, %v4454
        %v7847 = vpack.c.b16 %v4463, %v4455
        %v7848 = vpack.c.b16 %v4464, %v4456
        %v7849 = vpack.c.b16 %v4473, %v4465
        %v7850 = vpack.c.b16 %v4474, %v4466
        %v7851 = vpack.c.b16 %v4475, %v4467
        %v7852 = vpack.c.b16 %v4476, %v4468
        %v7853 = vpack.c.b16 %v4477, %v4469
        %v7854 = vpack.c.b16 %v4478, %v4470
        %v7855 = vpack.c.b16 %v4479, %v4471
        %v7856 = vpack.c.b16 %v4480, %v4472
        %v7857 = vpack.c.b16 %v4489, %v4481
        %v7858 = vpack.c.b16 %v4490, %v4482
        %v7859 = vpack.c.b16 %v4491, %v4483
        %v7860 = vpack.c.b16 %v4492, %v4484
        %v7861 = vpack.c.b16 %v4493, %v4485
        %v7862 = vpack.c.b16 %v4494, %v4486
        %v7863 = vpack.c.b16 %v4495, %v4487
        %v7864 = vpack.c.b16 %v4496, %v4488
        %v7865 = vpack.c.b16 %v4505, %v4497
        %v7866 = vpack.c.b16 %v4506, %v4498
        %v7867 = vpack.c.b16 %v4507, %v4499
        %v7868 = vpack.c.b16 %v4508, %v4500
        %v7869 = vpack.c.b16 %v4509, %v4501
        %v7870 = vpack.c.b16 %v4510, %v4502
        %v7871 = vpack.c.b16 %v4511, %v4503
        %v7872 = vpack.c.b16 %v4512, %v4504
        %v7873 = vpack.c.b16 %v4521, %v4513
        %v7874 = vpack.c.b16 %v4522, %v4514
        %v7875 = vpack.c.b16 %v4523, %v4515
        %v7876 = vpack.c.b16 %v4524, %v4516
        %v7877 = vpack.c.b16 %v4525, %v4517
        %v7878 = vpack.c.b16 %v4526, %v4518
        %v7879 = vpack.c.b16 %v4527, %v4519
        %v7880 = vpack.c.b16 %v4528, %v4520
        %v7881 = vpack.c.b16 %v4537, %v4529
        %v7882 = vpack.c.b16 %v4538, %v4530
        %v7883 = vpack.c.b16 %v4539, %v4531
        %v7884 = vpack.c.b16 %v4540, %v4532
        %v7885 = vpack.c.b16 %v4541, %v4533
        %v7886 = vpack.c.b16 %v4542, %v4534
        %v7887 = vpack.c.b16 %v4543, %v4535
        %v7888 = vpack.c.b16 %v4544, %v4536
        %v7889 = vpack.c.b16 %v4553, %v4545
        %v7890 = vpack.c.b16 %v4554, %v4546
        %v7891 = vpack.c.b16 %v4555, %v4547
        %v7892 = vpack.c.b16 %v4556, %v4548
        %v7893 = vpack.c.b16 %v4557, %v4549
        %v7894 = vpack.c.b16 %v4558, %v4550
        %v7895 = vpack.c.b16 %v4559, %v4551
        %v7896 = vpack.c.b16 %v4560, %v4552
        %v7897 = vpack.c.b16 %v4569, %v4561
        %v7898 = vpack.c.b16 %v4570, %v4562
        %v7899 = vpack.c.b16 %v4571, %v4563
        %v7900 = vpack.c.b16 %v4572, %v4564
        %v7901 = vpack.c.b16 %v4573, %v4565
        %v7902 = vpack.c.b16 %v4574, %v4566
        %v7903 = vpack.c.b16 %v4575, %v4567
        %v7904 = vpack.c.b16 %v4576, %v4568
        %v7905 = vpack.c.b16 %v4585, %v4577
        %v7906 = vpack.c.b16 %v4586, %v4578
        %v7907 = vpack.c.b16 %v4587, %v4579
        %v7908 = vpack.c.b16 %v4588, %v4580
        %v7909 = vpack.c.b16 %v4589, %v4581
        %v7910 = vpack.c.b16 %v4590, %v4582
        %v7911 = vpack.c.b16 %v4591, %v4583
        %v7912 = vpack.c.b16 %v4592, %v4584
        %v7913 = vpack.c.b16 %v4601, %v4593
        %v7914 = vpack.c.b16 %v4602, %v4594
        %v7915 = vpack.c.b16 %v4603, %v4595
        %v7916 = vpack.c.b16 %v4604, %v4596
        %v7917 = vpack.c.b16 %v4605, %v4597
        %v7918 = vpack.c.b16 %v4606, %v4598
        %v7919 = vpack.c.b16 %v4607, %v4599
        %v7920 = vpack.c.b16 %v4608, %v4600
        %v7921 = vpack.c.b16 %v4617, %v4609
        %v7922 = vpack.c.b16 %v4618, %v4610
        %v7923 = vpack.c.b16 %v4619, %v4611
        %v7924 = vpack.c.b16 %v4620, %v4612
        %v7925 = vpack.c.b16 %v4621, %v4613
        %v7926 = vpack.c.b16 %v4622, %v4614
        %v7927 = vpack.c.b16 %v4623, %v4615
        %v7928 = vpack.c.b16 %v4624, %v4616
        %v7929 = vpack.c.b16 %v4633, %v4625
        %v7930 = vpack.c.b16 %v4634, %v4626
        %v7931 = vpack.c.b16 %v4635, %v4627
        %v7932 = vpack.c.b16 %v4636, %v4628
        %v7933 = vpack.c.b16 %v4637, %v4629
        %v7934 = vpack.c.b16 %v4638, %v4630
        %v7935 = vpack.c.b16 %v4639, %v4631
        %v7936 = vpack.c.b16 %v4640, %v4632
        %v7937 = vpack.c.b16 %v4649, %v4641
        %v7938 = vpack.c.b16 %v4650, %v4642
        %v7939 = vpack.c.b16 %v4651, %v4643
        %v7940 = vpack.c.b16 %v4652, %v4644
        %v7941 = vpack.c.b16 %v4653, %v4645
        %v7942 = vpack.c.b16 %v4654, %v4646
        %v7943 = vpack.c.b16 %v4655, %v4647
        %v7944 = vpack.c.b16 %v4656, %v4648
        %v7945 = vpack.c.b16 %v4665, %v4657
        %v7946 = vpack.c.b16 %v4666, %v4658
        %v7947 = vpack.c.b16 %v4667, %v4659
        %v7948 = vpack.c.b16 %v4668, %v4660
        %v7949 = vpack.c.b16 %v4669, %v4661
        %v7950 = vpack.c.b16 %v4670, %v4662
        %v7951 = vpack.c.b16 %v4671, %v4663
        %v7952 = vpack.c.b16 %v4672, %v4664
        %v7953 = vpack.c.b16 %v4681, %v4673
        %v7954 = vpack.c.b16 %v4682, %v4674
        %v7955 = vpack.c.b16 %v4683, %v4675
        %v7956 = vpack.c.b16 %v4684, %v4676
        %v7957 = vpack.c.b16 %v4685, %v4677
        %v7958 = vpack.c.b16 %v4686, %v4678
        %v7959 = vpack.c.b16 %v4687, %v4679
        %v7960 = vpack.c.b16 %v4688, %v4680
        %v7961 = vpack.c.b16 %v4697, %v4689
        %v7962 = vpack.c.b16 %v4698, %v4690
        %v7963 = vpack.c.b16 %v4699, %v4691
        %v7964 = vpack.c.b16 %v4700, %v4692
        %v7965 = vpack.c.b16 %v4701, %v4693
        %v7966 = vpack.c.b16 %v4702, %v4694
        %v7967 = vpack.c.b16 %v4703, %v4695
        %v7968 = vpack.c.b16 %v4704, %v4696
        %v7969 = vpack.c.b16 %v4713, %v4705
        %v7970 = vpack.c.b16 %v4714, %v4706
        %v7971 = vpack.c.b16 %v4715, %v4707
        %v7972 = vpack.c.b16 %v4716, %v4708
        %v7973 = vpack.c.b16 %v4717, %v4709
        %v7974 = vpack.c.b16 %v4718, %v4710
        %v7975 = vpack.c.b16 %v4719, %v4711
        %v7976 = vpack.c.b16 %v4720, %v4712
        %v7977 = vpack.c.b16 %v4729, %v4721
        %v7978 = vpack.c.b16 %v4730, %v4722
        %v7979 = vpack.c.b16 %v4731, %v4723
        %v7980 = vpack.c.b16 %v4732, %v4724
        %v7981 = vpack.c.b16 %v4733, %v4725
        %v7982 = vpack.c.b16 %v4734, %v4726
        %v7983 = vpack.c.b16 %v4735, %v4727
        %v7984 = vpack.c.b16 %v4736, %v4728
        %v7985 = vpack.c.b16 %v4745, %v4737
        %v7986 = vpack.c.b16 %v4746, %v4738
        %v7987 = vpack.c.b16 %v4747, %v4739
        %v7988 = vpack.c.b16 %v4748, %v4740
        %v7989 = vpack.c.b16 %v4749, %v4741
        %v7990 = vpack.c.b16 %v4750, %v4742
        %v7991 = vpack.c.b16 %v4751, %v4743
        %v7992 = vpack.c.b16 %v4752, %v4744
        %v7993 = vpack.c.b16 %v4761, %v4753
        %v7994 = vpack.c.b16 %v4762, %v4754
        %v7995 = vpack.c.b16 %v4763, %v4755
        %v7996 = vpack.c.b16 %v4764, %v4756
        %v7997 = vpack.c.b16 %v4765, %v4757
        %v7998 = vpack.c.b16 %v4766, %v4758
        %v7999 = vpack.c.b16 %v4767, %v4759
        %v8000 = vpack.c.b16 %v4768, %v4760
        %v8001 = vpack.c.b16 %v4777, %v4769
        %v8002 = vpack.c.b16 %v4778, %v4770
        %v8003 = vpack.c.b16 %v4779, %v4771
        %v8004 = vpack.c.b16 %v4780, %v4772
        %v8005 = vpack.c.b16 %v4781, %v4773
        %v8006 = vpack.c.b16 %v4782, %v4774
        %v8007 = vpack.c.b16 %v4783, %v4775
        %v8008 = vpack.c.b16 %v4784, %v4776
        %v8009 = vpack.c.b16 %v4793, %v4785
        %v8010 = vpack.c.b16 %v4794, %v4786
        %v8011 = vpack.c.b16 %v4795, %v4787
        %v8012 = vpack.c.b16 %v4796, %v4788
        %v8013 = vpack.c.b16 %v4797, %v4789
        %v8014 = vpack.c.b16 %v4798, %v4790
        %v8015 = vpack.c.b16 %v4799, %v4791
        %v8016 = vpack.c.b16 %v4800, %v4792
        %v8017 = vpack.c.b16 %v4809, %v4801
        %v8018 = vpack.c.b16 %v4810, %v4802
        %v8019 = vpack.c.b16 %v4811, %v4803
        %v8020 = vpack.c.b16 %v4812, %v4804
        %v8021 = vpack.c.b16 %v4813, %v4805
        %v8022 = vpack.c.b16 %v4814, %v4806
        %v8023 = vpack.c.b16 %v4815, %v4807
        %v8024 = vpack.c.b16 %v4816, %v4808
        %v8025 = vpack.c.b16 %v4825, %v4817
        %v8026 = vpack.c.b16 %v4826, %v4818
        %v8027 = vpack.c.b16 %v4827, %v4819
        %v8028 = vpack.c.b16 %v4828, %v4820
        %v8029 = vpack.c.b16 %v4829, %v4821
        %v8030 = vpack.c.b16 %v4830, %v4822
        %v8031 = vpack.c.b16 %v4831, %v4823
        %v8032 = vpack.c.b16 %v4832, %v4824
        %v8033 = vpack.c.b16 %v4841, %v4833
        %v8034 = vpack.c.b16 %v4842, %v4834
        %v8035 = vpack.c.b16 %v4843, %v4835
        %v8036 = vpack.c.b16 %v4844, %v4836
        %v8037 = vpack.c.b16 %v4845, %v4837
        %v8038 = vpack.c.b16 %v4846, %v4838
        %v8039 = vpack.c.b16 %v4847, %v4839
        %v8040 = vpack.c.b16 %v4848, %v4840
        %v8041 = vpack.c.b16 %v4857, %v4849
        %v8042 = vpack.c.b16 %v4858, %v4850
        %v8043 = vpack.c.b16 %v4859, %v4851
        %v8044 = vpack.c.b16 %v4860, %v4852
        %v8045 = vpack.c.b16 %v4861, %v4853
        %v8046 = vpack.c.b16 %v4862, %v4854
        %v8047 = vpack.c.b16 %v4863, %v4855
        %v8048 = vpack.c.b16 %v4864, %v4856
        %v8049 = vpack.c.b16 %v4873, %v4865
        %v8050 = vpack.c.b16 %v4874, %v4866
        %v8051 = vpack.c.b16 %v4875, %v4867
        %v8052 = vpack.c.b16 %v4876, %v4868
        %v8053 = vpack.c.b16 %v4877, %v4869
        %v8054 = vpack.c.b16 %v4878, %v4870
        %v8055 = vpack.c.b16 %v4879, %v4871
        %v8056 = vpack.c.b16 %v4880, %v4872
        %v8057 = vpack.c.b16 %v4889, %v4881
        %v8058 = vpack.c.b16 %v4890, %v4882
        %v8059 = vpack.c.b16 %v4891, %v4883
        %v8060 = vpack.c.b16 %v4892, %v4884
        %v8061 = vpack.c.b16 %v4893, %v4885
        %v8062 = vpack.c.b16 %v4894, %v4886
        %v8063 = vpack.c.b16 %v4895, %v4887
        %v8064 = vpack.c.b16 %v4896, %v4888
        %v8065 = vpack.c.b16 %v4905, %v4897
        %v8066 = vpack.c.b16 %v4906, %v4898
        %v8067 = vpack.c.b16 %v4907, %v4899
        %v8068 = vpack.c.b16 %v4908, %v4900
        %v8069 = vpack.c.b16 %v4909, %v4901
        %v8070 = vpack.c.b16 %v4910, %v4902
        %v8071 = vpack.c.b16 %v4911, %v4903
        %v8072 = vpack.c.b16 %v4912, %v4904
        %v8073 = vpack.c.b16 %v4921, %v4913
        %v8074 = vpack.c.b16 %v4922, %v4914
        %v8075 = vpack.c.b16 %v4923, %v4915
        %v8076 = vpack.c.b16 %v4924, %v4916
        %v8077 = vpack.c.b16 %v4925, %v4917
        %v8078 = vpack.c.b16 %v4926, %v4918
        %v8079 = vpack.c.b16 %v4927, %v4919
        %v8080 = vpack.c.b16 %v4928, %v4920
        %v8081 = vpack.c.b16 %v4937, %v4929
        %v8082 = vpack.c.b16 %v4938, %v4930
        %v8083 = vpack.c.b16 %v4939, %v4931
        %v8084 = vpack.c.b16 %v4940, %v4932
        %v8085 = vpack.c.b16 %v4941, %v4933
        %v8086 = vpack.c.b16 %v4942, %v4934
        %v8087 = vpack.c.b16 %v4943, %v4935
        %v8088 = vpack.c.b16 %v4944, %v4936
        %v8089 = vpack.c.b16 %v4953, %v4945
        %v8090 = vpack.c.b16 %v4954, %v4946
        %v8091 = vpack.c.b16 %v4955, %v4947
        %v8092 = vpack.c.b16 %v4956, %v4948
        %v8093 = vpack.c.b16 %v4957, %v4949
        %v8094 = vpack.c.b16 %v4958, %v4950
        %v8095 = vpack.c.b16 %v4959, %v4951
        %v8096 = vpack.c.b16 %v4960, %v4952
        %v8097 = vpack.c.b16 %v4969, %v4961
        %v8098 = vpack.c.b16 %v4970, %v4962
        %v8099 = vpack.c.b16 %v4971, %v4963
        %v8100 = vpack.c.b16 %v4972, %v4964
        %v8101 = vpack.c.b16 %v4973, %v4965
        %v8102 = vpack.c.b16 %v4974, %v4966
        %v8103 = vpack.c.b16 %v4975, %v4967
        %v8104 = vpack.c.b16 %v4976, %v4968
        %v8105 = vpack.c.b16 %v4985, %v4977
        %v8106 = vpack.c.b16 %v4986, %v4978
        %v8107 = vpack.c.b16 %v4987, %v4979
        %v8108 = vpack.c.b16 %v4988, %v4980
        %v8109 = vpack.c.b16 %v4989, %v4981
        %v8110 = vpack.c.b16 %v4990, %v4982
        %v8111 = vpack.c.b16 %v4991, %v4983
        %v8112 = vpack.c.b16 %v4992, %v4984
        %v8113 = vpack.c.b16 %v5001, %v4993
        %v8114 = vpack.c.b16 %v5002, %v4994
        %v8115 = vpack.c.b16 %v5003, %v4995
        %v8116 = vpack.c.b16 %v5004, %v4996
        %v8117 = vpack.c.b16 %v5005, %v4997
        %v8118 = vpack.c.b16 %v5006, %v4998
        %v8119 = vpack.c.b16 %v5007, %v4999
        %v8120 = vpack.c.b16 %v5008, %v5000
        %v8121 = vpack.c.b16 %v5017, %v5009
        %v8122 = vpack.c.b16 %v5018, %v5010
        %v8123 = vpack.c.b16 %v5019, %v5011
        %v8124 = vpack.c.b16 %v5020, %v5012
        %v8125 = vpack.c.b16 %v5021, %v5013
        %v8126 = vpack.c.b16 %v5022, %v5014
        %v8127 = vpack.c.b16 %v5023, %v5015
        %v8128 = vpack.c.b16 %v5024, %v5016
        %v8129 = vpack.c.b16 %v5033, %v5025
        %v8130 = vpack.c.b16 %v5034, %v5026
        %v8131 = vpack.c.b16 %v5035, %v5027
        %v8132 = vpack.c.b16 %v5036, %v5028
        %v8133 = vpack.c.b16 %v5037, %v5029
        %v8134 = vpack.c.b16 %v5038, %v5030
        %v8135 = vpack.c.b16 %v5039, %v5031
        %v8136 = vpack.c.b16 %v5040, %v5032
        %v8137 = vpack.c.b16 %v5049, %v5041
        %v8138 = vpack.c.b16 %v5050, %v5042
        %v8139 = vpack.c.b16 %v5051, %v5043
        %v8140 = vpack.c.b16 %v5052, %v5044
        %v8141 = vpack.c.b16 %v5053, %v5045
        %v8142 = vpack.c.b16 %v5054, %v5046
        %v8143 = vpack.c.b16 %v5055, %v5047
        %v8144 = vpack.c.b16 %v5056, %v5048
        %v8145 = vpack.c.b16 %v5065, %v5057
        %v8146 = vpack.c.b16 %v5066, %v5058
        %v8147 = vpack.c.b16 %v5067, %v5059
        %v8148 = vpack.c.b16 %v5068, %v5060
        %v8149 = vpack.c.b16 %v5069, %v5061
        %v8150 = vpack.c.b16 %v5070, %v5062
        %v8151 = vpack.c.b16 %v5071, %v5063
        %v8152 = vpack.c.b16 %v5072, %v5064
        %v8153 = vpack.c.b16 %v5081, %v5073
        %v8154 = vpack.c.b16 %v5082, %v5074
        %v8155 = vpack.c.b16 %v5083, %v5075
        %v8156 = vpack.c.b16 %v5084, %v5076
        %v8157 = vpack.c.b16 %v5085, %v5077
        %v8158 = vpack.c.b16 %v5086, %v5078
        %v8159 = vpack.c.b16 %v5087, %v5079
        %v8160 = vpack.c.b16 %v5088, %v5080
        %v8161 = vpack.c.b16 %v5097, %v5089
        %v8162 = vpack.c.b16 %v5098, %v5090
        %v8163 = vpack.c.b16 %v5099, %v5091
        %v8164 = vpack.c.b16 %v5100, %v5092
        %v8165 = vpack.c.b16 %v5101, %v5093
        %v8166 = vpack.c.b16 %v5102, %v5094
        %v8167 = vpack.c.b16 %v5103, %v5095
        %v8168 = vpack.c.b16 %v5104, %v5096
        %v8169 = vpack.c.b16 %v5113, %v5105
        %v8170 = vpack.c.b16 %v5114, %v5106
        %v8171 = vpack.c.b16 %v5115, %v5107
        %v8172 = vpack.c.b16 %v5116, %v5108
        %v8173 = vpack.c.b16 %v5117, %v5109
        %v8174 = vpack.c.b16 %v5118, %v5110
        %v8175 = vpack.c.b16 %v5119, %v5111
        %v8176 = vpack.c.b16 %v5120, %v5112
        %v8177 = vpack.c.b16 %v5129, %v5121
        %v8178 = vpack.c.b16 %v5130, %v5122
        %v8179 = vpack.c.b16 %v5131, %v5123
        %v8180 = vpack.c.b16 %v5132, %v5124
        %v8181 = vpack.c.b16 %v5133, %v5125
        %v8182 = vpack.c.b16 %v5134, %v5126
        %v8183 = vpack.c.b16 %v5135, %v5127
        %v8184 = vpack.c.b16 %v5136, %v5128
        %v8185 = vpack.c.b16 %v5145, %v5137
        %v8186 = vpack.c.b16 %v5146, %v5138
        %v8187 = vpack.c.b16 %v5147, %v5139
        %v8188 = vpack.c.b16 %v5148, %v5140
        %v8189 = vpack.c.b16 %v5149, %v5141
        %v8190 = vpack.c.b16 %v5150, %v5142
        %v8191 = vpack.c.b16 %v5151, %v5143
        %v8192 = vpack.c.b16 %v5152, %v5144
        %v8193 = vpack.c.b16 %v5161, %v5153
        %v8194 = vpack.c.b16 %v5162, %v5154
        %v8195 = vpack.c.b16 %v5163, %v5155
        %v8196 = vpack.c.b16 %v5164, %v5156
        %v8197 = vpack.c.b16 %v5165, %v5157
        %v8198 = vpack.c.b16 %v5166, %v5158
        %v8199 = vpack.c.b16 %v5167, %v5159
        %v8200 = vpack.c.b16 %v5168, %v5160
        %v8201 = vpack.c.b16 %v5177, %v5169
        %v8202 = vpack.c.b16 %v5178, %v5170
        %v8203 = vpack.c.b16 %v5179, %v5171
        %v8204 = vpack.c.b16 %v5180, %v5172
        %v8205 = vpack.c.b16 %v5181, %v5173
        %v8206 = vpack.c.b16 %v5182, %v5174
        %v8207 = vpack.c.b16 %v5183, %v5175
        %v8208 = vpack.c.b16 %v5184, %v5176
        %v8209 = vpack.c.b16 %v5193, %v5185
        %v8210 = vpack.c.b16 %v5194, %v5186
        %v8211 = vpack.c.b16 %v5195, %v5187
        %v8212 = vpack.c.b16 %v5196, %v5188
        %v8213 = vpack.c.b16 %v5197, %v5189
        %v8214 = vpack.c.b16 %v5198, %v5190
        %v8215 = vpack.c.b16 %v5199, %v5191
        %v8216 = vpack.c.b16 %v5200, %v5192
        %v8217 = vpack.c.b16 %v5209, %v5201
        %v8218 = vpack.c.b16 %v5210, %v5202
        %v8219 = vpack.c.b16 %v5211, %v5203
        %v8220 = vpack.c.b16 %v5212, %v5204
        %v8221 = vpack.c.b16 %v5213, %v5205
        %v8222 = vpack.c.b16 %v5214, %v5206
        %v8223 = vpack.c.b16 %v5215, %v5207
        %v8224 = vpack.c.b16 %v5216, %v5208
        %v8225 = vpack.c.b16 %v5225, %v5217
        %v8226 = vpack.c.b16 %v5226, %v5218
        %v8227 = vpack.c.b16 %v5227, %v5219
        %v8228 = vpack.c.b16 %v5228, %v5220
        %v8229 = vpack.c.b16 %v5229, %v5221
        %v8230 = vpack.c.b16 %v5230, %v5222
        %v8231 = vpack.c.b16 %v5231, %v5223
        %v8232 = vpack.c.b16 %v5232, %v5224
        %v8233 = vpack.c.b16 %v5241, %v5233
        %v8234 = vpack.c.b16 %v5242, %v5234
        %v8235 = vpack.c.b16 %v5243, %v5235
        %v8236 = vpack.c.b16 %v5244, %v5236
        %v8237 = vpack.c.b16 %v5245, %v5237
        %v8238 = vpack.c.b16 %v5246, %v5238
        %v8239 = vpack.c.b16 %v5247, %v5239
        %v8240 = vpack.c.b16 %v5248, %v5240
        %v8241 = vpack.c.b16 %v5257, %v5249
        %v8242 = vpack.c.b16 %v5258, %v5250
        %v8243 = vpack.c.b16 %v5259, %v5251
        %v8244 = vpack.c.b16 %v5260, %v5252
        %v8245 = vpack.c.b16 %v5261, %v5253
        %v8246 = vpack.c.b16 %v5262, %v5254
        %v8247 = vpack.c.b16 %v5263, %v5255
        %v8248 = vpack.c.b16 %v5264, %v5256
        %v8249 = vpack.c.b16 %v5273, %v5265
        %v8250 = vpack.c.b16 %v5274, %v5266
        %v8251 = vpack.c.b16 %v5275, %v5267
        %v8252 = vpack.c.b16 %v5276, %v5268
        %v8253 = vpack.c.b16 %v5277, %v5269
        %v8254 = vpack.c.b16 %v5278, %v5270
        %v8255 = vpack.c.b16 %v5279, %v5271
        %v8256 = vpack.c.b16 %v5280, %v5272
        %v8257 = vpack.c.b16 %v5289, %v5281
        %v8258 = vpack.c.b16 %v5290, %v5282
        %v8259 = vpack.c.b16 %v5291, %v5283
        %v8260 = vpack.c.b16 %v5292, %v5284
        %v8261 = vpack.c.b16 %v5293, %v5285
        %v8262 = vpack.c.b16 %v5294, %v5286
        %v8263 = vpack.c.b16 %v5295, %v5287
        %v8264 = vpack.c.b16 %v5296, %v5288
        %v8265 = vpack.c.b16 %v5305, %v5297
        %v8266 = vpack.c.b16 %v5306, %v5298
        %v8267 = vpack.c.b16 %v5307, %v5299
        %v8268 = vpack.c.b16 %v5308, %v5300
        %v8269 = vpack.c.b16 %v5309, %v5301
        %v8270 = vpack.c.b16 %v5310, %v5302
        %v8271 = vpack.c.b16 %v5311, %v5303
        %v8272 = vpack.c.b16 %v5312, %v5304
        %v8273 = vpack.c.b16 %v5321, %v5313
        %v8274 = vpack.c.b16 %v5322, %v5314
        %v8275 = vpack.c.b16 %v5323, %v5315
        %v8276 = vpack.c.b16 %v5324, %v5316
        %v8277 = vpack.c.b16 %v5325, %v5317
        %v8278 = vpack.c.b16 %v5326, %v5318
        %v8279 = vpack.c.b16 %v5327, %v5319
        %v8280 = vpack.c.b16 %v5328, %v5320
        %v8281 = vpack.c.b16 %v5337, %v5329
        %v8282 = vpack.c.b16 %v5338, %v5330
        %v8283 = vpack.c.b16 %v5339, %v5331
        %v8284 = vpack.c.b16 %v5340, %v5332
        %v8285 = vpack.c.b16 %v5341, %v5333
        %v8286 = vpack.c.b16 %v5342, %v5334
        %v8287 = vpack.c.b16 %v5343, %v5335
        %v8288 = vpack.c.b16 %v5344, %v5336
        %v8289 = vpack.c.b16 %v5353, %v5345
        %v8290 = vpack.c.b16 %v5354, %v5346
        %v8291 = vpack.c.b16 %v5355, %v5347
        %v8292 = vpack.c.b16 %v5356, %v5348
        %v8293 = vpack.c.b16 %v5357, %v5349
        %v8294 = vpack.c.b16 %v5358, %v5350
        %v8295 = vpack.c.b16 %v5359, %v5351
        %v8296 = vpack.c.b16 %v5360, %v5352
        %v8297 = vpack.c.b16 %v5369, %v5361
        %v8298 = vpack.c.b16 %v5370, %v5362
        %v8299 = vpack.c.b16 %v5371, %v5363
        %v8300 = vpack.c.b16 %v5372, %v5364
        %v8301 = vpack.c.b16 %v5373, %v5365
        %v8302 = vpack.c.b16 %v5374, %v5366
        %v8303 = vpack.c.b16 %v5375, %v5367
        %v8304 = vpack.c.b16 %v5376, %v5368
        %v8305 = vpack.c.b16 %v5385, %v5377
        %v8306 = vpack.c.b16 %v5386, %v5378
        %v8307 = vpack.c.b16 %v5387, %v5379
        %v8308 = vpack.c.b16 %v5388, %v5380
        %v8309 = vpack.c.b16 %v5389, %v5381
        %v8310 = vpack.c.b16 %v5390, %v5382
        %v8311 = vpack.c.b16 %v5391, %v5383
        %v8312 = vpack.c.b16 %v5392, %v5384
        %v8313 = vpack.c.b16 %v5401, %v5393
        %v8314 = vpack.c.b16 %v5402, %v5394
        %v8315 = vpack.c.b16 %v5403, %v5395
        %v8316 = vpack.c.b16 %v5404, %v5396
        %v8317 = vpack.c.b16 %v5405, %v5397
        %v8318 = vpack.c.b16 %v5406, %v5398
        %v8319 = vpack.c.b16 %v5407, %v5399
        %v8320 = vpack.c.b16 %v5408, %v5400
        %v8321 = vpack.c.b16 %v5417, %v5409
        %v8322 = vpack.c.b16 %v5418, %v5410
        %v8323 = vpack.c.b16 %v5419, %v5411
        %v8324 = vpack.c.b16 %v5420, %v5412
        %v8325 = vpack.c.b16 %v5421, %v5413
        %v8326 = vpack.c.b16 %v5422, %v5414
        %v8327 = vpack.c.b16 %v5423, %v5415
        %v8328 = vpack.c.b16 %v5424, %v5416
        %v8329 = vpack.c.b16 %v5433, %v5425
        %v8330 = vpack.c.b16 %v5434, %v5426
        %v8331 = vpack.c.b16 %v5435, %v5427
        %v8332 = vpack.c.b16 %v5436, %v5428
        %v8333 = vpack.c.b16 %v5437, %v5429
        %v8334 = vpack.c.b16 %v5438, %v5430
        %v8335 = vpack.c.b16 %v5439, %v5431
        %v8336 = vpack.c.b16 %v5440, %v5432
        %v8337 = vpack.c.b16 %v5449, %v5441
        %v8338 = vpack.c.b16 %v5450, %v5442
        %v8339 = vpack.c.b16 %v5451, %v5443
        %v8340 = vpack.c.b16 %v5452, %v5444
        %v8341 = vpack.c.b16 %v5453, %v5445
        %v8342 = vpack.c.b16 %v5454, %v5446
        %v8343 = vpack.c.b16 %v5455, %v5447
        %v8344 = vpack.c.b16 %v5456, %v5448
        %v8345 = vpack.c.b16 %v5465, %v5457
        %v8346 = vpack.c.b16 %v5466, %v5458
        %v8347 = vpack.c.b16 %v5467, %v5459
        %v8348 = vpack.c.b16 %v5468, %v5460
        %v8349 = vpack.c.b16 %v5469, %v5461
        %v8350 = vpack.c.b16 %v5470, %v5462
        %v8351 = vpack.c.b16 %v5471, %v5463
        %v8352 = vpack.c.b16 %v5472, %v5464
        %v8353 = vpack.c.b16 %v5481, %v5473
        %v8354 = vpack.c.b16 %v5482, %v5474
        %v8355 = vpack.c.b16 %v5483, %v5475
        %v8356 = vpack.c.b16 %v5484, %v5476
        %v8357 = vpack.c.b16 %v5485, %v5477
        %v8358 = vpack.c.b16 %v5486, %v5478
        %v8359 = vpack.c.b16 %v5487, %v5479
        %v8360 = vpack.c.b16 %v5488, %v5480
        %v8361 = vpack.c.b16 %v5497, %v5489
        %v8362 = vpack.c.b16 %v5498, %v5490
        %v8363 = vpack.c.b16 %v5499, %v5491
        %v8364 = vpack.c.b16 %v5500, %v5492
        %v8365 = vpack.c.b16 %v5501, %v5493
        %v8366 = vpack.c.b16 %v5502, %v5494
        %v8367 = vpack.c.b16 %v5503, %v5495
        %v8368 = vpack.c.b16 %v5504, %v5496
        %v8369 = vpack.c.b16 %v5513, %v5505
        %v8370 = vpack.c.b16 %v5514, %v5506
        %v8371 = vpack.c.b16 %v5515, %v5507
        %v8372 = vpack.c.b16 %v5516, %v5508
        %v8373 = vpack.c.b16 %v5517, %v5509
        %v8374 = vpack.c.b16 %v5518, %v5510
        %v8375 = vpack.c.b16 %v5519, %v5511
        %v8376 = vpack.c.b16 %v5520, %v5512
        %v8377 = vpack.c.b16 %v5529, %v5521
        %v8378 = vpack.c.b16 %v5530, %v5522
        %v8379 = vpack.c.b16 %v5531, %v5523
        %v8380 = vpack.c.b16 %v5532, %v5524
        %v8381 = vpack.c.b16 %v5533, %v5525
        %v8382 = vpack.c.b16 %v5534, %v5526
        %v8383 = vpack.c.b16 %v5535, %v5527
        %v8384 = vpack.c.b16 %v5536, %v5528
        %v8385 = vpack.c.b16 %v5545, %v5537
        %v8386 = vpack.c.b16 %v5546, %v5538
        %v8387 = vpack.c.b16 %v5547, %v5539
        %v8388 = vpack.c.b16 %v5548, %v5540
        %v8389 = vpack.c.b16 %v5549, %v5541
        %v8390 = vpack.c.b16 %v5550, %v5542
        %v8391 = vpack.c.b16 %v5551, %v5543
        %v8392 = vpack.c.b16 %v5552, %v5544
        %v8393 = vpack.c.b16 %v5561, %v5553
        %v8394 = vpack.c.b16 %v5562, %v5554
        %v8395 = vpack.c.b16 %v5563, %v5555
        %v8396 = vpack.c.b16 %v5564, %v5556
        %v8397 = vpack.c.b16 %v5565, %v5557
        %v8398 = vpack.c.b16 %v5566, %v5558
        %v8399 = vpack.c.b16 %v5567, %v5559
        %v8400 = vpack.c.b16 %v5568, %v5560
        %v8401 = vpack.c.b16 %v5577, %v5569
        %v8402 = vpack.c.b16 %v5578, %v5570
        %v8403 = vpack.c.b16 %v5579, %v5571
        %v8404 = vpack.c.b16 %v5580, %v5572
        %v8405 = vpack.c.b16 %v5581, %v5573
        %v8406 = vpack.c.b16 %v5582, %v5574
        %v8407 = vpack.c.b16 %v5583, %v5575
        %v8408 = vpack.c.b16 %v5584, %v5576
        %v8409 = vpack.c.b16 %v5593, %v5585
        %v8410 = vpack.c.b16 %v5594, %v5586
        %v8411 = vpack.c.b16 %v5595, %v5587
        %v8412 = vpack.c.b16 %v5596, %v5588
        %v8413 = vpack.c.b16 %v5597, %v5589
        %v8414 = vpack.c.b16 %v5598, %v5590
        %v8415 = vpack.c.b16 %v5599, %v5591
        %v8416 = vpack.c.b16 %v5600, %v5592
        %v8417 = vpack.c.b16 %v5609, %v5601
        %v8418 = vpack.c.b16 %v5610, %v5602
        %v8419 = vpack.c.b16 %v5611, %v5603
        %v8420 = vpack.c.b16 %v5612, %v5604
        %v8421 = vpack.c.b16 %v5613, %v5605
        %v8422 = vpack.c.b16 %v5614, %v5606
        %v8423 = vpack.c.b16 %v5615, %v5607
        %v8424 = vpack.c.b16 %v5616, %v5608
        %v8425 = vpack.c.b16 %v5625, %v5617
        %v8426 = vpack.c.b16 %v5626, %v5618
        %v8427 = vpack.c.b16 %v5627, %v5619
        %v8428 = vpack.c.b16 %v5628, %v5620
        %v8429 = vpack.c.b16 %v5629, %v5621
        %v8430 = vpack.c.b16 %v5630, %v5622
        %v8431 = vpack.c.b16 %v5631, %v5623
        %v8432 = vpack.c.b16 %v5632, %v5624
        %v8433 = vpack.c.b16 %v5641, %v5633
        %v8434 = vpack.c.b16 %v5642, %v5634
        %v8435 = vpack.c.b16 %v5643, %v5635
        %v8436 = vpack.c.b16 %v5644, %v5636
        %v8437 = vpack.c.b16 %v5645, %v5637
        %v8438 = vpack.c.b16 %v5646, %v5638
        %v8439 = vpack.c.b16 %v5647, %v5639
        %v8440 = vpack.c.b16 %v5648, %v5640
        %v8441 = vpack.c.b16 %v5657, %v5649
        %v8442 = vpack.c.b16 %v5658, %v5650
        %v8443 = vpack.c.b16 %v5659, %v5651
        %v8444 = vpack.c.b16 %v5660, %v5652
        %v8445 = vpack.c.b16 %v5661, %v5653
        %v8446 = vpack.c.b16 %v5662, %v5654
        %v8447 = vpack.c.b16 %v5663, %v5655
        %v8448 = vpack.c.b16 %v5664, %v5656
        %v8449 = vpack.c.b16 %v5673, %v5665
        %v8450 = vpack.c.b16 %v5674, %v5666
        %v8451 = vpack.c.b16 %v5675, %v5667
        %v8452 = vpack.c.b16 %v5676, %v5668
        %v8453 = vpack.c.b16 %v5677, %v5669
        %v8454 = vpack.c.b16 %v5678, %v5670
        %v8455 = vpack.c.b16 %v5679, %v5671
        %v8456 = vpack.c.b16 %v5680, %v5672
        %v8457 = vpack.c.b16 %v5689, %v5681
        %v8458 = vpack.c.b16 %v5690, %v5682
        %v8459 = vpack.c.b16 %v5691, %v5683
        %v8460 = vpack.c.b16 %v5692, %v5684
        %v8461 = vpack.c.b16 %v5693, %v5685
        %v8462 = vpack.c.b16 %v5694, %v5686
        %v8463 = vpack.c.b16 %v5695, %v5687
        %v8464 = vpack.c.b16 %v5696, %v5688
        %v8465 = vpack.c.b16 %v5705, %v5697
        %v8466 = vpack.c.b16 %v5706, %v5698
        %v8467 = vpack.c.b16 %v5707, %v5699
        %v8468 = vpack.c.b16 %v5708, %v5700
        %v8469 = vpack.c.b16 %v5709, %v5701
        %v8470 = vpack.c.b16 %v5710, %v5702
        %v8471 = vpack.c.b16 %v5711, %v5703
        %v8472 = vpack.c.b16 %v5712, %v5704
        %v8473 = vpack.c.b16 %v5721, %v5713
        %v8474 = vpack.c.b16 %v5722, %v5714
        %v8475 = vpack.c.b16 %v5723, %v5715
        %v8476 = vpack.c.b16 %v5724, %v5716
        %v8477 = vpack.c.b16 %v5725, %v5717
        %v8478 = vpack.c.b16 %v5726, %v5718
        %v8479 = vpack.c.b16 %v5727, %v5719
        %v8480 = vpack.c.b16 %v5728, %v5720
        %v8481 = vpack.c.b16 %v5737, %v5729
        %v8482 = vpack.c.b16 %v5738, %v5730
        %v8483 = vpack.c.b16 %v5739, %v5731
        %v8484 = vpack.c.b16 %v5740, %v5732
        %v8485 = vpack.c.b16 %v5741, %v5733
        %v8486 = vpack.c.b16 %v5742, %v5734
        %v8487 = vpack.c.b16 %v5743, %v5735
        %v8488 = vpack.c.b16 %v5744, %v5736
        %v8489 = vpack.c.b16 %v5753, %v5745
        %v8490 = vpack.c.b16 %v5754, %v5746
        %v8491 = vpack.c.b16 %v5755, %v5747
        %v8492 = vpack.c.b16 %v5756, %v5748
        %v8493 = vpack.c.b16 %v5757, %v5749
        %v8494 = vpack.c.b16 %v5758, %v5750
        %v8495 = vpack.c.b16 %v5759, %v5751
        %v8496 = vpack.c.b16 %v5760, %v5752
        %v8497 = vpack.c.b16 %v5769, %v5761
        %v8498 = vpack.c.b16 %v5770, %v5762
        %v8499 = vpack.c.b16 %v5771, %v5763
        %v8500 = vpack.c.b16 %v5772, %v5764
        %v8501 = vpack.c.b16 %v5773, %v5765
        %v8502 = vpack.c.b16 %v5774, %v5766
        %v8503 = vpack.c.b16 %v5775, %v5767
        %v8504 = vpack.c.b16 %v5776, %v5768
        %v8505 = vpack.c.b16 %v5785, %v5777
        %v8506 = vpack.c.b16 %v5786, %v5778
        %v8507 = vpack.c.b16 %v5787, %v5779
        %v8508 = vpack.c.b16 %v5788, %v5780
        %v8509 = vpack.c.b16 %v5789, %v5781
        %v8510 = vpack.c.b16 %v5790, %v5782
        %v8511 = vpack.c.b16 %v5791, %v5783
        %v8512 = vpack.c.b16 %v5792, %v5784
        %v8513 = vpack.c.b16 %v5801, %v5793
        %v8514 = vpack.c.b16 %v5802, %v5794
        %v8515 = vpack.c.b16 %v5803, %v5795
        %v8516 = vpack.c.b16 %v5804, %v5796
        %v8517 = vpack.c.b16 %v5805, %v5797
        %v8518 = vpack.c.b16 %v5806, %v5798
        %v8519 = vpack.c.b16 %v5807, %v5799
        %v8520 = vpack.c.b16 %v5808, %v5800
        %v8521 = vpack.c.b16 %v5817, %v5809
        %v8522 = vpack.c.b16 %v5818, %v5810
        %v8523 = vpack.c.b16 %v5819, %v5811
        %v8524 = vpack.c.b16 %v5820, %v5812
        %v8525 = vpack.c.b16 %v5821, %v5813
        %v8526 = vpack.c.b16 %v5822, %v5814
        %v8527 = vpack.c.b16 %v5823, %v5815
        %v8528 = vpack.c.b16 %v5824, %v5816
        %v8529 = vpack.c.b16 %v5833, %v5825
        %v8530 = vpack.c.b16 %v5834, %v5826
        %v8531 = vpack.c.b16 %v5835, %v5827
        %v8532 = vpack.c.b16 %v5836, %v5828
        %v8533 = vpack.c.b16 %v5837, %v5829
        %v8534 = vpack.c.b16 %v5838, %v5830
        %v8535 = vpack.c.b16 %v5839, %v5831
        %v8536 = vpack.c.b16 %v5840, %v5832
        %v8537 = vpack.c.b16 %v5849, %v5841
        %v8538 = vpack.c.b16 %v5850, %v5842
        %v8539 = vpack.c.b16 %v5851, %v5843
        %v8540 = vpack.c.b16 %v5852, %v5844
        %v8541 = vpack.c.b16 %v5853, %v5845
        %v8542 = vpack.c.b16 %v5854, %v5846
        %v8543 = vpack.c.b16 %v5855, %v5847
        %v8544 = vpack.c.b16 %v5856, %v5848
        %v8545 = vpack.c.b16 %v5865, %v5857
        %v8546 = vpack.c.b16 %v5866, %v5858
        %v8547 = vpack.c.b16 %v5867, %v5859
        %v8548 = vpack.c.b16 %v5868, %v5860
        %v8549 = vpack.c.b16 %v5869, %v5861
        %v8550 = vpack.c.b16 %v5870, %v5862
        %v8551 = vpack.c.b16 %v5871, %v5863
        %v8552 = vpack.c.b16 %v5872, %v5864
        %v8553 = vpack.c.b16 %v5881, %v5873
        %v8554 = vpack.c.b16 %v5882, %v5874
        %v8555 = vpack.c.b16 %v5883, %v5875
        %v8556 = vpack.c.b16 %v5884, %v5876
        %v8557 = vpack.c.b16 %v5885, %v5877
        %v8558 = vpack.c.b16 %v5886, %v5878
        %v8559 = vpack.c.b16 %v5887, %v5879
        %v8560 = vpack.c.b16 %v5888, %v5880
        %v8561 = vpack.c.b16 %v5897, %v5889
        %v8562 = vpack.c.b16 %v5898, %v5890
        %v8563 = vpack.c.b16 %v5899, %v5891
        %v8564 = vpack.c.b16 %v5900, %v5892
        %v8565 = vpack.c.b16 %v5901, %v5893
        %v8566 = vpack.c.b16 %v5902, %v5894
        %v8567 = vpack.c.b16 %v5903, %v5895
        %v8568 = vpack.c.b16 %v5904, %v5896
        %v8569 = vpack.c.b16 %v5913, %v5905
        %v8570 = vpack.c.b16 %v5914, %v5906
        %v8571 = vpack.c.b16 %v5915, %v5907
        %v8572 = vpack.c.b16 %v5916, %v5908
        %v8573 = vpack.c.b16 %v5917, %v5909
        %v8574 = vpack.c.b16 %v5918, %v5910
        %v8575 = vpack.c.b16 %v5919, %v5911
        %v8576 = vpack.c.b16 %v5920, %v5912
        %v8577 = vpack.c.b16 %v5929, %v5921
        %v8578 = vpack.c.b16 %v5930, %v5922
        %v8579 = vpack.c.b16 %v5931, %v5923
        %v8580 = vpack.c.b16 %v5932, %v5924
        %v8581 = vpack.c.b16 %v5933, %v5925
        %v8582 = vpack.c.b16 %v5934, %v5926
        %v8583 = vpack.c.b16 %v5935, %v5927
        %v8584 = vpack.c.b16 %v5936, %v5928
        %v8585 = vpack.c.b16 %v5945, %v5937
        %v8586 = vpack.c.b16 %v5946, %v5938
        %v8587 = vpack.c.b16 %v5947, %v5939
        %v8588 = vpack.c.b16 %v5948, %v5940
        %v8589 = vpack.c.b16 %v5949, %v5941
        %v8590 = vpack.c.b16 %v5950, %v5942
        %v8591 = vpack.c.b16 %v5951, %v5943
        %v8592 = vpack.c.b16 %v5952, %v5944
        %v8593 = vpack.c.b16 %v5961, %v5953
        %v8594 = vpack.c.b16 %v5962, %v5954
        %v8595 = vpack.c.b16 %v5963, %v5955
        %v8596 = vpack.c.b16 %v5964, %v5956
        %v8597 = vpack.c.b16 %v5965, %v5957
        %v8598 = vpack.c.b16 %v5966, %v5958
        %v8599 = vpack.c.b16 %v5967, %v5959
        %v8600 = vpack.c.b16 %v5968, %v5960
        %v8601 = vpack.c.b16 %v5977, %v5969
        %v8602 = vpack.c.b16 %v5978, %v5970
        %v8603 = vpack.c.b16 %v5979, %v5971
        %v8604 = vpack.c.b16 %v5980, %v5972
        %v8605 = vpack.c.b16 %v5981, %v5973
        %v8606 = vpack.c.b16 %v5982, %v5974
        %v8607 = vpack.c.b16 %v5983, %v5975
        %v8608 = vpack.c.b16 %v5984, %v5976
        %v8609 = vpack.c.b16 %v5993, %v5985
        %v8610 = vpack.c.b16 %v5994, %v5986
        %v8611 = vpack.c.b16 %v5995, %v5987
        %v8612 = vpack.c.b16 %v5996, %v5988
        %v8613 = vpack.c.b16 %v5997, %v5989
        %v8614 = vpack.c.b16 %v5998, %v5990
        %v8615 = vpack.c.b16 %v5999, %v5991
        %v8616 = vpack.c.b16 %v6000, %v5992
        %v8617 = vpack.c.b16 %v6009, %v6001
        %v8618 = vpack.c.b16 %v6010, %v6002
        %v8619 = vpack.c.b16 %v6011, %v6003
        %v8620 = vpack.c.b16 %v6012, %v6004
        %v8621 = vpack.c.b16 %v6013, %v6005
        %v8622 = vpack.c.b16 %v6014, %v6006
        %v8623 = vpack.c.b16 %v6015, %v6007
        %v8624 = vpack.c.b16 %v6016, %v6008
        %v8625 = vpack.c.b16 %v6025, %v6017
        %v8626 = vpack.c.b16 %v6026, %v6018
        %v8627 = vpack.c.b16 %v6027, %v6019
        %v8628 = vpack.c.b16 %v6028, %v6020
        %v8629 = vpack.c.b16 %v6029, %v6021
        %v8630 = vpack.c.b16 %v6030, %v6022
        %v8631 = vpack.c.b16 %v6031, %v6023
        %v8632 = vpack.c.b16 %v6032, %v6024
        %v8633 = vpack.c.b16 %v6041, %v6033
        %v8634 = vpack.c.b16 %v6042, %v6034
        %v8635 = vpack.c.b16 %v6043, %v6035
        %v8636 = vpack.c.b16 %v6044, %v6036
        %v8637 = vpack.c.b16 %v6045, %v6037
        %v8638 = vpack.c.b16 %v6046, %v6038
        %v8639 = vpack.c.b16 %v6047, %v6039
        %v8640 = vpack.c.b16 %v6048, %v6040
        %v8641 = vpack.c.b16 %v6057, %v6049
        %v8642 = vpack.c.b16 %v6058, %v6050
        %v8643 = vpack.c.b16 %v6059, %v6051
        %v8644 = vpack.c.b16 %v6060, %v6052
        %v8645 = vpack.c.b16 %v6061, %v6053
        %v8646 = vpack.c.b16 %v6062, %v6054
        %v8647 = vpack.c.b16 %v6063, %v6055
        %v8648 = vpack.c.b16 %v6064, %v6056
        %v8649 = vpack.c.b16 %v6073, %v6065
        %v8650 = vpack.c.b16 %v6074, %v6066
        %v8651 = vpack.c.b16 %v6075, %v6067
        %v8652 = vpack.c.b16 %v6076, %v6068
        %v8653 = vpack.c.b16 %v6077, %v6069
        %v8654 = vpack.c.b16 %v6078, %v6070
        %v8655 = vpack.c.b16 %v6079, %v6071
        %v8656 = vpack.c.b16 %v6080, %v6072
        %v8657 = vpack.c.b16 %v6089, %v6081
        %v8658 = vpack.c.b16 %v6090, %v6082
        %v8659 = vpack.c.b16 %v6091, %v6083
        %v8660 = vpack.c.b16 %v6092, %v6084
        %v8661 = vpack.c.b16 %v6093, %v6085
        %v8662 = vpack.c.b16 %v6094, %v6086
        %v8663 = vpack.c.b16 %v6095, %v6087
        %v8664 = vpack.c.b16 %v6096, %v6088
        %v8665 = vpack.c.b16 %v6105, %v6097
        %v8666 = vpack.c.b16 %v6106, %v6098
        %v8667 = vpack.c.b16 %v6107, %v6099
        %v8668 = vpack.c.b16 %v6108, %v6100
        %v8669 = vpack.c.b16 %v6109, %v6101
        %v8670 = vpack.c.b16 %v6110, %v6102
        %v8671 = vpack.c.b16 %v6111, %v6103
        %v8672 = vpack.c.b16 %v6112, %v6104
        %v8673 = vpack.c.b16 %v6121, %v6113
        %v8674 = vpack.c.b16 %v6122, %v6114
        %v8675 = vpack.c.b16 %v6123, %v6115
        %v8676 = vpack.c.b16 %v6124, %v6116
        %v8677 = vpack.c.b16 %v6125, %v6117
        %v8678 = vpack.c.b16 %v6126, %v6118
        %v8679 = vpack.c.b16 %v6127, %v6119
        %v8680 = vpack.c.b16 %v6128, %v6120
        %v8681 = vpack.c.b16 %v6137, %v6129
        %v8682 = vpack.c.b16 %v6138, %v6130
        %v8683 = vpack.c.b16 %v6139, %v6131
        %v8684 = vpack.c.b16 %v6140, %v6132
        %v8685 = vpack.c.b16 %v6141, %v6133
        %v8686 = vpack.c.b16 %v6142, %v6134
        %v8687 = vpack.c.b16 %v6143, %v6135
        %v8688 = vpack.c.b16 %v6144, %v6136
        %v8689 = vpack.c.b16 %v6153, %v6145
        %v8690 = vpack.c.b16 %v6154, %v6146
        %v8691 = vpack.c.b16 %v6155, %v6147
        %v8692 = vpack.c.b16 %v6156, %v6148
        %v8693 = vpack.c.b16 %v6157, %v6149
        %v8694 = vpack.c.b16 %v6158, %v6150
        %v8695 = vpack.c.b16 %v6159, %v6151
        %v8696 = vpack.c.b16 %v6160, %v6152
        %v8697 = vpack.c.b16 %v6169, %v6161
        %v8698 = vpack.c.b16 %v6170, %v6162
        %v8699 = vpack.c.b16 %v6171, %v6163
        %v8700 = vpack.c.b16 %v6172, %v6164
        %v8701 = vpack.c.b16 %v6173, %v6165
        %v8702 = vpack.c.b16 %v6174, %v6166
        %v8703 = vpack.c.b16 %v6175, %v6167
        %v8704 = vpack.c.b16 %v6176, %v6168
        %v8705 = vpack.c.b16 %v6185, %v6177
        %v8706 = vpack.c.b16 %v6186, %v6178
        %v8707 = vpack.c.b16 %v6187, %v6179
        %v8708 = vpack.c.b16 %v6188, %v6180
        %v8709 = vpack.c.b16 %v6189, %v6181
        %v8710 = vpack.c.b16 %v6190, %v6182
        %v8711 = vpack.c.b16 %v6191, %v6183
        %v8712 = vpack.c.b16 %v6192, %v6184
        %v8713 = vpack.c.b16 %v6201, %v6193
        %v8714 = vpack.c.b16 %v6202, %v6194
        %v8715 = vpack.c.b16 %v6203, %v6195
        %v8716 = vpack.c.b16 %v6204, %v6196
        %v8717 = vpack.c.b16 %v6205, %v6197
        %v8718 = vpack.c.b16 %v6206, %v6198
        %v8719 = vpack.c.b16 %v6207, %v6199
        %v8720 = vpack.c.b16 %v6208, %v6200
        %v8721 = vpack.c.b16 %v6217, %v6209
        %v8722 = vpack.c.b16 %v6218, %v6210
        %v8723 = vpack.c.b16 %v6219, %v6211
        %v8724 = vpack.c.b16 %v6220, %v6212
        %v8725 = vpack.c.b16 %v6221, %v6213
        %v8726 = vpack.c.b16 %v6222, %v6214
        %v8727 = vpack.c.b16 %v6223, %v6215
        %v8728 = vpack.c.b16 %v6224, %v6216
        %v8729 = vpack.c.b16 %v6233, %v6225
        %v8730 = vpack.c.b16 %v6234, %v6226
        %v8731 = vpack.c.b16 %v6235, %v6227
        %v8732 = vpack.c.b16 %v6236, %v6228
        %v8733 = vpack.c.b16 %v6237, %v6229
        %v8734 = vpack.c.b16 %v6238, %v6230
        %v8735 = vpack.c.b16 %v6239, %v6231
        %v8736 = vpack.c.b16 %v6240, %v6232
        %v8737 = vpack.c.b16 %v6249, %v6241
        %v8738 = vpack.c.b16 %v6250, %v6242
        %v8739 = vpack.c.b16 %v6251, %v6243
        %v8740 = vpack.c.b16 %v6252, %v6244
        %v8741 = vpack.c.b16 %v6253, %v6245
        %v8742 = vpack.c.b16 %v6254, %v6246
        %v8743 = vpack.c.b16 %v6255, %v6247
        %v8744 = vpack.c.b16 %v6256, %v6248
        %v8745 = vpack.c.b16 %v6265, %v6257
        %v8746 = vpack.c.b16 %v6266, %v6258
        %v8747 = vpack.c.b16 %v6267, %v6259
        %v8748 = vpack.c.b16 %v6268, %v6260
        %v8749 = vpack.c.b16 %v6269, %v6261
        %v8750 = vpack.c.b16 %v6270, %v6262
        %v8751 = vpack.c.b16 %v6271, %v6263
        %v8752 = vpack.c.b16 %v6272, %v6264
        %v8753 = vpack.c.b16 %v6281, %v6273
        %v8754 = vpack.c.b16 %v6282, %v6274
        %v8755 = vpack.c.b16 %v6283, %v6275
        %v8756 = vpack.c.b16 %v6284, %v6276
        %v8757 = vpack.c.b16 %v6285, %v6277
        %v8758 = vpack.c.b16 %v6286, %v6278
        %v8759 = vpack.c.b16 %v6287, %v6279
        %v8760 = vpack.c.b16 %v6288, %v6280
        %v8761 = vpack.c.b16 %v6297, %v6289
        %v8762 = vpack.c.b16 %v6298, %v6290
        %v8763 = vpack.c.b16 %v6299, %v6291
        %v8764 = vpack.c.b16 %v6300, %v6292
        %v8765 = vpack.c.b16 %v6301, %v6293
        %v8766 = vpack.c.b16 %v6302, %v6294
        %v8767 = vpack.c.b16 %v6303, %v6295
        %v8768 = vpack.c.b16 %v6304, %v6296
        %v8769 = vpack.c.b16 %v6313, %v6305
        %v8770 = vpack.c.b16 %v6314, %v6306
        %v8771 = vpack.c.b16 %v6315, %v6307
        %v8772 = vpack.c.b16 %v6316, %v6308
        %v8773 = vpack.c.b16 %v6317, %v6309
        %v8774 = vpack.c.b16 %v6318, %v6310
        %v8775 = vpack.c.b16 %v6319, %v6311
        %v8776 = vpack.c.b16 %v6320, %v6312
        %v8777 = vpack.c.b16 %v6329, %v6321
        %v8778 = vpack.c.b16 %v6330, %v6322
        %v8779 = vpack.c.b16 %v6331, %v6323
        %v8780 = vpack.c.b16 %v6332, %v6324
        %v8781 = vpack.c.b16 %v6333, %v6325
        %v8782 = vpack.c.b16 %v6334, %v6326
        %v8783 = vpack.c.b16 %v6335, %v6327
        %v8784 = vpack.c.b16 %v6336, %v6328
        %v8785 = vpack.c.b16 %v6345, %v6337
        %v8786 = vpack.c.b16 %v6346, %v6338
        %v8787 = vpack.c.b16 %v6347, %v6339
        %v8788 = vpack.c.b16 %v6348, %v6340
        %v8789 = vpack.c.b16 %v6349, %v6341
        %v8790 = vpack.c.b16 %v6350, %v6342
        %v8791 = vpack.c.b16 %v6351, %v6343
        %v8792 = vpack.c.b16 %v6352, %v6344
        %v8793 = vpack.c.b16 %v6361, %v6353
        %v8794 = vpack.c.b16 %v6362, %v6354
        %v8795 = vpack.c.b16 %v6363, %v6355
        %v8796 = vpack.c.b16 %v6364, %v6356
        %v8797 = vpack.c.b16 %v6365, %v6357
        %v8798 = vpack.c.b16 %v6366, %v6358
        %v8799 = vpack.c.b16 %v6367, %v6359
        %v8800 = vpack.c.b16 %v6368, %v6360
        %v8801 = vpack.c.b16 %v6377, %v6369
        %v8802 = vpack.c.b16 %v6378, %v6370
        %v8803 = vpack.c.b16 %v6379, %v6371
        %v8804 = vpack.c.b16 %v6380, %v6372
        %v8805 = vpack.c.b16 %v6381, %v6373
        %v8806 = vpack.c.b16 %v6382, %v6374
        %v8807 = vpack.c.b16 %v6383, %v6375
        %v8808 = vpack.c.b16 %v6384, %v6376
        %v8809 = vpack.c.b16 %v6393, %v6385
        %v8810 = vpack.c.b16 %v6394, %v6386
        %v8811 = vpack.c.b16 %v6395, %v6387
        %v8812 = vpack.c.b16 %v6396, %v6388
        %v8813 = vpack.c.b16 %v6397, %v6389
        %v8814 = vpack.c.b16 %v6398, %v6390
        %v8815 = vpack.c.b16 %v6399, %v6391
        %v8816 = vpack.c.b16 %v6400, %v6392
        %v8817 = vpack.c.b16 %v6409, %v6401
        %v8818 = vpack.c.b16 %v6410, %v6402
        %v8819 = vpack.c.b16 %v6411, %v6403
        %v8820 = vpack.c.b16 %v6412, %v6404
        %v8821 = vpack.c.b16 %v6413, %v6405
        %v8822 = vpack.c.b16 %v6414, %v6406
        %v8823 = vpack.c.b16 %v6415, %v6407
        %v8824 = vpack.c.b16 %v6416, %v6408
        %v8825 = vpack.c.b16 %v6425, %v6417
        %v8826 = vpack.c.b16 %v6426, %v6418
        %v8827 = vpack.c.b16 %v6427, %v6419
        %v8828 = vpack.c.b16 %v6428, %v6420
        %v8829 = vpack.c.b16 %v6429, %v6421
        %v8830 = vpack.c.b16 %v6430, %v6422
        %v8831 = vpack.c.b16 %v6431, %v6423
        %v8832 = vpack.c.b16 %v6432, %v6424
        %v8833 = vpack.c.b16 %v6441, %v6433
        %v8834 = vpack.c.b16 %v6442, %v6434
        %v8835 = vpack.c.b16 %v6443, %v6435
        %v8836 = vpack.c.b16 %v6444, %v6436
        %v8837 = vpack.c.b16 %v6445, %v6437
        %v8838 = vpack.c.b16 %v6446, %v6438
        %v8839 = vpack.c.b16 %v6447, %v6439
        %v8840 = vpack.c.b16 %v6448, %v6440
        %v8841 = vpack.c.b16 %v6457, %v6449
        %v8842 = vpack.c.b16 %v6458, %v6450
        %v8843 = vpack.c.b16 %v6459, %v6451
        %v8844 = vpack.c.b16 %v6460, %v6452
        %v8845 = vpack.c.b16 %v6461, %v6453
        %v8846 = vpack.c.b16 %v6462, %v6454
        %v8847 = vpack.c.b16 %v6463, %v6455
        %v8848 = vpack.c.b16 %v6464, %v6456
        %v8849 = vpack.c.b16 %v6473, %v6465
        %v8850 = vpack.c.b16 %v6474, %v6466
        %v8851 = vpack.c.b16 %v6475, %v6467
        %v8852 = vpack.c.b16 %v6476, %v6468
        %v8853 = vpack.c.b16 %v6477, %v6469
        %v8854 = vpack.c.b16 %v6478, %v6470
        %v8855 = vpack.c.b16 %v6479, %v6471
        %v8856 = vpack.c.b16 %v6480, %v6472
        %v8857 = vpack.c.b16 %v6489, %v6481
        %v8858 = vpack.c.b16 %v6490, %v6482
        %v8859 = vpack.c.b16 %v6491, %v6483
        %v8860 = vpack.c.b16 %v6492, %v6484
        %v8861 = vpack.c.b16 %v6493, %v6485
        %v8862 = vpack.c.b16 %v6494, %v6486
        %v8863 = vpack.c.b16 %v6495, %v6487
        %v8864 = vpack.c.b16 %v6496, %v6488
        %v8865 = vpack.c.b16 %v6505, %v6497
        %v8866 = vpack.c.b16 %v6506, %v6498
        %v8867 = vpack.c.b16 %v6507, %v6499
        %v8868 = vpack.c.b16 %v6508, %v6500
        %v8869 = vpack.c.b16 %v6509, %v6501
        %v8870 = vpack.c.b16 %v6510, %v6502
        %v8871 = vpack.c.b16 %v6511, %v6503
        %v8872 = vpack.c.b16 %v6512, %v6504
        %v8873 = vpack.c.b16 %v6521, %v6513
        %v8874 = vpack.c.b16 %v6522, %v6514
        %v8875 = vpack.c.b16 %v6523, %v6515
        %v8876 = vpack.c.b16 %v6524, %v6516
        %v8877 = vpack.c.b16 %v6525, %v6517
        %v8878 = vpack.c.b16 %v6526, %v6518
        %v8879 = vpack.c.b16 %v6527, %v6519
        %v8880 = vpack.c.b16 %v6528, %v6520
        %v8881 = vpack.c.b16 %v6537, %v6529
        %v8882 = vpack.c.b16 %v6538, %v6530
        %v8883 = vpack.c.b16 %v6539, %v6531
        %v8884 = vpack.c.b16 %v6540, %v6532
        %v8885 = vpack.c.b16 %v6541, %v6533
        %v8886 = vpack.c.b16 %v6542, %v6534
        %v8887 = vpack.c.b16 %v6543, %v6535
        %v8888 = vpack.c.b16 %v6544, %v6536
        %v8889 = vpack.c.b16 %v6553, %v6545
        %v8890 = vpack.c.b16 %v6554, %v6546
        %v8891 = vpack.c.b16 %v6555, %v6547
        %v8892 = vpack.c.b16 %v6556, %v6548
        %v8893 = vpack.c.b16 %v6557, %v6549
        %v8894 = vpack.c.b16 %v6558, %v6550
        %v8895 = vpack.c.b16 %v6559, %v6551
        %v8896 = vpack.c.b16 %v6560, %v6552
        %v8897 = vpack.c.b16 %v6569, %v6561
        %v8898 = vpack.c.b16 %v6570, %v6562
        %v8899 = vpack.c.b16 %v6571, %v6563
        %v8900 = vpack.c.b16 %v6572, %v6564
        %v8901 = vpack.c.b16 %v6573, %v6565
        %v8902 = vpack.c.b16 %v6574, %v6566
        %v8903 = vpack.c.b16 %v6575, %v6567
        %v8904 = vpack.c.b16 %v6576, %v6568
        %v8905 = vpack.c.b16 %v6585, %v6577
        %v8906 = vpack.c.b16 %v6586, %v6578
        %v8907 = vpack.c.b16 %v6587, %v6579
        %v8908 = vpack.c.b16 %v6588, %v6580
        %v8909 = vpack.c.b16 %v6589, %v6581
        %v8910 = vpack.c.b16 %v6590, %v6582
        %v8911 = vpack.c.b16 %v6591, %v6583
        %v8912 = vpack.c.b16 %v6592, %v6584
        %v8913 = vpack.c.b16 %v6601, %v6593
        %v8914 = vpack.c.b16 %v6602, %v6594
        %v8915 = vpack.c.b16 %v6603, %v6595
        %v8916 = vpack.c.b16 %v6604, %v6596
        %v8917 = vpack.c.b16 %v6605, %v6597
        %v8918 = vpack.c.b16 %v6606, %v6598
        %v8919 = vpack.c.b16 %v6607, %v6599
        %v8920 = vpack.c.b16 %v6608, %v6600
        %v8921 = vpack.c.b16 %v6617, %v6609
        %v8922 = vpack.c.b16 %v6618, %v6610
        %v8923 = vpack.c.b16 %v6619, %v6611
        %v8924 = vpack.c.b16 %v6620, %v6612
        %v8925 = vpack.c.b16 %v6621, %v6613
        %v8926 = vpack.c.b16 %v6622, %v6614
        %v8927 = vpack.c.b16 %v6623, %v6615
        %v8928 = vpack.c.b16 %v6624, %v6616
        %v8929 = vpack.c.b16 %v6633, %v6625
        %v8930 = vpack.c.b16 %v6634, %v6626
        %v8931 = vpack.c.b16 %v6635, %v6627
        %v8932 = vpack.c.b16 %v6636, %v6628
        %v8933 = vpack.c.b16 %v6637, %v6629
        %v8934 = vpack.c.b16 %v6638, %v6630
        %v8935 = vpack.c.b16 %v6639, %v6631
        %v8936 = vpack.c.b16 %v6640, %v6632
        %v8937 = vpack.c.b16 %v6649, %v6641
        %v8938 = vpack.c.b16 %v6650, %v6642
        %v8939 = vpack.c.b16 %v6651, %v6643
        %v8940 = vpack.c.b16 %v6652, %v6644
        %v8941 = vpack.c.b16 %v6653, %v6645
        %v8942 = vpack.c.b16 %v6654, %v6646
        %v8943 = vpack.c.b16 %v6655, %v6647
        %v8944 = vpack.c.b16 %v6656, %v6648
        %v8945 = vpack.c.b16 %v6665, %v6657
        %v8946 = vpack.c.b16 %v6666, %v6658
        %v8947 = vpack.c.b16 %v6667, %v6659
        %v8948 = vpack.c.b16 %v6668, %v6660
        %v8949 = vpack.c.b16 %v6669, %v6661
        %v8950 = vpack.c.b16 %v6670, %v6662
        %v8951 = vpack.c.b16 %v6671, %v6663
        %v8952 = vpack.c.b16 %v6672, %v6664
        %v8953 = vpack.c.b16 %v6681, %v6673
        %v8954 = vpack.c.b16 %v6682, %v6674
        %v8955 = vpack.c.b16 %v6683, %v6675
        %v8956 = vpack.c.b16 %v6684, %v6676
        %v8957 = vpack.c.b16 %v6685, %v6677
        %v8958 = vpack.c.b16 %v6686, %v6678
        %v8959 = vpack.c.b16 %v6687, %v6679
        %v8960 = vpack.c.b16 %v6688, %v6680
        %v8961 = vpack.c.b16 %v6697, %v6689
        %v8962 = vpack.c.b16 %v6698, %v6690
        %v8963 = vpack.c.b16 %v6699, %v6691
        %v8964 = vpack.c.b16 %v6700, %v6692
        %v8965 = vpack.c.b16 %v6701, %v6693
        %v8966 = vpack.c.b16 %v6702, %v6694
        %v8967 = vpack.c.b16 %v6703, %v6695
        %v8968 = vpack.c.b16 %v6704, %v6696
        %v8969 = vpack.c.b16 %v6713, %v6705
        %v8970 = vpack.c.b16 %v6714, %v6706
        %v8971 = vpack.c.b16 %v6715, %v6707
        %v8972 = vpack.c.b16 %v6716, %v6708
        %v8973 = vpack.c.b16 %v6717, %v6709
        %v8974 = vpack.c.b16 %v6718, %v6710
        %v8975 = vpack.c.b16 %v6719, %v6711
        %v8976 = vpack.c.b16 %v6720, %v6712
        %v8977 = vpack.c.b16 %v6729, %v6721
        %v8978 = vpack.c.b16 %v6730, %v6722
        %v8979 = vpack.c.b16 %v6731, %v6723
        %v8980 = vpack.c.b16 %v6732, %v6724
        %v8981 = vpack.c.b16 %v6733, %v6725
        %v8982 = vpack.c.b16 %v6734, %v6726
        %v8983 = vpack.c.b16 %v6735, %v6727
        %v8984 = vpack.c.b16 %v6736, %v6728
        %v8985 = vpack.c.b16 %v6745, %v6737
        %v8986 = vpack.c.b16 %v6746, %v6738
        %v8987 = vpack.c.b16 %v6747, %v6739
        %v8988 = vpack.c.b16 %v6748, %v6740
        %v8989 = vpack.c.b16 %v6749, %v6741
        %v8990 = vpack.c.b16 %v6750, %v6742
        %v8991 = vpack.c.b16 %v6751, %v6743
        %v8992 = vpack.c.b16 %v6752, %v6744
        %v8993 = vpack.c.b16 %v6761, %v6753
        %v8994 = vpack.c.b16 %v6762, %v6754
        %v8995 = vpack.c.b16 %v6763, %v6755
        %v8996 = vpack.c.b16 %v6764, %v6756
        %v8997 = vpack.c.b16 %v6765, %v6757
        %v8998 = vpack.c.b16 %v6766, %v6758
        %v8999 = vpack.c.b16 %v6767, %v6759
        %v9000 = vpack.c.b16 %v6768, %v6760
        %v9001 = vpack.c.b16 %v6777, %v6769
        %v9002 = vpack.c.b16 %v6778, %v6770
        %v9003 = vpack.c.b16 %v6779, %v6771
        %v9004 = vpack.c.b16 %v6780, %v6772
        %v9005 = vpack.c.b16 %v6781, %v6773
        %v9006 = vpack.c.b16 %v6782, %v6774
        %v9007 = vpack.c.b16 %v6783, %v6775
        %v9008 = vpack.c.b16 %v6784, %v6776
        %v9009 = vpack.c.b16 %v6793, %v6785
        %v9010 = vpack.c.b16 %v6794, %v6786
        %v9011 = vpack.c.b16 %v6795, %v6787
        %v9012 = vpack.c.b16 %v6796, %v6788
        %v9013 = vpack.c.b16 %v6797, %v6789
        %v9014 = vpack.c.b16 %v6798, %v6790
        %v9015 = vpack.c.b16 %v6799, %v6791
        %v9016 = vpack.c.b16 %v6800, %v6792
        %v9017 = vpack.c.b16 %v6809, %v6801
        %v9018 = vpack.c.b16 %v6810, %v6802
        %v9019 = vpack.c.b16 %v6811, %v6803
        %v9020 = vpack.c.b16 %v6812, %v6804
        %v9021 = vpack.c.b16 %v6813, %v6805
        %v9022 = vpack.c.b16 %v6814, %v6806
        %v9023 = vpack.c.b16 %v6815, %v6807
        %v9024 = vpack.c.b16 %v6816, %v6808
        %v9025 = vpack.c.b16 %v6825, %v6817
        %v9026 = vpack.c.b16 %v6826, %v6818
        %v9027 = vpack.c.b16 %v6827, %v6819
        %v9028 = vpack.c.b16 %v6828, %v6820
        %v9029 = vpack.c.b16 %v6829, %v6821
        %v9030 = vpack.c.b16 %v6830, %v6822
        %v9031 = vpack.c.b16 %v6831, %v6823
        %v9032 = vpack.c.b16 %v6832, %v6824
        %v9033 = vpack.c.b16 %v6841, %v6833
        %v9034 = vpack.c.b16 %v6842, %v6834
        %v9035 = vpack.c.b16 %v6843, %v6835
        %v9036 = vpack.c.b16 %v6844, %v6836
        %v9037 = vpack.c.b16 %v6845, %v6837
        %v9038 = vpack.c.b16 %v6846, %v6838
        %v9039 = vpack.c.b16 %v6847, %v6839
        %v9040 = vpack.c.b16 %v6848, %v6840
        %v9041 = vpack.c.b16 %v6857, %v6849
        %v9042 = vpack.c.b16 %v6858, %v6850
        %v9043 = vpack.c.b16 %v6859, %v6851
        %v9044 = vpack.c.b16 %v6860, %v6852
        %v9045 = vpack.c.b16 %v6861, %v6853
        %v9046 = vpack.c.b16 %v6862, %v6854
        %v9047 = vpack.c.b16 %v6863, %v6855
        %v9048 = vpack.c.b16 %v6864, %v6856
        %v9049 = vpack.c.b16 %v6873, %v6865
        %v9050 = vpack.c.b16 %v6874, %v6866
        %v9051 = vpack.c.b16 %v6875, %v6867
        %v9052 = vpack.c.b16 %v6876, %v6868
        %v9053 = vpack.c.b16 %v6877, %v6869
        %v9054 = vpack.c.b16 %v6878, %v6870
        %v9055 = vpack.c.b16 %v6879, %v6871
        %v9056 = vpack.c.b16 %v6880, %v6872
        %v9057 = vpack.c.b16 %v6889, %v6881
        %v9058 = vpack.c.b16 %v6890, %v6882
        %v9059 = vpack.c.b16 %v6891, %v6883
        %v9060 = vpack.c.b16 %v6892, %v6884
        %v9061 = vpack.c.b16 %v6893, %v6885
        %v9062 = vpack.c.b16 %v6894, %v6886
        %v9063 = vpack.c.b16 %v6895, %v6887
        %v9064 = vpack.c.b16 %v6896, %v6888
        %v9065 = vpack.c.b16 %v6905, %v6897
        %v9066 = vpack.c.b16 %v6906, %v6898
        %v9067 = vpack.c.b16 %v6907, %v6899
        %v9068 = vpack.c.b16 %v6908, %v6900
        %v9069 = vpack.c.b16 %v6909, %v6901
        %v9070 = vpack.c.b16 %v6910, %v6902
        %v9071 = vpack.c.b16 %v6911, %v6903
        %v9072 = vpack.c.b16 %v6912, %v6904
        %v9073 = vpack.c.b16 %v6921, %v6913
        %v9074 = vpack.c.b16 %v6922, %v6914
        %v9075 = vpack.c.b16 %v6923, %v6915
        %v9076 = vpack.c.b16 %v6924, %v6916
        %v9077 = vpack.c.b16 %v6925, %v6917
        %v9078 = vpack.c.b16 %v6926, %v6918
        %v9079 = vpack.c.b16 %v6927, %v6919
        %v9080 = vpack.c.b16 %v6928, %v6920
        %v9081 = vpack.c.b16 %v6937, %v6929
        %v9082 = vpack.c.b16 %v6938, %v6930
        %v9083 = vpack.c.b16 %v6939, %v6931
        %v9084 = vpack.c.b16 %v6940, %v6932
        %v9085 = vpack.c.b16 %v6941, %v6933
        %v9086 = vpack.c.b16 %v6942, %v6934
        %v9087 = vpack.c.b16 %v6943, %v6935
        %v9088 = vpack.c.b16 %v6944, %v6936
        %v9089 = vpack.c.b16 %v6953, %v6945
        %v9090 = vpack.c.b16 %v6954, %v6946
        %v9091 = vpack.c.b16 %v6955, %v6947
        %v9092 = vpack.c.b16 %v6956, %v6948
        %v9093 = vpack.c.b16 %v6957, %v6949
        %v9094 = vpack.c.b16 %v6958, %v6950
        %v9095 = vpack.c.b16 %v6959, %v6951
        %v9096 = vpack.c.b16 %v6960, %v6952
        %v9097 = vpack.c.b16 %v6969, %v6961
        %v9098 = vpack.c.b16 %v6970, %v6962
        %v9099 = vpack.c.b16 %v6971, %v6963
        %v9100 = vpack.c.b16 %v6972, %v6964
        %v9101 = vpack.c.b16 %v6973, %v6965
        %v9102 = vpack.c.b16 %v6974, %v6966
        %v9103 = vpack.c.b16 %v6975, %v6967
        %v9104 = vpack.c.b16 %v6976, %v6968
        %v9105 = vpack.c.b16 %v6985, %v6977
        %v9106 = vpack.c.b16 %v6986, %v6978
        %v9107 = vpack.c.b16 %v6987, %v6979
        %v9108 = vpack.c.b16 %v6988, %v6980
        %v9109 = vpack.c.b16 %v6989, %v6981
        %v9110 = vpack.c.b16 %v6990, %v6982
        %v9111 = vpack.c.b16 %v6991, %v6983
        %v9112 = vpack.c.b16 %v6992, %v6984
        %v9113 = vpack.c.b16 %v7001, %v6993
        %v9114 = vpack.c.b16 %v7002, %v6994
        %v9115 = vpack.c.b16 %v7003, %v6995
        %v9116 = vpack.c.b16 %v7004, %v6996
        %v9117 = vpack.c.b16 %v7005, %v6997
        %v9118 = vpack.c.b16 %v7006, %v6998
        %v9119 = vpack.c.b16 %v7007, %v6999
        %v9120 = vpack.c.b16 %v7008, %v7000
        %v9121 = vpack.c.b16 %v7017, %v7009
        %v9122 = vpack.c.b16 %v7018, %v7010
        %v9123 = vpack.c.b16 %v7019, %v7011
        %v9124 = vpack.c.b16 %v7020, %v7012
        %v9125 = vpack.c.b16 %v7021, %v7013
        %v9126 = vpack.c.b16 %v7022, %v7014
        %v9127 = vpack.c.b16 %v7023, %v7015
        %v9128 = vpack.c.b16 %v7024, %v7016
        %v9129 = vpack.c.b16 %v7033, %v7025
        %v9130 = vpack.c.b16 %v7034, %v7026
        %v9131 = vpack.c.b16 %v7035, %v7027
        %v9132 = vpack.c.b16 %v7036, %v7028
        %v9133 = vpack.c.b16 %v7037, %v7029
        %v9134 = vpack.c.b16 %v7038, %v7030
        %v9135 = vpack.c.b16 %v7039, %v7031
        %v9136 = vpack.c.b16 %v7040, %v7032
        %v9137 = vpack.c.b16 %v7049, %v7041
        %v9138 = vpack.c.b16 %v7050, %v7042
        %v9139 = vpack.c.b16 %v7051, %v7043
        %v9140 = vpack.c.b16 %v7052, %v7044
        %v9141 = vpack.c.b16 %v7053, %v7045
        %v9142 = vpack.c.b16 %v7054, %v7046
        %v9143 = vpack.c.b16 %v7055, %v7047
        %v9144 = vpack.c.b16 %v7056, %v7048
        %v9145 = vpack.c.b16 %v7065, %v7057
        %v9146 = vpack.c.b16 %v7066, %v7058
        %v9147 = vpack.c.b16 %v7067, %v7059
        %v9148 = vpack.c.b16 %v7068, %v7060
        %v9149 = vpack.c.b16 %v7069, %v7061
        %v9150 = vpack.c.b16 %v7070, %v7062
        %v9151 = vpack.c.b16 %v7071, %v7063
        %v9152 = vpack.c.b16 %v7072, %v7064
        %v9153 = vpack.c.b16 %v7081, %v7073
        %v9154 = vpack.c.b16 %v7082, %v7074
        %v9155 = vpack.c.b16 %v7083, %v7075
        %v9156 = vpack.c.b16 %v7084, %v7076
        %v9157 = vpack.c.b16 %v7085, %v7077
        %v9158 = vpack.c.b16 %v7086, %v7078
        %v9159 = vpack.c.b16 %v7087, %v7079
        %v9160 = vpack.c.b16 %v7088, %v7080
        %v9161 = vpack.c.b16 %v7097, %v7089
        %v9162 = vpack.c.b16 %v7098, %v7090
        %v9163 = vpack.c.b16 %v7099, %v7091
        %v9164 = vpack.c.b16 %v7100, %v7092
        %v9165 = vpack.c.b16 %v7101, %v7093
        %v9166 = vpack.c.b16 %v7102, %v7094
        %v9167 = vpack.c.b16 %v7103, %v7095
        %v9168 = vpack.c.b16 %v7104, %v7096
        %v9169 = vpack.c.b16 %v7113, %v7105
        %v9170 = vpack.c.b16 %v7114, %v7106
        %v9171 = vpack.c.b16 %v7115, %v7107
        %v9172 = vpack.c.b16 %v7116, %v7108
        %v9173 = vpack.c.b16 %v7117, %v7109
        %v9174 = vpack.c.b16 %v7118, %v7110
        %v9175 = vpack.c.b16 %v7119, %v7111
        %v9176 = vpack.c.b16 %v7120, %v7112
        %v9177 = vpack.c.b16 %v7129, %v7121
        %v9178 = vpack.c.b16 %v7130, %v7122
        %v9179 = vpack.c.b16 %v7131, %v7123
        %v9180 = vpack.c.b16 %v7132, %v7124
        %v9181 = vpack.c.b16 %v7133, %v7125
        %v9182 = vpack.c.b16 %v7134, %v7126
        %v9183 = vpack.c.b16 %v7135, %v7127
        %v9184 = vpack.c.b16 %v7136, %v7128
        %v9185 = vpack.c.b16 %v7145, %v7137
        %v9186 = vpack.c.b16 %v7146, %v7138
        %v9187 = vpack.c.b16 %v7147, %v7139
        %v9188 = vpack.c.b16 %v7148, %v7140
        %v9189 = vpack.c.b16 %v7149, %v7141
        %v9190 = vpack.c.b16 %v7150, %v7142
        %v9191 = vpack.c.b16 %v7151, %v7143
        %v9192 = vpack.c.b16 %v7152, %v7144
        %v9193 = vpack.c.b16 %v7161, %v7153
        %v9194 = vpack.c.b16 %v7162, %v7154
        %v9195 = vpack.c.b16 %v7163, %v7155
        %v9196 = vpack.c.b16 %v7164, %v7156
        %v9197 = vpack.c.b16 %v7165, %v7157
        %v9198 = vpack.c.b16 %v7166, %v7158
        %v9199 = vpack.c.b16 %v7167, %v7159
        %v9200 = vpack.c.b16 %v7168, %v7160
        %v9201 = vpack.c.b16 %v7177, %v7169
        %v9202 = vpack.c.b16 %v7178, %v7170
        %v9203 = vpack.c.b16 %v7179, %v7171
        %v9204 = vpack.c.b16 %v7180, %v7172
        %v9205 = vpack.c.b16 %v7181, %v7173
        %v9206 = vpack.c.b16 %v7182, %v7174
        %v9207 = vpack.c.b16 %v7183, %v7175
        %v9208 = vpack.c.b16 %v7184, %v7176
        %v9209 = vpack.c.b16 %v7193, %v7185
        %v9210 = vpack.c.b16 %v7194, %v7186
        %v9211 = vpack.c.b16 %v7195, %v7187
        %v9212 = vpack.c.b16 %v7196, %v7188
        %v9213 = vpack.c.b16 %v7197, %v7189
        %v9214 = vpack.c.b16 %v7198, %v7190
        %v9215 = vpack.c.b16 %v7199, %v7191
        %v9216 = vpack.c.b16 %v7200, %v7192
        %v9217 = vpack.c.b16 %v7209, %v7201
        %v9218 = vpack.c.b16 %v7210, %v7202
        %v9219 = vpack.c.b16 %v7211, %v7203
        %v9220 = vpack.c.b16 %v7212, %v7204
        %v9221 = vpack.c.b16 %v7213, %v7205
        %v9222 = vpack.c.b16 %v7214, %v7206
        %v9223 = vpack.c.b16 %v7215, %v7207
        %v9224 = vpack.c.b16 %v7216, %v7208
        %v9225 = vpack.c.b16 %v7225, %v7217
        %v9226 = vpack.c.b16 %v7226, %v7218
        %v9227 = vpack.c.b16 %v7227, %v7219
        %v9228 = vpack.c.b16 %v7228, %v7220
        %v9229 = vpack.c.b16 %v7229, %v7221
        %v9230 = vpack.c.b16 %v7230, %v7222
        %v9231 = vpack.c.b16 %v7231, %v7223
        %v9232 = vpack.c.b16 %v7232, %v7224
        %v9233 = vpack.c.b16 %v7241, %v7233
        %v9234 = vpack.c.b16 %v7242, %v7234
        %v9235 = vpack.c.b16 %v7243, %v7235
        %v9236 = vpack.c.b16 %v7244, %v7236
        %v9237 = vpack.c.b16 %v7245, %v7237
        %v9238 = vpack.c.b16 %v7246, %v7238
        %v9239 = vpack.c.b16 %v7247, %v7239
        %v9240 = vpack.c.b16 %v7248, %v7240
        %v9241 = vpack.c.b16 %v7257, %v7249
        %v9242 = vpack.c.b16 %v7258, %v7250
        %v9243 = vpack.c.b16 %v7259, %v7251
        %v9244 = vpack.c.b16 %v7260, %v7252
        %v9245 = vpack.c.b16 %v7261, %v7253
        %v9246 = vpack.c.b16 %v7262, %v7254
        %v9247 = vpack.c.b16 %v7263, %v7255
        %v9248 = vpack.c.b16 %v7264, %v7256
        %v9249 = vpack.c.b16 %v7273, %v7265
        %v9250 = vpack.c.b16 %v7274, %v7266
        %v9251 = vpack.c.b16 %v7275, %v7267
        %v9252 = vpack.c.b16 %v7276, %v7268
        %v9253 = vpack.c.b16 %v7277, %v7269
        %v9254 = vpack.c.b16 %v7278, %v7270
        %v9255 = vpack.c.b16 %v7279, %v7271
        %v9256 = vpack.c.b16 %v7280, %v7272
        %v9257 = vpack.c.b16 %v7289, %v7281
        %v9258 = vpack.c.b16 %v7290, %v7282
        %v9259 = vpack.c.b16 %v7291, %v7283
        %v9260 = vpack.c.b16 %v7292, %v7284
        %v9261 = vpack.c.b16 %v7293, %v7285
        %v9262 = vpack.c.b16 %v7294, %v7286
        %v9263 = vpack.c.b16 %v7295, %v7287
        %v9264 = vpack.c.b16 %v7296, %v7288
        %v9265 = vpack.c.b16 %v7305, %v7297
        %v9266 = vpack.c.b16 %v7306, %v7298
        %v9267 = vpack.c.b16 %v7307, %v7299
        %v9268 = vpack.c.b16 %v7308, %v7300
        %v9269 = vpack.c.b16 %v7309, %v7301
        %v9270 = vpack.c.b16 %v7310, %v7302
        %v9271 = vpack.c.b16 %v7311, %v7303
        %v9272 = vpack.c.b16 %v7312, %v7304
        %v9273 = vpack.c.b16 %v7321, %v7313
        %v9274 = vpack.c.b16 %v7322, %v7314
        %v9275 = vpack.c.b16 %v7323, %v7315
        %v9276 = vpack.c.b16 %v7324, %v7316
        %v9277 = vpack.c.b16 %v7325, %v7317
        %v9278 = vpack.c.b16 %v7326, %v7318
        %v9279 = vpack.c.b16 %v7327, %v7319
        %v9280 = vpack.c.b16 %v7328, %v7320
        %v9281 = vpack.c.b16 %v7337, %v7329
        %v9282 = vpack.c.b16 %v7338, %v7330
        %v9283 = vpack.c.b16 %v7339, %v7331
        %v9284 = vpack.c.b16 %v7340, %v7332
        %v9285 = vpack.c.b16 %v7341, %v7333
        %v9286 = vpack.c.b16 %v7342, %v7334
        %v9287 = vpack.c.b16 %v7343, %v7335
        %v9288 = vpack.c.b16 %v7344, %v7336
        %v9289 = vpack.c.b16 %v7353, %v7345
        %v9290 = vpack.c.b16 %v7354, %v7346
        %v9291 = vpack.c.b16 %v7355, %v7347
        %v9292 = vpack.c.b16 %v7356, %v7348
        %v9293 = vpack.c.b16 %v7357, %v7349
        %v9294 = vpack.c.b16 %v7358, %v7350
        %v9295 = vpack.c.b16 %v7359, %v7351
        %v9296 = vpack.c.b16 %v7360, %v7352
        %v9297 = vpack.c.b16 %v7369, %v7361
        %v9298 = vpack.c.b16 %v7370, %v7362
        %v9299 = vpack.c.b16 %v7371, %v7363
        %v9300 = vpack.c.b16 %v7372, %v7364
        %v9301 = vpack.c.b16 %v7373, %v7365
        %v9302 = vpack.c.b16 %v7374, %v7366
        %v9303 = vpack.c.b16 %v7375, %v7367
        %v9304 = vpack.c.b16 %v7376, %v7368
        %v9305 = vpack.c.b16 %v7385, %v7377
        %v9306 = vpack.c.b16 %v7386, %v7378
        %v9307 = vpack.c.b16 %v7387, %v7379
        %v9308 = vpack.c.b16 %v7388, %v7380
        %v9309 = vpack.c.b16 %v7389, %v7381
        %v9310 = vpack.c.b16 %v7390, %v7382
        %v9311 = vpack.c.b16 %v7391, %v7383
        %v9312 = vpack.c.b16 %v7392, %v7384
        %v9313 = vpack.c.b16 %v7401, %v7393
        %v9314 = vpack.c.b16 %v7402, %v7394
        %v9315 = vpack.c.b16 %v7403, %v7395
        %v9316 = vpack.c.b16 %v7404, %v7396
        %v9317 = vpack.c.b16 %v7405, %v7397
        %v9318 = vpack.c.b16 %v7406, %v7398
        %v9319 = vpack.c.b16 %v7407, %v7399
        %v9320 = vpack.c.b16 %v7408, %v7400
        %v9321 = vpack.c.b16 %v7417, %v7409
        %v9322 = vpack.c.b16 %v7418, %v7410
        %v9323 = vpack.c.b16 %v7419, %v7411
        %v9324 = vpack.c.b16 %v7420, %v7412
        %v9325 = vpack.c.b16 %v7421, %v7413
        %v9326 = vpack.c.b16 %v7422, %v7414
        %v9327 = vpack.c.b16 %v7423, %v7415
        %v9328 = vpack.c.b16 %v7424, %v7416
        %v9329 = vpack.c.b16 %v7433, %v7425
        %v9330 = vpack.c.b16 %v7434, %v7426
        %v9331 = vpack.c.b16 %v7435, %v7427
        %v9332 = vpack.c.b16 %v7436, %v7428
        %v9333 = vpack.c.b16 %v7437, %v7429
        %v9334 = vpack.c.b16 %v7438, %v7430
        %v9335 = vpack.c.b16 %v7439, %v7431
        %v9336 = vpack.c.b16 %v7440, %v7432
        %v9337 = vpack.c.b16 %v7449, %v7441
        %v9338 = vpack.c.b16 %v7450, %v7442
        %v9339 = vpack.c.b16 %v7451, %v7443
        %v9340 = vpack.c.b16 %v7452, %v7444
        %v9341 = vpack.c.b16 %v7453, %v7445
        %v9342 = vpack.c.b16 %v7454, %v7446
        %v9343 = vpack.c.b16 %v7455, %v7447
        %v9344 = vpack.c.b16 %v7456, %v7448
        %v9345 = vpack.c.b16 %v7465, %v7457
        %v9346 = vpack.c.b16 %v7466, %v7458
        %v9347 = vpack.c.b16 %v7467, %v7459
        %v9348 = vpack.c.b16 %v7468, %v7460
        %v9349 = vpack.c.b16 %v7469, %v7461
        %v9350 = vpack.c.b16 %v7470, %v7462
        %v9351 = vpack.c.b16 %v7471, %v7463
        %v9352 = vpack.c.b16 %v7472, %v7464
        %v9353 = vpack.c.b16 %v7481, %v7473
        %v9354 = vpack.c.b16 %v7482, %v7474
        %v9355 = vpack.c.b16 %v7483, %v7475
        %v9356 = vpack.c.b16 %v7484, %v7476
        %v9357 = vpack.c.b16 %v7485, %v7477
        %v9358 = vpack.c.b16 %v7486, %v7478
        %v9359 = vpack.c.b16 %v7487, %v7479
        %v9360 = vpack.c.b16 %v7488, %v7480
        %v9361 = vpack.c.b16 %v7497, %v7489
        %v9362 = vpack.c.b16 %v7498, %v7490
        %v9363 = vpack.c.b16 %v7499, %v7491
        %v9364 = vpack.c.b16 %v7500, %v7492
        %v9365 = vpack.c.b16 %v7501, %v7493
        %v9366 = vpack.c.b16 %v7502, %v7494
        %v9367 = vpack.c.b16 %v7503, %v7495
        %v9368 = vpack.c.b16 %v7504, %v7496
        %v9369 = vpack.c.b16 %v7513, %v7505
        %v9370 = vpack.c.b16 %v7514, %v7506
        %v9371 = vpack.c.b16 %v7515, %v7507
        %v9372 = vpack.c.b16 %v7516, %v7508
        %v9373 = vpack.c.b16 %v7517, %v7509
        %v9374 = vpack.c.b16 %v7518, %v7510
        %v9375 = vpack.c.b16 %v7519, %v7511
        %v9376 = vpack.c.b16 %v7520, %v7512
        %v9377 = vpack.c.b16 %v7529, %v7521
        %v9378 = vpack.c.b16 %v7530, %v7522
        %v9379 = vpack.c.b16 %v7531, %v7523
        %v9380 = vpack.c.b16 %v7532, %v7524
        %v9381 = vpack.c.b16 %v7533, %v7525
        %v9382 = vpack.c.b16 %v7534, %v7526
        %v9383 = vpack.c.b16 %v7535, %v7527
        %v9384 = vpack.c.b16 %v7536, %v7528
        %v9385 = vpack.c.b16 %v7545, %v7537
        %v9386 = vpack.c.b16 %v7546, %v7538
        %v9387 = vpack.c.b16 %v7547, %v7539
        %v9388 = vpack.c.b16 %v7548, %v7540
        %v9389 = vpack.c.b16 %v7549, %v7541
        %v9390 = vpack.c.b16 %v7550, %v7542
        %v9391 = vpack.c.b16 %v7551, %v7543
        %v9392 = vpack.c.b16 %v7552, %v7544
        %v9393 = vpack.c.b16 %v7561, %v7553
        %v9394 = vpack.c.b16 %v7562, %v7554
        %v9395 = vpack.c.b16 %v7563, %v7555
        %v9396 = vpack.c.b16 %v7564, %v7556
        %v9397 = vpack.c.b16 %v7565, %v7557
        %v9398 = vpack.c.b16 %v7566, %v7558
        %v9399 = vpack.c.b16 %v7567, %v7559
        %v9400 = vpack.c.b16 %v7568, %v7560
        %v9401 = vpack.c.b16 %v7577, %v7569
        %v9402 = vpack.c.b16 %v7578, %v7570
        %v9403 = vpack.c.b16 %v7579, %v7571
        %v9404 = vpack.c.b16 %v7580, %v7572
        %v9405 = vpack.c.b16 %v7581, %v7573
        %v9406 = vpack.c.b16 %v7582, %v7574
        %v9407 = vpack.c.b16 %v7583, %v7575
        %v9408 = vpack.c.b16 %v7584, %v7576
        %v9409 = vpack.c.b16 %v7593, %v7585
        %v9410 = vpack.c.b16 %v7594, %v7586
        %v9411 = vpack.c.b16 %v7595, %v7587
        %v9412 = vpack.c.b16 %v7596, %v7588
        %v9413 = vpack.c.b16 %v7597, %v7589
        %v9414 = vpack.c.b16 %v7598, %v7590
        %v9415 = vpack.c.b16 %v7599, %v7591
        %v9416 = vpack.c.b16 %v7600, %v7592
        %v9417 = vpack.c.b16 %v7609, %v7601
        %v9418 = vpack.c.b16 %v7610, %v7602
        %v9419 = vpack.c.b16 %v7611, %v7603
        %v9420 = vpack.c.b16 %v7612, %v7604
        %v9421 = vpack.c.b16 %v7613, %v7605
        %v9422 = vpack.c.b16 %v7614, %v7606
        %v9423 = vpack.c.b16 %v7615, %v7607
        %v9424 = vpack.c.b16 %v7616, %v7608
        %v9425 = vpack.c.b16 %v7625, %v7617
        %v9426 = vpack.c.b16 %v7626, %v7618
        %v9427 = vpack.c.b16 %v7627, %v7619
        %v9428 = vpack.c.b16 %v7628, %v7620
        %v9429 = vpack.c.b16 %v7629, %v7621
        %v9430 = vpack.c.b16 %v7630, %v7622
        %v9431 = vpack.c.b16 %v7631, %v7623
        %v9432 = vpack.c.b16 %v7632, %v7624
        %v9433 = vpack.c.b16 %v7641, %v7633
        %v9434 = vpack.c.b16 %v7642, %v7634
        %v9435 = vpack.c.b16 %v7643, %v7635
        %v9436 = vpack.c.b16 %v7644, %v7636
        %v9437 = vpack.c.b16 %v7645, %v7637
        %v9438 = vpack.c.b16 %v7646, %v7638
        %v9439 = vpack.c.b16 %v7647, %v7639
        %v9440 = vpack.c.b16 %v7648, %v7640
        %11233 = vmatprep.subr.bf16.mxu0 %v7650
        %11234 = vmatpush1.bf16.msra.mxu0 %v7649
        %11235 = vmatprep.subr.bf16.mxu0 %v7658
        %11236 = vmatpush1.bf16.msra.mxu0 %v7657
        %11237 = vmatprep.subr.bf16.mxu0 %v7666
        %11238 = vmatpush1.bf16.msra.mxu0 %v7665
        %11239 = vmatprep.subr.bf16.mxu0 %v7674
        %11240 = vmatpush1.bf16.msra.mxu0 %v7673
        %11241 = vmatprep.subr.bf16.mxu0 %v7682
        %11242 = vmatpush1.bf16.msra.mxu0 %v7681
        %11243 = vmatprep.subr.bf16.mxu0 %v7690
        %11244 = vmatpush1.bf16.msra.mxu0 %v7689
        %11245 = vmatprep.subr.bf16.mxu0 %v7698
        %11246 = vmatpush1.bf16.msra.mxu0 %v7697
        %11247 = vmatprep.subr.bf16.mxu0 %v7706
        %11248 = vmatpush1.bf16.msra.mxu0 %v7705
        %11249 = vmatprep.subr.bf16.mxu0 %v7714
        %11250 = vmatpush1.bf16.msra.mxu0 %v7713
        %11251 = vmatprep.subr.bf16.mxu0 %v7722
        %11252 = vmatpush1.bf16.msra.mxu0 %v7721
        %11253 = vmatprep.subr.bf16.mxu0 %v7730
        %11254 = vmatpush1.bf16.msra.mxu0 %v7729
        %11255 = vmatprep.subr.bf16.mxu0 %v7738
        %11256 = vmatpush1.bf16.msra.mxu0 %v7737
        %11257 = vmatprep.subr.bf16.mxu0 %v7746
        %11258 = vmatpush1.bf16.msra.mxu0 %v7745
        %11259 = vmatprep.subr.bf16.mxu0 %v7754
        %11260 = vmatpush1.bf16.msra.mxu0 %v7753
        %11261 = vmatprep.subr.bf16.mxu0 %v7762
        %11262 = vmatpush1.bf16.msra.mxu0 %v7761
        %11263 = vmatprep.subr.bf16.mxu0 %v7770
        %11264 = vmatpush1.bf16.msra.mxu0 %v7769
        %11265 = vmatprep.mubr.bf16.mxu0 %v454
        %11266 = vmatmul.mubr.bf16.gmra.mrb[0].mxu0 %v453
        %v11267 = vpop.f32.mrb[0].mxu0
        %v11268 = vadd.f32 0.0, %v11267
        %v11269 = vpop.f32.mrb[0].mxu0
        %v11270 = vadd.f32 0.0, %v11269
        %v11271 = vpop.f32.mrb[0].mxu0
        %v11272 = vpop.f32.mrb[0].mxu0
        %11273 = vdwg.mxu0
        %11274 = vmatprep.subr.bf16.mxu0 %v7778
        %11275 = vmatpush1.bf16.msra.mxu0 %v7777
        %11276 = vmatprep.subr.bf16.mxu0 %v7786
        %11277 = vmatpush1.bf16.msra.mxu0 %v7785
        %11278 = vmatprep.subr.bf16.mxu0 %v7794
        %11279 = vmatpush1.bf16.msra.mxu0 %v7793
        %11280 = vmatprep.subr.bf16.mxu0 %v7802
        %11281 = vmatpush1.bf16.msra.mxu0 %v7801
        %11282 = vmatprep.subr.bf16.mxu0 %v7810
        %11283 = vmatpush1.bf16.msra.mxu0 %v7809
        %11284 = vmatprep.subr.bf16.mxu0 %v7818
        %11285 = vmatpush1.bf16.msra.mxu0 %v7817
        %11286 = vmatprep.subr.bf16.mxu0 %v7826
        %11287 = vmatpush1.bf16.msra.mxu0 %v7825
        %11288 = vmatprep.subr.bf16.mxu0 %v7834
        %11289 = vmatpush1.bf16.msra.mxu0 %v7833
        %11290 = vmatprep.subr.bf16.mxu0 %v7842
        %11291 = vmatpush1.bf16.msra.mxu0 %v7841
        %11292 = vmatprep.subr.bf16.mxu0 %v7850
        %11293 = vmatpush1.bf16.msra.mxu0 %v7849
        %11294 = vmatprep.subr.bf16.mxu0 %v7858
        %11295 = vmatpush1.bf16.msra.mxu0 %v7857
        %11296 = vmatprep.subr.bf16.mxu0 %v7866
        %11297 = vmatpush1.bf16.msra.mxu0 %v7865
        %11298 = vmatprep.subr.bf16.mxu0 %v7874
        %11299 = vmatpush1.bf16.msra.mxu0 %v7873
        %11300 = vmatprep.subr.bf16.mxu0 %v7882
        %11301 = vmatpush1.bf16.msra.mxu0 %v7881
        %11302 = vmatprep.subr.bf16.mxu0 %v7890
        %11303 = vmatpush1.bf16.msra.mxu0 %v7889
        %11304 = vmatprep.subr.bf16.mxu0 %v7898
        %11305 = vmatpush1.bf16.msra.mxu0 %v7897
        %11306 = vmatprep.mubr.bf16.mxu0 %v456
        %11307 = vmatmul.mubr.bf16.gmra.mrb[0].mxu0 %v455
        %v11308 = vpop.f32.mrb[0].mxu0
        %v11309 = vadd.f32 %v11268, %v11308
        %v11310 = vpop.f32.mrb[0].mxu0
        %v11311 = vadd.f32 %v11270, %v11310
        %v11312 = vpop.f32.mrb[0].mxu0
        %v11313 = vpop.f32.mrb[0].mxu0
        %11314 = vdwg.mxu0
        %11315 = vmatprep.subr.bf16.mxu0 %v7906
        %11316 = vmatpush1.bf16.msra.mxu0 %v7905
        %11317 = vmatprep.subr.bf16.mxu0 %v7914
        %11318 = vmatpush1.bf16.msra.mxu0 %v7913
        %11319 = vmatprep.subr.bf16.mxu0 %v7922
        %11320 = vmatpush1.bf16.msra.mxu0 %v7921
        %11321 = vmatprep.subr.bf16.mxu0 %v7930
        %11322 = vmatpush1.bf16.msra.mxu0 %v7929
        %11323 = vmatprep.subr.bf16.mxu0 %v7938
        %11324 = vmatpush1.bf16.msra.mxu0 %v7937
        %11325 = vmatprep.subr.bf16.mxu0 %v7946
        %11326 = vmatpush1.bf16.msra.mxu0 %v7945
        %11327 = vmatprep.subr.bf16.mxu0 %v7954
        %11328 = vmatpush1.bf16.msra.mxu0 %v7953
        %11329 = vmatprep.subr.bf16.mxu0 %v7962
        %11330 = vmatpush1.bf16.msra.mxu0 %v7961
        %11331 = vmatprep.subr.bf16.mxu0 %v7970
        %11332 = vmatpush1.bf16.msra.mxu0 %v7969
        %11333 = vmatprep.subr.bf16.mxu0 %v7978
        %11334 = vmatpush1.bf16.msra.mxu0 %v7977
        %11335 = vmatprep.subr.bf16.mxu0 %v7986
        %11336 = vmatpush1.bf16.msra.mxu0 %v7985
        %11337 = vmatprep.subr.bf16.mxu0 %v7994
        %11338 = vmatpush1.bf16.msra.mxu0 %v7993
        %11339 = vmatprep.subr.bf16.mxu0 %v8002
        %11340 = vmatpush1.bf16.msra.mxu0 %v8001
        %11341 = vmatprep.subr.bf16.mxu0 %v8010
        %11342 = vmatpush1.bf16.msra.mxu0 %v8009
        %11343 = vmatprep.subr.bf16.mxu0 %v8018
        %11344 = vmatpush1.bf16.msra.mxu0 %v8017
        %11345 = vmatprep.subr.bf16.mxu0 %v8026
        %11346 = vmatpush1.bf16.msra.mxu0 %v8025
        %11347 = vmatprep.mubr.bf16.mxu0 %v458
        %11348 = vmatmul.mubr.bf16.gmra.mrb[0].mxu0 %v457
        %v11349 = vpop.f32.mrb[0].mxu0
        %v11350 = vadd.f32 %v11309, %v11349
        %v11351 = vpop.f32.mrb[0].mxu0
        %v11352 = vadd.f32 %v11311, %v11351
        %v11353 = vpop.f32.mrb[0].mxu0
        %v11354 = vpop.f32.mrb[0].mxu0
        %11355 = vdwg.mxu0
        %11356 = vmatprep.subr.bf16.mxu0 %v8034
        %11357 = vmatpush1.bf16.msra.mxu0 %v8033
        %11358 = vmatprep.subr.bf16.mxu0 %v8042
        %11359 = vmatpush1.bf16.msra.mxu0 %v8041
        %11360 = vmatprep.subr.bf16.mxu0 %v8050
        %11361 = vmatpush1.bf16.msra.mxu0 %v8049
        %11362 = vmatprep.subr.bf16.mxu0 %v8058
        %11363 = vmatpush1.bf16.msra.mxu0 %v8057
        %11364 = vmatprep.subr.bf16.mxu0 %v8066
        %11365 = vmatpush1.bf16.msra.mxu0 %v8065
        %11366 = vmatprep.subr.bf16.mxu0 %v8074
        %11367 = vmatpush1.bf16.msra.mxu0 %v8073
        %11368 = vmatprep.subr.bf16.mxu0 %v8082
        %11369 = vmatpush1.bf16.msra.mxu0 %v8081
        %11370 = vmatprep.subr.bf16.mxu0 %v8090
        %11371 = vmatpush1.bf16.msra.mxu0 %v8089
        %11372 = vmatprep.subr.bf16.mxu0 %v8098
        %11373 = vmatpush1.bf16.msra.mxu0 %v8097
        %11374 = vmatprep.subr.bf16.mxu0 %v8106
        %11375 = vmatpush1.bf16.msra.mxu0 %v8105
        %11376 = vmatprep.subr.bf16.mxu0 %v8114
        %11377 = vmatpush1.bf16.msra.mxu0 %v8113
        %11378 = vmatprep.subr.bf16.mxu0 %v8122
        %11379 = vmatpush1.bf16.msra.mxu0 %v8121
        %11380 = vmatprep.subr.bf16.mxu0 %v8130
        %11381 = vmatpush1.bf16.msra.mxu0 %v8129
        %11382 = vmatprep.subr.bf16.mxu0 %v8138
        %11383 = vmatpush1.bf16.msra.mxu0 %v8137
        %11384 = vmatprep.subr.bf16.mxu0 %v8146
        %11385 = vmatpush1.bf16.msra.mxu0 %v8145
        %11386 = vmatprep.subr.bf16.mxu0 %v8154
        %11387 = vmatpush1.bf16.msra.mxu0 %v8153
        %11388 = vmatprep.mubr.bf16.mxu0 %v460
        %11389 = vmatmul.mubr.bf16.gmra.mrb[0].mxu0 %v459
        %v11390 = vpop.f32.mrb[0].mxu0
        %v11391 = vadd.f32 %v11350, %v11390
        %v11392 = vpop.f32.mrb[0].mxu0
        %v11393 = vadd.f32 %v11352, %v11392
        %v11394 = vpop.f32.mrb[0].mxu0
        %v11395 = vpop.f32.mrb[0].mxu0
        %11396 = vdwg.mxu0
        %11397 = vmatprep.subr.bf16.mxu0 %v8162
        %11398 = vmatpush1.bf16.msra.mxu0 %v8161
        %11399 = vmatprep.subr.bf16.mxu0 %v8170
        %11400 = vmatpush1.bf16.msra.mxu0 %v8169
        %11401 = vmatprep.subr.bf16.mxu0 %v8178
        %11402 = vmatpush1.bf16.msra.mxu0 %v8177
        %11403 = vmatprep.subr.bf16.mxu0 %v8186
        %11404 = vmatpush1.bf16.msra.mxu0 %v8185
        %11405 = vmatprep.subr.bf16.mxu0 %v8194
        %11406 = vmatpush1.bf16.msra.mxu0 %v8193
        %11407 = vmatprep.subr.bf16.mxu0 %v8202
        %11408 = vmatpush1.bf16.msra.mxu0 %v8201
        %11409 = vmatprep.subr.bf16.mxu0 %v8210
        %11410 = vmatpush1.bf16.msra.mxu0 %v8209
        %11411 = vmatprep.subr.bf16.mxu0 %v8218
        %11412 = vmatpush1.bf16.msra.mxu0 %v8217
        %11413 = vmatprep.subr.bf16.mxu0 %v8226
        %11414 = vmatpush1.bf16.msra.mxu0 %v8225
        %11415 = vmatprep.subr.bf16.mxu0 %v8234
        %11416 = vmatpush1.bf16.msra.mxu0 %v8233
        %11417 = vmatprep.subr.bf16.mxu0 %v8242
        %11418 = vmatpush1.bf16.msra.mxu0 %v8241
        %11419 = vmatprep.subr.bf16.mxu0 %v8250
        %11420 = vmatpush1.bf16.msra.mxu0 %v8249
        %11421 = vmatprep.subr.bf16.mxu0 %v8258
        %11422 = vmatpush1.bf16.msra.mxu0 %v8257
        %11423 = vmatprep.subr.bf16.mxu0 %v8266
        %11424 = vmatpush1.bf16.msra.mxu0 %v8265
        %11425 = vmatprep.subr.bf16.mxu0 %v8274
        %11426 = vmatpush1.bf16.msra.mxu0 %v8273
        %11427 = vmatprep.subr.bf16.mxu0 %v8282
        %11428 = vmatpush1.bf16.msra.mxu0 %v8281
        %11429 = vmatprep.mubr.bf16.mxu0 %v462
        %11430 = vmatmul.mubr.bf16.gmra.mrb[0].mxu0 %v461
        %v11431 = vpop.f32.mrb[0].mxu0
        %v11432 = vadd.f32 %v11391, %v11431
        %v11433 = vpop.f32.mrb[0].mxu0
        %v11434 = vadd.f32 %v11393, %v11433
        %v11435 = vpop.f32.mrb[0].mxu0
        %v11436 = vpop.f32.mrb[0].mxu0
        %11437 = vdwg.mxu0
        %11438 = vmatprep.subr.bf16.mxu0 %v8290
        %11439 = vmatpush1.bf16.msra.mxu0 %v8289
        %11440 = vmatprep.subr.bf16.mxu0 %v8298
        %11441 = vmatpush1.bf16.msra.mxu0 %v8297
        %11442 = vmatprep.subr.bf16.mxu0 %v8306
        %11443 = vmatpush1.bf16.msra.mxu0 %v8305
        %11444 = vmatprep.subr.bf16.mxu0 %v8314
        %11445 = vmatpush1.bf16.msra.mxu0 %v8313
        %11446 = vmatprep.subr.bf16.mxu0 %v8322
        %11447 = vmatpush1.bf16.msra.mxu0 %v8321
        %11448 = vmatprep.subr.bf16.mxu0 %v8330
        %11449 = vmatpush1.bf16.msra.mxu0 %v8329
        %11450 = vmatprep.subr.bf16.mxu0 %v8338
        %11451 = vmatpush1.bf16.msra.mxu0 %v8337
        %11452 = vmatprep.subr.bf16.mxu0 %v8346
        %11453 = vmatpush1.bf16.msra.mxu0 %v8345
        %11454 = vmatprep.subr.bf16.mxu0 %v8354
        %11455 = vmatpush1.bf16.msra.mxu0 %v8353
        %11456 = vmatprep.subr.bf16.mxu0 %v8362
        %11457 = vmatpush1.bf16.msra.mxu0 %v8361
        %11458 = vmatprep.subr.bf16.mxu0 %v8370
        %11459 = vmatpush1.bf16.msra.mxu0 %v8369
        %11460 = vmatprep.subr.bf16.mxu0 %v8378
        %11461 = vmatpush1.bf16.msra.mxu0 %v8377
        %11462 = vmatprep.subr.bf16.mxu0 %v8386
        %11463 = vmatpush1.bf16.msra.mxu0 %v8385
        %11464 = vmatprep.subr.bf16.mxu0 %v8394
        %11465 = vmatpush1.bf16.msra.mxu0 %v8393
        %11466 = vmatprep.subr.bf16.mxu0 %v8402
        %11467 = vmatpush1.bf16.msra.mxu0 %v8401
        %11468 = vmatprep.subr.bf16.mxu0 %v8410
        %11469 = vmatpush1.bf16.msra.mxu0 %v8409
        %11470 = vmatprep.mubr.bf16.mxu0 %v464
        %11471 = vmatmul.mubr.bf16.gmra.mrb[0].mxu0 %v463
        %v11472 = vpop.f32.mrb[0].mxu0
        %v11473 = vadd.f32 %v11432, %v11472
        %v11474 = vpop.f32.mrb[0].mxu0
        %v11475 = vadd.f32 %v11434, %v11474
        %v11476 = vpop.f32.mrb[0].mxu0
        %v11477 = vpop.f32.mrb[0].mxu0
        %11478 = vdwg.mxu0
        %11479 = vmatprep.subr.bf16.mxu0 %v8418
        %11480 = vmatpush1.bf16.msra.mxu0 %v8417
        %11481 = vmatprep.subr.bf16.mxu0 %v8426
        %11482 = vmatpush1.bf16.msra.mxu0 %v8425
        %11483 = vmatprep.subr.bf16.mxu0 %v8434
        %11484 = vmatpush1.bf16.msra.mxu0 %v8433
        %11485 = vmatprep.subr.bf16.mxu0 %v8442
        %11486 = vmatpush1.bf16.msra.mxu0 %v8441
        %11487 = vmatprep.subr.bf16.mxu0 %v8450
        %11488 = vmatpush1.bf16.msra.mxu0 %v8449
        %11489 = vmatprep.subr.bf16.mxu0 %v8458
        %11490 = vmatpush1.bf16.msra.mxu0 %v8457
        %11491 = vmatprep.subr.bf16.mxu0 %v8466
        %11492 = vmatpush1.bf16.msra.mxu0 %v8465
        %11493 = vmatprep.subr.bf16.mxu0 %v8474
        %11494 = vmatpush1.bf16.msra.mxu0 %v8473
        %11495 = vmatprep.subr.bf16.mxu0 %v8482
        %11496 = vmatpush1.bf16.msra.mxu0 %v8481
        %11497 = vmatprep.subr.bf16.mxu0 %v8490
        %11498 = vmatpush1.bf16.msra.mxu0 %v8489
        %11499 = vmatprep.subr.bf16.mxu0 %v8498
        %11500 = vmatpush1.bf16.msra.mxu0 %v8497
        %11501 = vmatprep.subr.bf16.mxu0 %v8506
        %11502 = vmatpush1.bf16.msra.mxu0 %v8505
        %11503 = vmatprep.subr.bf16.mxu0 %v8514
        %11504 = vmatpush1.bf16.msra.mxu0 %v8513
        %11505 = vmatprep.subr.bf16.mxu0 %v8522
        %11506 = vmatpush1.bf16.msra.mxu0 %v8521
        %11507 = vmatprep.subr.bf16.mxu0 %v8530
        %11508 = vmatpush1.bf16.msra.mxu0 %v8529
        %11509 = vmatprep.subr.bf16.mxu0 %v8538
        %11510 = vmatpush1.bf16.msra.mxu0 %v8537
        %11511 = vmatprep.mubr.bf16.mxu0 %v466
        %11512 = vmatmul.mubr.bf16.gmra.mrb[0].mxu0 %v465
        %v11513 = vpop.f32.mrb[0].mxu0
        %v11514 = vadd.f32 %v11473, %v11513
        %v11515 = vpop.f32.mrb[0].mxu0
        %v11516 = vadd.f32 %v11475, %v11515
        %v11517 = vpop.f32.mrb[0].mxu0
        %v11518 = vpop.f32.mrb[0].mxu0
        %11519 = vdwg.mxu0
        %11520 = vmatprep.subr.bf16.mxu0 %v8546
        %11521 = vmatpush1.bf16.msra.mxu0 %v8545
        %11522 = vmatprep.subr.bf16.mxu0 %v8554
        %11523 = vmatpush1.bf16.msra.mxu0 %v8553
        %11524 = vmatprep.subr.bf16.mxu0 %v8562
        %11525 = vmatpush1.bf16.msra.mxu0 %v8561
        %11526 = vmatprep.subr.bf16.mxu0 %v8570
        %11527 = vmatpush1.bf16.msra.mxu0 %v8569
        %11528 = vmatprep.subr.bf16.mxu0 %v8578
        %11529 = vmatpush1.bf16.msra.mxu0 %v8577
        %11530 = vmatprep.subr.bf16.mxu0 %v8586
        %11531 = vmatpush1.bf16.msra.mxu0 %v8585
        %11532 = vmatprep.subr.bf16.mxu0 %v8594
        %11533 = vmatpush1.bf16.msra.mxu0 %v8593
        %11534 = vmatprep.subr.bf16.mxu0 %v8602
        %11535 = vmatpush1.bf16.msra.mxu0 %v8601
        %11536 = vmatprep.subr.bf16.mxu0 %v8610
        %11537 = vmatpush1.bf16.msra.mxu0 %v8609
        %11538 = vmatprep.subr.bf16.mxu0 %v8618
        %11539 = vmatpush1.bf16.msra.mxu0 %v8617
        %11540 = vmatprep.subr.bf16.mxu0 %v8626
        %11541 = vmatpush1.bf16.msra.mxu0 %v8625
        %11542 = vmatprep.subr.bf16.mxu0 %v8634
        %11543 = vmatpush1.bf16.msra.mxu0 %v8633
        %11544 = vmatprep.subr.bf16.mxu0 %v8642
        %11545 = vmatpush1.bf16.msra.mxu0 %v8641
        %11546 = vmatprep.subr.bf16.mxu0 %v8650
        %11547 = vmatpush1.bf16.msra.mxu0 %v8649
        %11548 = vmatprep.subr.bf16.mxu0 %v8658
        %11549 = vmatpush1.bf16.msra.mxu0 %v8657
        %11550 = vmatprep.subr.bf16.mxu0 %v8666
        %11551 = vmatpush1.bf16.msra.mxu0 %v8665
        %11552 = vmatprep.mubr.bf16.mxu0 %v468
        %11553 = vmatmul.mubr.bf16.gmra.mrb[0].mxu0 %v467
        %v11554 = vpop.f32.mrb[0].mxu0
        %v11555 = vadd.f32 %v11514, %v11554
        %v11556 = vpop.f32.mrb[0].mxu0
        %v11557 = vadd.f32 %v11516, %v11556
        %v11558 = vpop.f32.mrb[0].mxu0
        %v11559 = vpop.f32.mrb[0].mxu0
        %11560 = vdwg.mxu0
        %11561 = vmatprep.subr.bf16.mxu0 %v8674
        %11562 = vmatpush1.bf16.msra.mxu0 %v8673
        %11563 = vmatprep.subr.bf16.mxu0 %v8682
        %11564 = vmatpush1.bf16.msra.mxu0 %v8681
        %11565 = vmatprep.subr.bf16.mxu0 %v8690
        %11566 = vmatpush1.bf16.msra.mxu0 %v8689
        %11567 = vmatprep.subr.bf16.mxu0 %v8698
        %11568 = vmatpush1.bf16.msra.mxu0 %v8697
        %11569 = vmatprep.subr.bf16.mxu0 %v8706
        %11570 = vmatpush1.bf16.msra.mxu0 %v8705
        %11571 = vmatprep.subr.bf16.mxu0 %v8714
        %11572 = vmatpush1.bf16.msra.mxu0 %v8713
        %11573 = vmatprep.subr.bf16.mxu0 %v8722
        %11574 = vmatpush1.bf16.msra.mxu0 %v8721
        %11575 = vmatprep.subr.bf16.mxu0 %v8730
        %11576 = vmatpush1.bf16.msra.mxu0 %v8729
        %11577 = vmatprep.subr.bf16.mxu0 %v8738
        %11578 = vmatpush1.bf16.msra.mxu0 %v8737
        %11579 = vmatprep.subr.bf16.mxu0 %v8746
        %11580 = vmatpush1.bf16.msra.mxu0 %v8745
        %11581 = vmatprep.subr.bf16.mxu0 %v8754
        %11582 = vmatpush1.bf16.msra.mxu0 %v8753
        %11583 = vmatprep.subr.bf16.mxu0 %v8762
        %11584 = vmatpush1.bf16.msra.mxu0 %v8761
        %11585 = vmatprep.subr.bf16.mxu0 %v8770
        %11586 = vmatpush1.bf16.msra.mxu0 %v8769
        %11587 = vmatprep.subr.bf16.mxu0 %v8778
        %11588 = vmatpush1.bf16.msra.mxu0 %v8777
        %11589 = vmatprep.subr.bf16.mxu0 %v8786
        %11590 = vmatpush1.bf16.msra.mxu0 %v8785
        %11591 = vmatprep.subr.bf16.mxu0 %v8794
        %11592 = vmatpush1.bf16.msra.mxu0 %v8793
        %11593 = vmatprep.mubr.bf16.mxu0 %v470
        %11594 = vmatmul.mubr.bf16.gmra.mrb[0].mxu0 %v469
        %v11595 = vpop.f32.mrb[0].mxu0
        %v11596 = vadd.f32 %v11555, %v11595
        %v11597 = vpop.f32.mrb[0].mxu0
        %v11598 = vadd.f32 %v11557, %v11597
        %v11599 = vpop.f32.mrb[0].mxu0
        %v11600 = vpop.f32.mrb[0].mxu0
        %11601 = vdwg.mxu0
        %11602 = vmatprep.subr.bf16.mxu0 %v8802
        %11603 = vmatpush1.bf16.msra.mxu0 %v8801
        %11604 = vmatprep.subr.bf16.mxu0 %v8810
        %11605 = vmatpush1.bf16.msra.mxu0 %v8809
        %11606 = vmatprep.subr.bf16.mxu0 %v8818
        %11607 = vmatpush1.bf16.msra.mxu0 %v8817
        %11608 = vmatprep.subr.bf16.mxu0 %v8826
        %11609 = vmatpush1.bf16.msra.mxu0 %v8825
        %11610 = vmatprep.subr.bf16.mxu0 %v8834
        %11611 = vmatpush1.bf16.msra.mxu0 %v8833
        %11612 = vmatprep.subr.bf16.mxu0 %v8842
        %11613 = vmatpush1.bf16.msra.mxu0 %v8841
        %11614 = vmatprep.subr.bf16.mxu0 %v8850
        %11615 = vmatpush1.bf16.msra.mxu0 %v8849
        %11616 = vmatprep.subr.bf16.mxu0 %v8858
        %11617 = vmatpush1.bf16.msra.mxu0 %v8857
        %11618 = vmatprep.subr.bf16.mxu0 %v8866
        %11619 = vmatpush1.bf16.msra.mxu0 %v8865
        %11620 = vmatprep.subr.bf16.mxu0 %v8874
        %11621 = vmatpush1.bf16.msra.mxu0 %v8873
        %11622 = vmatprep.subr.bf16.mxu0 %v8882
        %11623 = vmatpush1.bf16.msra.mxu0 %v8881
        %11624 = vmatprep.subr.bf16.mxu0 %v8890
        %11625 = vmatpush1.bf16.msra.mxu0 %v8889
        %11626 = vmatprep.subr.bf16.mxu0 %v8898
        %11627 = vmatpush1.bf16.msra.mxu0 %v8897
        %11628 = vmatprep.subr.bf16.mxu0 %v8906
        %11629 = vmatpush1.bf16.msra.mxu0 %v8905
        %11630 = vmatprep.subr.bf16.mxu0 %v8914
        %11631 = vmatpush1.bf16.msra.mxu0 %v8913
        %11632 = vmatprep.subr.bf16.mxu0 %v8922
        %11633 = vmatpush1.bf16.msra.mxu0 %v8921
        %11634 = vmatprep.mubr.bf16.mxu0 %v472
        %11635 = vmatmul.mubr.bf16.gmra.mrb[0].mxu0 %v471
        %v11636 = vpop.f32.mrb[0].mxu0
        %v11637 = vadd.f32 %v11596, %v11636
        %v11638 = vpop.f32.mrb[0].mxu0
        %v11639 = vadd.f32 %v11598, %v11638
        %v11640 = vpop.f32.mrb[0].mxu0
        %v11641 = vpop.f32.mrb[0].mxu0
        %11642 = vdwg.mxu0
        %11643 = vmatprep.subr.bf16.mxu0 %v8930
        %11644 = vmatpush1.bf16.msra.mxu0 %v8929
        %11645 = vmatprep.subr.bf16.mxu0 %v8938
        %11646 = vmatpush1.bf16.msra.mxu0 %v8937
        %11647 = vmatprep.subr.bf16.mxu0 %v8946
        %11648 = vmatpush1.bf16.msra.mxu0 %v8945
        %11649 = vmatprep.subr.bf16.mxu0 %v8954
        %11650 = vmatpush1.bf16.msra.mxu0 %v8953
        %11651 = vmatprep.subr.bf16.mxu0 %v8962
        %11652 = vmatpush1.bf16.msra.mxu0 %v8961
        %11653 = vmatprep.subr.bf16.mxu0 %v8970
        %11654 = vmatpush1.bf16.msra.mxu0 %v8969
        %11655 = vmatprep.subr.bf16.mxu0 %v8978
        %11656 = vmatpush1.bf16.msra.mxu0 %v8977
        %11657 = vmatprep.subr.bf16.mxu0 %v8986
        %11658 = vmatpush1.bf16.msra.mxu0 %v8985
        %11659 = vmatprep.subr.bf16.mxu0 %v8994
        %11660 = vmatpush1.bf16.msra.mxu0 %v8993
        %11661 = vmatprep.subr.bf16.mxu0 %v9002
        %11662 = vmatpush1.bf16.msra.mxu0 %v9001
        %11663 = vmatprep.subr.bf16.mxu0 %v9010
        %11664 = vmatpush1.bf16.msra.mxu0 %v9009
        %11665 = vmatprep.subr.bf16.mxu0 %v9018
        %11666 = vmatpush1.bf16.msra.mxu0 %v9017
        %11667 = vmatprep.subr.bf16.mxu0 %v9026
        %11668 = vmatpush1.bf16.msra.mxu0 %v9025
        %11669 = vmatprep.subr.bf16.mxu0 %v9034
        %11670 = vmatpush1.bf16.msra.mxu0 %v9033
        %11671 = vmatprep.subr.bf16.mxu0 %v9042
        %11672 = vmatpush1.bf16.msra.mxu0 %v9041
        %11673 = vmatprep.subr.bf16.mxu0 %v9050
        %11674 = vmatpush1.bf16.msra.mxu0 %v9049
        %11675 = vmatprep.mubr.bf16.mxu0 %v474
        %11676 = vmatmul.mubr.bf16.gmra.mrb[0].mxu0 %v473
        %v11677 = vpop.f32.mrb[0].mxu0
        %v11678 = vadd.f32 %v11637, %v11677
        %v11679 = vpop.f32.mrb[0].mxu0
        %v11680 = vadd.f32 %v11639, %v11679
        %v11681 = vpop.f32.mrb[0].mxu0
        %v11682 = vpop.f32.mrb[0].mxu0
        %11683 = vdwg.mxu0
        %11684 = vmatprep.subr.bf16.mxu0 %v9058
        %11685 = vmatpush1.bf16.msra.mxu0 %v9057
        %11686 = vmatprep.subr.bf16.mxu0 %v9066
        %11687 = vmatpush1.bf16.msra.mxu0 %v9065
        %11688 = vmatprep.subr.bf16.mxu0 %v9074
        %11689 = vmatpush1.bf16.msra.mxu0 %v9073
        %11690 = vmatprep.subr.bf16.mxu0 %v9082
        %11691 = vmatpush1.bf16.msra.mxu0 %v9081
        %11692 = vmatprep.subr.bf16.mxu0 %v9090
        %11693 = vmatpush1.bf16.msra.mxu0 %v9089
        %11694 = vmatprep.subr.bf16.mxu0 %v9098
        %11695 = vmatpush1.bf16.msra.mxu0 %v9097
        %11696 = vmatprep.subr.bf16.mxu0 %v9106
        %11697 = vmatpush1.bf16.msra.mxu0 %v9105
        %11698 = vmatprep.subr.bf16.mxu0 %v9114
        %11699 = vmatpush1.bf16.msra.mxu0 %v9113
        %11700 = vmatprep.subr.bf16.mxu0 %v9122
        %11701 = vmatpush1.bf16.msra.mxu0 %v9121
        %11702 = vmatprep.subr.bf16.mxu0 %v9130
        %11703 = vmatpush1.bf16.msra.mxu0 %v9129
        %11704 = vmatprep.subr.bf16.mxu0 %v9138
        %11705 = vmatpush1.bf16.msra.mxu0 %v9137
        %11706 = vmatprep.subr.bf16.mxu0 %v9146
        %11707 = vmatpush1.bf16.msra.mxu0 %v9145
        %11708 = vmatprep.subr.bf16.mxu0 %v9154
        %11709 = vmatpush1.bf16.msra.mxu0 %v9153
        %11710 = vmatprep.subr.bf16.mxu0 %v9162
        %11711 = vmatpush1.bf16.msra.mxu0 %v9161
        %11712 = vmatprep.subr.bf16.mxu0 %v9170
        %11713 = vmatpush1.bf16.msra.mxu0 %v9169
        %11714 = vmatprep.subr.bf16.mxu0 %v9178
        %11715 = vmatpush1.bf16.msra.mxu0 %v9177
        %11716 = vmatprep.mubr.bf16.mxu0 %v476
        %11717 = vmatmul.mubr.bf16.gmra.mrb[0].mxu0 %v475
        %v11718 = vpop.f32.mrb[0].mxu0
        %v11719 = vadd.f32 %v11678, %v11718
        %v11720 = vpop.f32.mrb[0].mxu0
        %v11721 = vadd.f32 %v11680, %v11720
        %v11722 = vpop.f32.mrb[0].mxu0
        %v11723 = vpop.f32.mrb[0].mxu0
        %11724 = vdwg.mxu0
        %11725 = vmatprep.subr.bf16.mxu0 %v9186
        %11726 = vmatpush1.bf16.msra.mxu0 %v9185
        %11727 = vmatprep.subr.bf16.mxu0 %v9194
        %11728 = vmatpush1.bf16.msra.mxu0 %v9193
        %11729 = vmatprep.subr.bf16.mxu0 %v9202
        %11730 = vmatpush1.bf16.msra.mxu0 %v9201
        %11731 = vmatprep.subr.bf16.mxu0 %v9210
        %11732 = vmatpush1.bf16.msra.mxu0 %v9209
        %11733 = vmatprep.subr.bf16.mxu0 %v9218
        %11734 = vmatpush1.bf16.msra.mxu0 %v9217
        %11735 = vmatprep.subr.bf16.mxu0 %v9226
        %11736 = vmatpush1.bf16.msra.mxu0 %v9225
        %11737 = vmatprep.subr.bf16.mxu0 %v9234
        %11738 = vmatpush1.bf16.msra.mxu0 %v9233
        %11739 = vmatprep.subr.bf16.mxu0 %v9242
        %11740 = vmatpush1.bf16.msra.mxu0 %v9241
        %11741 = vmatprep.subr.bf16.mxu0 %v9250
        %11742 = vmatpush1.bf16.msra.mxu0 %v9249
        %11743 = vmatprep.subr.bf16.mxu0 %v9258
        %11744 = vmatpush1.bf16.msra.mxu0 %v9257
        %11745 = vmatprep.subr.bf16.mxu0 %v9266
        %11746 = vmatpush1.bf16.msra.mxu0 %v9265
        %11747 = vmatprep.subr.bf16.mxu0 %v9274
        %11748 = vmatpush1.bf16.msra.mxu0 %v9273
        %11749 = vmatprep.subr.bf16.mxu0 %v9282
        %11750 = vmatpush1.bf16.msra.mxu0 %v9281
        %11751 = vmatprep.subr.bf16.mxu0 %v9290
        %11752 = vmatpush1.bf16.msra.mxu0 %v9289
        %11753 = vmatprep.subr.bf16.mxu0 %v9298
        %11754 = vmatpush1.bf16.msra.mxu0 %v9297
        %11755 = vmatprep.subr.bf16.mxu0 %v9306
        %11756 = vmatpush1.bf16.msra.mxu0 %v9305
        %11757 = vmatprep.mubr.bf16.mxu0 %v478
        %11758 = vmatmul.mubr.bf16.gmra.mrb[0].mxu0 %v477
        %v11759 = vpop.f32.mrb[0].mxu0
        %v11760 = vadd.f32 %v11719, %v11759
        %v11761 = vpop.f32.mrb[0].mxu0
        %v11762 = vadd.f32 %v11721, %v11761
        %v11763 = vpop.f32.mrb[0].mxu0
        %v11764 = vpop.f32.mrb[0].mxu0
        %11765 = vdwg.mxu0
        %11766 = vmatprep.subr.bf16.mxu0 %v9314
        %11767 = vmatpush1.bf16.msra.mxu0 %v9313
        %11768 = vmatprep.subr.bf16.mxu0 %v9322
        %11769 = vmatpush1.bf16.msra.mxu0 %v9321
        %11770 = vmatprep.subr.bf16.mxu0 %v9330
        %11771 = vmatpush1.bf16.msra.mxu0 %v9329
        %11772 = vmatprep.subr.bf16.mxu0 %v9338
        %11773 = vmatpush1.bf16.msra.mxu0 %v9337
        %11774 = vmatprep.subr.bf16.mxu0 %v9346
        %11775 = vmatpush1.bf16.msra.mxu0 %v9345
        %11776 = vmatprep.subr.bf16.mxu0 %v9354
        %11777 = vmatpush1.bf16.msra.mxu0 %v9353
        %11778 = vmatprep.subr.bf16.mxu0 %v9362
        %11779 = vmatpush1.bf16.msra.mxu0 %v9361
        %11780 = vmatprep.subr.bf16.mxu0 %v9370
        %11781 = vmatpush1.bf16.msra.mxu0 %v9369
        %11782 = vmatprep.subr.bf16.mxu0 %v9378
        %11783 = vmatpush1.bf16.msra.mxu0 %v9377
        %11784 = vmatprep.subr.bf16.mxu0 %v9386
        %11785 = vmatpush1.bf16.msra.mxu0 %v9385
        %11786 = vmatprep.subr.bf16.mxu0 %v9394
        %11787 = vmatpush1.bf16.msra.mxu0 %v9393
        %11788 = vmatprep.subr.bf16.mxu0 %v9402
        %11789 = vmatpush1.bf16.msra.mxu0 %v9401
        %11790 = vmatprep.subr.bf16.mxu0 %v9410
        %11791 = vmatpush1.bf16.msra.mxu0 %v9409
        %11792 = vmatprep.subr.bf16.mxu0 %v9418
        %11793 = vmatpush1.bf16.msra.mxu0 %v9417
        %11794 = vmatprep.subr.bf16.mxu0 %v9426
        %11795 = vmatpush1.bf16.msra.mxu0 %v9425
        %11796 = vmatprep.subr.bf16.mxu0 %v9434
        %11797 = vmatpush1.bf16.msra.mxu0 %v9433
        %11798 = vmatprep.mubr.bf16.mxu0 %v480
        %11799 = vmatmul.mubr.bf16.gmra.mrb[0].mxu0 %v479
        %v11800 = vpop.f32.mrb[0].mxu0
        %v11801 = vadd.f32 %v11760, %v11800
        %v11802 = vpop.f32.mrb[0].mxu0
        %v11803 = vadd.f32 %v11762, %v11802
        %v11804 = vpop.f32.mrb[0].mxu0
        %v11805 = vpop.f32.mrb[0].mxu0
        %11806 = vdwg.mxu0
        %11807 = vmatprep.subr.bf16.mxu0 %v7652
        %11808 = vmatpush1.bf16.msra.mxu0 %v7651
        %11809 = vmatprep.subr.bf16.mxu0 %v7660
        %11810 = vmatpush1.bf16.msra.mxu0 %v7659
        %11811 = vmatprep.subr.bf16.mxu0 %v7668
        %11812 = vmatpush1.bf16.msra.mxu0 %v7667
        %11813 = vmatprep.subr.bf16.mxu0 %v7676
        %11814 = vmatpush1.bf16.msra.mxu0 %v7675
        %11815 = vmatprep.subr.bf16.mxu0 %v7684
        %11816 = vmatpush1.bf16.msra.mxu0 %v7683
        %11817 = vmatprep.subr.bf16.mxu0 %v7692
        %11818 = vmatpush1.bf16.msra.mxu0 %v7691
        %11819 = vmatprep.subr.bf16.mxu0 %v7700
        %11820 = vmatpush1.bf16.msra.mxu0 %v7699
        %11821 = vmatprep.subr.bf16.mxu0 %v7708
        %11822 = vmatpush1.bf16.msra.mxu0 %v7707
        %11823 = vmatprep.subr.bf16.mxu0 %v7716
        %11824 = vmatpush1.bf16.msra.mxu0 %v7715
        %11825 = vmatprep.subr.bf16.mxu0 %v7724
        %11826 = vmatpush1.bf16.msra.mxu0 %v7723
        %11827 = vmatprep.subr.bf16.mxu0 %v7732
        %11828 = vmatpush1.bf16.msra.mxu0 %v7731
        %11829 = vmatprep.subr.bf16.mxu0 %v7740
        %11830 = vmatpush1.bf16.msra.mxu0 %v7739
        %11831 = vmatprep.subr.bf16.mxu0 %v7748
        %11832 = vmatpush1.bf16.msra.mxu0 %v7747
        %11833 = vmatprep.subr.bf16.mxu0 %v7756
        %11834 = vmatpush1.bf16.msra.mxu0 %v7755
        %11835 = vmatprep.subr.bf16.mxu0 %v7764
        %11836 = vmatpush1.bf16.msra.mxu0 %v7763
        %11837 = vmatprep.subr.bf16.mxu0 %v7772
        %11838 = vmatpush1.bf16.msra.mxu0 %v7771
        %11839 = vmatprep.mubr.bf16.mxu0 %v454
        %11840 = vmatmul.mubr.bf16.gmra.mrb[0].mxu0 %v453
        %v11841 = vpop.f32.mrb[0].mxu0
        %v11842 = vadd.f32 0.0, %v11841
        %v11843 = vpop.f32.mrb[0].mxu0
        %v11844 = vadd.f32 0.0, %v11843
        %v11845 = vpop.f32.mrb[0].mxu0
        %v11846 = vpop.f32.mrb[0].mxu0
        %11847 = vdwg.mxu0
        %11848 = vmatprep.subr.bf16.mxu0 %v7780
        %11849 = vmatpush1.bf16.msra.mxu0 %v7779
        %11850 = vmatprep.subr.bf16.mxu0 %v7788
        %11851 = vmatpush1.bf16.msra.mxu0 %v7787
        %11852 = vmatprep.subr.bf16.mxu0 %v7796
        %11853 = vmatpush1.bf16.msra.mxu0 %v7795
        %11854 = vmatprep.subr.bf16.mxu0 %v7804
        %11855 = vmatpush1.bf16.msra.mxu0 %v7803
        %11856 = vmatprep.subr.bf16.mxu0 %v7812
        %11857 = vmatpush1.bf16.msra.mxu0 %v7811
        %11858 = vmatprep.subr.bf16.mxu0 %v7820
        %11859 = vmatpush1.bf16.msra.mxu0 %v7819
        %11860 = vmatprep.subr.bf16.mxu0 %v7828
        %11861 = vmatpush1.bf16.msra.mxu0 %v7827
        %11862 = vmatprep.subr.bf16.mxu0 %v7836
        %11863 = vmatpush1.bf16.msra.mxu0 %v7835
        %11864 = vmatprep.subr.bf16.mxu0 %v7844
        %11865 = vmatpush1.bf16.msra.mxu0 %v7843
        %11866 = vmatprep.subr.bf16.mxu0 %v7852
        %11867 = vmatpush1.bf16.msra.mxu0 %v7851
        %11868 = vmatprep.subr.bf16.mxu0 %v7860
        %11869 = vmatpush1.bf16.msra.mxu0 %v7859
        %11870 = vmatprep.subr.bf16.mxu0 %v7868
        %11871 = vmatpush1.bf16.msra.mxu0 %v7867
        %11872 = vmatprep.subr.bf16.mxu0 %v7876
        %11873 = vmatpush1.bf16.msra.mxu0 %v7875
        %11874 = vmatprep.subr.bf16.mxu0 %v7884
        %11875 = vmatpush1.bf16.msra.mxu0 %v7883
        %11876 = vmatprep.subr.bf16.mxu0 %v7892
        %11877 = vmatpush1.bf16.msra.mxu0 %v7891
        %11878 = vmatprep.subr.bf16.mxu0 %v7900
        %11879 = vmatpush1.bf16.msra.mxu0 %v7899
        %11880 = vmatprep.mubr.bf16.mxu0 %v456
        %11881 = vmatmul.mubr.bf16.gmra.mrb[0].mxu0 %v455
        %v11882 = vpop.f32.mrb[0].mxu0
        %v11883 = vadd.f32 %v11842, %v11882
        %v11884 = vpop.f32.mrb[0].mxu0
        %v11885 = vadd.f32 %v11844, %v11884
        %v11886 = vpop.f32.mrb[0].mxu0
        %v11887 = vpop.f32.mrb[0].mxu0
        %11888 = vdwg.mxu0
        %11889 = vmatprep.subr.bf16.mxu0 %v7908
        %11890 = vmatpush1.bf16.msra.mxu0 %v7907
        %11891 = vmatprep.subr.bf16.mxu0 %v7916
        %11892 = vmatpush1.bf16.msra.mxu0 %v7915
        %11893 = vmatprep.subr.bf16.mxu0 %v7924
        %11894 = vmatpush1.bf16.msra.mxu0 %v7923
        %11895 = vmatprep.subr.bf16.mxu0 %v7932
        %11896 = vmatpush1.bf16.msra.mxu0 %v7931
        %11897 = vmatprep.subr.bf16.mxu0 %v7940
        %11898 = vmatpush1.bf16.msra.mxu0 %v7939
        %11899 = vmatprep.subr.bf16.mxu0 %v7948
        %11900 = vmatpush1.bf16.msra.mxu0 %v7947
        %11901 = vmatprep.subr.bf16.mxu0 %v7956
        %11902 = vmatpush1.bf16.msra.mxu0 %v7955
        %11903 = vmatprep.subr.bf16.mxu0 %v7964
        %11904 = vmatpush1.bf16.msra.mxu0 %v7963
        %11905 = vmatprep.subr.bf16.mxu0 %v7972
        %11906 = vmatpush1.bf16.msra.mxu0 %v7971
        %11907 = vmatprep.subr.bf16.mxu0 %v7980
        %11908 = vmatpush1.bf16.msra.mxu0 %v7979
        %11909 = vmatprep.subr.bf16.mxu0 %v7988
        %11910 = vmatpush1.bf16.msra.mxu0 %v7987
        %11911 = vmatprep.subr.bf16.mxu0 %v7996
        %11912 = vmatpush1.bf16.msra.mxu0 %v7995
        %11913 = vmatprep.subr.bf16.mxu0 %v8004
        %11914 = vmatpush1.bf16.msra.mxu0 %v8003
        %11915 = vmatprep.subr.bf16.mxu0 %v8012
        %11916 = vmatpush1.bf16.msra.mxu0 %v8011
        %11917 = vmatprep.subr.bf16.mxu0 %v8020
        %11918 = vmatpush1.bf16.msra.mxu0 %v8019
        %11919 = vmatprep.subr.bf16.mxu0 %v8028
        %11920 = vmatpush1.bf16.msra.mxu0 %v8027
        %11921 = vmatprep.mubr.bf16.mxu0 %v458
        %11922 = vmatmul.mubr.bf16.gmra.mrb[0].mxu0 %v457
        %v11923 = vpop.f32.mrb[0].mxu0
        %v11924 = vadd.f32 %v11883, %v11923
        %v11925 = vpop.f32.mrb[0].mxu0
        %v11926 = vadd.f32 %v11885, %v11925
        %v11927 = vpop.f32.mrb[0].mxu0
        %v11928 = vpop.f32.mrb[0].mxu0
        %11929 = vdwg.mxu0
        %11930 = vmatprep.subr.bf16.mxu0 %v8036
        %11931 = vmatpush1.bf16.msra.mxu0 %v8035
        %11932 = vmatprep.subr.bf16.mxu0 %v8044
        %11933 = vmatpush1.bf16.msra.mxu0 %v8043
        %11934 = vmatprep.subr.bf16.mxu0 %v8052
        %11935 = vmatpush1.bf16.msra.mxu0 %v8051
        %11936 = vmatprep.subr.bf16.mxu0 %v8060
        %11937 = vmatpush1.bf16.msra.mxu0 %v8059
        %11938 = vmatprep.subr.bf16.mxu0 %v8068
        %11939 = vmatpush1.bf16.msra.mxu0 %v8067
        %11940 = vmatprep.subr.bf16.mxu0 %v8076
        %11941 = vmatpush1.bf16.msra.mxu0 %v8075
        %11942 = vmatprep.subr.bf16.mxu0 %v8084
        %11943 = vmatpush1.bf16.msra.mxu0 %v8083
        %11944 = vmatprep.subr.bf16.mxu0 %v8092
        %11945 = vmatpush1.bf16.msra.mxu0 %v8091
        %11946 = vmatprep.subr.bf16.mxu0 %v8100
        %11947 = vmatpush1.bf16.msra.mxu0 %v8099
        %11948 = vmatprep.subr.bf16.mxu0 %v8108
        %11949 = vmatpush1.bf16.msra.mxu0 %v8107
        %11950 = vmatprep.subr.bf16.mxu0 %v8116
        %11951 = vmatpush1.bf16.msra.mxu0 %v8115
        %11952 = vmatprep.subr.bf16.mxu0 %v8124
        %11953 = vmatpush1.bf16.msra.mxu0 %v8123
        %11954 = vmatprep.subr.bf16.mxu0 %v8132
        %11955 = vmatpush1.bf16.msra.mxu0 %v8131
        %11956 = vmatprep.subr.bf16.mxu0 %v8140
        %11957 = vmatpush1.bf16.msra.mxu0 %v8139
        %11958 = vmatprep.subr.bf16.mxu0 %v8148
        %11959 = vmatpush1.bf16.msra.mxu0 %v8147
        %11960 = vmatprep.subr.bf16.mxu0 %v8156
        %11961 = vmatpush1.bf16.msra.mxu0 %v8155
        %11962 = vmatprep.mubr.bf16.mxu0 %v460
        %11963 = vmatmul.mubr.bf16.gmra.mrb[0].mxu0 %v459
        %v11964 = vpop.f32.mrb[0].mxu0
        %v11965 = vadd.f32 %v11924, %v11964
        %v11966 = vpop.f32.mrb[0].mxu0
        %v11967 = vadd.f32 %v11926, %v11966
        %v11968 = vpop.f32.mrb[0].mxu0
        %v11969 = vpop.f32.mrb[0].mxu0
        %11970 = vdwg.mxu0
        %11971 = vmatprep.subr.bf16.mxu0 %v8164
        %11972 = vmatpush1.bf16.msra.mxu0 %v8163
        %11973 = vmatprep.subr.bf16.mxu0 %v8172
        %11974 = vmatpush1.bf16.msra.mxu0 %v8171
        %11975 = vmatprep.subr.bf16.mxu0 %v8180
        %11976 = vmatpush1.bf16.msra.mxu0 %v8179
        %11977 = vmatprep.subr.bf16.mxu0 %v8188
        %11978 = vmatpush1.bf16.msra.mxu0 %v8187
        %11979 = vmatprep.subr.bf16.mxu0 %v8196
        %11980 = vmatpush1.bf16.msra.mxu0 %v8195
        %11981 = vmatprep.subr.bf16.mxu0 %v8204
        %11982 = vmatpush1.bf16.msra.mxu0 %v8203
        %11983 = vmatprep.subr.bf16.mxu0 %v8212
        %11984 = vmatpush1.bf16.msra.mxu0 %v8211
        %11985 = vmatprep.subr.bf16.mxu0 %v8220
        %11986 = vmatpush1.bf16.msra.mxu0 %v8219
        %11987 = vmatprep.subr.bf16.mxu0 %v8228
        %11988 = vmatpush1.bf16.msra.mxu0 %v8227
        %11989 = vmatprep.subr.bf16.mxu0 %v8236
        %11990 = vmatpush1.bf16.msra.mxu0 %v8235
        %11991 = vmatprep.subr.bf16.mxu0 %v8244
        %11992 = vmatpush1.bf16.msra.mxu0 %v8243
        %11993 = vmatprep.subr.bf16.mxu0 %v8252
        %11994 = vmatpush1.bf16.msra.mxu0 %v8251
        %11995 = vmatprep.subr.bf16.mxu0 %v8260
        %11996 = vmatpush1.bf16.msra.mxu0 %v8259
        %11997 = vmatprep.subr.bf16.mxu0 %v8268
        %11998 = vmatpush1.bf16.msra.mxu0 %v8267
        %11999 = vmatprep.subr.bf16.mxu0 %v8276
        %12000 = vmatpush1.bf16.msra.mxu0 %v8275
        %12001 = vmatprep.subr.bf16.mxu0 %v8284
        %12002 = vmatpush1.bf16.msra.mxu0 %v8283
        %12003 = vmatprep.mubr.bf16.mxu0 %v462
        %12004 = vmatmul.mubr.bf16.gmra.mrb[0].mxu0 %v461
        %v12005 = vpop.f32.mrb[0].mxu0
        %v12006 = vadd.f32 %v11965, %v12005
        %v12007 = vpop.f32.mrb[0].mxu0
        %v12008 = vadd.f32 %v11967, %v12007
        %v12009 = vpop.f32.mrb[0].mxu0
        %v12010 = vpop.f32.mrb[0].mxu0
        %12011 = vdwg.mxu0
        %12012 = vmatprep.subr.bf16.mxu0 %v8292
        %12013 = vmatpush1.bf16.msra.mxu0 %v8291
        %12014 = vmatprep.subr.bf16.mxu0 %v8300
        %12015 = vmatpush1.bf16.msra.mxu0 %v8299
        %12016 = vmatprep.subr.bf16.mxu0 %v8308
        %12017 = vmatpush1.bf16.msra.mxu0 %v8307
        %12018 = vmatprep.subr.bf16.mxu0 %v8316
        %12019 = vmatpush1.bf16.msra.mxu0 %v8315
        %12020 = vmatprep.subr.bf16.mxu0 %v8324
        %12021 = vmatpush1.bf16.msra.mxu0 %v8323
        %12022 = vmatprep.subr.bf16.mxu0 %v8332
        %12023 = vmatpush1.bf16.msra.mxu0 %v8331
        %12024 = vmatprep.subr.bf16.mxu0 %v8340
        %12025 = vmatpush1.bf16.msra.mxu0 %v8339
        %12026 = vmatprep.subr.bf16.mxu0 %v8348
        %12027 = vmatpush1.bf16.msra.mxu0 %v8347
        %12028 = vmatprep.subr.bf16.mxu0 %v8356
        %12029 = vmatpush1.bf16.msra.mxu0 %v8355
        %12030 = vmatprep.subr.bf16.mxu0 %v8364
        %12031 = vmatpush1.bf16.msra.mxu0 %v8363
        %12032 = vmatprep.subr.bf16.mxu0 %v8372
        %12033 = vmatpush1.bf16.msra.mxu0 %v8371
        %12034 = vmatprep.subr.bf16.mxu0 %v8380
        %12035 = vmatpush1.bf16.msra.mxu0 %v8379
        %12036 = vmatprep.subr.bf16.mxu0 %v8388
        %12037 = vmatpush1.bf16.msra.mxu0 %v8387
        %12038 = vmatprep.subr.bf16.mxu0 %v8396
        %12039 = vmatpush1.bf16.msra.mxu0 %v8395
        %12040 = vmatprep.subr.bf16.mxu0 %v8404
        %12041 = vmatpush1.bf16.msra.mxu0 %v8403
        %12042 = vmatprep.subr.bf16.mxu0 %v8412
        %12043 = vmatpush1.bf16.msra.mxu0 %v8411
        %12044 = vmatprep.mubr.bf16.mxu0 %v464
        %12045 = vmatmul.mubr.bf16.gmra.mrb[0].mxu0 %v463
        %v12046 = vpop.f32.mrb[0].mxu0
        %v12047 = vadd.f32 %v12006, %v12046
        %v12048 = vpop.f32.mrb[0].mxu0
        %v12049 = vadd.f32 %v12008, %v12048
        %v12050 = vpop.f32.mrb[0].mxu0
        %v12051 = vpop.f32.mrb[0].mxu0
        %12052 = vdwg.mxu0
        %12053 = vmatprep.subr.bf16.mxu0 %v8420
        %12054 = vmatpush1.bf16.msra.mxu0 %v8419
        %12055 = vmatprep.subr.bf16.mxu0 %v8428
        %12056 = vmatpush1.bf16.msra.mxu0 %v8427
        %12057 = vmatprep.subr.bf16.mxu0 %v8436
        %12058 = vmatpush1.bf16.msra.mxu0 %v8435
        %12059 = vmatprep.subr.bf16.mxu0 %v8444
        %12060 = vmatpush1.bf16.msra.mxu0 %v8443
        %12061 = vmatprep.subr.bf16.mxu0 %v8452
        %12062 = vmatpush1.bf16.msra.mxu0 %v8451
        %12063 = vmatprep.subr.bf16.mxu0 %v8460
        %12064 = vmatpush1.bf16.msra.mxu0 %v8459
        %12065 = vmatprep.subr.bf16.mxu0 %v8468
        %12066 = vmatpush1.bf16.msra.mxu0 %v8467
        %12067 = vmatprep.subr.bf16.mxu0 %v8476
        %12068 = vmatpush1.bf16.msra.mxu0 %v8475
        %12069 = vmatprep.subr.bf16.mxu0 %v8484
        %12070 = vmatpush1.bf16.msra.mxu0 %v8483
        %12071 = vmatprep.subr.bf16.mxu0 %v8492
        %12072 = vmatpush1.bf16.msra.mxu0 %v8491
        %12073 = vmatprep.subr.bf16.mxu0 %v8500
        %12074 = vmatpush1.bf16.msra.mxu0 %v8499
        %12075 = vmatprep.subr.bf16.mxu0 %v8508
        %12076 = vmatpush1.bf16.msra.mxu0 %v8507
        %12077 = vmatprep.subr.bf16.mxu0 %v8516
        %12078 = vmatpush1.bf16.msra.mxu0 %v8515
        %12079 = vmatprep.subr.bf16.mxu0 %v8524
        %12080 = vmatpush1.bf16.msra.mxu0 %v8523
        %12081 = vmatprep.subr.bf16.mxu0 %v8532
        %12082 = vmatpush1.bf16.msra.mxu0 %v8531
        %12083 = vmatprep.subr.bf16.mxu0 %v8540
        %12084 = vmatpush1.bf16.msra.mxu0 %v8539
        %12085 = vmatprep.mubr.bf16.mxu0 %v466
        %12086 = vmatmul.mubr.bf16.gmra.mrb[0].mxu0 %v465
        %v12087 = vpop.f32.mrb[0].mxu0
        %v12088 = vadd.f32 %v12047, %v12087
        %v12089 = vpop.f32.mrb[0].mxu0
        %v12090 = vadd.f32 %v12049, %v12089
        %v12091 = vpop.f32.mrb[0].mxu0
        %v12092 = vpop.f32.mrb[0].mxu0
        %12093 = vdwg.mxu0
        %12094 = vmatprep.subr.bf16.mxu0 %v8548
        %12095 = vmatpush1.bf16.msra.mxu0 %v8547
        %12096 = vmatprep.subr.bf16.mxu0 %v8556
        %12097 = vmatpush1.bf16.msra.mxu0 %v8555
        %12098 = vmatprep.subr.bf16.mxu0 %v8564
        %12099 = vmatpush1.bf16.msra.mxu0 %v8563
        %12100 = vmatprep.subr.bf16.mxu0 %v8572
        %12101 = vmatpush1.bf16.msra.mxu0 %v8571
        %12102 = vmatprep.subr.bf16.mxu0 %v8580
        %12103 = vmatpush1.bf16.msra.mxu0 %v8579
        %12104 = vmatprep.subr.bf16.mxu0 %v8588
        %12105 = vmatpush1.bf16.msra.mxu0 %v8587
        %12106 = vmatprep.subr.bf16.mxu0 %v8596
        %12107 = vmatpush1.bf16.msra.mxu0 %v8595
        %12108 = vmatprep.subr.bf16.mxu0 %v8604
        %12109 = vmatpush1.bf16.msra.mxu0 %v8603
        %12110 = vmatprep.subr.bf16.mxu0 %v8612
        %12111 = vmatpush1.bf16.msra.mxu0 %v8611
        %12112 = vmatprep.subr.bf16.mxu0 %v8620
        %12113 = vmatpush1.bf16.msra.mxu0 %v8619
        %12114 = vmatprep.subr.bf16.mxu0 %v8628
        %12115 = vmatpush1.bf16.msra.mxu0 %v8627
        %12116 = vmatprep.subr.bf16.mxu0 %v8636
        %12117 = vmatpush1.bf16.msra.mxu0 %v8635
        %12118 = vmatprep.subr.bf16.mxu0 %v8644
        %12119 = vmatpush1.bf16.msra.mxu0 %v8643
        %12120 = vmatprep.subr.bf16.mxu0 %v8652
        %12121 = vmatpush1.bf16.msra.mxu0 %v8651
        %12122 = vmatprep.subr.bf16.mxu0 %v8660
        %12123 = vmatpush1.bf16.msra.mxu0 %v8659
        %12124 = vmatprep.subr.bf16.mxu0 %v8668
        %12125 = vmatpush1.bf16.msra.mxu0 %v8667
        %12126 = vmatprep.mubr.bf16.mxu0 %v468
        %12127 = vmatmul.mubr.bf16.gmra.mrb[0].mxu0 %v467
        %v12128 = vpop.f32.mrb[0].mxu0
        %v12129 = vadd.f32 %v12088, %v12128
        %v12130 = vpop.f32.mrb[0].mxu0
        %v12131 = vadd.f32 %v12090, %v12130
        %v12132 = vpop.f32.mrb[0].mxu0
        %v12133 = vpop.f32.mrb[0].mxu0
        %12134 = vdwg.mxu0
        %12135 = vmatprep.subr.bf16.mxu0 %v8676
        %12136 = vmatpush1.bf16.msra.mxu0 %v8675
        %12137 = vmatprep.subr.bf16.mxu0 %v8684
        %12138 = vmatpush1.bf16.msra.mxu0 %v8683
        %12139 = vmatprep.subr.bf16.mxu0 %v8692
        %12140 = vmatpush1.bf16.msra.mxu0 %v8691
        %12141 = vmatprep.subr.bf16.mxu0 %v8700
        %12142 = vmatpush1.bf16.msra.mxu0 %v8699
        %12143 = vmatprep.subr.bf16.mxu0 %v8708
        %12144 = vmatpush1.bf16.msra.mxu0 %v8707
        %12145 = vmatprep.subr.bf16.mxu0 %v8716
        %12146 = vmatpush1.bf16.msra.mxu0 %v8715
        %12147 = vmatprep.subr.bf16.mxu0 %v8724
        %12148 = vmatpush1.bf16.msra.mxu0 %v8723
        %12149 = vmatprep.subr.bf16.mxu0 %v8732
        %12150 = vmatpush1.bf16.msra.mxu0 %v8731
        %12151 = vmatprep.subr.bf16.mxu0 %v8740
        %12152 = vmatpush1.bf16.msra.mxu0 %v8739
        %12153 = vmatprep.subr.bf16.mxu0 %v8748
        %12154 = vmatpush1.bf16.msra.mxu0 %v8747
        %12155 = vmatprep.subr.bf16.mxu0 %v8756
        %12156 = vmatpush1.bf16.msra.mxu0 %v8755
        %12157 = vmatprep.subr.bf16.mxu0 %v8764
        %12158 = vmatpush1.bf16.msra.mxu0 %v8763
        %12159 = vmatprep.subr.bf16.mxu0 %v8772
        %12160 = vmatpush1.bf16.msra.mxu0 %v8771
        %12161 = vmatprep.subr.bf16.mxu0 %v8780
        %12162 = vmatpush1.bf16.msra.mxu0 %v8779
        %12163 = vmatprep.subr.bf16.mxu0 %v8788
        %12164 = vmatpush1.bf16.msra.mxu0 %v8787
        %12165 = vmatprep.subr.bf16.mxu0 %v8796
        %12166 = vmatpush1.bf16.msra.mxu0 %v8795
        %12167 = vmatprep.mubr.bf16.mxu0 %v470
        %12168 = vmatmul.mubr.bf16.gmra.mrb[0].mxu0 %v469
        %v12169 = vpop.f32.mrb[0].mxu0
        %v12170 = vadd.f32 %v12129, %v12169
        %v12171 = vpop.f32.mrb[0].mxu0
        %v12172 = vadd.f32 %v12131, %v12171
        %v12173 = vpop.f32.mrb[0].mxu0
        %v12174 = vpop.f32.mrb[0].mxu0
        %12175 = vdwg.mxu0
        %12176 = vmatprep.subr.bf16.mxu0 %v8804
        %12177 = vmatpush1.bf16.msra.mxu0 %v8803
        %12178 = vmatprep.subr.bf16.mxu0 %v8812
        %12179 = vmatpush1.bf16.msra.mxu0 %v8811
        %12180 = vmatprep.subr.bf16.mxu0 %v8820
        %12181 = vmatpush1.bf16.msra.mxu0 %v8819
        %12182 = vmatprep.subr.bf16.mxu0 %v8828
        %12183 = vmatpush1.bf16.msra.mxu0 %v8827
        %12184 = vmatprep.subr.bf16.mxu0 %v8836
        %12185 = vmatpush1.bf16.msra.mxu0 %v8835
        %12186 = vmatprep.subr.bf16.mxu0 %v8844
        %12187 = vmatpush1.bf16.msra.mxu0 %v8843
        %12188 = vmatprep.subr.bf16.mxu0 %v8852
        %12189 = vmatpush1.bf16.msra.mxu0 %v8851
        %12190 = vmatprep.subr.bf16.mxu0 %v8860
        %12191 = vmatpush1.bf16.msra.mxu0 %v8859
        %12192 = vmatprep.subr.bf16.mxu0 %v8868
        %12193 = vmatpush1.bf16.msra.mxu0 %v8867
        %12194 = vmatprep.subr.bf16.mxu0 %v8876
        %12195 = vmatpush1.bf16.msra.mxu0 %v8875
        %12196 = vmatprep.subr.bf16.mxu0 %v8884
        %12197 = vmatpush1.bf16.msra.mxu0 %v8883
        %12198 = vmatprep.subr.bf16.mxu0 %v8892
        %12199 = vmatpush1.bf16.msra.mxu0 %v8891
        %12200 = vmatprep.subr.bf16.mxu0 %v8900
        %12201 = vmatpush1.bf16.msra.mxu0 %v8899
        %12202 = vmatprep.subr.bf16.mxu0 %v8908
        %12203 = vmatpush1.bf16.msra.mxu0 %v8907
        %12204 = vmatprep.subr.bf16.mxu0 %v8916
        %12205 = vmatpush1.bf16.msra.mxu0 %v8915
        %12206 = vmatprep.subr.bf16.mxu0 %v8924
        %12207 = vmatpush1.bf16.msra.mxu0 %v8923
        %12208 = vmatprep.mubr.bf16.mxu0 %v472
        %12209 = vmatmul.mubr.bf16.gmra.mrb[0].mxu0 %v471
        %v12210 = vpop.f32.mrb[0].mxu0
        %v12211 = vadd.f32 %v12170, %v12210
        %v12212 = vpop.f32.mrb[0].mxu0
        %v12213 = vadd.f32 %v12172, %v12212
        %v12214 = vpop.f32.mrb[0].mxu0
        %v12215 = vpop.f32.mrb[0].mxu0
        %12216 = vdwg.mxu0
        %12217 = vmatprep.subr.bf16.mxu0 %v8932
        %12218 = vmatpush1.bf16.msra.mxu0 %v8931
        %12219 = vmatprep.subr.bf16.mxu0 %v8940
        %12220 = vmatpush1.bf16.msra.mxu0 %v8939
        %12221 = vmatprep.subr.bf16.mxu0 %v8948
        %12222 = vmatpush1.bf16.msra.mxu0 %v8947
        %12223 = vmatprep.subr.bf16.mxu0 %v8956
        %12224 = vmatpush1.bf16.msra.mxu0 %v8955
        %12225 = vmatprep.subr.bf16.mxu0 %v8964
        %12226 = vmatpush1.bf16.msra.mxu0 %v8963
        %12227 = vmatprep.subr.bf16.mxu0 %v8972
        %12228 = vmatpush1.bf16.msra.mxu0 %v8971
        %12229 = vmatprep.subr.bf16.mxu0 %v8980
        %12230 = vmatpush1.bf16.msra.mxu0 %v8979
        %12231 = vmatprep.subr.bf16.mxu0 %v8988
        %12232 = vmatpush1.bf16.msra.mxu0 %v8987
        %12233 = vmatprep.subr.bf16.mxu0 %v8996
        %12234 = vmatpush1.bf16.msra.mxu0 %v8995
        %12235 = vmatprep.subr.bf16.mxu0 %v9004
        %12236 = vmatpush1.bf16.msra.mxu0 %v9003
        %12237 = vmatprep.subr.bf16.mxu0 %v9012
        %12238 = vmatpush1.bf16.msra.mxu0 %v9011
        %12239 = vmatprep.subr.bf16.mxu0 %v9020
        %12240 = vmatpush1.bf16.msra.mxu0 %v9019
        %12241 = vmatprep.subr.bf16.mxu0 %v9028
        %12242 = vmatpush1.bf16.msra.mxu0 %v9027
        %12243 = vmatprep.subr.bf16.mxu0 %v9036
        %12244 = vmatpush1.bf16.msra.mxu0 %v9035
        %12245 = vmatprep.subr.bf16.mxu0 %v9044
        %12246 = vmatpush1.bf16.msra.mxu0 %v9043
        %12247 = vmatprep.subr.bf16.mxu0 %v9052
        %12248 = vmatpush1.bf16.msra.mxu0 %v9051
        %12249 = vmatprep.mubr.bf16.mxu0 %v474
        %12250 = vmatmul.mubr.bf16.gmra.mrb[0].mxu0 %v473
        %v12251 = vpop.f32.mrb[0].mxu0
        %v12252 = vadd.f32 %v12211, %v12251
        %v12253 = vpop.f32.mrb[0].mxu0
        %v12254 = vadd.f32 %v12213, %v12253
        %v12255 = vpop.f32.mrb[0].mxu0
        %v12256 = vpop.f32.mrb[0].mxu0
        %12257 = vdwg.mxu0
        %12258 = vmatprep.subr.bf16.mxu0 %v9060
        %12259 = vmatpush1.bf16.msra.mxu0 %v9059
        %12260 = vmatprep.subr.bf16.mxu0 %v9068
        %12261 = vmatpush1.bf16.msra.mxu0 %v9067
        %12262 = vmatprep.subr.bf16.mxu0 %v9076
        %12263 = vmatpush1.bf16.msra.mxu0 %v9075
        %12264 = vmatprep.subr.bf16.mxu0 %v9084
        %12265 = vmatpush1.bf16.msra.mxu0 %v9083
        %12266 = vmatprep.subr.bf16.mxu0 %v9092
        %12267 = vmatpush1.bf16.msra.mxu0 %v9091
        %12268 = vmatprep.subr.bf16.mxu0 %v9100
        %12269 = vmatpush1.bf16.msra.mxu0 %v9099
        %12270 = vmatprep.subr.bf16.mxu0 %v9108
        %12271 = vmatpush1.bf16.msra.mxu0 %v9107
        %12272 = vmatprep.subr.bf16.mxu0 %v9116
        %12273 = vmatpush1.bf16.msra.mxu0 %v9115
        %12274 = vmatprep.subr.bf16.mxu0 %v9124
        %12275 = vmatpush1.bf16.msra.mxu0 %v9123
        %12276 = vmatprep.subr.bf16.mxu0 %v9132
        %12277 = vmatpush1.bf16.msra.mxu0 %v9131
        %12278 = vmatprep.subr.bf16.mxu0 %v9140
        %12279 = vmatpush1.bf16.msra.mxu0 %v9139
        %12280 = vmatprep.subr.bf16.mxu0 %v9148
        %12281 = vmatpush1.bf16.msra.mxu0 %v9147
        %12282 = vmatprep.subr.bf16.mxu0 %v9156
        %12283 = vmatpush1.bf16.msra.mxu0 %v9155
        %12284 = vmatprep.subr.bf16.mxu0 %v9164
        %12285 = vmatpush1.bf16.msra.mxu0 %v9163
        %12286 = vmatprep.subr.bf16.mxu0 %v9172
        %12287 = vmatpush1.bf16.msra.mxu0 %v9171
        %12288 = vmatprep.subr.bf16.mxu0 %v9180
        %12289 = vmatpush1.bf16.msra.mxu0 %v9179
        %12290 = vmatprep.mubr.bf16.mxu0 %v476
        %12291 = vmatmul.mubr.bf16.gmra.mrb[0].mxu0 %v475
        %v12292 = vpop.f32.mrb[0].mxu0
        %v12293 = vadd.f32 %v12252, %v12292
        %v12294 = vpop.f32.mrb[0].mxu0
        %v12295 = vadd.f32 %v12254, %v12294
        %v12296 = vpop.f32.mrb[0].mxu0
        %v12297 = vpop.f32.mrb[0].mxu0
        %12298 = vdwg.mxu0
        %12299 = vmatprep.subr.bf16.mxu0 %v9188
        %12300 = vmatpush1.bf16.msra.mxu0 %v9187
        %12301 = vmatprep.subr.bf16.mxu0 %v9196
        %12302 = vmatpush1.bf16.msra.mxu0 %v9195
        %12303 = vmatprep.subr.bf16.mxu0 %v9204
        %12304 = vmatpush1.bf16.msra.mxu0 %v9203
        %12305 = vmatprep.subr.bf16.mxu0 %v9212
        %12306 = vmatpush1.bf16.msra.mxu0 %v9211
        %12307 = vmatprep.subr.bf16.mxu0 %v9220
        %12308 = vmatpush1.bf16.msra.mxu0 %v9219
        %12309 = vmatprep.subr.bf16.mxu0 %v9228
        %12310 = vmatpush1.bf16.msra.mxu0 %v9227
        %12311 = vmatprep.subr.bf16.mxu0 %v9236
        %12312 = vmatpush1.bf16.msra.mxu0 %v9235
        %12313 = vmatprep.subr.bf16.mxu0 %v9244
        %12314 = vmatpush1.bf16.msra.mxu0 %v9243
        %12315 = vmatprep.subr.bf16.mxu0 %v9252
        %12316 = vmatpush1.bf16.msra.mxu0 %v9251
        %12317 = vmatprep.subr.bf16.mxu0 %v9260
        %12318 = vmatpush1.bf16.msra.mxu0 %v9259
        %12319 = vmatprep.subr.bf16.mxu0 %v9268
        %12320 = vmatpush1.bf16.msra.mxu0 %v9267
        %12321 = vmatprep.subr.bf16.mxu0 %v9276
        %12322 = vmatpush1.bf16.msra.mxu0 %v9275
        %12323 = vmatprep.subr.bf16.mxu0 %v9284
        %12324 = vmatpush1.bf16.msra.mxu0 %v9283
        %12325 = vmatprep.subr.bf16.mxu0 %v9292
        %12326 = vmatpush1.bf16.msra.mxu0 %v9291
        %12327 = vmatprep.subr.bf16.mxu0 %v9300
        %12328 = vmatpush1.bf16.msra.mxu0 %v9299
        %12329 = vmatprep.subr.bf16.mxu0 %v9308
        %12330 = vmatpush1.bf16.msra.mxu0 %v9307
        %12331 = vmatprep.mubr.bf16.mxu0 %v478
        %12332 = vmatmul.mubr.bf16.gmra.mrb[0].mxu0 %v477
        %v12333 = vpop.f32.mrb[0].mxu0
        %v12334 = vadd.f32 %v12293, %v12333
        %v12335 = vpop.f32.mrb[0].mxu0
        %v12336 = vadd.f32 %v12295, %v12335
        %v12337 = vpop.f32.mrb[0].mxu0
        %v12338 = vpop.f32.mrb[0].mxu0
        %12339 = vdwg.mxu0
        %12340 = vmatprep.subr.bf16.mxu0 %v9316
        %12341 = vmatpush1.bf16.msra.mxu0 %v9315
        %12342 = vmatprep.subr.bf16.mxu0 %v9324
        %12343 = vmatpush1.bf16.msra.mxu0 %v9323
        %12344 = vmatprep.subr.bf16.mxu0 %v9332
        %12345 = vmatpush1.bf16.msra.mxu0 %v9331
        %12346 = vmatprep.subr.bf16.mxu0 %v9340
        %12347 = vmatpush1.bf16.msra.mxu0 %v9339
        %12348 = vmatprep.subr.bf16.mxu0 %v9348
        %12349 = vmatpush1.bf16.msra.mxu0 %v9347
        %12350 = vmatprep.subr.bf16.mxu0 %v9356
        %12351 = vmatpush1.bf16.msra.mxu0 %v9355
        %12352 = vmatprep.subr.bf16.mxu0 %v9364
        %12353 = vmatpush1.bf16.msra.mxu0 %v9363
        %12354 = vmatprep.subr.bf16.mxu0 %v9372
        %12355 = vmatpush1.bf16.msra.mxu0 %v9371
        %12356 = vmatprep.subr.bf16.mxu0 %v9380
        %12357 = vmatpush1.bf16.msra.mxu0 %v9379
        %12358 = vmatprep.subr.bf16.mxu0 %v9388
        %12359 = vmatpush1.bf16.msra.mxu0 %v9387
        %12360 = vmatprep.subr.bf16.mxu0 %v9396
        %12361 = vmatpush1.bf16.msra.mxu0 %v9395
        %12362 = vmatprep.subr.bf16.mxu0 %v9404
        %12363 = vmatpush1.bf16.msra.mxu0 %v9403
        %12364 = vmatprep.subr.bf16.mxu0 %v9412
        %12365 = vmatpush1.bf16.msra.mxu0 %v9411
        %12366 = vmatprep.subr.bf16.mxu0 %v9420
        %12367 = vmatpush1.bf16.msra.mxu0 %v9419
        %12368 = vmatprep.subr.bf16.mxu0 %v9428
        %12369 = vmatpush1.bf16.msra.mxu0 %v9427
        %12370 = vmatprep.subr.bf16.mxu0 %v9436
        %12371 = vmatpush1.bf16.msra.mxu0 %v9435
        %12372 = vmatprep.mubr.bf16.mxu0 %v480
        %12373 = vmatmul.mubr.bf16.gmra.mrb[0].mxu0 %v479
        %v12374 = vpop.f32.mrb[0].mxu0
        %v12375 = vadd.f32 %v12334, %v12374
        %v12376 = vpop.f32.mrb[0].mxu0
        %v12377 = vadd.f32 %v12336, %v12376
        %v12378 = vpop.f32.mrb[0].mxu0
        %v12379 = vpop.f32.mrb[0].mxu0
        %12380 = vdwg.mxu0
        %12381 = vmatprep.subr.bf16.mxu0 %v7654
        %12382 = vmatpush1.bf16.msra.mxu0 %v7653
        %12383 = vmatprep.subr.bf16.mxu0 %v7662
        %12384 = vmatpush1.bf16.msra.mxu0 %v7661
        %12385 = vmatprep.subr.bf16.mxu0 %v7670
        %12386 = vmatpush1.bf16.msra.mxu0 %v7669
        %12387 = vmatprep.subr.bf16.mxu0 %v7678
        %12388 = vmatpush1.bf16.msra.mxu0 %v7677
        %12389 = vmatprep.subr.bf16.mxu0 %v7686
        %12390 = vmatpush1.bf16.msra.mxu0 %v7685
        %12391 = vmatprep.subr.bf16.mxu0 %v7694
        %12392 = vmatpush1.bf16.msra.mxu0 %v7693
        %12393 = vmatprep.subr.bf16.mxu0 %v7702
        %12394 = vmatpush1.bf16.msra.mxu0 %v7701
        %12395 = vmatprep.subr.bf16.mxu0 %v7710
        %12396 = vmatpush1.bf16.msra.mxu0 %v7709
        %12397 = vmatprep.subr.bf16.mxu0 %v7718
        %12398 = vmatpush1.bf16.msra.mxu0 %v7717
        %12399 = vmatprep.subr.bf16.mxu0 %v7726
        %12400 = vmatpush1.bf16.msra.mxu0 %v7725
        %12401 = vmatprep.subr.bf16.mxu0 %v7734
        %12402 = vmatpush1.bf16.msra.mxu0 %v7733
        %12403 = vmatprep.subr.bf16.mxu0 %v7742
        %12404 = vmatpush1.bf16.msra.mxu0 %v7741
        %12405 = vmatprep.subr.bf16.mxu0 %v7750
        %12406 = vmatpush1.bf16.msra.mxu0 %v7749
        %12407 = vmatprep.subr.bf16.mxu0 %v7758
        %12408 = vmatpush1.bf16.msra.mxu0 %v7757
        %12409 = vmatprep.subr.bf16.mxu0 %v7766
        %12410 = vmatpush1.bf16.msra.mxu0 %v7765
        %12411 = vmatprep.subr.bf16.mxu0 %v7774
        %12412 = vmatpush1.bf16.msra.mxu0 %v7773
        %12413 = vmatprep.mubr.bf16.mxu0 %v454
        %12414 = vmatmul.mubr.bf16.gmra.mrb[0].mxu0 %v453
        %v12415 = vpop.f32.mrb[0].mxu0
        %v12416 = vadd.f32 0.0, %v12415
        %v12417 = vpop.f32.mrb[0].mxu0
        %v12418 = vadd.f32 0.0, %v12417
        %v12419 = vpop.f32.mrb[0].mxu0
        %v12420 = vpop.f32.mrb[0].mxu0
        %12421 = vdwg.mxu0
        %12422 = vmatprep.subr.bf16.mxu0 %v7782
        %12423 = vmatpush1.bf16.msra.mxu0 %v7781
        %12424 = vmatprep.subr.bf16.mxu0 %v7790
        %12425 = vmatpush1.bf16.msra.mxu0 %v7789
        %12426 = vmatprep.subr.bf16.mxu0 %v7798
        %12427 = vmatpush1.bf16.msra.mxu0 %v7797
        %12428 = vmatprep.subr.bf16.mxu0 %v7806
        %12429 = vmatpush1.bf16.msra.mxu0 %v7805
        %12430 = vmatprep.subr.bf16.mxu0 %v7814
        %12431 = vmatpush1.bf16.msra.mxu0 %v7813
        %12432 = vmatprep.subr.bf16.mxu0 %v7822
        %12433 = vmatpush1.bf16.msra.mxu0 %v7821
        %12434 = vmatprep.subr.bf16.mxu0 %v7830
        %12435 = vmatpush1.bf16.msra.mxu0 %v7829
        %12436 = vmatprep.subr.bf16.mxu0 %v7838
        %12437 = vmatpush1.bf16.msra.mxu0 %v7837
        %12438 = vmatprep.subr.bf16.mxu0 %v7846
        %12439 = vmatpush1.bf16.msra.mxu0 %v7845
        %12440 = vmatprep.subr.bf16.mxu0 %v7854
        %12441 = vmatpush1.bf16.msra.mxu0 %v7853
        %12442 = vmatprep.subr.bf16.mxu0 %v7862
        %12443 = vmatpush1.bf16.msra.mxu0 %v7861
        %12444 = vmatprep.subr.bf16.mxu0 %v7870
        %12445 = vmatpush1.bf16.msra.mxu0 %v7869
        %12446 = vmatprep.subr.bf16.mxu0 %v7878
        %12447 = vmatpush1.bf16.msra.mxu0 %v7877
        %12448 = vmatprep.subr.bf16.mxu0 %v7886
        %12449 = vmatpush1.bf16.msra.mxu0 %v7885
        %12450 = vmatprep.subr.bf16.mxu0 %v7894
        %12451 = vmatpush1.bf16.msra.mxu0 %v7893
        %12452 = vmatprep.subr.bf16.mxu0 %v7902
        %12453 = vmatpush1.bf16.msra.mxu0 %v7901
        %12454 = vmatprep.mubr.bf16.mxu0 %v456
        %12455 = vmatmul.mubr.bf16.gmra.mrb[0].mxu0 %v455
        %v12456 = vpop.f32.mrb[0].mxu0
        %v12457 = vadd.f32 %v12416, %v12456
        %v12458 = vpop.f32.mrb[0].mxu0
        %v12459 = vadd.f32 %v12418, %v12458
        %v12460 = vpop.f32.mrb[0].mxu0
        %v12461 = vpop.f32.mrb[0].mxu0
        %12462 = vdwg.mxu0
        %12463 = vmatprep.subr.bf16.mxu0 %v7910
        %12464 = vmatpush1.bf16.msra.mxu0 %v7909
        %12465 = vmatprep.subr.bf16.mxu0 %v7918
        %12466 = vmatpush1.bf16.msra.mxu0 %v7917
        %12467 = vmatprep.subr.bf16.mxu0 %v7926
        %12468 = vmatpush1.bf16.msra.mxu0 %v7925
        %12469 = vmatprep.subr.bf16.mxu0 %v7934
        %12470 = vmatpush1.bf16.msra.mxu0 %v7933
        %12471 = vmatprep.subr.bf16.mxu0 %v7942
        %12472 = vmatpush1.bf16.msra.mxu0 %v7941
        %12473 = vmatprep.subr.bf16.mxu0 %v7950
        %12474 = vmatpush1.bf16.msra.mxu0 %v7949
        %12475 = vmatprep.subr.bf16.mxu0 %v7958
        %12476 = vmatpush1.bf16.msra.mxu0 %v7957
        %12477 = vmatprep.subr.bf16.mxu0 %v7966
        %12478 = vmatpush1.bf16.msra.mxu0 %v7965
        %12479 = vmatprep.subr.bf16.mxu0 %v7974
        %12480 = vmatpush1.bf16.msra.mxu0 %v7973
        %12481 = vmatprep.subr.bf16.mxu0 %v7982
        %12482 = vmatpush1.bf16.msra.mxu0 %v7981
        %12483 = vmatprep.subr.bf16.mxu0 %v7990
        %12484 = vmatpush1.bf16.msra.mxu0 %v7989
        %12485 = vmatprep.subr.bf16.mxu0 %v7998
        %12486 = vmatpush1.bf16.msra.mxu0 %v7997
        %12487 = vmatprep.subr.bf16.mxu0 %v8006
        %12488 = vmatpush1.bf16.msra.mxu0 %v8005
        %12489 = vmatprep.subr.bf16.mxu0 %v8014
        %12490 = vmatpush1.bf16.msra.mxu0 %v8013
        %12491 = vmatprep.subr.bf16.mxu0 %v8022
        %12492 = vmatpush1.bf16.msra.mxu0 %v8021
        %12493 = vmatprep.subr.bf16.mxu0 %v8030
        %12494 = vmatpush1.bf16.msra.mxu0 %v8029
        %12495 = vmatprep.mubr.bf16.mxu0 %v458
        %12496 = vmatmul.mubr.bf16.gmra.mrb[0].mxu0 %v457
        %v12497 = vpop.f32.mrb[0].mxu0
        %v12498 = vadd.f32 %v12457, %v12497
        %v12499 = vpop.f32.mrb[0].mxu0
        %v12500 = vadd.f32 %v12459, %v12499
        %v12501 = vpop.f32.mrb[0].mxu0
        %v12502 = vpop.f32.mrb[0].mxu0
        %12503 = vdwg.mxu0
        %12504 = vmatprep.subr.bf16.mxu0 %v8038
        %12505 = vmatpush1.bf16.msra.mxu0 %v8037
        %12506 = vmatprep.subr.bf16.mxu0 %v8046
        %12507 = vmatpush1.bf16.msra.mxu0 %v8045
        %12508 = vmatprep.subr.bf16.mxu0 %v8054
        %12509 = vmatpush1.bf16.msra.mxu0 %v8053
        %12510 = vmatprep.subr.bf16.mxu0 %v8062
        %12511 = vmatpush1.bf16.msra.mxu0 %v8061
        %12512 = vmatprep.subr.bf16.mxu0 %v8070
        %12513 = vmatpush1.bf16.msra.mxu0 %v8069
        %12514 = vmatprep.subr.bf16.mxu0 %v8078
        %12515 = vmatpush1.bf16.msra.mxu0 %v8077
        %12516 = vmatprep.subr.bf16.mxu0 %v8086
        %12517 = vmatpush1.bf16.msra.mxu0 %v8085
        %12518 = vmatprep.subr.bf16.mxu0 %v8094
        %12519 = vmatpush1.bf16.msra.mxu0 %v8093
        %12520 = vmatprep.subr.bf16.mxu0 %v8102
        %12521 = vmatpush1.bf16.msra.mxu0 %v8101
        %12522 = vmatprep.subr.bf16.mxu0 %v8110
        %12523 = vmatpush1.bf16.msra.mxu0 %v8109
        %12524 = vmatprep.subr.bf16.mxu0 %v8118
        %12525 = vmatpush1.bf16.msra.mxu0 %v8117
        %12526 = vmatprep.subr.bf16.mxu0 %v8126
        %12527 = vmatpush1.bf16.msra.mxu0 %v8125
        %12528 = vmatprep.subr.bf16.mxu0 %v8134
        %12529 = vmatpush1.bf16.msra.mxu0 %v8133
        %12530 = vmatprep.subr.bf16.mxu0 %v8142
        %12531 = vmatpush1.bf16.msra.mxu0 %v8141
        %12532 = vmatprep.subr.bf16.mxu0 %v8150
        %12533 = vmatpush1.bf16.msra.mxu0 %v8149
        %12534 = vmatprep.subr.bf16.mxu0 %v8158
        %12535 = vmatpush1.bf16.msra.mxu0 %v8157
        %12536 = vmatprep.mubr.bf16.mxu0 %v460
        %12537 = vmatmul.mubr.bf16.gmra.mrb[0].mxu0 %v459
        %v12538 = vpop.f32.mrb[0].mxu0
        %v12539 = vadd.f32 %v12498, %v12538
        %v12540 = vpop.f32.mrb[0].mxu0
        %v12541 = vadd.f32 %v12500, %v12540
        %v12542 = vpop.f32.mrb[0].mxu0
        %v12543 = vpop.f32.mrb[0].mxu0
        %12544 = vdwg.mxu0
        %12545 = vmatprep.subr.bf16.mxu0 %v8166
        %12546 = vmatpush1.bf16.msra.mxu0 %v8165
        %12547 = vmatprep.subr.bf16.mxu0 %v8174
        %12548 = vmatpush1.bf16.msra.mxu0 %v8173
        %12549 = vmatprep.subr.bf16.mxu0 %v8182
        %12550 = vmatpush1.bf16.msra.mxu0 %v8181
        %12551 = vmatprep.subr.bf16.mxu0 %v8190
        %12552 = vmatpush1.bf16.msra.mxu0 %v8189
        %12553 = vmatprep.subr.bf16.mxu0 %v8198
        %12554 = vmatpush1.bf16.msra.mxu0 %v8197
        %12555 = vmatprep.subr.bf16.mxu0 %v8206
        %12556 = vmatpush1.bf16.msra.mxu0 %v8205
        %12557 = vmatprep.subr.bf16.mxu0 %v8214
        %12558 = vmatpush1.bf16.msra.mxu0 %v8213
        %12559 = vmatprep.subr.bf16.mxu0 %v8222
        %12560 = vmatpush1.bf16.msra.mxu0 %v8221
        %12561 = vmatprep.subr.bf16.mxu0 %v8230
        %12562 = vmatpush1.bf16.msra.mxu0 %v8229
        %12563 = vmatprep.subr.bf16.mxu0 %v8238
        %12564 = vmatpush1.bf16.msra.mxu0 %v8237
        %12565 = vmatprep.subr.bf16.mxu0 %v8246
        %12566 = vmatpush1.bf16.msra.mxu0 %v8245
        %12567 = vmatprep.subr.bf16.mxu0 %v8254
        %12568 = vmatpush1.bf16.msra.mxu0 %v8253
        %12569 = vmatprep.subr.bf16.mxu0 %v8262
        %12570 = vmatpush1.bf16.msra.mxu0 %v8261
        %12571 = vmatprep.subr.bf16.mxu0 %v8270
        %12572 = vmatpush1.bf16.msra.mxu0 %v8269
        %12573 = vmatprep.subr.bf16.mxu0 %v8278
        %12574 = vmatpush1.bf16.msra.mxu0 %v8277
        %12575 = vmatprep.subr.bf16.mxu0 %v8286
        %12576 = vmatpush1.bf16.msra.mxu0 %v8285
        %12577 = vmatprep.mubr.bf16.mxu0 %v462
        %12578 = vmatmul.mubr.bf16.gmra.mrb[0].mxu0 %v461
        %v12579 = vpop.f32.mrb[0].mxu0
        %v12580 = vadd.f32 %v12539, %v12579
        %v12581 = vpop.f32.mrb[0].mxu0
        %v12582 = vadd.f32 %v12541, %v12581
        %v12583 = vpop.f32.mrb[0].mxu0
        %v12584 = vpop.f32.mrb[0].mxu0
        %12585 = vdwg.mxu0
        %12586 = vmatprep.subr.bf16.mxu0 %v8294
        %12587 = vmatpush1.bf16.msra.mxu0 %v8293
        %12588 = vmatprep.subr.bf16.mxu0 %v8302
        %12589 = vmatpush1.bf16.msra.mxu0 %v8301
        %12590 = vmatprep.subr.bf16.mxu0 %v8310
        %12591 = vmatpush1.bf16.msra.mxu0 %v8309
        %12592 = vmatprep.subr.bf16.mxu0 %v8318
        %12593 = vmatpush1.bf16.msra.mxu0 %v8317
        %12594 = vmatprep.subr.bf16.mxu0 %v8326
        %12595 = vmatpush1.bf16.msra.mxu0 %v8325
        %12596 = vmatprep.subr.bf16.mxu0 %v8334
        %12597 = vmatpush1.bf16.msra.mxu0 %v8333
        %12598 = vmatprep.subr.bf16.mxu0 %v8342
        %12599 = vmatpush1.bf16.msra.mxu0 %v8341
        %12600 = vmatprep.subr.bf16.mxu0 %v8350
        %12601 = vmatpush1.bf16.msra.mxu0 %v8349
        %12602 = vmatprep.subr.bf16.mxu0 %v8358
        %12603 = vmatpush1.bf16.msra.mxu0 %v8357
        %12604 = vmatprep.subr.bf16.mxu0 %v8366
        %12605 = vmatpush1.bf16.msra.mxu0 %v8365
        %12606 = vmatprep.subr.bf16.mxu0 %v8374
        %12607 = vmatpush1.bf16.msra.mxu0 %v8373
        %12608 = vmatprep.subr.bf16.mxu0 %v8382
        %12609 = vmatpush1.bf16.msra.mxu0 %v8381
        %12610 = vmatprep.subr.bf16.mxu0 %v8390
        %12611 = vmatpush1.bf16.msra.mxu0 %v8389
        %12612 = vmatprep.subr.bf16.mxu0 %v8398
        %12613 = vmatpush1.bf16.msra.mxu0 %v8397
        %12614 = vmatprep.subr.bf16.mxu0 %v8406
        %12615 = vmatpush1.bf16.msra.mxu0 %v8405
        %12616 = vmatprep.subr.bf16.mxu0 %v8414
        %12617 = vmatpush1.bf16.msra.mxu0 %v8413
        %12618 = vmatprep.mubr.bf16.mxu0 %v464
        %12619 = vmatmul.mubr.bf16.gmra.mrb[0].mxu0 %v463
        %v12620 = vpop.f32.mrb[0].mxu0
        %v12621 = vadd.f32 %v12580, %v12620
        %v12622 = vpop.f32.mrb[0].mxu0
        %v12623 = vadd.f32 %v12582, %v12622
        %v12624 = vpop.f32.mrb[0].mxu0
        %v12625 = vpop.f32.mrb[0].mxu0
        %12626 = vdwg.mxu0
        %12627 = vmatprep.subr.bf16.mxu0 %v8422
        %12628 = vmatpush1.bf16.msra.mxu0 %v8421
        %12629 = vmatprep.subr.bf16.mxu0 %v8430
        %12630 = vmatpush1.bf16.msra.mxu0 %v8429
        %12631 = vmatprep.subr.bf16.mxu0 %v8438
        %12632 = vmatpush1.bf16.msra.mxu0 %v8437
        %12633 = vmatprep.subr.bf16.mxu0 %v8446
        %12634 = vmatpush1.bf16.msra.mxu0 %v8445
        %12635 = vmatprep.subr.bf16.mxu0 %v8454
        %12636 = vmatpush1.bf16.msra.mxu0 %v8453
        %12637 = vmatprep.subr.bf16.mxu0 %v8462
        %12638 = vmatpush1.bf16.msra.mxu0 %v8461
        %12639 = vmatprep.subr.bf16.mxu0 %v8470
        %12640 = vmatpush1.bf16.msra.mxu0 %v8469
        %12641 = vmatprep.subr.bf16.mxu0 %v8478
        %12642 = vmatpush1.bf16.msra.mxu0 %v8477
        %12643 = vmatprep.subr.bf16.mxu0 %v8486
        %12644 = vmatpush1.bf16.msra.mxu0 %v8485
        %12645 = vmatprep.subr.bf16.mxu0 %v8494
        %12646 = vmatpush1.bf16.msra.mxu0 %v8493
        %12647 = vmatprep.subr.bf16.mxu0 %v8502
        %12648 = vmatpush1.bf16.msra.mxu0 %v8501
        %12649 = vmatprep.subr.bf16.mxu0 %v8510
        %12650 = vmatpush1.bf16.msra.mxu0 %v8509
        %12651 = vmatprep.subr.bf16.mxu0 %v8518
        %12652 = vmatpush1.bf16.msra.mxu0 %v8517
        %12653 = vmatprep.subr.bf16.mxu0 %v8526
        %12654 = vmatpush1.bf16.msra.mxu0 %v8525
        %12655 = vmatprep.subr.bf16.mxu0 %v8534
        %12656 = vmatpush1.bf16.msra.mxu0 %v8533
        %12657 = vmatprep.subr.bf16.mxu0 %v8542
        %12658 = vmatpush1.bf16.msra.mxu0 %v8541
        %12659 = vmatprep.mubr.bf16.mxu0 %v466
        %12660 = vmatmul.mubr.bf16.gmra.mrb[0].mxu0 %v465
        %v12661 = vpop.f32.mrb[0].mxu0
        %v12662 = vadd.f32 %v12621, %v12661
        %v12663 = vpop.f32.mrb[0].mxu0
        %v12664 = vadd.f32 %v12623, %v12663
        %v12665 = vpop.f32.mrb[0].mxu0
        %v12666 = vpop.f32.mrb[0].mxu0
        %12667 = vdwg.mxu0
        %12668 = vmatprep.subr.bf16.mxu0 %v8550
        %12669 = vmatpush1.bf16.msra.mxu0 %v8549
        %12670 = vmatprep.subr.bf16.mxu0 %v8558
        %12671 = vmatpush1.bf16.msra.mxu0 %v8557
        %12672 = vmatprep.subr.bf16.mxu0 %v8566
        %12673 = vmatpush1.bf16.msra.mxu0 %v8565
        %12674 = vmatprep.subr.bf16.mxu0 %v8574
        %12675 = vmatpush1.bf16.msra.mxu0 %v8573
        %12676 = vmatprep.subr.bf16.mxu0 %v8582
        %12677 = vmatpush1.bf16.msra.mxu0 %v8581
        %12678 = vmatprep.subr.bf16.mxu0 %v8590
        %12679 = vmatpush1.bf16.msra.mxu0 %v8589
        %12680 = vmatprep.subr.bf16.mxu0 %v8598
        %12681 = vmatpush1.bf16.msra.mxu0 %v8597
        %12682 = vmatprep.subr.bf16.mxu0 %v8606
        %12683 = vmatpush1.bf16.msra.mxu0 %v8605
        %12684 = vmatprep.subr.bf16.mxu0 %v8614
        %12685 = vmatpush1.bf16.msra.mxu0 %v8613
        %12686 = vmatprep.subr.bf16.mxu0 %v8622
        %12687 = vmatpush1.bf16.msra.mxu0 %v8621
        %12688 = vmatprep.subr.bf16.mxu0 %v8630
        %12689 = vmatpush1.bf16.msra.mxu0 %v8629
        %12690 = vmatprep.subr.bf16.mxu0 %v8638
        %12691 = vmatpush1.bf16.msra.mxu0 %v8637
        %12692 = vmatprep.subr.bf16.mxu0 %v8646
        %12693 = vmatpush1.bf16.msra.mxu0 %v8645
        %12694 = vmatprep.subr.bf16.mxu0 %v8654
        %12695 = vmatpush1.bf16.msra.mxu0 %v8653
        %12696 = vmatprep.subr.bf16.mxu0 %v8662
        %12697 = vmatpush1.bf16.msra.mxu0 %v8661
        %12698 = vmatprep.subr.bf16.mxu0 %v8670
        %12699 = vmatpush1.bf16.msra.mxu0 %v8669
        %12700 = vmatprep.mubr.bf16.mxu0 %v468
        %12701 = vmatmul.mubr.bf16.gmra.mrb[0].mxu0 %v467
        %v12702 = vpop.f32.mrb[0].mxu0
        %v12703 = vadd.f32 %v12662, %v12702
        %v12704 = vpop.f32.mrb[0].mxu0
        %v12705 = vadd.f32 %v12664, %v12704
        %v12706 = vpop.f32.mrb[0].mxu0
        %v12707 = vpop.f32.mrb[0].mxu0
        %12708 = vdwg.mxu0
        %12709 = vmatprep.subr.bf16.mxu0 %v8678
        %12710 = vmatpush1.bf16.msra.mxu0 %v8677
        %12711 = vmatprep.subr.bf16.mxu0 %v8686
        %12712 = vmatpush1.bf16.msra.mxu0 %v8685
        %12713 = vmatprep.subr.bf16.mxu0 %v8694
        %12714 = vmatpush1.bf16.msra.mxu0 %v8693
        %12715 = vmatprep.subr.bf16.mxu0 %v8702
        %12716 = vmatpush1.bf16.msra.mxu0 %v8701
        %12717 = vmatprep.subr.bf16.mxu0 %v8710
        %12718 = vmatpush1.bf16.msra.mxu0 %v8709
        %12719 = vmatprep.subr.bf16.mxu0 %v8718
        %12720 = vmatpush1.bf16.msra.mxu0 %v8717
        %12721 = vmatprep.subr.bf16.mxu0 %v8726
        %12722 = vmatpush1.bf16.msra.mxu0 %v8725
        %12723 = vmatprep.subr.bf16.mxu0 %v8734
        %12724 = vmatpush1.bf16.msra.mxu0 %v8733
        %12725 = vmatprep.subr.bf16.mxu0 %v8742
        %12726 = vmatpush1.bf16.msra.mxu0 %v8741
        %12727 = vmatprep.subr.bf16.mxu0 %v8750
        %12728 = vmatpush1.bf16.msra.mxu0 %v8749
        %12729 = vmatprep.subr.bf16.mxu0 %v8758
        %12730 = vmatpush1.bf16.msra.mxu0 %v8757
        %12731 = vmatprep.subr.bf16.mxu0 %v8766
        %12732 = vmatpush1.bf16.msra.mxu0 %v8765
        %12733 = vmatprep.subr.bf16.mxu0 %v8774
        %12734 = vmatpush1.bf16.msra.mxu0 %v8773
        %12735 = vmatprep.subr.bf16.mxu0 %v8782
        %12736 = vmatpush1.bf16.msra.mxu0 %v8781
        %12737 = vmatprep.subr.bf16.mxu0 %v8790
        %12738 = vmatpush1.bf16.msra.mxu0 %v8789
        %12739 = vmatprep.subr.bf16.mxu0 %v8798
        %12740 = vmatpush1.bf16.msra.mxu0 %v8797
        %12741 = vmatprep.mubr.bf16.mxu0 %v470
        %12742 = vmatmul.mubr.bf16.gmra.mrb[0].mxu0 %v469
        %v12743 = vpop.f32.mrb[0].mxu0
        %v12744 = vadd.f32 %v12703, %v12743
        %v12745 = vpop.f32.mrb[0].mxu0
        %v12746 = vadd.f32 %v12705, %v12745
        %v12747 = vpop.f32.mrb[0].mxu0
        %v12748 = vpop.f32.mrb[0].mxu0
        %12749 = vdwg.mxu0
        %12750 = vmatprep.subr.bf16.mxu0 %v8806
        %12751 = vmatpush1.bf16.msra.mxu0 %v8805
        %12752 = vmatprep.subr.bf16.mxu0 %v8814
        %12753 = vmatpush1.bf16.msra.mxu0 %v8813
        %12754 = vmatprep.subr.bf16.mxu0 %v8822
        %12755 = vmatpush1.bf16.msra.mxu0 %v8821
        %12756 = vmatprep.subr.bf16.mxu0 %v8830
        %12757 = vmatpush1.bf16.msra.mxu0 %v8829
        %12758 = vmatprep.subr.bf16.mxu0 %v8838
        %12759 = vmatpush1.bf16.msra.mxu0 %v8837
        %12760 = vmatprep.subr.bf16.mxu0 %v8846
        %12761 = vmatpush1.bf16.msra.mxu0 %v8845
        %12762 = vmatprep.subr.bf16.mxu0 %v8854
        %12763 = vmatpush1.bf16.msra.mxu0 %v8853
        %12764 = vmatprep.subr.bf16.mxu0 %v8862
        %12765 = vmatpush1.bf16.msra.mxu0 %v8861
        %12766 = vmatprep.subr.bf16.mxu0 %v8870
        %12767 = vmatpush1.bf16.msra.mxu0 %v8869
        %12768 = vmatprep.subr.bf16.mxu0 %v8878
        %12769 = vmatpush1.bf16.msra.mxu0 %v8877
        %12770 = vmatprep.subr.bf16.mxu0 %v8886
        %12771 = vmatpush1.bf16.msra.mxu0 %v8885
        %12772 = vmatprep.subr.bf16.mxu0 %v8894
        %12773 = vmatpush1.bf16.msra.mxu0 %v8893
        %12774 = vmatprep.subr.bf16.mxu0 %v8902
        %12775 = vmatpush1.bf16.msra.mxu0 %v8901
        %12776 = vmatprep.subr.bf16.mxu0 %v8910
        %12777 = vmatpush1.bf16.msra.mxu0 %v8909
        %12778 = vmatprep.subr.bf16.mxu0 %v8918
        %12779 = vmatpush1.bf16.msra.mxu0 %v8917
        %12780 = vmatprep.subr.bf16.mxu0 %v8926
        %12781 = vmatpush1.bf16.msra.mxu0 %v8925
        %12782 = vmatprep.mubr.bf16.mxu0 %v472
        %12783 = vmatmul.mubr.bf16.gmra.mrb[0].mxu0 %v471
        %v12784 = vpop.f32.mrb[0].mxu0
        %v12785 = vadd.f32 %v12744, %v12784
        %v12786 = vpop.f32.mrb[0].mxu0
        %v12787 = vadd.f32 %v12746, %v12786
        %v12788 = vpop.f32.mrb[0].mxu0
        %v12789 = vpop.f32.mrb[0].mxu0
        %12790 = vdwg.mxu0
        %12791 = vmatprep.subr.bf16.mxu0 %v8934
        %12792 = vmatpush1.bf16.msra.mxu0 %v8933
        %12793 = vmatprep.subr.bf16.mxu0 %v8942
        %12794 = vmatpush1.bf16.msra.mxu0 %v8941
        %12795 = vmatprep.subr.bf16.mxu0 %v8950
        %12796 = vmatpush1.bf16.msra.mxu0 %v8949
        %12797 = vmatprep.subr.bf16.mxu0 %v8958
        %12798 = vmatpush1.bf16.msra.mxu0 %v8957
        %12799 = vmatprep.subr.bf16.mxu0 %v8966
        %12800 = vmatpush1.bf16.msra.mxu0 %v8965
        %12801 = vmatprep.subr.bf16.mxu0 %v8974
        %12802 = vmatpush1.bf16.msra.mxu0 %v8973
        %12803 = vmatprep.subr.bf16.mxu0 %v8982
        %12804 = vmatpush1.bf16.msra.mxu0 %v8981
        %12805 = vmatprep.subr.bf16.mxu0 %v8990
        %12806 = vmatpush1.bf16.msra.mxu0 %v8989
        %12807 = vmatprep.subr.bf16.mxu0 %v8998
        %12808 = vmatpush1.bf16.msra.mxu0 %v8997
        %12809 = vmatprep.subr.bf16.mxu0 %v9006
        %12810 = vmatpush1.bf16.msra.mxu0 %v9005
        %12811 = vmatprep.subr.bf16.mxu0 %v9014
        %12812 = vmatpush1.bf16.msra.mxu0 %v9013
        %12813 = vmatprep.subr.bf16.mxu0 %v9022
        %12814 = vmatpush1.bf16.msra.mxu0 %v9021
        %12815 = vmatprep.subr.bf16.mxu0 %v9030
        %12816 = vmatpush1.bf16.msra.mxu0 %v9029
        %12817 = vmatprep.subr.bf16.mxu0 %v9038
        %12818 = vmatpush1.bf16.msra.mxu0 %v9037
        %12819 = vmatprep.subr.bf16.mxu0 %v9046
        %12820 = vmatpush1.bf16.msra.mxu0 %v9045
        %12821 = vmatprep.subr.bf16.mxu0 %v9054
        %12822 = vmatpush1.bf16.msra.mxu0 %v9053
        %12823 = vmatprep.mubr.bf16.mxu0 %v474
        %12824 = vmatmul.mubr.bf16.gmra.mrb[0].mxu0 %v473
        %v12825 = vpop.f32.mrb[0].mxu0
        %v12826 = vadd.f32 %v12785, %v12825
        %v12827 = vpop.f32.mrb[0].mxu0
        %v12828 = vadd.f32 %v12787, %v12827
        %v12829 = vpop.f32.mrb[0].mxu0
        %v12830 = vpop.f32.mrb[0].mxu0
        %12831 = vdwg.mxu0
        %12832 = vmatprep.subr.bf16.mxu0 %v9062
        %12833 = vmatpush1.bf16.msra.mxu0 %v9061
        %12834 = vmatprep.subr.bf16.mxu0 %v9070
        %12835 = vmatpush1.bf16.msra.mxu0 %v9069
        %12836 = vmatprep.subr.bf16.mxu0 %v9078
        %12837 = vmatpush1.bf16.msra.mxu0 %v9077
        %12838 = vmatprep.subr.bf16.mxu0 %v9086
        %12839 = vmatpush1.bf16.msra.mxu0 %v9085
        %12840 = vmatprep.subr.bf16.mxu0 %v9094
        %12841 = vmatpush1.bf16.msra.mxu0 %v9093
        %12842 = vmatprep.subr.bf16.mxu0 %v9102
        %12843 = vmatpush1.bf16.msra.mxu0 %v9101
        %12844 = vmatprep.subr.bf16.mxu0 %v9110
        %12845 = vmatpush1.bf16.msra.mxu0 %v9109
        %12846 = vmatprep.subr.bf16.mxu0 %v9118
        %12847 = vmatpush1.bf16.msra.mxu0 %v9117
        %12848 = vmatprep.subr.bf16.mxu0 %v9126
        %12849 = vmatpush1.bf16.msra.mxu0 %v9125
        %12850 = vmatprep.subr.bf16.mxu0 %v9134
        %12851 = vmatpush1.bf16.msra.mxu0 %v9133
        %12852 = vmatprep.subr.bf16.mxu0 %v9142
        %12853 = vmatpush1.bf16.msra.mxu0 %v9141
        %12854 = vmatprep.subr.bf16.mxu0 %v9150
        %12855 = vmatpush1.bf16.msra.mxu0 %v9149
        %12856 = vmatprep.subr.bf16.mxu0 %v9158
        %12857 = vmatpush1.bf16.msra.mxu0 %v9157
        %12858 = vmatprep.subr.bf16.mxu0 %v9166
        %12859 = vmatpush1.bf16.msra.mxu0 %v9165
        %12860 = vmatprep.subr.bf16.mxu0 %v9174
        %12861 = vmatpush1.bf16.msra.mxu0 %v9173
        %12862 = vmatprep.subr.bf16.mxu0 %v9182
        %12863 = vmatpush1.bf16.msra.mxu0 %v9181
        %12864 = vmatprep.mubr.bf16.mxu0 %v476
        %12865 = vmatmul.mubr.bf16.gmra.mrb[0].mxu0 %v475
        %v12866 = vpop.f32.mrb[0].mxu0
        %v12867 = vadd.f32 %v12826, %v12866
        %v12868 = vpop.f32.mrb[0].mxu0
        %v12869 = vadd.f32 %v12828, %v12868
        %v12870 = vpop.f32.mrb[0].mxu0
        %v12871 = vpop.f32.mrb[0].mxu0
        %12872 = vdwg.mxu0
        %12873 = vmatprep.subr.bf16.mxu0 %v9190
        %12874 = vmatpush1.bf16.msra.mxu0 %v9189
        %12875 = vmatprep.subr.bf16.mxu0 %v9198
        %12876 = vmatpush1.bf16.msra.mxu0 %v9197
        %12877 = vmatprep.subr.bf16.mxu0 %v9206
        %12878 = vmatpush1.bf16.msra.mxu0 %v9205
        %12879 = vmatprep.subr.bf16.mxu0 %v9214
        %12880 = vmatpush1.bf16.msra.mxu0 %v9213
        %12881 = vmatprep.subr.bf16.mxu0 %v9222
        %12882 = vmatpush1.bf16.msra.mxu0 %v9221
        %12883 = vmatprep.subr.bf16.mxu0 %v9230
        %12884 = vmatpush1.bf16.msra.mxu0 %v9229
        %12885 = vmatprep.subr.bf16.mxu0 %v9238
        %12886 = vmatpush1.bf16.msra.mxu0 %v9237
        %12887 = vmatprep.subr.bf16.mxu0 %v9246
        %12888 = vmatpush1.bf16.msra.mxu0 %v9245
        %12889 = vmatprep.subr.bf16.mxu0 %v9254
        %12890 = vmatpush1.bf16.msra.mxu0 %v9253
        %12891 = vmatprep.subr.bf16.mxu0 %v9262
        %12892 = vmatpush1.bf16.msra.mxu0 %v9261
        %12893 = vmatprep.subr.bf16.mxu0 %v9270
        %12894 = vmatpush1.bf16.msra.mxu0 %v9269
        %12895 = vmatprep.subr.bf16.mxu0 %v9278
        %12896 = vmatpush1.bf16.msra.mxu0 %v9277
        %12897 = vmatprep.subr.bf16.mxu0 %v9286
        %12898 = vmatpush1.bf16.msra.mxu0 %v9285
        %12899 = vmatprep.subr.bf16.mxu0 %v9294
        %12900 = vmatpush1.bf16.msra.mxu0 %v9293
        %12901 = vmatprep.subr.bf16.mxu0 %v9302
        %12902 = vmatpush1.bf16.msra.mxu0 %v9301
        %12903 = vmatprep.subr.bf16.mxu0 %v9310
        %12904 = vmatpush1.bf16.msra.mxu0 %v9309
        %12905 = vmatprep.mubr.bf16.mxu0 %v478
        %12906 = vmatmul.mubr.bf16.gmra.mrb[0].mxu0 %v477
        %v12907 = vpop.f32.mrb[0].mxu0
        %v12908 = vadd.f32 %v12867, %v12907
        %v12909 = vpop.f32.mrb[0].mxu0
        %v12910 = vadd.f32 %v12869, %v12909
        %v12911 = vpop.f32.mrb[0].mxu0
        %v12912 = vpop.f32.mrb[0].mxu0
        %12913 = vdwg.mxu0
        %12914 = vmatprep.subr.bf16.mxu0 %v9318
        %12915 = vmatpush1.bf16.msra.mxu0 %v9317
        %12916 = vmatprep.subr.bf16.mxu0 %v9326
        %12917 = vmatpush1.bf16.msra.mxu0 %v9325
        %12918 = vmatprep.subr.bf16.mxu0 %v9334
        %12919 = vmatpush1.bf16.msra.mxu0 %v9333
        %12920 = vmatprep.subr.bf16.mxu0 %v9342
        %12921 = vmatpush1.bf16.msra.mxu0 %v9341
        %12922 = vmatprep.subr.bf16.mxu0 %v9350
        %12923 = vmatpush1.bf16.msra.mxu0 %v9349
        %12924 = vmatprep.subr.bf16.mxu0 %v9358
        %12925 = vmatpush1.bf16.msra.mxu0 %v9357
        %12926 = vmatprep.subr.bf16.mxu0 %v9366
        %12927 = vmatpush1.bf16.msra.mxu0 %v9365
        %12928 = vmatprep.subr.bf16.mxu0 %v9374
        %12929 = vmatpush1.bf16.msra.mxu0 %v9373
        %12930 = vmatprep.subr.bf16.mxu0 %v9382
        %12931 = vmatpush1.bf16.msra.mxu0 %v9381
        %12932 = vmatprep.subr.bf16.mxu0 %v9390
        %12933 = vmatpush1.bf16.msra.mxu0 %v9389
        %12934 = vmatprep.subr.bf16.mxu0 %v9398
        %12935 = vmatpush1.bf16.msra.mxu0 %v9397
        %12936 = vmatprep.subr.bf16.mxu0 %v9406
        %12937 = vmatpush1.bf16.msra.mxu0 %v9405
        %12938 = vmatprep.subr.bf16.mxu0 %v9414
        %12939 = vmatpush1.bf16.msra.mxu0 %v9413
        %12940 = vmatprep.subr.bf16.mxu0 %v9422
        %12941 = vmatpush1.bf16.msra.mxu0 %v9421
        %12942 = vmatprep.subr.bf16.mxu0 %v9430
        %12943 = vmatpush1.bf16.msra.mxu0 %v9429
        %12944 = vmatprep.subr.bf16.mxu0 %v9438
        %12945 = vmatpush1.bf16.msra.mxu0 %v9437
        %12946 = vmatprep.mubr.bf16.mxu0 %v480
        %12947 = vmatmul.mubr.bf16.gmra.mrb[0].mxu0 %v479
        %v12948 = vpop.f32.mrb[0].mxu0
        %v12949 = vadd.f32 %v12908, %v12948
        %v12950 = vpop.f32.mrb[0].mxu0
        %v12951 = vadd.f32 %v12910, %v12950
        %v12952 = vpop.f32.mrb[0].mxu0
        %v12953 = vpop.f32.mrb[0].mxu0
        %12954 = vdwg.mxu0
        %12955 = vmatprep.subr.bf16.mxu0 %v7656
        %12956 = vmatpush1.bf16.msra.mxu0 %v7655
        %12957 = vmatprep.subr.bf16.mxu0 %v7664
        %12958 = vmatpush1.bf16.msra.mxu0 %v7663
        %12959 = vmatprep.subr.bf16.mxu0 %v7672
        %12960 = vmatpush1.bf16.msra.mxu0 %v7671
        %12961 = vmatprep.subr.bf16.mxu0 %v7680
        %12962 = vmatpush1.bf16.msra.mxu0 %v7679
        %12963 = vmatprep.subr.bf16.mxu0 %v7688
        %12964 = vmatpush1.bf16.msra.mxu0 %v7687
        %12965 = vmatprep.subr.bf16.mxu0 %v7696
        %12966 = vmatpush1.bf16.msra.mxu0 %v7695
        %12967 = vmatprep.subr.bf16.mxu0 %v7704
        %12968 = vmatpush1.bf16.msra.mxu0 %v7703
        %12969 = vmatprep.subr.bf16.mxu0 %v7712
        %12970 = vmatpush1.bf16.msra.mxu0 %v7711
        %12971 = vmatprep.subr.bf16.mxu0 %v7720
        %12972 = vmatpush1.bf16.msra.mxu0 %v7719
        %12973 = vmatprep.subr.bf16.mxu0 %v7728
        %12974 = vmatpush1.bf16.msra.mxu0 %v7727
        %12975 = vmatprep.subr.bf16.mxu0 %v7736
        %12976 = vmatpush1.bf16.msra.mxu0 %v7735
        %12977 = vmatprep.subr.bf16.mxu0 %v7744
        %12978 = vmatpush1.bf16.msra.mxu0 %v7743
        %12979 = vmatprep.subr.bf16.mxu0 %v7752
        %12980 = vmatpush1.bf16.msra.mxu0 %v7751
        %12981 = vmatprep.subr.bf16.mxu0 %v7760
        %12982 = vmatpush1.bf16.msra.mxu0 %v7759
        %12983 = vmatprep.subr.bf16.mxu0 %v7768
        %12984 = vmatpush1.bf16.msra.mxu0 %v7767
        %12985 = vmatprep.subr.bf16.mxu0 %v7776
        %12986 = vmatpush1.bf16.msra.mxu0 %v7775
        %12987 = vmatprep.mubr.bf16.mxu0 %v454
        %12988 = vmatmul.mubr.bf16.gmra.mrb[0].mxu0 %v453
        %v12989 = vpop.f32.mrb[0].mxu0
        %v12990 = vadd.f32 0.0, %v12989
        %v12991 = vpop.f32.mrb[0].mxu0
        %v12992 = vadd.f32 0.0, %v12991
        %v12993 = vpop.f32.mrb[0].mxu0
        %v12994 = vpop.f32.mrb[0].mxu0
        %12995 = vdwg.mxu0
        %12996 = vmatprep.subr.bf16.mxu0 %v7784
        %12997 = vmatpush1.bf16.msra.mxu0 %v7783
        %12998 = vmatprep.subr.bf16.mxu0 %v7792
        %12999 = vmatpush1.bf16.msra.mxu0 %v7791
        %13000 = vmatprep.subr.bf16.mxu0 %v7800
        %13001 = vmatpush1.bf16.msra.mxu0 %v7799
        %13002 = vmatprep.subr.bf16.mxu0 %v7808
        %13003 = vmatpush1.bf16.msra.mxu0 %v7807
        %13004 = vmatprep.subr.bf16.mxu0 %v7816
        %13005 = vmatpush1.bf16.msra.mxu0 %v7815
        %13006 = vmatprep.subr.bf16.mxu0 %v7824
        %13007 = vmatpush1.bf16.msra.mxu0 %v7823
        %13008 = vmatprep.subr.bf16.mxu0 %v7832
        %13009 = vmatpush1.bf16.msra.mxu0 %v7831
        %13010 = vmatprep.subr.bf16.mxu0 %v7840
        %13011 = vmatpush1.bf16.msra.mxu0 %v7839
        %13012 = vmatprep.subr.bf16.mxu0 %v7848
        %13013 = vmatpush1.bf16.msra.mxu0 %v7847
        %13014 = vmatprep.subr.bf16.mxu0 %v7856
        %13015 = vmatpush1.bf16.msra.mxu0 %v7855
        %13016 = vmatprep.subr.bf16.mxu0 %v7864
        %13017 = vmatpush1.bf16.msra.mxu0 %v7863
        %13018 = vmatprep.subr.bf16.mxu0 %v7872
        %13019 = vmatpush1.bf16.msra.mxu0 %v7871
        %13020 = vmatprep.subr.bf16.mxu0 %v7880
        %13021 = vmatpush1.bf16.msra.mxu0 %v7879
        %13022 = vmatprep.subr.bf16.mxu0 %v7888
        %13023 = vmatpush1.bf16.msra.mxu0 %v7887
        %13024 = vmatprep.subr.bf16.mxu0 %v7896
        %13025 = vmatpush1.bf16.msra.mxu0 %v7895
        %13026 = vmatprep.subr.bf16.mxu0 %v7904
        %13027 = vmatpush1.bf16.msra.mxu0 %v7903
        %13028 = vmatprep.mubr.bf16.mxu0 %v456
        %13029 = vmatmul.mubr.bf16.gmra.mrb[0].mxu0 %v455
        %v13030 = vpop.f32.mrb[0].mxu0
        %v13031 = vadd.f32 %v12990, %v13030
        %v13032 = vpop.f32.mrb[0].mxu0
        %v13033 = vadd.f32 %v12992, %v13032
        %v13034 = vpop.f32.mrb[0].mxu0
        %v13035 = vpop.f32.mrb[0].mxu0
        %13036 = vdwg.mxu0
        %13037 = vmatprep.subr.bf16.mxu0 %v7912
        %13038 = vmatpush1.bf16.msra.mxu0 %v7911
        %13039 = vmatprep.subr.bf16.mxu0 %v7920
        %13040 = vmatpush1.bf16.msra.mxu0 %v7919
        %13041 = vmatprep.subr.bf16.mxu0 %v7928
        %13042 = vmatpush1.bf16.msra.mxu0 %v7927
        %13043 = vmatprep.subr.bf16.mxu0 %v7936
        %13044 = vmatpush1.bf16.msra.mxu0 %v7935
        %13045 = vmatprep.subr.bf16.mxu0 %v7944
        %13046 = vmatpush1.bf16.msra.mxu0 %v7943
        %13047 = vmatprep.subr.bf16.mxu0 %v7952
        %13048 = vmatpush1.bf16.msra.mxu0 %v7951
        %13049 = vmatprep.subr.bf16.mxu0 %v7960
        %13050 = vmatpush1.bf16.msra.mxu0 %v7959
        %13051 = vmatprep.subr.bf16.mxu0 %v7968
        %13052 = vmatpush1.bf16.msra.mxu0 %v7967
        %13053 = vmatprep.subr.bf16.mxu0 %v7976
        %13054 = vmatpush1.bf16.msra.mxu0 %v7975
        %13055 = vmatprep.subr.bf16.mxu0 %v7984
        %13056 = vmatpush1.bf16.msra.mxu0 %v7983
        %13057 = vmatprep.subr.bf16.mxu0 %v7992
        %13058 = vmatpush1.bf16.msra.mxu0 %v7991
        %13059 = vmatprep.subr.bf16.mxu0 %v8000
        %13060 = vmatpush1.bf16.msra.mxu0 %v7999
        %13061 = vmatprep.subr.bf16.mxu0 %v8008
        %13062 = vmatpush1.bf16.msra.mxu0 %v8007
        %13063 = vmatprep.subr.bf16.mxu0 %v8016
        %13064 = vmatpush1.bf16.msra.mxu0 %v8015
        %13065 = vmatprep.subr.bf16.mxu0 %v8024
        %13066 = vmatpush1.bf16.msra.mxu0 %v8023
        %13067 = vmatprep.subr.bf16.mxu0 %v8032
        %13068 = vmatpush1.bf16.msra.mxu0 %v8031
        %13069 = vmatprep.mubr.bf16.mxu0 %v458
        %13070 = vmatmul.mubr.bf16.gmra.mrb[0].mxu0 %v457
        %v13071 = vpop.f32.mrb[0].mxu0
        %v13072 = vadd.f32 %v13031, %v13071
        %v13073 = vpop.f32.mrb[0].mxu0
        %v13074 = vadd.f32 %v13033, %v13073
        %v13075 = vpop.f32.mrb[0].mxu0
        %v13076 = vpop.f32.mrb[0].mxu0
        %13077 = vdwg.mxu0
        %13078 = vmatprep.subr.bf16.mxu0 %v8040
        %13079 = vmatpush1.bf16.msra.mxu0 %v8039
        %13080 = vmatprep.subr.bf16.mxu0 %v8048
        %13081 = vmatpush1.bf16.msra.mxu0 %v8047
        %13082 = vmatprep.subr.bf16.mxu0 %v8056
        %13083 = vmatpush1.bf16.msra.mxu0 %v8055
        %13084 = vmatprep.subr.bf16.mxu0 %v8064
        %13085 = vmatpush1.bf16.msra.mxu0 %v8063
        %13086 = vmatprep.subr.bf16.mxu0 %v8072
        %13087 = vmatpush1.bf16.msra.mxu0 %v8071
        %13088 = vmatprep.subr.bf16.mxu0 %v8080
        %13089 = vmatpush1.bf16.msra.mxu0 %v8079
        %13090 = vmatprep.subr.bf16.mxu0 %v8088
        %13091 = vmatpush1.bf16.msra.mxu0 %v8087
        %13092 = vmatprep.subr.bf16.mxu0 %v8096
        %13093 = vmatpush1.bf16.msra.mxu0 %v8095
        %13094 = vmatprep.subr.bf16.mxu0 %v8104
        %13095 = vmatpush1.bf16.msra.mxu0 %v8103
        %13096 = vmatprep.subr.bf16.mxu0 %v8112
        %13097 = vmatpush1.bf16.msra.mxu0 %v8111
        %13098 = vmatprep.subr.bf16.mxu0 %v8120
        %13099 = vmatpush1.bf16.msra.mxu0 %v8119
        %13100 = vmatprep.subr.bf16.mxu0 %v8128
        %13101 = vmatpush1.bf16.msra.mxu0 %v8127
        %13102 = vmatprep.subr.bf16.mxu0 %v8136
        %13103 = vmatpush1.bf16.msra.mxu0 %v8135
        %13104 = vmatprep.subr.bf16.mxu0 %v8144
        %13105 = vmatpush1.bf16.msra.mxu0 %v8143
        %13106 = vmatprep.subr.bf16.mxu0 %v8152
        %13107 = vmatpush1.bf16.msra.mxu0 %v8151
        %13108 = vmatprep.subr.bf16.mxu0 %v8160
        %13109 = vmatpush1.bf16.msra.mxu0 %v8159
        %13110 = vmatprep.mubr.bf16.mxu0 %v460
        %13111 = vmatmul.mubr.bf16.gmra.mrb[0].mxu0 %v459
        %v13112 = vpop.f32.mrb[0].mxu0
        %v13113 = vadd.f32 %v13072, %v13112
        %v13114 = vpop.f32.mrb[0].mxu0
        %v13115 = vadd.f32 %v13074, %v13114
        %v13116 = vpop.f32.mrb[0].mxu0
        %v13117 = vpop.f32.mrb[0].mxu0
        %13118 = vdwg.mxu0
        %13119 = vmatprep.subr.bf16.mxu0 %v8168
        %13120 = vmatpush1.bf16.msra.mxu0 %v8167
        %13121 = vmatprep.subr.bf16.mxu0 %v8176
        %13122 = vmatpush1.bf16.msra.mxu0 %v8175
        %13123 = vmatprep.subr.bf16.mxu0 %v8184
        %13124 = vmatpush1.bf16.msra.mxu0 %v8183
        %13125 = vmatprep.subr.bf16.mxu0 %v8192
        %13126 = vmatpush1.bf16.msra.mxu0 %v8191
        %13127 = vmatprep.subr.bf16.mxu0 %v8200
        %13128 = vmatpush1.bf16.msra.mxu0 %v8199
        %13129 = vmatprep.subr.bf16.mxu0 %v8208
        %13130 = vmatpush1.bf16.msra.mxu0 %v8207
        %13131 = vmatprep.subr.bf16.mxu0 %v8216
        %13132 = vmatpush1.bf16.msra.mxu0 %v8215
        %13133 = vmatprep.subr.bf16.mxu0 %v8224
        %13134 = vmatpush1.bf16.msra.mxu0 %v8223
        %13135 = vmatprep.subr.bf16.mxu0 %v8232
        %13136 = vmatpush1.bf16.msra.mxu0 %v8231
        %13137 = vmatprep.subr.bf16.mxu0 %v8240
        %13138 = vmatpush1.bf16.msra.mxu0 %v8239
        %13139 = vmatprep.subr.bf16.mxu0 %v8248
        %13140 = vmatpush1.bf16.msra.mxu0 %v8247
        %13141 = vmatprep.subr.bf16.mxu0 %v8256
        %13142 = vmatpush1.bf16.msra.mxu0 %v8255
        %13143 = vmatprep.subr.bf16.mxu0 %v8264
        %13144 = vmatpush1.bf16.msra.mxu0 %v8263
        %13145 = vmatprep.subr.bf16.mxu0 %v8272
        %13146 = vmatpush1.bf16.msra.mxu0 %v8271
        %13147 = vmatprep.subr.bf16.mxu0 %v8280
        %13148 = vmatpush1.bf16.msra.mxu0 %v8279
        %13149 = vmatprep.subr.bf16.mxu0 %v8288
        %13150 = vmatpush1.bf16.msra.mxu0 %v8287
        %13151 = vmatprep.mubr.bf16.mxu0 %v462
        %13152 = vmatmul.mubr.bf16.gmra.mrb[0].mxu0 %v461
        %v13153 = vpop.f32.mrb[0].mxu0
        %v13154 = vadd.f32 %v13113, %v13153
        %v13155 = vpop.f32.mrb[0].mxu0
        %v13156 = vadd.f32 %v13115, %v13155
        %v13157 = vpop.f32.mrb[0].mxu0
        %v13158 = vpop.f32.mrb[0].mxu0
        %13159 = vdwg.mxu0
        %13160 = vmatprep.subr.bf16.mxu0 %v8296
        %13161 = vmatpush1.bf16.msra.mxu0 %v8295
        %13162 = vmatprep.subr.bf16.mxu0 %v8304
        %13163 = vmatpush1.bf16.msra.mxu0 %v8303
        %13164 = vmatprep.subr.bf16.mxu0 %v8312
        %13165 = vmatpush1.bf16.msra.mxu0 %v8311
        %13166 = vmatprep.subr.bf16.mxu0 %v8320
        %13167 = vmatpush1.bf16.msra.mxu0 %v8319
        %13168 = vmatprep.subr.bf16.mxu0 %v8328
        %13169 = vmatpush1.bf16.msra.mxu0 %v8327
        %13170 = vmatprep.subr.bf16.mxu0 %v8336
        %13171 = vmatpush1.bf16.msra.mxu0 %v8335
        %13172 = vmatprep.subr.bf16.mxu0 %v8344
        %13173 = vmatpush1.bf16.msra.mxu0 %v8343
        %13174 = vmatprep.subr.bf16.mxu0 %v8352
        %13175 = vmatpush1.bf16.msra.mxu0 %v8351
        %13176 = vmatprep.subr.bf16.mxu0 %v8360
        %13177 = vmatpush1.bf16.msra.mxu0 %v8359
        %13178 = vmatprep.subr.bf16.mxu0 %v8368
        %13179 = vmatpush1.bf16.msra.mxu0 %v8367
        %13180 = vmatprep.subr.bf16.mxu0 %v8376
        %13181 = vmatpush1.bf16.msra.mxu0 %v8375
        %13182 = vmatprep.subr.bf16.mxu0 %v8384
        %13183 = vmatpush1.bf16.msra.mxu0 %v8383
        %13184 = vmatprep.subr.bf16.mxu0 %v8392
        %13185 = vmatpush1.bf16.msra.mxu0 %v8391
        %13186 = vmatprep.subr.bf16.mxu0 %v8400
        %13187 = vmatpush1.bf16.msra.mxu0 %v8399
        %13188 = vmatprep.subr.bf16.mxu0 %v8408
        %13189 = vmatpush1.bf16.msra.mxu0 %v8407
        %13190 = vmatprep.subr.bf16.mxu0 %v8416
        %13191 = vmatpush1.bf16.msra.mxu0 %v8415
        %13192 = vmatprep.mubr.bf16.mxu0 %v464
        %13193 = vmatmul.mubr.bf16.gmra.mrb[0].mxu0 %v463
        %v13194 = vpop.f32.mrb[0].mxu0
        %v13195 = vadd.f32 %v13154, %v13194
        %v13196 = vpop.f32.mrb[0].mxu0
        %v13197 = vadd.f32 %v13156, %v13196
        %v13198 = vpop.f32.mrb[0].mxu0
        %v13199 = vpop.f32.mrb[0].mxu0
        %13200 = vdwg.mxu0
        %13201 = vmatprep.subr.bf16.mxu0 %v8424
        %13202 = vmatpush1.bf16.msra.mxu0 %v8423
        %13203 = vmatprep.subr.bf16.mxu0 %v8432
        %13204 = vmatpush1.bf16.msra.mxu0 %v8431
        %13205 = vmatprep.subr.bf16.mxu0 %v8440
        %13206 = vmatpush1.bf16.msra.mxu0 %v8439
        %13207 = vmatprep.subr.bf16.mxu0 %v8448
        %13208 = vmatpush1.bf16.msra.mxu0 %v8447
        %13209 = vmatprep.subr.bf16.mxu0 %v8456
        %13210 = vmatpush1.bf16.msra.mxu0 %v8455
        %13211 = vmatprep.subr.bf16.mxu0 %v8464
        %13212 = vmatpush1.bf16.msra.mxu0 %v8463
        %13213 = vmatprep.subr.bf16.mxu0 %v8472
        %13214 = vmatpush1.bf16.msra.mxu0 %v8471
        %13215 = vmatprep.subr.bf16.mxu0 %v8480
        %13216 = vmatpush1.bf16.msra.mxu0 %v8479
        %13217 = vmatprep.subr.bf16.mxu0 %v8488
        %13218 = vmatpush1.bf16.msra.mxu0 %v8487
        %13219 = vmatprep.subr.bf16.mxu0 %v8496
        %13220 = vmatpush1.bf16.msra.mxu0 %v8495
        %13221 = vmatprep.subr.bf16.mxu0 %v8504
        %13222 = vmatpush1.bf16.msra.mxu0 %v8503
        %13223 = vmatprep.subr.bf16.mxu0 %v8512
        %13224 = vmatpush1.bf16.msra.mxu0 %v8511
        %13225 = vmatprep.subr.bf16.mxu0 %v8520
        %13226 = vmatpush1.bf16.msra.mxu0 %v8519
        %13227 = vmatprep.subr.bf16.mxu0 %v8528
        %13228 = vmatpush1.bf16.msra.mxu0 %v8527
        %13229 = vmatprep.subr.bf16.mxu0 %v8536
        %13230 = vmatpush1.bf16.msra.mxu0 %v8535
        %13231 = vmatprep.subr.bf16.mxu0 %v8544
        %13232 = vmatpush1.bf16.msra.mxu0 %v8543
        %13233 = vmatprep.mubr.bf16.mxu0 %v466
        %13234 = vmatmul.mubr.bf16.gmra.mrb[0].mxu0 %v465
        %v13235 = vpop.f32.mrb[0].mxu0
        %v13236 = vadd.f32 %v13195, %v13235
        %v13237 = vpop.f32.mrb[0].mxu0
        %v13238 = vadd.f32 %v13197, %v13237
        %v13239 = vpop.f32.mrb[0].mxu0
        %v13240 = vpop.f32.mrb[0].mxu0
        %13241 = vdwg.mxu0
        %13242 = vmatprep.subr.bf16.mxu0 %v8552
        %13243 = vmatpush1.bf16.msra.mxu0 %v8551
        %13244 = vmatprep.subr.bf16.mxu0 %v8560
        %13245 = vmatpush1.bf16.msra.mxu0 %v8559
        %13246 = vmatprep.subr.bf16.mxu0 %v8568
        %13247 = vmatpush1.bf16.msra.mxu0 %v8567
        %13248 = vmatprep.subr.bf16.mxu0 %v8576
        %13249 = vmatpush1.bf16.msra.mxu0 %v8575
        %13250 = vmatprep.subr.bf16.mxu0 %v8584
        %13251 = vmatpush1.bf16.msra.mxu0 %v8583
        %13252 = vmatprep.subr.bf16.mxu0 %v8592
        %13253 = vmatpush1.bf16.msra.mxu0 %v8591
        %13254 = vmatprep.subr.bf16.mxu0 %v8600
        %13255 = vmatpush1.bf16.msra.mxu0 %v8599
        %13256 = vmatprep.subr.bf16.mxu0 %v8608
        %13257 = vmatpush1.bf16.msra.mxu0 %v8607
        %13258 = vmatprep.subr.bf16.mxu0 %v8616
        %13259 = vmatpush1.bf16.msra.mxu0 %v8615
        %13260 = vmatprep.subr.bf16.mxu0 %v8624
        %13261 = vmatpush1.bf16.msra.mxu0 %v8623
        %13262 = vmatprep.subr.bf16.mxu0 %v8632
        %13263 = vmatpush1.bf16.msra.mxu0 %v8631
        %13264 = vmatprep.subr.bf16.mxu0 %v8640
        %13265 = vmatpush1.bf16.msra.mxu0 %v8639
        %13266 = vmatprep.subr.bf16.mxu0 %v8648
        %13267 = vmatpush1.bf16.msra.mxu0 %v8647
        %13268 = vmatprep.subr.bf16.mxu0 %v8656
        %13269 = vmatpush1.bf16.msra.mxu0 %v8655
        %13270 = vmatprep.subr.bf16.mxu0 %v8664
        %13271 = vmatpush1.bf16.msra.mxu0 %v8663
        %13272 = vmatprep.subr.bf16.mxu0 %v8672
        %13273 = vmatpush1.bf16.msra.mxu0 %v8671
        %13274 = vmatprep.mubr.bf16.mxu0 %v468
        %13275 = vmatmul.mubr.bf16.gmra.mrb[0].mxu0 %v467
        %v13276 = vpop.f32.mrb[0].mxu0
        %v13277 = vadd.f32 %v13236, %v13276
        %v13278 = vpop.f32.mrb[0].mxu0
        %v13279 = vadd.f32 %v13238, %v13278
        %v13280 = vpop.f32.mrb[0].mxu0
        %v13281 = vpop.f32.mrb[0].mxu0
        %13282 = vdwg.mxu0
        %13283 = vmatprep.subr.bf16.mxu0 %v8680
        %13284 = vmatpush1.bf16.msra.mxu0 %v8679
        %13285 = vmatprep.subr.bf16.mxu0 %v8688
        %13286 = vmatpush1.bf16.msra.mxu0 %v8687
        %13287 = vmatprep.subr.bf16.mxu0 %v8696
        %13288 = vmatpush1.bf16.msra.mxu0 %v8695
        %13289 = vmatprep.subr.bf16.mxu0 %v8704
        %13290 = vmatpush1.bf16.msra.mxu0 %v8703
        %13291 = vmatprep.subr.bf16.mxu0 %v8712
        %13292 = vmatpush1.bf16.msra.mxu0 %v8711
        %13293 = vmatprep.subr.bf16.mxu0 %v8720
        %13294 = vmatpush1.bf16.msra.mxu0 %v8719
        %13295 = vmatprep.subr.bf16.mxu0 %v8728
        %13296 = vmatpush1.bf16.msra.mxu0 %v8727
        %13297 = vmatprep.subr.bf16.mxu0 %v8736
        %13298 = vmatpush1.bf16.msra.mxu0 %v8735
        %13299 = vmatprep.subr.bf16.mxu0 %v8744
        %13300 = vmatpush1.bf16.msra.mxu0 %v8743
        %13301 = vmatprep.subr.bf16.mxu0 %v8752
        %13302 = vmatpush1.bf16.msra.mxu0 %v8751
        %13303 = vmatprep.subr.bf16.mxu0 %v8760
        %13304 = vmatpush1.bf16.msra.mxu0 %v8759
        %13305 = vmatprep.subr.bf16.mxu0 %v8768
        %13306 = vmatpush1.bf16.msra.mxu0 %v8767
        %13307 = vmatprep.subr.bf16.mxu0 %v8776
        %13308 = vmatpush1.bf16.msra.mxu0 %v8775
        %13309 = vmatprep.subr.bf16.mxu0 %v8784
        %13310 = vmatpush1.bf16.msra.mxu0 %v8783
        %13311 = vmatprep.subr.bf16.mxu0 %v8792
        %13312 = vmatpush1.bf16.msra.mxu0 %v8791
        %13313 = vmatprep.subr.bf16.mxu0 %v8800
        %13314 = vmatpush1.bf16.msra.mxu0 %v8799
        %13315 = vmatprep.mubr.bf16.mxu0 %v470
        %13316 = vmatmul.mubr.bf16.gmra.mrb[0].mxu0 %v469
        %v13317 = vpop.f32.mrb[0].mxu0
        %v13318 = vadd.f32 %v13277, %v13317
        %v13319 = vpop.f32.mrb[0].mxu0
        %v13320 = vadd.f32 %v13279, %v13319
        %v13321 = vpop.f32.mrb[0].mxu0
        %v13322 = vpop.f32.mrb[0].mxu0
        %13323 = vdwg.mxu0
        %13324 = vmatprep.subr.bf16.mxu0 %v8808
        %13325 = vmatpush1.bf16.msra.mxu0 %v8807
        %13326 = vmatprep.subr.bf16.mxu0 %v8816
        %13327 = vmatpush1.bf16.msra.mxu0 %v8815
        %13328 = vmatprep.subr.bf16.mxu0 %v8824
        %13329 = vmatpush1.bf16.msra.mxu0 %v8823
        %13330 = vmatprep.subr.bf16.mxu0 %v8832
        %13331 = vmatpush1.bf16.msra.mxu0 %v8831
        %13332 = vmatprep.subr.bf16.mxu0 %v8840
        %13333 = vmatpush1.bf16.msra.mxu0 %v8839
        %13334 = vmatprep.subr.bf16.mxu0 %v8848
        %13335 = vmatpush1.bf16.msra.mxu0 %v8847
        %13336 = vmatprep.subr.bf16.mxu0 %v8856
        %13337 = vmatpush1.bf16.msra.mxu0 %v8855
        %13338 = vmatprep.subr.bf16.mxu0 %v8864
        %13339 = vmatpush1.bf16.msra.mxu0 %v8863
        %13340 = vmatprep.subr.bf16.mxu0 %v8872
        %13341 = vmatpush1.bf16.msra.mxu0 %v8871
        %13342 = vmatprep.subr.bf16.mxu0 %v8880
        %13343 = vmatpush1.bf16.msra.mxu0 %v8879
        %13344 = vmatprep.subr.bf16.mxu0 %v8888
        %13345 = vmatpush1.bf16.msra.mxu0 %v8887
        %13346 = vmatprep.subr.bf16.mxu0 %v8896
        %13347 = vmatpush1.bf16.msra.mxu0 %v8895
        %13348 = vmatprep.subr.bf16.mxu0 %v8904
        %13349 = vmatpush1.bf16.msra.mxu0 %v8903
        %13350 = vmatprep.subr.bf16.mxu0 %v8912
        %13351 = vmatpush1.bf16.msra.mxu0 %v8911
        %13352 = vmatprep.subr.bf16.mxu0 %v8920
        %13353 = vmatpush1.bf16.msra.mxu0 %v8919
        %13354 = vmatprep.subr.bf16.mxu0 %v8928
        %13355 = vmatpush1.bf16.msra.mxu0 %v8927
        %13356 = vmatprep.mubr.bf16.mxu0 %v472
        %13357 = vmatmul.mubr.bf16.gmra.mrb[0].mxu0 %v471
        %v13358 = vpop.f32.mrb[0].mxu0
        %v13359 = vadd.f32 %v13318, %v13358
        %v13360 = vpop.f32.mrb[0].mxu0
        %v13361 = vadd.f32 %v13320, %v13360
        %v13362 = vpop.f32.mrb[0].mxu0
        %v13363 = vpop.f32.mrb[0].mxu0
        %13364 = vdwg.mxu0
        %13365 = vmatprep.subr.bf16.mxu0 %v8936
        %13366 = vmatpush1.bf16.msra.mxu0 %v8935
        %13367 = vmatprep.subr.bf16.mxu0 %v8944
        %13368 = vmatpush1.bf16.msra.mxu0 %v8943
        %13369 = vmatprep.subr.bf16.mxu0 %v8952
        %13370 = vmatpush1.bf16.msra.mxu0 %v8951
        %13371 = vmatprep.subr.bf16.mxu0 %v8960
        %13372 = vmatpush1.bf16.msra.mxu0 %v8959
        %13373 = vmatprep.subr.bf16.mxu0 %v8968
        %13374 = vmatpush1.bf16.msra.mxu0 %v8967
        %13375 = vmatprep.subr.bf16.mxu0 %v8976
        %13376 = vmatpush1.bf16.msra.mxu0 %v8975
        %13377 = vmatprep.subr.bf16.mxu0 %v8984
        %13378 = vmatpush1.bf16.msra.mxu0 %v8983
        %13379 = vmatprep.subr.bf16.mxu0 %v8992
        %13380 = vmatpush1.bf16.msra.mxu0 %v8991
        %13381 = vmatprep.subr.bf16.mxu0 %v9000
        %13382 = vmatpush1.bf16.msra.mxu0 %v8999
        %13383 = vmatprep.subr.bf16.mxu0 %v9008
        %13384 = vmatpush1.bf16.msra.mxu0 %v9007
        %13385 = vmatprep.subr.bf16.mxu0 %v9016
        %13386 = vmatpush1.bf16.msra.mxu0 %v9015
        %13387 = vmatprep.subr.bf16.mxu0 %v9024
        %13388 = vmatpush1.bf16.msra.mxu0 %v9023
        %13389 = vmatprep.subr.bf16.mxu0 %v9032
        %13390 = vmatpush1.bf16.msra.mxu0 %v9031
        %13391 = vmatprep.subr.bf16.mxu0 %v9040
        %13392 = vmatpush1.bf16.msra.mxu0 %v9039
        %13393 = vmatprep.subr.bf16.mxu0 %v9048
        %13394 = vmatpush1.bf16.msra.mxu0 %v9047
        %13395 = vmatprep.subr.bf16.mxu0 %v9056
        %13396 = vmatpush1.bf16.msra.mxu0 %v9055
        %13397 = vmatprep.mubr.bf16.mxu0 %v474
        %13398 = vmatmul.mubr.bf16.gmra.mrb[0].mxu0 %v473
        %v13399 = vpop.f32.mrb[0].mxu0
        %v13400 = vadd.f32 %v13359, %v13399
        %v13401 = vpop.f32.mrb[0].mxu0
        %v13402 = vadd.f32 %v13361, %v13401
        %v13403 = vpop.f32.mrb[0].mxu0
        %v13404 = vpop.f32.mrb[0].mxu0
        %13405 = vdwg.mxu0
        %13406 = vmatprep.subr.bf16.mxu0 %v9064
        %13407 = vmatpush1.bf16.msra.mxu0 %v9063
        %13408 = vmatprep.subr.bf16.mxu0 %v9072
        %13409 = vmatpush1.bf16.msra.mxu0 %v9071
        %13410 = vmatprep.subr.bf16.mxu0 %v9080
        %13411 = vmatpush1.bf16.msra.mxu0 %v9079
        %13412 = vmatprep.subr.bf16.mxu0 %v9088
        %13413 = vmatpush1.bf16.msra.mxu0 %v9087
        %13414 = vmatprep.subr.bf16.mxu0 %v9096
        %13415 = vmatpush1.bf16.msra.mxu0 %v9095
        %13416 = vmatprep.subr.bf16.mxu0 %v9104
        %13417 = vmatpush1.bf16.msra.mxu0 %v9103
        %13418 = vmatprep.subr.bf16.mxu0 %v9112
        %13419 = vmatpush1.bf16.msra.mxu0 %v9111
        %13420 = vmatprep.subr.bf16.mxu0 %v9120
        %13421 = vmatpush1.bf16.msra.mxu0 %v9119
        %13422 = vmatprep.subr.bf16.mxu0 %v9128
        %13423 = vmatpush1.bf16.msra.mxu0 %v9127
        %13424 = vmatprep.subr.bf16.mxu0 %v9136
        %13425 = vmatpush1.bf16.msra.mxu0 %v9135
        %13426 = vmatprep.subr.bf16.mxu0 %v9144
        %13427 = vmatpush1.bf16.msra.mxu0 %v9143
        %13428 = vmatprep.subr.bf16.mxu0 %v9152
        %13429 = vmatpush1.bf16.msra.mxu0 %v9151
        %13430 = vmatprep.subr.bf16.mxu0 %v9160
        %13431 = vmatpush1.bf16.msra.mxu0 %v9159
        %13432 = vmatprep.subr.bf16.mxu0 %v9168
        %13433 = vmatpush1.bf16.msra.mxu0 %v9167
        %13434 = vmatprep.subr.bf16.mxu0 %v9176
        %13435 = vmatpush1.bf16.msra.mxu0 %v9175
        %13436 = vmatprep.subr.bf16.mxu0 %v9184
        %13437 = vmatpush1.bf16.msra.mxu0 %v9183
        %13438 = vmatprep.mubr.bf16.mxu0 %v476
        %13439 = vmatmul.mubr.bf16.gmra.mrb[0].mxu0 %v475
        %v13440 = vpop.f32.mrb[0].mxu0
        %v13441 = vadd.f32 %v13400, %v13440
        %v13442 = vpop.f32.mrb[0].mxu0
        %v13443 = vadd.f32 %v13402, %v13442
        %v13444 = vpop.f32.mrb[0].mxu0
        %v13445 = vpop.f32.mrb[0].mxu0
        %13446 = vdwg.mxu0
        %13447 = vmatprep.subr.bf16.mxu0 %v9192
        %13448 = vmatpush1.bf16.msra.mxu0 %v9191
        %13449 = vmatprep.subr.bf16.mxu0 %v9200
        %13450 = vmatpush1.bf16.msra.mxu0 %v9199
        %13451 = vmatprep.subr.bf16.mxu0 %v9208
        %13452 = vmatpush1.bf16.msra.mxu0 %v9207
        %13453 = vmatprep.subr.bf16.mxu0 %v9216
        %13454 = vmatpush1.bf16.msra.mxu0 %v9215
        %13455 = vmatprep.subr.bf16.mxu0 %v9224
        %13456 = vmatpush1.bf16.msra.mxu0 %v9223
        %13457 = vmatprep.subr.bf16.mxu0 %v9232
        %13458 = vmatpush1.bf16.msra.mxu0 %v9231
        %13459 = vmatprep.subr.bf16.mxu0 %v9240
        %13460 = vmatpush1.bf16.msra.mxu0 %v9239
        %13461 = vmatprep.subr.bf16.mxu0 %v9248
        %13462 = vmatpush1.bf16.msra.mxu0 %v9247
        %13463 = vmatprep.subr.bf16.mxu0 %v9256
        %13464 = vmatpush1.bf16.msra.mxu0 %v9255
        %13465 = vmatprep.subr.bf16.mxu0 %v9264
        %13466 = vmatpush1.bf16.msra.mxu0 %v9263
        %13467 = vmatprep.subr.bf16.mxu0 %v9272
        %13468 = vmatpush1.bf16.msra.mxu0 %v9271
        %13469 = vmatprep.subr.bf16.mxu0 %v9280
        %13470 = vmatpush1.bf16.msra.mxu0 %v9279
        %13471 = vmatprep.subr.bf16.mxu0 %v9288
        %13472 = vmatpush1.bf16.msra.mxu0 %v9287
        %13473 = vmatprep.subr.bf16.mxu0 %v9296
        %13474 = vmatpush1.bf16.msra.mxu0 %v9295
        %13475 = vmatprep.subr.bf16.mxu0 %v9304
        %13476 = vmatpush1.bf16.msra.mxu0 %v9303
        %13477 = vmatprep.subr.bf16.mxu0 %v9312
        %13478 = vmatpush1.bf16.msra.mxu0 %v9311
        %13479 = vmatprep.mubr.bf16.mxu0 %v478
        %13480 = vmatmul.mubr.bf16.gmra.mrb[0].mxu0 %v477
        %v13481 = vpop.f32.mrb[0].mxu0
        %v13482 = vadd.f32 %v13441, %v13481
        %v13483 = vpop.f32.mrb[0].mxu0
        %v13484 = vadd.f32 %v13443, %v13483
        %v13485 = vpop.f32.mrb[0].mxu0
        %v13486 = vpop.f32.mrb[0].mxu0
        %13487 = vdwg.mxu0
        %13488 = vmatprep.subr.bf16.mxu0 %v9320
        %13489 = vmatpush1.bf16.msra.mxu0 %v9319
        %13490 = vmatprep.subr.bf16.mxu0 %v9328
        %13491 = vmatpush1.bf16.msra.mxu0 %v9327
        %13492 = vmatprep.subr.bf16.mxu0 %v9336
        %13493 = vmatpush1.bf16.msra.mxu0 %v9335
        %13494 = vmatprep.subr.bf16.mxu0 %v9344
        %13495 = vmatpush1.bf16.msra.mxu0 %v9343
        %13496 = vmatprep.subr.bf16.mxu0 %v9352
        %13497 = vmatpush1.bf16.msra.mxu0 %v9351
        %13498 = vmatprep.subr.bf16.mxu0 %v9360
        %13499 = vmatpush1.bf16.msra.mxu0 %v9359
        %13500 = vmatprep.subr.bf16.mxu0 %v9368
        %13501 = vmatpush1.bf16.msra.mxu0 %v9367
        %13502 = vmatprep.subr.bf16.mxu0 %v9376
        %13503 = vmatpush1.bf16.msra.mxu0 %v9375
        %13504 = vmatprep.subr.bf16.mxu0 %v9384
        %13505 = vmatpush1.bf16.msra.mxu0 %v9383
        %13506 = vmatprep.subr.bf16.mxu0 %v9392
        %13507 = vmatpush1.bf16.msra.mxu0 %v9391
        %13508 = vmatprep.subr.bf16.mxu0 %v9400
        %13509 = vmatpush1.bf16.msra.mxu0 %v9399
        %13510 = vmatprep.subr.bf16.mxu0 %v9408
        %13511 = vmatpush1.bf16.msra.mxu0 %v9407
        %13512 = vmatprep.subr.bf16.mxu0 %v9416
        %13513 = vmatpush1.bf16.msra.mxu0 %v9415
        %13514 = vmatprep.subr.bf16.mxu0 %v9424
        %13515 = vmatpush1.bf16.msra.mxu0 %v9423
        %13516 = vmatprep.subr.bf16.mxu0 %v9432
        %13517 = vmatpush1.bf16.msra.mxu0 %v9431
        %13518 = vmatprep.subr.bf16.mxu0 %v9440
        %13519 = vmatpush1.bf16.msra.mxu0 %v9439
        %13520 = vmatprep.mubr.bf16.mxu0 %v480
        %13521 = vmatmul.mubr.bf16.gmra.mrb[0].mxu0 %v479
        %v13522 = vpop.f32.mrb[0].mxu0
        %v13523 = vadd.f32 %v13482, %v13522
        %v13524 = vpop.f32.mrb[0].mxu0
        %v13525 = vadd.f32 %v13484, %v13524
        %v13526 = vpop.f32.mrb[0].mxu0
        %v13527 = vpop.f32.mrb[0].mxu0
        %13528 = vdwg.mxu0
        %v13537 = vcombine.low %v11801, %v11803
        %v13538 = vcombine.low %v12375, %v12377
        %v13540 = vunpack.c.l.s4 1983009808
        %v13541 = vunpack.c.0.s8 %v13540
        %v13542 = vlaneseq
        %v13543 = vshrl.u32 %v13542, 7
        %v13544 = vsub.s32 %v13541, %v13543
        %v13545 = vrot.slane %v13537, %v13544
        %v13547 = vunpack.c.l.s4 1983009808
        %v13548 = vunpack.c.0.s8 %v13547
        %v13549 = vlaneseq
        %v13550 = vshrl.u32 %v13549, 7
        %v13551 = vsub.s32 %v13548, %v13550
        %v13552 = vrot.slane %v13538, %v13551
        %v13553 = vcombine.low %v13545, %v13552
        %v13554 = vcombine.low %v12949, %v12951
        %v13555 = vcombine.low %v13523, %v13525
        %v13557 = vunpack.c.l.s4 1983009808
        %v13558 = vunpack.c.0.s8 %v13557
        %v13559 = vlaneseq
        %v13560 = vshrl.u32 %v13559, 7
        %v13561 = vsub.s32 %v13558, %v13560
        %v13562 = vrot.slane %v13554, %v13561
        %v13564 = vunpack.c.l.s4 1983009808
        %v13565 = vunpack.c.0.s8 %v13564
        %v13566 = vlaneseq
        %v13567 = vshrl.u32 %v13566, 7
        %v13568 = vsub.s32 %v13565, %v13567
        %v13569 = vrot.slane %v13555, %v13568
        %v13570 = vcombine.low %v13562, %v13569
        %v13573 = vadd.f32 %v290, %v13553
        %v13574 = vadd.f32 %v291, %v13570
        %13575 = vst [vmem:[%s278] sm:$0xff] %v13573
        %13576 = vst [vmem:[%s278 + $0x8] sm:$0xff] %v13574
        %p13577 = scmp.eq.s32.totalorder %s28, 13
        // Predicated region
        $region49: #{tpu_custom_call.1} parent=31 // pred_check
          %p13578 = pneg %p13577
        $region50: #{tpu_custom_call.1} parent=31 // pred_check_branch
          %13580 = sbr.rel (%p13578) target = $region52
        $region51: #{tpu_custom_call.1} parent=31 // pred_region
          %v13581 = vld [vmem:[%s278] sm:$0xff]
          %v13582 = vld [vmem:[%s278 + $0x8] sm:$0xff]
          %v13583 = vld [vmem:[%s246] sm:$0xff]
          %v13585 = vlaneseq
          %v13586 = vshrl.u32 %v13585, 7
          %v13587 = vsub.s32 0, %v13586
          %v13588 = vrot.slane %v13583, %v13587
          %v13589 = vlaneseq
          %v13590 = vshrl.u32 %v13589, 7
          %v13591 = vsub.s32 1, %v13590
          %v13592 = vrot.slane %v13583, %v13591
          %v13593 = vlaneseq
          %v13594 = vshrl.u32 %v13593, 7
          %v13595 = vsub.s32 2, %v13594
          %v13596 = vrot.slane %v13583, %v13595
          %v13597 = vlaneseq
          %v13598 = vshrl.u32 %v13597, 7
          %v13599 = vsub.s32 3, %v13598
          %v13600 = vrot.slane %v13583, %v13599
          %v13601 = vlaneseq
          %v13602 = vshrl.u32 %v13601, 7
          %v13603 = vsub.s32 4, %v13602
          %v13604 = vrot.slane %v13583, %v13603
          %v13605 = vlaneseq
          %v13606 = vshrl.u32 %v13605, 7
          %v13607 = vsub.s32 5, %v13606
          %v13608 = vrot.slane %v13583, %v13607
          %v13609 = vlaneseq
          %v13610 = vshrl.u32 %v13609, 7
          %v13611 = vsub.s32 6, %v13610
          %v13612 = vrot.slane %v13583, %v13611
          %v13613 = vlaneseq
          %v13614 = vshrl.u32 %v13613, 7
          %v13615 = vsub.s32 7, %v13614
          %v13616 = vrot.slane %v13583, %v13615
          %v13617 = vcombine.low %v13588, %v13592
          %v13618 = vcombine.low %v13596, %v13600
          %v13620 = vunpack.c.l.s4 1983009808
          %v13621 = vunpack.c.0.s8 %v13620
          %v13622 = vlaneseq
          %v13623 = vshrl.u32 %v13622, 7
          %v13624 = vsub.s32 %v13621, %v13623
          %v13625 = vrot.slane %v13617, %v13624
          %v13627 = vunpack.c.l.s4 1983009808
          %v13628 = vunpack.c.0.s8 %v13627
          %v13629 = vlaneseq
          %v13630 = vshrl.u32 %v13629, 7
          %v13631 = vsub.s32 %v13628, %v13630
          %v13632 = vrot.slane %v13618, %v13631
          %v13633 = vcombine.low %v13625, %v13632
          %v13634 = vcombine.low %v13604, %v13608
          %v13635 = vcombine.low %v13612, %v13616
          %v13637 = vunpack.c.l.s4 1983009808
          %v13638 = vunpack.c.0.s8 %v13637
          %v13639 = vlaneseq
          %v13640 = vshrl.u32 %v13639, 7
          %v13641 = vsub.s32 %v13638, %v13640
          %v13642 = vrot.slane %v13634, %v13641
          %v13644 = vunpack.c.l.s4 1983009808
          %v13645 = vunpack.c.0.s8 %v13644
          %v13646 = vlaneseq
          %v13647 = vshrl.u32 %v13646, 7
          %v13648 = vsub.s32 %v13645, %v13647
          %v13649 = vrot.slane %v13635, %v13648
          %v13650 = vcombine.low %v13642, %v13649
          %v13653 = vadd.f32 %v13581, %v13633
          %v13654 = vadd.f32 %v13582, %v13650
          %v13655 = vmax.f32 %v13653, 0.0
          %v13656 = vmax.f32 %v13654, 0.0
          %13657 = vst [vmem:[%s278] sm:$0xff] %v13655
          %13658 = vst [vmem:[%s278 + $0x8] sm:$0xff] %v13656
        $region52: #{tpu_custom_call.1} parent=31 // pred_fallthru
          _
        %s13659 = sand.u32 %s123, 1
        %s13660 = scalar_lea.sflag [#allocation4], %s13659
        %s13661 = sand.u32 %s123, 1
        %s13662 = smul.addr %s13661, 16
        %s13663 = scalar_lea.vmem [#allocation8], %s13662
        // Predicated region
        $region53: #{tpu_custom_call.1} parent=31 // pred_check
          %p13664 = pneg %p133
        $region54: #{tpu_custom_call.1} parent=31 // pred_check_branch
          %13666 = sbr.rel (%p13664) target = $region56
        $region55: #{tpu_custom_call.1} parent=31 // pred_region
          %s13667 = smul.u32 8, %s27
          %s13669 = ssub.s32 256, 256
          %13670 = vsyncadd %s13660, %s13669
          %s13671 = smul.addr %s13667, 32
          %s13672 = scalar_lea.hbm %s3, %s13671
          %s13674 = sshll.u32 %s13663, 4
          %s13675 = int_to_ptr.vmem [resolvable:$true] %s13674
          %13677 = dma.vmem_to_hbm [thread:$0]  %s13675, 256, %s13672, %s13660
        $region56: #{tpu_custom_call.1} parent=31 // pred_fallthru
          _
      $region32: #{tpu_custom_call.1} parent=5 // pred_fallthru
        _
      %p13678 = scmp.le.s32.totalorder 2, %s18
      // Predicated region
      $region57: #{tpu_custom_call.1} parent=5 // pred_check
        %p13679 = pneg %p13678
      $region58: #{tpu_custom_call.1} parent=5 // pred_check_branch
        %13681 = sbr.rel (%p13679) target = $region60
      $region59: #{tpu_custom_call.1} parent=5 // pred_region
        %s13682 = ssub.s32 %s18, 2
        // Predicated region
        $region61: #{tpu_custom_call.1} parent=59 // pred_check
          %p13683 = pneg %p139
        $region62: #{tpu_custom_call.1} parent=59 // pred_check_branch
          %13685 = sbr.rel (%p13683) target = $region64
        $region63: #{tpu_custom_call.1} parent=59 // pred_region
          %s13686 = sand.u32 %s124, 1
          %s13687 = scalar_lea.sflag [#allocation4], %s13686
          %s13688 = sand.u32 %s124, 1
          %s13689 = smul.addr %s13688, 16
          %s13690 = scalar_lea.vmem [#allocation8], %s13689
          %13691 = dma.done %s13687, 256
        $region64: #{tpu_custom_call.1} parent=59 // pred_fallthru
          _
      $region60: #{tpu_custom_call.1} parent=5 // pred_fallthru
        _
    $region6: #{tpu_custom_call.1} parent=1 // loop_footer
      %s22 = sadd.s32 1, %s18
    $region7: #{tpu_custom_call.1} parent=1 // loop_footer_branch
      %17 = sbr.rel target = $region3
    $region8: #{tpu_custom_call.1} parent=1 // loop_exit
      _
    %13692 = vsyncpa [#allocation3], 1
    %s13693 = scalar_lea.sflag [#allocation3], 1
    %13694 = vsyncpa %s13693, 1
    %13695 = vsyncpa [#allocation6], 1
    %s13696 = scalar_lea.sflag [#allocation6], 1
    %13697 = vsyncpa %s13696, 1
    %13698 = vsyncpa [#allocation4], 1
    %s13699 = scalar_lea.sflag [#allocation4], 1
    %13700 = vsyncpa %s13699, 1

</llo_original>
